<compile_context>
chip_gen: v6e
topology: v6e:2x2x1
jax: 0.10.0
libtpu: 0.0.40
codegen_flags: <defaults>
</compile_context>

<pallas_src>
import functools
import math

import jax
import jax.numpy as jnp
from jax.experimental import pallas as pl
from jax.experimental.pallas import tpu as pltpu


# --------------------------- in-kernel helpers ------------------------------

def _ln_rows(x, g_ref, b_ref, eps):
    """Row-wise LayerNorm (biased variance, like torch). x: [S, D] f32."""
    mean = jnp.mean(x, axis=-1, keepdims=True)
    var = jnp.mean(jnp.square(x - mean), axis=-1, keepdims=True)
    return (x - mean) * jax.lax.rsqrt(var + eps) * g_ref[...] + b_ref[...]


def _mha_heads(xq_b, xkv_b, wq_ref, bq_ref, wk_ref, bk_ref, wv_ref, bv_ref,
               wo_ref, bo_ref, *, nhead, att_scale):
    """Fused multi-head attention.

    xq_b:  [Sq, D] bf16 (query-side activations)
    xkv_b: [Sk, D] bf16 (key/value-side activations)
    wq/wk/wv refs: [H, D, dh] bf16, biases [H, 1, dh] f32
    wo ref: [H, dh, D] bf16, bo: [1, D] f32
    Returns [Sq, D] f32.  Head split is baked into the weight layout, so the
    per-head output projection is accumulated (sum_h ctx_h @ Wo_h) -- no lane
    slicing / concatenation of activations.
    """
    Sq = xq_b.shape[0]
    D = bo_ref.shape[-1]
    out = jnp.zeros((Sq, D), jnp.float32)
    for h in range(nhead):
        qh = jnp.dot(xq_b, wq_ref[h], preferred_element_type=jnp.float32) + bq_ref[h]
        kh = jnp.dot(xkv_b, wk_ref[h], preferred_element_type=jnp.float32) + bk_ref[h]
        vh = jnp.dot(xkv_b, wv_ref[h], preferred_element_type=jnp.float32) + bv_ref[h]
        # scores: contract the head dim of both (MXU handles the transposed rhs).
        s = jax.lax.dot_general(
            qh.astype(jnp.bfloat16), kh.astype(jnp.bfloat16),
            dimension_numbers=(((1,), (1,)), ((), ())),
            preferred_element_type=jnp.float32) * att_scale          # [Sq, Sk]
        m = jnp.max(s, axis=-1, keepdims=True)
        p = jnp.exp(s - m)
        p = p * pl.reciprocal(jnp.sum(p, axis=-1, keepdims=True), approx=True)
        ctx = jnp.dot(p.astype(jnp.bfloat16), vh.astype(jnp.bfloat16),
                      preferred_element_type=jnp.float32)            # [Sq, dh]
        out = out + jnp.dot(ctx.astype(jnp.bfloat16), wo_ref[h],
                            preferred_element_type=jnp.float32)      # [Sq, D]
    return out + bo_ref[...]


def _ffn(y, w1_ref, b1_ref, w2_ref, b2_ref):
    """ReLU FFN, intermediate kept in-register/VMEM. y: [S, D] f32 -> [S, D] f32."""
    f = jnp.dot(y.astype(jnp.bfloat16), w1_ref[...],
                preferred_element_type=jnp.float32) + b1_ref[...]
    f = jnp.maximum(f, 0.0)
    return jnp.dot(f.astype(jnp.bfloat16), w2_ref[...],
                   preferred_element_type=jnp.float32) + b2_ref[...]


# ----------------------------- Pallas kernels -------------------------------

def _encoder_layer_kernel(x_ref,
                          wq_ref, bq_ref, wk_ref, bk_ref, wv_ref, bv_ref,
                          wo_ref, bo_ref,
                          g1_ref, be1_ref, g2_ref, be2_ref,
                          w1_ref, b1_ref, w2_ref, b2_ref,
                          o_ref, *, nhead, att_scale, eps):
    x = x_ref[0]                                     # [S, D] f32
    xb = x.astype(jnp.bfloat16)
    a = _mha_heads(xb, xb, wq_ref, bq_ref, wk_ref, bk_ref, wv_ref, bv_ref,
                   wo_ref, bo_ref, nhead=nhead, att_scale=att_scale)
    y1 = _ln_rows(x + a, g1_ref, be1_ref, eps)
    f = _ffn(y1, w1_ref, b1_ref, w2_ref, b2_ref)
    y2 = _ln_rows(y1 + f, g2_ref, be2_ref, eps)
    o_ref[0] = y2.astype(o_ref.dtype)


def _decoder_layer_kernel(x_ref, mem_ref,
                          sa_wq, sa_bq, sa_wk, sa_bk, sa_wv, sa_bv, sa_wo, sa_bo,
                          ca_wq, ca_bq, ca_wk, ca_bk, ca_wv, ca_bv, ca_wo, ca_bo,
                          g1_ref, be1_ref, g2_ref, be2_ref, g3_ref, be3_ref,
                          w1_ref, b1_ref, w2_ref, b2_ref,
                          o_ref, *, nhead, att_scale, eps):
    x = x_ref[0]                                     # [St, D] f32
    mem = mem_ref[0]                                 # [Ss, D] f32
    xb = x.astype(jnp.bfloat16)
    memb = mem.astype(jnp.bfloat16)

    a = _mha_heads(xb, xb, sa_wq, sa_bq, sa_wk, sa_bk, sa_wv, sa_bv,
                   sa_wo, sa_bo, nhead=nhead, att_scale=att_scale)
    y1 = _ln_rows(x + a, g1_ref, be1_ref, eps)

    c = _mha_heads(y1.astype(jnp.bfloat16), memb,
                   ca_wq, ca_bq, ca_wk, ca_bk, ca_wv, ca_bv,
                   ca_wo, ca_bo, nhead=nhead, att_scale=att_scale)
    y2 = _ln_rows(y1 + c, g2_ref, be2_ref, eps)

    f = _ffn(y2, w1_ref, b1_ref, w2_ref, b2_ref)
    y3 = _ln_rows(y2 + f, g3_ref, be3_ref, eps)
    o_ref[0] = y3.astype(o_ref.dtype)


def _layernorm_kernel(x_ref, g_ref, b_ref, o_ref, *, eps):
    o_ref[0] = _ln_rows(x_ref[0], g_ref, b_ref, eps).astype(o_ref.dtype)


def _final_head_kernel(x_ref, g_ref, b_ref, w_ref, bw_ref, o_ref, *, eps):
    y = _ln_rows(x_ref[0], g_ref, b_ref, eps)
    logits = jnp.dot(y.astype(jnp.bfloat16), w_ref[...],
                     preferred_element_type=jnp.float32) + bw_ref[...]
    o_ref[0] = logits.astype(o_ref.dtype)


# --------------------------- pallas_call wrappers ----------------------------

_PARALLEL = pltpu.CompilerParams(dimension_semantics=("parallel",))


def _rep(shape):
    """Full-array block, same block for every grid step (weights, biases)."""
    return pl.BlockSpec(shape, lambda i: (0,) * len(shape))


def _attn_specs(nhead, D, dh):
    return [_rep((nhead, D, dh)), _rep((nhead, 1, dh)),   # wq, bq
            _rep((nhead, D, dh)), _rep((nhead, 1, dh)),   # wk, bk
            _rep((nhead, D, dh)), _rep((nhead, 1, dh)),   # wv, bv
            _rep((nhead, dh, D)), _rep((1, D))]           # wo, bo


def encoder_layer(x, p, nhead):
    B, S, D = x.shape
    dh = D // nhead
    F = p["w1"].shape[1]
    in_specs = (
        [pl.BlockSpec((1, S, D), lambda i: (i, 0, 0))]
        + _attn_specs(nhead, D, dh)
        + [_rep((1, D)), _rep((1, D)), _rep((1, D)), _rep((1, D))]   # LN1, LN2
        + [_rep((D, F)), _rep((1, F)), _rep((F, D)), _rep((1, D))]   # FFN
    )
    sa = p["self_attn"]
    return pl.pallas_call(
        functools.partial(_encoder_layer_kernel, nhead=nhead,
                          att_scale=1.0 / math.sqrt(dh), eps=1e-5),
        out_shape=jax.ShapeDtypeStruct((B, S, D), jnp.float32),
        grid=(B,),
        in_specs=in_specs,
        out_specs=pl.BlockSpec((1, S, D), lambda i: (i, 0, 0)),
        compiler_params=_PARALLEL,
    )(x,
      sa["wq"], sa["bq"], sa["wk"], sa["bk"], sa["wv"], sa["bv"], sa["wo"], sa["bo"],
      p["norm1_g"], p["norm1_b"], p["norm2_g"], p["norm2_b"],
      p["w1"], p["b1"], p["w2"], p["b2"])


def decoder_layer(x, mem, p, nhead):
    B, St, D = x.shape
    Ss = mem.shape[1]
    dh = D // nhead
    F = p["w1"].shape[1]
    in_specs = (
        [pl.BlockSpec((1, St, D), lambda i: (i, 0, 0)),
         pl.BlockSpec((1, Ss, D), lambda i: (i, 0, 0))]
        + _attn_specs(nhead, D, dh)                                   # self-attn
        + _attn_specs(nhead, D, dh)                                   # cross-attn
        + [_rep((1, D))] * 6                                          # LN1..LN3
        + [_rep((D, F)), _rep((1, F)), _rep((F, D)), _rep((1, D))]    # FFN
    )
    sa, ca = p["self_attn"], p["cross_attn"]
    return pl.pallas_call(
        functools.partial(_decoder_layer_kernel, nhead=nhead,
                          att_scale=1.0 / math.sqrt(dh), eps=1e-5),
        out_shape=jax.ShapeDtypeStruct((B, St, D), jnp.float32),
        grid=(B,),
        in_specs=in_specs,
        out_specs=pl.BlockSpec((1, St, D), lambda i: (i, 0, 0)),
        compiler_params=_PARALLEL,
    )(x, mem,
      sa["wq"], sa["bq"], sa["wk"], sa["bk"], sa["wv"], sa["bv"], sa["wo"], sa["bo"],
      ca["wq"], ca["bq"], ca["wk"], ca["bk"], ca["wv"], ca["bv"], ca["wo"], ca["bo"],
      p["norm1_g"], p["norm1_b"], p["norm2_g"], p["norm2_b"],
      p["norm3_g"], p["norm3_b"],
      p["w1"], p["b1"], p["w2"], p["b2"])


def layernorm3d(x, g, b, eps=1e-5):
    B, S, D = x.shape
    return pl.pallas_call(
        functools.partial(_layernorm_kernel, eps=eps),
        out_shape=jax.ShapeDtypeStruct((B, S, D), jnp.float32),
        grid=(B,),
        in_specs=[pl.BlockSpec((1, S, D), lambda i: (i, 0, 0)),
                  _rep((1, D)), _rep((1, D))],
        out_specs=pl.BlockSpec((1, S, D), lambda i: (i, 0, 0)),
        compiler_params=_PARALLEL,
    )(x, g, b)


def final_head(x, g, b, w, bw, eps=1e-5):
    """Fused decoder-final LayerNorm + fc_out.  x: [B, St, D] -> [B, St, V]."""
    B, St, D = x.shape
    V = w.shape[1]
    return pl.pallas_call(
        functools.partial(_final_head_kernel, eps=eps),
        out_shape=jax.ShapeDtypeStruct((B, St, V), jnp.float32),
        grid=(B,),
        in_specs=[pl.BlockSpec((1, St, D), lambda i: (i, 0, 0)),
                  _rep((1, D)), _rep((1, D)),
                  _rep((D, V)), _rep((1, V))],
        out_specs=pl.BlockSpec((1, St, V), lambda i: (i, 0, 0)),
        compiler_params=_PARALLEL,
    )(x, g, b, w, bw)


# ------------------------------- parameters ---------------------------------

def make_pe_table(max_len, d_model):
    position = jnp.arange(max_len, dtype=jnp.float32)[:, None]
    div_term = jnp.exp(
        jnp.arange(0, d_model, 2, dtype=jnp.float32) * (-math.log(10000.0) / d_model)
    )
    pe = jnp.zeros((max_len, d_model), jnp.float32)
    pe = pe.at[:, 0::2].set(jnp.sin(position * div_term))
    pe = pe.at[:, 1::2].set(jnp.cos(position * div_term))
    return pe                                         # [max_len, d_model]


def init_params(key, src_vocab, tgt_vocab, d_model, nhead, n_enc, n_dec, d_ff, max_len):
    keys = iter(jax.random.split(key, 512))
    dh = d_model // nhead

    def w(shape, scale=0.02):
        return jax.random.normal(next(keys), shape, jnp.float32) * scale

    def zeros(shape):
        return jnp.zeros(shape, jnp.float32)

    def ones(shape):
        return jnp.ones(shape, jnp.float32)

    def attn_params():
        # Head-split layout baked into storage: wq/wk/wv [H, D, dh], wo [H, dh, D].
        def split_in(m):
            return m.reshape(d_model, nhead, dh).transpose(1, 0, 2).astype(jnp.bfloat16)
        wo = w((d_model, d_model))
        return dict(
            wq=split_in(w((d_model, d_model))), bq=zeros((nhead, 1, dh)),
            wk=split_in(w((d_model, d_model))), bk=zeros((nhead, 1, dh)),
            wv=split_in(w((d_model, d_model))), bv=zeros((nhead, 1, dh)),
            wo=wo.reshape(nhead, dh, d_model).astype(jnp.bfloat16),
            bo=zeros((1, d_model)),
        )

    def enc_layer():
        return dict(
            self_attn=attn_params(),
            w1=w((d_model, d_ff)).astype(jnp.bfloat16), b1=zeros((1, d_ff)),
            w2=w((d_ff, d_model)).astype(jnp.bfloat16), b2=zeros((1, d_model)),
            norm1_g=ones((1, d_model)), norm1_b=zeros((1, d_model)),
            norm2_g=ones((1, d_model)), norm2_b=zeros((1, d_model)),
        )

    def dec_layer():
        return dict(
            self_attn=attn_params(),
            cross_attn=attn_params(),
            w1=w((d_model, d_ff)).astype(jnp.bfloat16), b1=zeros((1, d_ff)),
            w2=w((d_ff, d_model)).astype(jnp.bfloat16), b2=zeros((1, d_model)),
            norm1_g=ones((1, d_model)), norm1_b=zeros((1, d_model)),
            norm2_g=ones((1, d_model)), norm2_b=zeros((1, d_model)),
            norm3_g=ones((1, d_model)), norm3_b=zeros((1, d_model)),
        )

    return dict(
        embed_src=w((src_vocab, d_model), scale=1.0),
        embed_tgt=w((tgt_vocab, d_model), scale=1.0),
        pe=make_pe_table(max_len, d_model),
        enc_layers=[enc_layer() for _ in range(n_enc)],
        dec_layers=[dec_layer() for _ in range(n_dec)],
        enc_norm_g=ones((1, d_model)), enc_norm_b=zeros((1, d_model)),
        dec_norm_g=ones((1, d_model)), dec_norm_b=zeros((1, d_model)),
        fc_w=w((d_model, tgt_vocab)).astype(jnp.bfloat16), fc_b=zeros((1, tgt_vocab)),
    )


# --------------------------------- forward ----------------------------------

def custom_transformer_forward(params, src_ids, tgt_ids, d_model, nhead):
    B, _ = src_ids.shape
    scale = math.sqrt(d_model)

    # Embedding gather * sqrt(d_model) + PE add: plain JAX, XLA fuses elementwise
    # ops into the gather (no dedicated Pallas kernel needed at these sizes).
    # Reproduces pe[:x.size(0)] (batch-indexed positional rows) from the module.
    pe_rows = params["pe"][:B][:, None, :]                          # [B, 1, D]
    src = jnp.take(params["embed_src"], src_ids, axis=0) * scale + pe_rows
    tgt = jnp.take(params["embed_tgt"], tgt_ids, axis=0) * scale + pe_rows
    # TODO(synk): dropout (p=0.1) treated as eval-mode identity (no RNG-matched dropout).

    mem = src
    for lp in params["enc_layers"]:
        mem = encoder_layer(mem, lp, nhead)
    mem = layernorm3d(mem, params["enc_norm_g"], params["enc_norm_b"])

    out = tgt
    for lp in params["dec_layers"]:
        out = decoder_layer(out, mem, lp, nhead)

    # Decoder final LayerNorm fused with fc_out.
    logits = final_head(out, params["dec_norm_g"], params["dec_norm_b"],
                        params["fc_w"], params["fc_b"])
    return logits


# ----------------------------------- main ------------------------------------

if __name__ == "__main__":
    SRC_VOCAB, TGT_VOCAB = 16, 16
    D_MODEL, NHEAD = 32, 4
    N_ENC, N_DEC = 2, 2
    D_FF = 64
    B, S_SRC, S_TGT = 2, 8, 8
    MAX_LEN = 64

    key = jax.random.PRNGKey(0)
    k_params, k_src, k_tgt = jax.random.split(key, 3)

    params = init_params(
        k_params, SRC_VOCAB, TGT_VOCAB, D_MODEL, NHEAD, N_ENC, N_DEC, D_FF, MAX_LEN
    )
    src_ids = jax.random.randint(k_src, (B, S_SRC), 0, SRC_VOCAB, dtype=jnp.int32)
    tgt_ids = jax.random.randint(k_tgt, (B, S_TGT), 0, TGT_VOCAB, dtype=jnp.int32)

    fwd = jax.jit(
        functools.partial(custom_transformer_forward, d_model=D_MODEL, nhead=NHEAD)
    )
    logits = fwd(params, src_ids, tgt_ids)
    jax.block_until_ready(logits)

    assert logits.shape == (B, S_TGT, TGT_VOCAB), logits.shape
    assert bool(jnp.all(jnp.isfinite(logits)))
    print("KERNEL_OK")
</pallas_src>

<mosaic_0001>
module attributes {stable_mosaic.version = 11 : i64} {
  func.func @_layernorm_kernel(%arg0: i32, %arg1: memref<1x8x32xf32, #tpu.memory_space<vmem>>, %arg2: memref<1x32xf32, #tpu.memory_space<vmem>>, %arg3: memref<1x32xf32, #tpu.memory_space<vmem>>, %arg4: memref<1x8x32xf32, #tpu.memory_space<vmem>>) attributes {dimension_semantics = [#tpu.dimension_semantics<parallel>], iteration_bounds = array<i64: 2>, scalar_prefetch = 0 : i64, scratch_operands = 0 : i64, tpu.core_type = #tpu.core_type<tc>, window_params = [{transform_indices = @transform_0, window_bounds = array<i64: 1, 8, 32>}, {pipeline_mode = #tpu.pipeline_mode<synchronous>, transform_indices = @transform_1, window_bounds = array<i64: 1, 32>}, {pipeline_mode = #tpu.pipeline_mode<synchronous>, transform_indices = @transform_2, window_bounds = array<i64: 1, 32>}, {transform_indices = @transform_3, window_bounds = array<i64: 1, 8, 32>}]} {
    %c0 = arith.constant 0 : index
    %c0_0 = arith.constant 0 : index
    %c0_1 = arith.constant 0 : index
    %0 = vector.load %arg1[%c0, %c0_0, %c0_1] : memref<1x8x32xf32, #tpu.memory_space<vmem>>, vector<1x8x32xf32>
    %1 = vector.shape_cast %0 : vector<1x8x32xf32> to vector<8x32xf32>
    %cst = arith.constant dense<0.000000e+00> : vector<8xf32>
    %2 = vector.multi_reduction <add>, %1, %cst [1] : vector<8x32xf32> to vector<8xf32>
    %3 = vector.shape_cast %2 : vector<8xf32> to vector<8x1xf32>
    %cst_2 = arith.constant 3.200000e+01 : f32
    %4 = vector.broadcast %cst_2 : f32 to vector<8x1xf32>
    %5 = arith.divf %3, %4 : vector<8x1xf32>
    %6 = vector.broadcast %5 : vector<8x1xf32> to vector<8x32xf32>
    %7 = arith.subf %1, %6 : vector<8x32xf32>
    %8 = arith.mulf %7, %7 : vector<8x32xf32>
    %cst_3 = arith.constant dense<0.000000e+00> : vector<8xf32>
    %9 = vector.multi_reduction <add>, %8, %cst_3 [1] : vector<8x32xf32> to vector<8xf32>
    %10 = vector.shape_cast %9 : vector<8xf32> to vector<8x1xf32>
    %cst_4 = arith.constant 3.200000e+01 : f32
    %11 = vector.broadcast %cst_4 : f32 to vector<8x1xf32>
    %12 = arith.divf %10, %11 : vector<8x1xf32>
    %13 = vector.broadcast %5 : vector<8x1xf32> to vector<8x32xf32>
    %14 = arith.subf %1, %13 : vector<8x32xf32>
    %cst_5 = arith.constant 9.99999974E-6 : f32
    %15 = vector.broadcast %cst_5 : f32 to vector<8x1xf32>
    %16 = arith.addf %12, %15 : vector<8x1xf32>
    %17 = math.rsqrt %16 : vector<8x1xf32>
    %18 = vector.broadcast %17 : vector<8x1xf32> to vector<8x32xf32>
    %19 = arith.mulf %14, %18 : vector<8x32xf32>
    %c0_6 = arith.constant 0 : index
    %c0_7 = arith.constant 0 : index
    %20 = vector.load %arg2[%c0_6, %c0_7] : memref<1x32xf32, #tpu.memory_space<vmem>>, vector<1x32xf32>
    %21 = vector.broadcast %20 : vector<1x32xf32> to vector<8x32xf32>
    %22 = arith.mulf %19, %21 : vector<8x32xf32>
    %c0_8 = arith.constant 0 : index
    %c0_9 = arith.constant 0 : index
    %23 = vector.load %arg3[%c0_8, %c0_9] : memref<1x32xf32, #tpu.memory_space<vmem>>, vector<1x32xf32>
    %24 = vector.broadcast %23 : vector<1x32xf32> to vector<8x32xf32>
    %25 = arith.addf %22, %24 : vector<8x32xf32>
    %c0_10 = arith.constant 0 : index
    %c0_11 = arith.constant 0 : index
    %c0_12 = arith.constant 0 : index
    %26 = vector.load %arg4[%c0_10, %c0_11, %c0_12] : memref<1x8x32xf32, #tpu.memory_space<vmem>>, vector<1x8x32xf32>
    %27 = vector.shape_cast %26 : vector<1x8x32xf32> to vector<8x32xf32>
    %28 = vector.shape_cast %25 : vector<8x32xf32> to vector<1x8x32xf32>
    tpu.vector_store %arg4[%c0_10, %c0_11, %c0_12], %28 {strides = array<i32>} : memref<1x8x32xf32, #tpu.memory_space<vmem>>, vector<1x8x32xf32>,
    return
  }
  func.func @transform_0(%arg0: i32) -> (i32, i32, i32) {
    %c0_i32 = arith.constant 0 : i32
    %c0_i32_0 = arith.constant 0 : i32
    %c0_i32_1 = arith.constant 0 : i32
    return %arg0, %c0_i32, %c0_i32_0 : i32, i32, i32
  }
  func.func @transform_1(%arg0: i32) -> (i32, i32) {
    %c0_i32 = arith.constant 0 : i32
    %c0_i32_0 = arith.constant 0 : i32
    %c0_i32_1 = arith.constant 0 : i32
    return %c0_i32, %c0_i32_0 : i32, i32
  }
  func.func @transform_2(%arg0: i32) -> (i32, i32) {
    %c0_i32 = arith.constant 0 : i32
    %c0_i32_0 = arith.constant 0 : i32
    %c0_i32_1 = arith.constant 0 : i32
    return %c0_i32, %c0_i32_0 : i32, i32
  }
  func.func @transform_3(%arg0: i32) -> (i32, i32, i32) {
    %c0_i32 = arith.constant 0 : i32
    %c0_i32_0 = arith.constant 0 : i32
    %c0_i32_1 = arith.constant 0 : i32
    return %arg0, %c0_i32, %c0_i32_0 : i32, i32, i32
  }
}

module attributes {stable_mosaic.version = 11 : i64} {
  func.func @_encoder_layer_kernel(%arg0: i32, %arg1: memref<1x8x32xf32, #tpu.memory_space<vmem>>, %arg2: memref<4x32x8xbf16, #tpu.memory_space<vmem>>, %arg3: memref<4x1x8xf32, #tpu.memory_space<vmem>>, %arg4: memref<4x32x8xbf16, #tpu.memory_space<vmem>>, %arg5: memref<4x1x8xf32, #tpu.memory_space<vmem>>, %arg6: memref<4x32x8xbf16, #tpu.memory_space<vmem>>, %arg7: memref<4x1x8xf32, #tpu.memory_space<vmem>>, %arg8: memref<4x8x32xbf16, #tpu.memory_space<vmem>>, %arg9: memref<1x32xf32, #tpu.memory_space<vmem>>, %arg10: memref<1x32xf32, #tpu.memory_space<vmem>>, %arg11: memref<1x32xf32, #tpu.memory_space<vmem>>, %arg12: memref<1x32xf32, #tpu.memory_space<vmem>>, %arg13: memref<1x32xf32, #tpu.memory_space<vmem>>, %arg14: memref<32x64xbf16, #tpu.memory_space<vmem>>, %arg15: memref<1x64xf32, #tpu.memory_space<vmem>>, %arg16: memref<64x32xbf16, #tpu.memory_space<vmem>>, %arg17: memref<1x32xf32, #tpu.memory_space<vmem>>, %arg18: memref<1x8x32xf32, #tpu.memory_space<vmem>>) attributes {dimension_semantics = [#tpu.dimension_semantics<parallel>], iteration_bounds = array<i64: 2>, scalar_prefetch = 0 : i64, scratch_operands = 0 : i64, tpu.core_type = #tpu.core_type<tc>, window_params = [{transform_indices = @transform_0, window_bounds = array<i64: 1, 8, 32>}, {pipeline_mode = #tpu.pipeline_mode<synchronous>, transform_indices = @transform_1, window_bounds = array<i64: 4, 32, 8>}, {pipeline_mode = #tpu.pipeline_mode<synchronous>, transform_indices = @transform_2, window_bounds = array<i64: 4, 1, 8>}, {pipeline_mode = #tpu.pipeline_mode<synchronous>, transform_indices = @transform_3, window_bounds = array<i64: 4, 32, 8>}, {pipeline_mode = #tpu.pipeline_mode<synchronous>, transform_indices = @transform_4, window_bounds = array<i64: 4, 1, 8>}, {pipeline_mode = #tpu.pipeline_mode<synchronous>, transform_indices = @transform_5, window_bounds = array<i64: 4, 32, 8>}, {pipeline_mode = #tpu.pipeline_mode<synchronous>, transform_indices = @transform_6, window_bounds = array<i64: 4, 1, 8>}, {pipeline_mode = #tpu.pipeline_mode<synchronous>, transform_indices = @transform_7, window_bounds = array<i64: 4, 8, 32>}, {pipeline_mode = #tpu.pipeline_mode<synchronous>, transform_indices = @transform_8, window_bounds = array<i64: 1, 32>}, {pipeline_mode = #tpu.pipeline_mode<synchronous>, transform_indices = @transform_9, window_bounds = array<i64: 1, 32>}, {pipeline_mode = #tpu.pipeline_mode<synchronous>, transform_indices = @transform_10, window_bounds = array<i64: 1, 32>}, {pipeline_mode = #tpu.pipeline_mode<synchronous>, transform_indices = @transform_11, window_bounds = array<i64: 1, 32>}, {pipeline_mode = #tpu.pipeline_mode<synchronous>, transform_indices = @transform_12, window_bounds = array<i64: 1, 32>}, {pipeline_mode = #tpu.pipeline_mode<synchronous>, transform_indices = @transform_13, window_bounds = array<i64: 32, 64>}, {pipeline_mode = #tpu.pipeline_mode<synchronous>, transform_indices = @transform_14, window_bounds = array<i64: 1, 64>}, {pipeline_mode = #tpu.pipeline_mode<synchronous>, transform_indices = @transform_15, window_bounds = array<i64: 64, 32>}, {pipeline_mode = #tpu.pipeline_mode<synchronous>, transform_indices = @transform_16, window_bounds = array<i64: 1, 32>}, {transform_indices = @transform_17, window_bounds = array<i64: 1, 8, 32>}]} {
    %c0 = arith.constant 0 : index
    %c0_0 = arith.constant 0 : index
    %c0_1 = arith.constant 0 : index
    %0 = vector.load %arg1[%c0, %c0_0, %c0_1] : memref<1x8x32xf32, #tpu.memory_space<vmem>>, vector<1x8x32xf32>
    %1 = vector.shape_cast %0 : vector<1x8x32xf32> to vector<8x32xf32>
    %2 = arith.truncf %1 : vector<8x32xf32> to vector<8x32xbf16>
    %cst = arith.constant 0.000000e+00 : f32
    %3 = vector.broadcast %cst : f32 to vector<8x32xf32>
    %c0_2 = arith.constant 0 : index
    %c0_3 = arith.constant 0 : index
    %c0_4 = arith.constant 0 : index
    %4 = vector.load %arg2[%c0_2, %c0_3, %c0_4] : memref<4x32x8xbf16, #tpu.memory_space<vmem>>, vector<1x32x8xbf16>
    %5 = vector.shape_cast %4 : vector<1x32x8xbf16> to vector<32x8xbf16>
    %cst_5 = arith.constant dense<0.000000e+00> : vector<8x8xf32>
    %6 = tpu.matmul %2, %5, %cst_5 {dimension_numbers = #tpu.dot_dimension_numbers<[1], [0], [0], [1], [0, 0, 1, 1], [], []>} : vector<8x32xbf16>, vector<32x8xbf16>, vector<8x8xf32> -> vector<8x8xf32>
    %c0_6 = arith.constant 0 : index
    %c0_7 = arith.constant 0 : index
    %c0_8 = arith.constant 0 : index
    %7 = vector.load %arg3[%c0_6, %c0_7, %c0_8] : memref<4x1x8xf32, #tpu.memory_space<vmem>>, vector<1x1x8xf32>
    %8 = vector.shape_cast %7 : vector<1x1x8xf32> to vector<1x8xf32>
    %9 = vector.broadcast %8 : vector<1x8xf32> to vector<8x8xf32>
    %10 = arith.addf %6, %9 : vector<8x8xf32>
    %c0_9 = arith.constant 0 : index
    %c0_10 = arith.constant 0 : index
    %c0_11 = arith.constant 0 : index
    %11 = vector.load %arg4[%c0_9, %c0_10, %c0_11] : memref<4x32x8xbf16, #tpu.memory_space<vmem>>, vector<1x32x8xbf16>
    %12 = vector.shape_cast %11 : vector<1x32x8xbf16> to vector<32x8xbf16>
    %cst_12 = arith.constant dense<0.000000e+00> : vector<8x8xf32>
    %13 = tpu.matmul %2, %12, %cst_12 {dimension_numbers = #tpu.dot_dimension_numbers<[1], [0], [0], [1], [0, 0, 1, 1], [], []>} : vector<8x32xbf16>, vector<32x8xbf16>, vector<8x8xf32> -> vector<8x8xf32>
    %c0_13 = arith.constant 0 : index
    %c0_14 = arith.constant 0 : index
    %c0_15 = arith.constant 0 : index
    %14 = vector.load %arg5[%c0_13, %c0_14, %c0_15] : memref<4x1x8xf32, #tpu.memory_space<vmem>>, vector<1x1x8xf32>
    %15 = vector.shape_cast %14 : vector<1x1x8xf32> to vector<1x8xf32>
    %16 = vector.broadcast %15 : vector<1x8xf32> to vector<8x8xf32>
    %17 = arith.addf %13, %16 : vector<8x8xf32>
    %c0_16 = arith.constant 0 : index
    %c0_17 = arith.constant 0 : index
    %c0_18 = arith.constant 0 : index
    %18 = vector.load %arg6[%c0_16, %c0_17, %c0_18] : memref<4x32x8xbf16, #tpu.memory_space<vmem>>, vector<1x32x8xbf16>
    %19 = vector.shape_cast %18 : vector<1x32x8xbf16> to vector<32x8xbf16>
    %cst_19 = arith.constant dense<0.000000e+00> : vector<8x8xf32>
    %20 = tpu.matmul %2, %19, %cst_19 {dimension_numbers = #tpu.dot_dimension_numbers<[1], [0], [0], [1], [0, 0, 1, 1], [], []>} : vector<8x32xbf16>, vector<32x8xbf16>, vector<8x8xf32> -> vector<8x8xf32>
    %c0_20 = arith.constant 0 : index
    %c0_21 = arith.constant 0 : index
    %c0_22 = arith.constant 0 : index
    %21 = vector.load %arg7[%c0_20, %c0_21, %c0_22] : memref<4x1x8xf32, #tpu.memory_space<vmem>>, vector<1x1x8xf32>
    %22 = vector.shape_cast %21 : vector<1x1x8xf32> to vector<1x8xf32>
    %23 = vector.broadcast %22 : vector<1x8xf32> to vector<8x8xf32>
    %24 = arith.addf %20, %23 : vector<8x8xf32>
    %25 = arith.truncf %10 : vector<8x8xf32> to vector<8x8xbf16>
    %26 = arith.truncf %17 : vector<8x8xf32> to vector<8x8xbf16>
    %cst_23 = arith.constant dense<0.000000e+00> : vector<8x8xf32>
    %27 = tpu.matmul %25, %26, %cst_23 {dimension_numbers = #tpu.dot_dimension_numbers<[1], [1], [0], [0], [0, 0, 1, 0], [], []>} : vector<8x8xbf16>, vector<8x8xbf16>, vector<8x8xf32> -> vector<8x8xf32>
    %cst_24 = arith.constant 0.353553385 : f32
    %28 = vector.broadcast %cst_24 : f32 to vector<8x8xf32>
    %29 = arith.mulf %27, %28 : vector<8x8xf32>
    %cst_25 = arith.constant dense<0xFF800000> : vector<8xf32>
    %30 = vector.multi_reduction <maximumf>, %29, %cst_25 [1] : vector<8x8xf32> to vector<8xf32>
    %31 = vector.shape_cast %30 : vector<8xf32> to vector<8x1xf32>
    %32 = vector.broadcast %31 : vector<8x1xf32> to vector<8x8xf32>
    %33 = arith.subf %29, %32 : vector<8x8xf32>
    %34 = math.exp %33 : vector<8x8xf32>
    %cst_26 = arith.constant dense<0.000000e+00> : vector<8xf32>
    %35 = vector.multi_reduction <add>, %34, %cst_26 [1] : vector<8x8xf32> to vector<8xf32>
    %36 = vector.shape_cast %35 : vector<8xf32> to vector<8x1xf32>
    %37 = tpu.reciprocal %36 {approx = true} : vector<8x1xf32> -> vector<8x1xf32>
    %38 = vector.broadcast %37 : vector<8x1xf32> to vector<8x8xf32>
    %39 = arith.mulf %34, %38 : vector<8x8xf32>
    %40 = arith.truncf %39 : vector<8x8xf32> to vector<8x8xbf16>
    %41 = arith.truncf %24 : vector<8x8xf32> to vector<8x8xbf16>
    %cst_27 = arith.constant dense<0.000000e+00> : vector<8x8xf32>
    %42 = tpu.matmul %40, %41, %cst_27 {dimension_numbers = #tpu.dot_dimension_numbers<[1], [0], [0], [1], [0, 0, 1, 1], [], []>} : vector<8x8xbf16>, vector<8x8xbf16>, vector<8x8xf32> -> vector<8x8xf32>
    %43 = arith.truncf %42 : vector<8x8xf32> to vector<8x8xbf16>
    %c0_28 = arith.constant 0 : index
    %c0_29 = arith.constant 0 : index
    %c0_30 = arith.constant 0 : index
    %44 = vector.load %arg8[%c0_28, %c0_29, %c0_30] : memref<4x8x32xbf16, #tpu.memory_space<vmem>>, vector<1x8x32xbf16>
    %45 = vector.shape_cast %44 : vector<1x8x32xbf16> to vector<8x32xbf16>
    %cst_31 = arith.constant dense<0.000000e+00> : vector<8x32xf32>
    %46 = tpu.matmul %43, %45, %cst_31 {dimension_numbers = #tpu.dot_dimension_numbers<[1], [0], [0], [1], [0, 0, 1, 1], [], []>} : vector<8x8xbf16>, vector<8x32xbf16>, vector<8x32xf32> -> vector<8x32xf32>
    %47 = arith.addf %3, %46 : vector<8x32xf32>
    %c1 = arith.constant 1 : index
    %c0_32 = arith.constant 0 : index
    %c0_33 = arith.constant 0 : index
    %48 = vector.load %arg2[%c1, %c0_32, %c0_33] : memref<4x32x8xbf16, #tpu.memory_space<vmem>>, vector<1x32x8xbf16>
    %49 = vector.shape_cast %48 : vector<1x32x8xbf16> to vector<32x8xbf16>
    %cst_34 = arith.constant dense<0.000000e+00> : vector<8x8xf32>
    %50 = tpu.matmul %2, %49, %cst_34 {dimension_numbers = #tpu.dot_dimension_numbers<[1], [0], [0], [1], [0, 0, 1, 1], [], []>} : vector<8x32xbf16>, vector<32x8xbf16>, vector<8x8xf32> -> vector<8x8xf32>
    %c1_35 = arith.constant 1 : index
    %c0_36 = arith.constant 0 : index
    %c0_37 = arith.constant 0 : index
    %51 = vector.load %arg3[%c1_35, %c0_36, %c0_37] : memref<4x1x8xf32, #tpu.memory_space<vmem>>, vector<1x1x8xf32>
    %52 = vector.shape_cast %51 : vector<1x1x8xf32> to vector<1x8xf32>
    %53 = vector.broadcast %52 : vector<1x8xf32> to vector<8x8xf32>
    %54 = arith.addf %50, %53 : vector<8x8xf32>
    %c1_38 = arith.constant 1 : index
    %c0_39 = arith.constant 0 : index
    %c0_40 = arith.constant 0 : index
    %55 = vector.load %arg4[%c1_38, %c0_39, %c0_40] : memref<4x32x8xbf16, #tpu.memory_space<vmem>>, vector<1x32x8xbf16>
    %56 = vector.shape_cast %55 : vector<1x32x8xbf16> to vector<32x8xbf16>
    %cst_41 = arith.constant dense<0.000000e+00> : vector<8x8xf32>
    %57 = tpu.matmul %2, %56, %cst_41 {dimension_numbers = #tpu.dot_dimension_numbers<[1], [0], [0], [1], [0, 0, 1, 1], [], []>} : vector<8x32xbf16>, vector<32x8xbf16>, vector<8x8xf32> -> vector<8x8xf32>
    %c1_42 = arith.constant 1 : index
    %c0_43 = arith.constant 0 : index
    %c0_44 = arith.constant 0 : index
    %58 = vector.load %arg5[%c1_42, %c0_43, %c0_44] : memref<4x1x8xf32, #tpu.memory_space<vmem>>, vector<1x1x8xf32>
    %59 = vector.shape_cast %58 : vector<1x1x8xf32> to vector<1x8xf32>
    %60 = vector.broadcast %59 : vector<1x8xf32> to vector<8x8xf32>
    %61 = arith.addf %57, %60 : vector<8x8xf32>
    %c1_45 = arith.constant 1 : index
    %c0_46 = arith.constant 0 : index
    %c0_47 = arith.constant 0 : index
    %62 = vector.load %arg6[%c1_45, %c0_46, %c0_47] : memref<4x32x8xbf16, #tpu.memory_space<vmem>>, vector<1x32x8xbf16>
    %63 = vector.shape_cast %62 : vector<1x32x8xbf16> to vector<32x8xbf16>
    %cst_48 = arith.constant dense<0.000000e+00> : vector<8x8xf32>
    %64 = tpu.matmul %2, %63, %cst_48 {dimension_numbers = #tpu.dot_dimension_numbers<[1], [0], [0], [1], [0, 0, 1, 1], [], []>} : vector<8x32xbf16>, vector<32x8xbf16>, vector<8x8xf32> -> vector<8x8xf32>
    %c1_49 = arith.constant 1 : index
    %c0_50 = arith.constant 0 : index
    %c0_51 = arith.constant 0 : index
    %65 = vector.load %arg7[%c1_49, %c0_50, %c0_51] : memref<4x1x8xf32, #tpu.memory_space<vmem>>, vector<1x1x8xf32>
    %66 = vector.shape_cast %65 : vector<1x1x8xf32> to vector<1x8xf32>
    %67 = vector.broadcast %66 : vector<1x8xf32> to vector<8x8xf32>
    %68 = arith.addf %64, %67 : vector<8x8xf32>
    %69 = arith.truncf %54 : vector<8x8xf32> to vector<8x8xbf16>
    %70 = arith.truncf %61 : vector<8x8xf32> to vector<8x8xbf16>
    %cst_52 = arith.constant dense<0.000000e+00> : vector<8x8xf32>
    %71 = tpu.matmul %69, %70, %cst_52 {dimension_numbers = #tpu.dot_dimension_numbers<[1], [1], [0], [0], [0, 0, 1, 0], [], []>} : vector<8x8xbf16>, vector<8x8xbf16>, vector<8x8xf32> -> vector<8x8xf32>
    %cst_53 = arith.constant 0.353553385 : f32
    %72 = vector.broadcast %cst_53 : f32 to vector<8x8xf32>
    %73 = arith.mulf %71, %72 : vector<8x8xf32>
    %cst_54 = arith.constant dense<0xFF800000> : vector<8xf32>
    %74 = vector.multi_reduction <maximumf>, %73, %cst_54 [1] : vector<8x8xf32> to vector<8xf32>
    %75 = vector.shape_cast %74 : vector<8xf32> to vector<8x1xf32>
    %76 = vector.broadcast %75 : vector<8x1xf32> to vector<8x8xf32>
    %77 = arith.subf %73, %76 : vector<8x8xf32>
    %78 = math.exp %77 : vector<8x8xf32>
    %cst_55 = arith.constant dense<0.000000e+00> : vector<8xf32>
    %79 = vector.multi_reduction <add>, %78, %cst_55 [1] : vector<8x8xf32> to vector<8xf32>
    %80 = vector.shape_cast %79 : vector<8xf32> to vector<8x1xf32>
    %81 = tpu.reciprocal %80 {approx = true} : vector<8x1xf32> -> vector<8x1xf32>
    %82 = vector.broadcast %81 : vector<8x1xf32> to vector<8x8xf32>
    %83 = arith.mulf %78, %82 : vector<8x8xf32>
    %84 = arith.truncf %83 : vector<8x8xf32> to vector<8x8xbf16>
    %85 = arith.truncf %68 : vector<8x8xf32> to vector<8x8xbf16>
    %cst_56 = arith.constant dense<0.000000e+00> : vector<8x8xf32>
    %86 = tpu.matmul %84, %85, %cst_56 {dimension_numbers = #tpu.dot_dimension_numbers<[1], [0], [0], [1], [0, 0, 1, 1], [], []>} : vector<8x8xbf16>, vector<8x8xbf16>, vector<8x8xf32> -> vector<8x8xf32>
    %87 = arith.truncf %86 : vector<8x8xf32> to vector<8x8xbf16>
    %c1_57 = arith.constant 1 : index
    %c0_58 = arith.constant 0 : index
    %c0_59 = arith.constant 0 : index
    %88 = vector.load %arg8[%c1_57, %c0_58, %c0_59] : memref<4x8x32xbf16, #tpu.memory_space<vmem>>, vector<1x8x32xbf16>
    %89 = vector.shape_cast %88 : vector<1x8x32xbf16> to vector<8x32xbf16>
    %cst_60 = arith.constant dense<0.000000e+00> : vector<8x32xf32>
    %90 = tpu.matmul %87, %89, %cst_60 {dimension_numbers = #tpu.dot_dimension_numbers<[1], [0], [0], [1], [0, 0, 1, 1], [], []>} : vector<8x8xbf16>, vector<8x32xbf16>, vector<8x32xf32> -> vector<8x32xf32>
    %91 = arith.addf %47, %90 : vector<8x32xf32>
    %c2 = arith.constant 2 : index
    %c0_61 = arith.constant 0 : index
    %c0_62 = arith.constant 0 : index
    %92 = vector.load %arg2[%c2, %c0_61, %c0_62] : memref<4x32x8xbf16, #tpu.memory_space<vmem>>, vector<1x32x8xbf16>
    %93 = vector.shape_cast %92 : vector<1x32x8xbf16> to vector<32x8xbf16>
    %cst_63 = arith.constant dense<0.000000e+00> : vector<8x8xf32>
    %94 = tpu.matmul %2, %93, %cst_63 {dimension_numbers = #tpu.dot_dimension_numbers<[1], [0], [0], [1], [0, 0, 1, 1], [], []>} : vector<8x32xbf16>, vector<32x8xbf16>, vector<8x8xf32> -> vector<8x8xf32>
    %c2_64 = arith.constant 2 : index
    %c0_65 = arith.constant 0 : index
    %c0_66 = arith.constant 0 : index
    %95 = vector.load %arg3[%c2_64, %c0_65, %c0_66] : memref<4x1x8xf32, #tpu.memory_space<vmem>>, vector<1x1x8xf32>
    %96 = vector.shape_cast %95 : vector<1x1x8xf32> to vector<1x8xf32>
    %97 = vector.broadcast %96 : vector<1x8xf32> to vector<8x8xf32>
    %98 = arith.addf %94, %97 : vector<8x8xf32>
    %c2_67 = arith.constant 2 : index
    %c0_68 = arith.constant 0 : index
    %c0_69 = arith.constant 0 : index
    %99 = vector.load %arg4[%c2_67, %c0_68, %c0_69] : memref<4x32x8xbf16, #tpu.memory_space<vmem>>, vector<1x32x8xbf16>
    %100 = vector.shape_cast %99 : vector<1x32x8xbf16> to vector<32x8xbf16>
    %cst_70 = arith.constant dense<0.000000e+00> : vector<8x8xf32>
    %101 = tpu.matmul %2, %100, %cst_70 {dimension_numbers = #tpu.dot_dimension_numbers<[1], [0], [0], [1], [0, 0, 1, 1], [], []>} : vector<8x32xbf16>, vector<32x8xbf16>, vector<8x8xf32> -> vector<8x8xf32>
    %c2_71 = arith.constant 2 : index
    %c0_72 = arith.constant 0 : index
    %c0_73 = arith.constant 0 : index
    %102 = vector.load %arg5[%c2_71, %c0_72, %c0_73] : memref<4x1x8xf32, #tpu.memory_space<vmem>>, vector<1x1x8xf32>
    %103 = vector.shape_cast %102 : vector<1x1x8xf32> to vector<1x8xf32>
    %104 = vector.broadcast %103 : vector<1x8xf32> to vector<8x8xf32>
    %105 = arith.addf %101, %104 : vector<8x8xf32>
    %c2_74 = arith.constant 2 : index
    %c0_75 = arith.constant 0 : index
    %c0_76 = arith.constant 0 : index
    %106 = vector.load %arg6[%c2_74, %c0_75, %c0_76] : memref<4x32x8xbf16, #tpu.memory_space<vmem>>, vector<1x32x8xbf16>
    %107 = vector.shape_cast %106 : vector<1x32x8xbf16> to vector<32x8xbf16>
    %cst_77 = arith.constant dense<0.000000e+00> : vector<8x8xf32>
    %108 = tpu.matmul %2, %107, %cst_77 {dimension_numbers = #tpu.dot_dimension_numbers<[1], [0], [0], [1], [0, 0, 1, 1], [], []>} : vector<8x32xbf16>, vector<32x8xbf16>, vector<8x8xf32> -> vector<8x8xf32>
    %c2_78 = arith.constant 2 : index
    %c0_79 = arith.constant 0 : index
    %c0_80 = arith.constant 0 : index
    %109 = vector.load %arg7[%c2_78, %c0_79, %c0_80] : memref<4x1x8xf32, #tpu.memory_space<vmem>>, vector<1x1x8xf32>
    %110 = vector.shape_cast %109 : vector<1x1x8xf32> to vector<1x8xf32>
    %111 = vector.broadcast %110 : vector<1x8xf32> to vector<8x8xf32>
    %112 = arith.addf %108, %111 : vector<8x8xf32>
    %113 = arith.truncf %98 : vector<8x8xf32> to vector<8x8xbf16>
    %114 = arith.truncf %105 : vector<8x8xf32> to vector<8x8xbf16>
    %cst_81 = arith.constant dense<0.000000e+00> : vector<8x8xf32>
    %115 = tpu.matmul %113, %114, %cst_81 {dimension_numbers = #tpu.dot_dimension_numbers<[1], [1], [0], [0], [0, 0, 1, 0], [], []>} : vector<8x8xbf16>, vector<8x8xbf16>, vector<8x8xf32> -> vector<8x8xf32>
    %cst_82 = arith.constant 0.353553385 : f32
    %116 = vector.broadcast %cst_82 : f32 to vector<8x8xf32>
    %117 = arith.mulf %115, %116 : vector<8x8xf32>
    %cst_83 = arith.constant dense<0xFF800000> : vector<8xf32>
    %118 = vector.multi_reduction <maximumf>, %117, %cst_83 [1] : vector<8x8xf32> to vector<8xf32>
    %119 = vector.shape_cast %118 : vector<8xf32> to vector<8x1xf32>
    %120 = vector.broadcast %119 : vector<8x1xf32> to vector<8x8xf32>
    %121 = arith.subf %117, %120 : vector<8x8xf32>
    %122 = math.exp %121 : vector<8x8xf32>
    %cst_84 = arith.constant dense<0.000000e+00> : vector<8xf32>
    %123 = vector.multi_reduction <add>, %122, %cst_84 [1] : vector<8x8xf32> to vector<8xf32>
    %124 = vector.shape_cast %123 : vector<8xf32> to vector<8x1xf32>
    %125 = tpu.reciprocal %124 {approx = true} : vector<8x1xf32> -> vector<8x1xf32>
    %126 = vector.broadcast %125 : vector<8x1xf32> to vector<8x8xf32>
    %127 = arith.mulf %122, %126 : vector<8x8xf32>
    %128 = arith.truncf %127 : vector<8x8xf32> to vector<8x8xbf16>
    %129 = arith.truncf %112 : vector<8x8xf32> to vector<8x8xbf16>
    %cst_85 = arith.constant dense<0.000000e+00> : vector<8x8xf32>
    %130 = tpu.matmul %128, %129, %cst_85 {dimension_numbers = #tpu.dot_dimension_numbers<[1], [0], [0], [1], [0, 0, 1, 1], [], []>} : vector<8x8xbf16>, vector<8x8xbf16>, vector<8x8xf32> -> vector<8x8xf32>
    %131 = arith.truncf %130 : vector<8x8xf32> to vector<8x8xbf16>
    %c2_86 = arith.constant 2 : index
    %c0_87 = arith.constant 0 : index
    %c0_88 = arith.constant 0 : index
    %132 = vector.load %arg8[%c2_86, %c0_87, %c0_88] : memref<4x8x32xbf16, #tpu.memory_space<vmem>>, vector<1x8x32xbf16>
    %133 = vector.shape_cast %132 : vector<1x8x32xbf16> to vector<8x32xbf16>
    %cst_89 = arith.constant dense<0.000000e+00> : vector<8x32xf32>
    %134 = tpu.matmul %131, %133, %cst_89 {dimension_numbers = #tpu.dot_dimension_numbers<[1], [0], [0], [1], [0, 0, 1, 1], [], []>} : vector<8x8xbf16>, vector<8x32xbf16>, vector<8x32xf32> -> vector<8x32xf32>
    %135 = arith.addf %91, %134 : vector<8x32xf32>
    %c3 = arith.constant 3 : index
    %c0_90 = arith.constant 0 : index
    %c0_91 = arith.constant 0 : index
    %136 = vector.load %arg2[%c3, %c0_90, %c0_91] : memref<4x32x8xbf16, #tpu.memory_space<vmem>>, vector<1x32x8xbf16>
    %137 = vector.shape_cast %136 : vector<1x32x8xbf16> to vector<32x8xbf16>
    %cst_92 = arith.constant dense<0.000000e+00> : vector<8x8xf32>
    %138 = tpu.matmul %2, %137, %cst_92 {dimension_numbers = #tpu.dot_dimension_numbers<[1], [0], [0], [1], [0, 0, 1, 1], [], []>} : vector<8x32xbf16>, vector<32x8xbf16>, vector<8x8xf32> -> vector<8x8xf32>
    %c3_93 = arith.constant 3 : index
    %c0_94 = arith.constant 0 : index
    %c0_95 = arith.constant 0 : index
    %139 = vector.load %arg3[%c3_93, %c0_94, %c0_95] : memref<4x1x8xf32, #tpu.memory_space<vmem>>, vector<1x1x8xf32>
    %140 = vector.shape_cast %139 : vector<1x1x8xf32> to vector<1x8xf32>
    %141 = vector.broadcast %140 : vector<1x8xf32> to vector<8x8xf32>
    %142 = arith.addf %138, %141 : vector<8x8xf32>
    %c3_96 = arith.constant 3 : index
    %c0_97 = arith.constant 0 : index
    %c0_98 = arith.constant 0 : index
    %143 = vector.load %arg4[%c3_96, %c0_97, %c0_98] : memref<4x32x8xbf16, #tpu.memory_space<vmem>>, vector<1x32x8xbf16>
    %144 = vector.shape_cast %143 : vector<1x32x8xbf16> to vector<32x8xbf16>
    %cst_99 = arith.constant dense<0.000000e+00> : vector<8x8xf32>
    %145 = tpu.matmul %2, %144, %cst_99 {dimension_numbers = #tpu.dot_dimension_numbers<[1], [0], [0], [1], [0, 0, 1, 1], [], []>} : vector<8x32xbf16>, vector<32x8xbf16>, vector<8x8xf32> -> vector<8x8xf32>
    %c3_100 = arith.constant 3 : index
    %c0_101 = arith.constant 0 : index
    %c0_102 = arith.constant 0 : index
    %146 = vector.load %arg5[%c3_100, %c0_101, %c0_102] : memref<4x1x8xf32, #tpu.memory_space<vmem>>, vector<1x1x8xf32>
    %147 = vector.shape_cast %146 : vector<1x1x8xf32> to vector<1x8xf32>
    %148 = vector.broadcast %147 : vector<1x8xf32> to vector<8x8xf32>
    %149 = arith.addf %145, %148 : vector<8x8xf32>
    %c3_103 = arith.constant 3 : index
    %c0_104 = arith.constant 0 : index
    %c0_105 = arith.constant 0 : index
    %150 = vector.load %arg6[%c3_103, %c0_104, %c0_105] : memref<4x32x8xbf16, #tpu.memory_space<vmem>>, vector<1x32x8xbf16>
    %151 = vector.shape_cast %150 : vector<1x32x8xbf16> to vector<32x8xbf16>
    %cst_106 = arith.constant dense<0.000000e+00> : vector<8x8xf32>
    %152 = tpu.matmul %2, %151, %cst_106 {dimension_numbers = #tpu.dot_dimension_numbers<[1], [0], [0], [1], [0, 0, 1, 1], [], []>} : vector<8x32xbf16>, vector<32x8xbf16>, vector<8x8xf32> -> vector<8x8xf32>
    %c3_107 = arith.constant 3 : index
    %c0_108 = arith.constant 0 : index
    %c0_109 = arith.constant 0 : index
    %153 = vector.load %arg7[%c3_107, %c0_108, %c0_109] : memref<4x1x8xf32, #tpu.memory_space<vmem>>, vector<1x1x8xf32>
    %154 = vector.shape_cast %153 : vector<1x1x8xf32> to vector<1x8xf32>
    %155 = vector.broadcast %154 : vector<1x8xf32> to vector<8x8xf32>
    %156 = arith.addf %152, %155 : vector<8x8xf32>
    %157 = arith.truncf %142 : vector<8x8xf32> to vector<8x8xbf16>
    %158 = arith.truncf %149 : vector<8x8xf32> to vector<8x8xbf16>
    %cst_110 = arith.constant dense<0.000000e+00> : vector<8x8xf32>
    %159 = tpu.matmul %157, %158, %cst_110 {dimension_numbers = #tpu.dot_dimension_numbers<[1], [1], [0], [0], [0, 0, 1, 0], [], []>} : vector<8x8xbf16>, vector<8x8xbf16>, vector<8x8xf32> -> vector<8x8xf32>
    %cst_111 = arith.constant 0.353553385 : f32
    %160 = vector.broadcast %cst_111 : f32 to vector<8x8xf32>
    %161 = arith.mulf %159, %160 : vector<8x8xf32>
    %cst_112 = arith.constant dense<0xFF800000> : vector<8xf32>
    %162 = vector.multi_reduction <maximumf>, %161, %cst_112 [1] : vector<8x8xf32> to vector<8xf32>
    %163 = vector.shape_cast %162 : vector<8xf32> to vector<8x1xf32>
    %164 = vector.broadcast %163 : vector<8x1xf32> to vector<8x8xf32>
    %165 = arith.subf %161, %164 : vector<8x8xf32>
    %166 = math.exp %165 : vector<8x8xf32>
    %cst_113 = arith.constant dense<0.000000e+00> : vector<8xf32>
    %167 = vector.multi_reduction <add>, %166, %cst_113 [1] : vector<8x8xf32> to vector<8xf32>
    %168 = vector.shape_cast %167 : vector<8xf32> to vector<8x1xf32>
    %169 = tpu.reciprocal %168 {approx = true} : vector<8x1xf32> -> vector<8x1xf32>
    %170 = vector.broadcast %169 : vector<8x1xf32> to vector<8x8xf32>
    %171 = arith.mulf %166, %170 : vector<8x8xf32>
    %172 = arith.truncf %171 : vector<8x8xf32> to vector<8x8xbf16>
    %173 = arith.truncf %156 : vector<8x8xf32> to vector<8x8xbf16>
    %cst_114 = arith.constant dense<0.000000e+00> : vector<8x8xf32>
    %174 = tpu.matmul %172, %173, %cst_114 {dimension_numbers = #tpu.dot_dimension_numbers<[1], [0], [0], [1], [0, 0, 1, 1], [], []>} : vector<8x8xbf16>, vector<8x8xbf16>, vector<8x8xf32> -> vector<8x8xf32>
    %175 = arith.truncf %174 : vector<8x8xf32> to vector<8x8xbf16>
    %c3_115 = arith.constant 3 : index
    %c0_116 = arith.constant 0 : index
    %c0_117 = arith.constant 0 : index
    %176 = vector.load %arg8[%c3_115, %c0_116, %c0_117] : memref<4x8x32xbf16, #tpu.memory_space<vmem>>, vector<1x8x32xbf16>
    %177 = vector.shape_cast %176 : vector<1x8x32xbf16> to vector<8x32xbf16>
    %cst_118 = arith.constant dense<0.000000e+00> : vector<8x32xf32>
    %178 = tpu.matmul %175, %177, %cst_118 {dimension_numbers = #tpu.dot_dimension_numbers<[1], [0], [0], [1], [0, 0, 1, 1], [], []>} : vector<8x8xbf16>, vector<8x32xbf16>, vector<8x32xf32> -> vector<8x32xf32>
    %179 = arith.addf %135, %178 : vector<8x32xf32>
    %c0_119 = arith.constant 0 : index
    %c0_120 = arith.constant 0 : index
    %180 = vector.load %arg9[%c0_119, %c0_120] : memref<1x32xf32, #tpu.memory_space<vmem>>, vector<1x32xf32>
    %181 = vector.broadcast %180 : vector<1x32xf32> to vector<8x32xf32>
    %182 = arith.addf %179, %181 : vector<8x32xf32>
    %183 = arith.addf %1, %182 : vector<8x32xf32>
    %cst_121 = arith.constant dense<0.000000e+00> : vector<8xf32>
    %184 = vector.multi_reduction <add>, %183, %cst_121 [1] : vector<8x32xf32> to vector<8xf32>
    %185 = vector.shape_cast %184 : vector<8xf32> to vector<8x1xf32>
    %cst_122 = arith.constant 3.200000e+01 : f32
    %186 = vector.broadcast %cst_122 : f32 to vector<8x1xf32>
    %187 = arith.divf %185, %186 : vector<8x1xf32>
    %188 = vector.broadcast %187 : vector<8x1xf32> to vector<8x32xf32>
    %189 = arith.subf %183, %188 : vector<8x32xf32>
    %190 = arith.mulf %189, %189 : vector<8x32xf32>
    %cst_123 = arith.constant dense<0.000000e+00> : vector<8xf32>
    %191 = vector.multi_reduction <add>, %190, %cst_123 [1] : vector<8x32xf32> to vector<8xf32>
    %192 = vector.shape_cast %191 : vector<8xf32> to vector<8x1xf32>
    %cst_124 = arith.constant 3.200000e+01 : f32
    %193 = vector.broadcast %cst_124 : f32 to vector<8x1xf32>
    %194 = arith.divf %192, %193 : vector<8x1xf32>
    %195 = vector.broadcast %187 : vector<8x1xf32> to vector<8x32xf32>
    %196 = arith.subf %183, %195 : vector<8x32xf32>
    %cst_125 = arith.constant 9.99999974E-6 : f32
    %197 = vector.broadcast %cst_125 : f32 to vector<8x1xf32>
    %198 = arith.addf %194, %197 : vector<8x1xf32>
    %199 = math.rsqrt %198 : vector<8x1xf32>
    %200 = vector.broadcast %199 : vector<8x1xf32> to vector<8x32xf32>
    %201 = arith.mulf %196, %200 : vector<8x32xf32>
    %c0_126 = arith.constant 0 : index
    %c0_127 = arith.constant 0 : index
    %202 = vector.load %arg10[%c0_126, %c0_127] : memref<1x32xf32, #tpu.memory_space<vmem>>, vector<1x32xf32>
    %203 = vector.broadcast %202 : vector<1x32xf32> to vector<8x32xf32>
    %204 = arith.mulf %201, %203 : vector<8x32xf32>
    %c0_128 = arith.constant 0 : index
    %c0_129 = arith.constant 0 : index
    %205 = vector.load %arg11[%c0_128, %c0_129] : memref<1x32xf32, #tpu.memory_space<vmem>>, vector<1x32xf32>
    %206 = vector.broadcast %205 : vector<1x32xf32> to vector<8x32xf32>
    %207 = arith.addf %204, %206 : vector<8x32xf32>
    %208 = arith.truncf %207 : vector<8x32xf32> to vector<8x32xbf16>
    %c0_130 = arith.constant 0 : index
    %c0_131 = arith.constant 0 : index
    %209 = vector.load %arg14[%c0_130, %c0_131] : memref<32x64xbf16, #tpu.memory_space<vmem>>, vector<32x64xbf16>
    %cst_132 = arith.constant dense<0.000000e+00> : vector<8x64xf32>
    %210 = tpu.matmul %208, %209, %cst_132 {dimension_numbers = #tpu.dot_dimension_numbers<[1], [0], [0], [1], [0, 0, 1, 1], [], []>} : vector<8x32xbf16>, vector<32x64xbf16>, vector<8x64xf32> -> vector<8x64xf32>
    %c0_133 = arith.constant 0 : index
    %c0_134 = arith.constant 0 : index
    %211 = vector.load %arg15[%c0_133, %c0_134] : memref<1x64xf32, #tpu.memory_space<vmem>>, vector<1x64xf32>
    %212 = vector.broadcast %211 : vector<1x64xf32> to vector<8x64xf32>
    %213 = arith.addf %210, %212 : vector<8x64xf32>
    %cst_135 = arith.constant 0.000000e+00 : f32
    %214 = vector.broadcast %cst_135 : f32 to vector<8x64xf32>
    %215 = arith.maximumf %213, %214 : vector<8x64xf32>
    %216 = arith.truncf %215 : vector<8x64xf32> to vector<8x64xbf16>
    %c0_136 = arith.constant 0 : index
    %c0_137 = arith.constant 0 : index
    %217 = vector.load %arg16[%c0_136, %c0_137] : memref<64x32xbf16, #tpu.memory_space<vmem>>, vector<64x32xbf16>
    %cst_138 = arith.constant dense<0.000000e+00> : vector<8x32xf32>
    %218 = tpu.matmul %216, %217, %cst_138 {dimension_numbers = #tpu.dot_dimension_numbers<[1], [0], [0], [1], [0, 0, 1, 1], [], []>} : vector<8x64xbf16>, vector<64x32xbf16>, vector<8x32xf32> -> vector<8x32xf32>
    %c0_139 = arith.constant 0 : index
    %c0_140 = arith.constant 0 : index
    %219 = vector.load %arg17[%c0_139, %c0_140] : memref<1x32xf32, #tpu.memory_space<vmem>>, vector<1x32xf32>
    %220 = vector.broadcast %219 : vector<1x32xf32> to vector<8x32xf32>
    %221 = arith.addf %218, %220 : vector<8x32xf32>
    %222 = arith.addf %207, %221 : vector<8x32xf32>
    %cst_141 = arith.constant dense<0.000000e+00> : vector<8xf32>
    %223 = vector.multi_reduction <add>, %222, %cst_141 [1] : vector<8x32xf32> to vector<8xf32>
    %224 = vector.shape_cast %223 : vector<8xf32> to vector<8x1xf32>
    %cst_142 = arith.constant 3.200000e+01 : f32
    %225 = vector.broadcast %cst_142 : f32 to vector<8x1xf32>
    %226 = arith.divf %224, %225 : vector<8x1xf32>
    %227 = vector.broadcast %226 : vector<8x1xf32> to vector<8x32xf32>
    %228 = arith.subf %222, %227 : vector<8x32xf32>
    %229 = arith.mulf %228, %228 : vector<8x32xf32>
    %cst_143 = arith.constant dense<0.000000e+00> : vector<8xf32>
    %230 = vector.multi_reduction <add>, %229, %cst_143 [1] : vector<8x32xf32> to vector<8xf32>
    %231 = vector.shape_cast %230 : vector<8xf32> to vector<8x1xf32>
    %cst_144 = arith.constant 3.200000e+01 : f32
    %232 = vector.broadcast %cst_144 : f32 to vector<8x1xf32>
    %233 = arith.divf %231, %232 : vector<8x1xf32>
    %234 = vector.broadcast %226 : vector<8x1xf32> to vector<8x32xf32>
    %235 = arith.subf %222, %234 : vector<8x32xf32>
    %cst_145 = arith.constant 9.99999974E-6 : f32
    %236 = vector.broadcast %cst_145 : f32 to vector<8x1xf32>
    %237 = arith.addf %233, %236 : vector<8x1xf32>
    %238 = math.rsqrt %237 : vector<8x1xf32>
    %239 = vector.broadcast %238 : vector<8x1xf32> to vector<8x32xf32>
    %240 = arith.mulf %235, %239 : vector<8x32xf32>
    %c0_146 = arith.constant 0 : index
    %c0_147 = arith.constant 0 : index
    %241 = vector.load %arg12[%c0_146, %c0_147] : memref<1x32xf32, #tpu.memory_space<vmem>>, vector<1x32xf32>
    %242 = vector.broadcast %241 : vector<1x32xf32> to vector<8x32xf32>
    %243 = arith.mulf %240, %242 : vector<8x32xf32>
    %c0_148 = arith.constant 0 : index
    %c0_149 = arith.constant 0 : index
    %244 = vector.load %arg13[%c0_148, %c0_149] : memref<1x32xf32, #tpu.memory_space<vmem>>, vector<1x32xf32>
    %245 = vector.broadcast %244 : vector<1x32xf32> to vector<8x32xf32>
    %246 = arith.addf %243, %245 : vector<8x32xf32>
    %c0_150 = arith.constant 0 : index
    %c0_151 = arith.constant 0 : index
    %c0_152 = arith.constant 0 : index
    %247 = vector.load %arg18[%c0_150, %c0_151, %c0_152] : memref<1x8x32xf32, #tpu.memory_space<vmem>>, vector<1x8x32xf32>
    %248 = vector.shape_cast %247 : vector<1x8x32xf32> to vector<8x32xf32>
    %249 = vector.shape_cast %246 : vector<8x32xf32> to vector<1x8x32xf32>
    tpu.vector_store %arg18[%c0_150, %c0_151, %c0_152], %249 {strides = array<i32>} : memref<1x8x32xf32, #tpu.memory_space<vmem>>, vector<1x8x32xf32>,
    return
  }
  func.func @transform_0(%arg0: i32) -> (i32, i32, i32) {
    %c0_i32 = arith.constant 0 : i32
    %c0_i32_0 = arith.constant 0 : i32
    %c0_i32_1 = arith.constant 0 : i32
    return %arg0, %c0_i32, %c0_i32_0 : i32, i32, i32
  }
  func.func @transform_1(%arg0: i32) -> (i32, i32, i32) {
    %c0_i32 = arith.constant 0 : i32
    %c0_i32_0 = arith.constant 0 : i32
    %c0_i32_1 = arith.constant 0 : i32
    %c0_i32_2 = arith.constant 0 : i32
    return %c0_i32, %c0_i32_0, %c0_i32_1 : i32, i32, i32
  }
  func.func @transform_2(%arg0: i32) -> (i32, i32, i32) {
    %c0_i32 = arith.constant 0 : i32
    %c0_i32_0 = arith.constant 0 : i32
    %c0_i32_1 = arith.constant 0 : i32
    %c0_i32_2 = arith.constant 0 : i32
    return %c0_i32, %c0_i32_0, %c0_i32_1 : i32, i32, i32
  }
  func.func @transform_3(%arg0: i32) -> (i32, i32, i32) {
    %c0_i32 = arith.constant 0 : i32
    %c0_i32_0 = arith.constant 0 : i32
    %c0_i32_1 = arith.constant 0 : i32
    %c0_i32_2 = arith.constant 0 : i32
    return %c0_i32, %c0_i32_0, %c0_i32_1 : i32, i32, i32
  }
  func.func @transform_4(%arg0: i32) -> (i32, i32, i32) {
    %c0_i32 = arith.constant 0 : i32
    %c0_i32_0 = arith.constant 0 : i32
    %c0_i32_1 = arith.constant 0 : i32
    %c0_i32_2 = arith.constant 0 : i32
    return %c0_i32, %c0_i32_0, %c0_i32_1 : i32, i32, i32
  }
  func.func @transform_5(%arg0: i32) -> (i32, i32, i32) {
    %c0_i32 = arith.constant 0 : i32
    %c0_i32_0 = arith.constant 0 : i32
    %c0_i32_1 = arith.constant 0 : i32
    %c0_i32_2 = arith.constant 0 : i32
    return %c0_i32, %c0_i32_0, %c0_i32_1 : i32, i32, i32
  }
  func.func @transform_6(%arg0: i32) -> (i32, i32, i32) {
    %c0_i32 = arith.constant 0 : i32
    %c0_i32_0 = arith.constant 0 : i32
    %c0_i32_1 = arith.constant 0 : i32
    %c0_i32_2 = arith.constant 0 : i32
    return %c0_i32, %c0_i32_0, %c0_i32_1 : i32, i32, i32
  }
  func.func @transform_7(%arg0: i32) -> (i32, i32, i32) {
    %c0_i32 = arith.constant 0 : i32
    %c0_i32_0 = arith.constant 0 : i32
    %c0_i32_1 = arith.constant 0 : i32
    %c0_i32_2 = arith.constant 0 : i32
    return %c0_i32, %c0_i32_0, %c0_i32_1 : i32, i32, i32
  }
  func.func @transform_8(%arg0: i32) -> (i32, i32) {
    %c0_i32 = arith.constant 0 : i32
    %c0_i32_0 = arith.constant 0 : i32
    %c0_i32_1 = arith.constant 0 : i32
    return %c0_i32, %c0_i32_0 : i32, i32
  }
  func.func @transform_9(%arg0: i32) -> (i32, i32) {
    %c0_i32 = arith.constant 0 : i32
    %c0_i32_0 = arith.constant 0 : i32
    %c0_i32_1 = arith.constant 0 : i32
    return %c0_i32, %c0_i32_0 : i32, i32
  }
  func.func @transform_10(%arg0: i32) -> (i32, i32) {
    %c0_i32 = arith.constant 0 : i32
    %c0_i32_0 = arith.constant 0 : i32
    %c0_i32_1 = arith.constant 0 : i32
    return %c0_i32, %c0_i32_0 : i32, i32
  }
  func.func @transform_11(%arg0: i32) -> (i32, i32) {
    %c0_i32 = arith.constant 0 : i32
    %c0_i32_0 = arith.constant 0 : i32
    %c0_i32_1 = arith.constant 0 : i32
    return %c0_i32, %c0_i32_0 : i32, i32
  }
  func.func @transform_12(%arg0: i32) -> (i32, i32) {
    %c0_i32 = arith.constant 0 : i32
    %c0_i32_0 = arith.constant 0 : i32
    %c0_i32_1 = arith.constant 0 : i32
    return %c0_i32, %c0_i32_0 : i32, i32
  }
  func.func @transform_13(%arg0: i32) -> (i32, i32) {
    %c0_i32 = arith.constant 0 : i32
    %c0_i32_0 = arith.constant 0 : i32
    %c0_i32_1 = arith.constant 0 : i32
    return %c0_i32, %c0_i32_0 : i32, i32
  }
  func.func @transform_14(%arg0: i32) -> (i32, i32) {
    %c0_i32 = arith.constant 0 : i32
    %c0_i32_0 = arith.constant 0 : i32
    %c0_i32_1 = arith.constant 0 : i32
    return %c0_i32, %c0_i32_0 : i32, i32
  }
  func.func @transform_15(%arg0: i32) -> (i32, i32) {
    %c0_i32 = arith.constant 0 : i32
    %c0_i32_0 = arith.constant 0 : i32
    %c0_i32_1 = arith.constant 0 : i32
    return %c0_i32, %c0_i32_0 : i32, i32
  }
  func.func @transform_16(%arg0: i32) -> (i32, i32) {
    %c0_i32 = arith.constant 0 : i32
    %c0_i32_0 = arith.constant 0 : i32
    %c0_i32_1 = arith.constant 0 : i32
    return %c0_i32, %c0_i32_0 : i32, i32
  }
  func.func @transform_17(%arg0: i32) -> (i32, i32, i32) {
    %c0_i32 = arith.constant 0 : i32
    %c0_i32_0 = arith.constant 0 : i32
    %c0_i32_1 = arith.constant 0 : i32
    return %arg0, %c0_i32, %c0_i32_0 : i32, i32, i32
  }
}

module attributes {stable_mosaic.version = 11 : i64} {
  func.func @_final_head_kernel(%arg0: i32, %arg1: memref<1x8x32xf32, #tpu.memory_space<vmem>>, %arg2: memref<1x32xf32, #tpu.memory_space<vmem>>, %arg3: memref<1x32xf32, #tpu.memory_space<vmem>>, %arg4: memref<32x16xbf16, #tpu.memory_space<vmem>>, %arg5: memref<1x16xf32, #tpu.memory_space<vmem>>, %arg6: memref<1x8x16xf32, #tpu.memory_space<vmem>>) attributes {dimension_semantics = [#tpu.dimension_semantics<parallel>], iteration_bounds = array<i64: 2>, scalar_prefetch = 0 : i64, scratch_operands = 0 : i64, tpu.core_type = #tpu.core_type<tc>, window_params = [{transform_indices = @transform_0, window_bounds = array<i64: 1, 8, 32>}, {pipeline_mode = #tpu.pipeline_mode<synchronous>, transform_indices = @transform_1, window_bounds = array<i64: 1, 32>}, {pipeline_mode = #tpu.pipeline_mode<synchronous>, transform_indices = @transform_2, window_bounds = array<i64: 1, 32>}, {pipeline_mode = #tpu.pipeline_mode<synchronous>, transform_indices = @transform_3, window_bounds = array<i64: 32, 16>}, {pipeline_mode = #tpu.pipeline_mode<synchronous>, transform_indices = @transform_4, window_bounds = array<i64: 1, 16>}, {transform_indices = @transform_5, window_bounds = array<i64: 1, 8, 16>}]} {
    %c0 = arith.constant 0 : index
    %c0_0 = arith.constant 0 : index
    %c0_1 = arith.constant 0 : index
    %0 = vector.load %arg1[%c0, %c0_0, %c0_1] : memref<1x8x32xf32, #tpu.memory_space<vmem>>, vector<1x8x32xf32>
    %1 = vector.shape_cast %0 : vector<1x8x32xf32> to vector<8x32xf32>
    %cst = arith.constant dense<0.000000e+00> : vector<8xf32>
    %2 = vector.multi_reduction <add>, %1, %cst [1] : vector<8x32xf32> to vector<8xf32>
    %3 = vector.shape_cast %2 : vector<8xf32> to vector<8x1xf32>
    %cst_2 = arith.constant 3.200000e+01 : f32
    %4 = vector.broadcast %cst_2 : f32 to vector<8x1xf32>
    %5 = arith.divf %3, %4 : vector<8x1xf32>
    %6 = vector.broadcast %5 : vector<8x1xf32> to vector<8x32xf32>
    %7 = arith.subf %1, %6 : vector<8x32xf32>
    %8 = arith.mulf %7, %7 : vector<8x32xf32>
    %cst_3 = arith.constant dense<0.000000e+00> : vector<8xf32>
    %9 = vector.multi_reduction <add>, %8, %cst_3 [1] : vector<8x32xf32> to vector<8xf32>
    %10 = vector.shape_cast %9 : vector<8xf32> to vector<8x1xf32>
    %cst_4 = arith.constant 3.200000e+01 : f32
    %11 = vector.broadcast %cst_4 : f32 to vector<8x1xf32>
    %12 = arith.divf %10, %11 : vector<8x1xf32>
    %13 = vector.broadcast %5 : vector<8x1xf32> to vector<8x32xf32>
    %14 = arith.subf %1, %13 : vector<8x32xf32>
    %cst_5 = arith.constant 9.99999974E-6 : f32
    %15 = vector.broadcast %cst_5 : f32 to vector<8x1xf32>
    %16 = arith.addf %12, %15 : vector<8x1xf32>
    %17 = math.rsqrt %16 : vector<8x1xf32>
    %18 = vector.broadcast %17 : vector<8x1xf32> to vector<8x32xf32>
    %19 = arith.mulf %14, %18 : vector<8x32xf32>
    %c0_6 = arith.constant 0 : index
    %c0_7 = arith.constant 0 : index
    %20 = vector.load %arg2[%c0_6, %c0_7] : memref<1x32xf32, #tpu.memory_space<vmem>>, vector<1x32xf32>
    %21 = vector.broadcast %20 : vector<1x32xf32> to vector<8x32xf32>
    %22 = arith.mulf %19, %21 : vector<8x32xf32>
    %c0_8 = arith.constant 0 : index
    %c0_9 = arith.constant 0 : index
    %23 = vector.load %arg3[%c0_8, %c0_9] : memref<1x32xf32, #tpu.memory_space<vmem>>, vector<1x32xf32>
    %24 = vector.broadcast %23 : vector<1x32xf32> to vector<8x32xf32>
    %25 = arith.addf %22, %24 : vector<8x32xf32>
    %26 = arith.truncf %25 : vector<8x32xf32> to vector<8x32xbf16>
    %c0_10 = arith.constant 0 : index
    %c0_11 = arith.constant 0 : index
    %27 = vector.load %arg4[%c0_10, %c0_11] : memref<32x16xbf16, #tpu.memory_space<vmem>>, vector<32x16xbf16>
    %cst_12 = arith.constant dense<0.000000e+00> : vector<8x16xf32>
    %28 = tpu.matmul %26, %27, %cst_12 {dimension_numbers = #tpu.dot_dimension_numbers<[1], [0], [0], [1], [0, 0, 1, 1], [], []>} : vector<8x32xbf16>, vector<32x16xbf16>, vector<8x16xf32> -> vector<8x16xf32>
    %c0_13 = arith.constant 0 : index
    %c0_14 = arith.constant 0 : index
    %29 = vector.load %arg5[%c0_13, %c0_14] : memref<1x16xf32, #tpu.memory_space<vmem>>, vector<1x16xf32>
    %30 = vector.broadcast %29 : vector<1x16xf32> to vector<8x16xf32>
    %31 = arith.addf %28, %30 : vector<8x16xf32>
    %c0_15 = arith.constant 0 : index
    %c0_16 = arith.constant 0 : index
    %c0_17 = arith.constant 0 : index
    %32 = vector.load %arg6[%c0_15, %c0_16, %c0_17] : memref<1x8x16xf32, #tpu.memory_space<vmem>>, vector<1x8x16xf32>
    %33 = vector.shape_cast %32 : vector<1x8x16xf32> to vector<8x16xf32>
    %34 = vector.shape_cast %31 : vector<8x16xf32> to vector<1x8x16xf32>
    tpu.vector_store %arg6[%c0_15, %c0_16, %c0_17], %34 {strides = array<i32>} : memref<1x8x16xf32, #tpu.memory_space<vmem>>, vector<1x8x16xf32>,
    return
  }
  func.func @transform_0(%arg0: i32) -> (i32, i32, i32) {
    %c0_i32 = arith.constant 0 : i32
    %c0_i32_0 = arith.constant 0 : i32
    %c0_i32_1 = arith.constant 0 : i32
    return %arg0, %c0_i32, %c0_i32_0 : i32, i32, i32
  }
  func.func @transform_1(%arg0: i32) -> (i32, i32) {
    %c0_i32 = arith.constant 0 : i32
    %c0_i32_0 = arith.constant 0 : i32
    %c0_i32_1 = arith.constant 0 : i32
    return %c0_i32, %c0_i32_0 : i32, i32
  }
  func.func @transform_2(%arg0: i32) -> (i32, i32) {
    %c0_i32 = arith.constant 0 : i32
    %c0_i32_0 = arith.constant 0 : i32
    %c0_i32_1 = arith.constant 0 : i32
    return %c0_i32, %c0_i32_0 : i32, i32
  }
  func.func @transform_3(%arg0: i32) -> (i32, i32) {
    %c0_i32 = arith.constant 0 : i32
    %c0_i32_0 = arith.constant 0 : i32
    %c0_i32_1 = arith.constant 0 : i32
    return %c0_i32, %c0_i32_0 : i32, i32
  }
  func.func @transform_4(%arg0: i32) -> (i32, i32) {
    %c0_i32 = arith.constant 0 : i32
    %c0_i32_0 = arith.constant 0 : i32
    %c0_i32_1 = arith.constant 0 : i32
    return %c0_i32, %c0_i32_0 : i32, i32
  }
  func.func @transform_5(%arg0: i32) -> (i32, i32, i32) {
    %c0_i32 = arith.constant 0 : i32
    %c0_i32_0 = arith.constant 0 : i32
    %c0_i32_1 = arith.constant 0 : i32
    return %arg0, %c0_i32, %c0_i32_0 : i32, i32, i32
  }
}

module attributes {stable_mosaic.version = 11 : i64} {
  func.func @_decoder_layer_kernel(%arg0: i32, %arg1: memref<1x8x32xf32, #tpu.memory_space<vmem>>, %arg2: memref<1x8x32xf32, #tpu.memory_space<vmem>>, %arg3: memref<4x32x8xbf16, #tpu.memory_space<vmem>>, %arg4: memref<4x1x8xf32, #tpu.memory_space<vmem>>, %arg5: memref<4x32x8xbf16, #tpu.memory_space<vmem>>, %arg6: memref<4x1x8xf32, #tpu.memory_space<vmem>>, %arg7: memref<4x32x8xbf16, #tpu.memory_space<vmem>>, %arg8: memref<4x1x8xf32, #tpu.memory_space<vmem>>, %arg9: memref<4x8x32xbf16, #tpu.memory_space<vmem>>, %arg10: memref<1x32xf32, #tpu.memory_space<vmem>>, %arg11: memref<4x32x8xbf16, #tpu.memory_space<vmem>>, %arg12: memref<4x1x8xf32, #tpu.memory_space<vmem>>, %arg13: memref<4x32x8xbf16, #tpu.memory_space<vmem>>, %arg14: memref<4x1x8xf32, #tpu.memory_space<vmem>>, %arg15: memref<4x32x8xbf16, #tpu.memory_space<vmem>>, %arg16: memref<4x1x8xf32, #tpu.memory_space<vmem>>, %arg17: memref<4x8x32xbf16, #tpu.memory_space<vmem>>, %arg18: memref<1x32xf32, #tpu.memory_space<vmem>>, %arg19: memref<1x32xf32, #tpu.memory_space<vmem>>, %arg20: memref<1x32xf32, #tpu.memory_space<vmem>>, %arg21: memref<1x32xf32, #tpu.memory_space<vmem>>, %arg22: memref<1x32xf32, #tpu.memory_space<vmem>>, %arg23: memref<1x32xf32, #tpu.memory_space<vmem>>, %arg24: memref<1x32xf32, #tpu.memory_space<vmem>>, %arg25: memref<32x64xbf16, #tpu.memory_space<vmem>>, %arg26: memref<1x64xf32, #tpu.memory_space<vmem>>, %arg27: memref<64x32xbf16, #tpu.memory_space<vmem>>, %arg28: memref<1x32xf32, #tpu.memory_space<vmem>>, %arg29: memref<1x8x32xf32, #tpu.memory_space<vmem>>) attributes {dimension_semantics = [#tpu.dimension_semantics<parallel>], iteration_bounds = array<i64: 2>, scalar_prefetch = 0 : i64, scratch_operands = 0 : i64, tpu.core_type = #tpu.core_type<tc>, window_params = [{transform_indices = @transform_0, window_bounds = array<i64: 1, 8, 32>}, {transform_indices = @transform_1, window_bounds = array<i64: 1, 8, 32>}, {pipeline_mode = #tpu.pipeline_mode<synchronous>, transform_indices = @transform_2, window_bounds = array<i64: 4, 32, 8>}, {pipeline_mode = #tpu.pipeline_mode<synchronous>, transform_indices = @transform_3, window_bounds = array<i64: 4, 1, 8>}, {pipeline_mode = #tpu.pipeline_mode<synchronous>, transform_indices = @transform_4, window_bounds = array<i64: 4, 32, 8>}, {pipeline_mode = #tpu.pipeline_mode<synchronous>, transform_indices = @transform_5, window_bounds = array<i64: 4, 1, 8>}, {pipeline_mode = #tpu.pipeline_mode<synchronous>, transform_indices = @transform_6, window_bounds = array<i64: 4, 32, 8>}, {pipeline_mode = #tpu.pipeline_mode<synchronous>, transform_indices = @transform_7, window_bounds = array<i64: 4, 1, 8>}, {pipeline_mode = #tpu.pipeline_mode<synchronous>, transform_indices = @transform_8, window_bounds = array<i64: 4, 8, 32>}, {pipeline_mode = #tpu.pipeline_mode<synchronous>, transform_indices = @transform_9, window_bounds = array<i64: 1, 32>}, {pipeline_mode = #tpu.pipeline_mode<synchronous>, transform_indices = @transform_10, window_bounds = array<i64: 4, 32, 8>}, {pipeline_mode = #tpu.pipeline_mode<synchronous>, transform_indices = @transform_11, window_bounds = array<i64: 4, 1, 8>}, {pipeline_mode = #tpu.pipeline_mode<synchronous>, transform_indices = @transform_12, window_bounds = array<i64: 4, 32, 8>}, {pipeline_mode = #tpu.pipeline_mode<synchronous>, transform_indices = @transform_13, window_bounds = array<i64: 4, 1, 8>}, {pipeline_mode = #tpu.pipeline_mode<synchronous>, transform_indices = @transform_14, window_bounds = array<i64: 4, 32, 8>}, {pipeline_mode = #tpu.pipeline_mode<synchronous>, transform_indices = @transform_15, window_bounds = array<i64: 4, 1, 8>}, {pipeline_mode = #tpu.pipeline_mode<synchronous>, transform_indices = @transform_16, window_bounds = array<i64: 4, 8, 32>}, {pipeline_mode = #tpu.pipeline_mode<synchronous>, transform_indices = @transform_17, window_bounds = array<i64: 1, 32>}, {pipeline_mode = #tpu.pipeline_mode<synchronous>, transform_indices = @transform_18, window_bounds = array<i64: 1, 32>}, {pipeline_mode = #tpu.pipeline_mode<synchronous>, transform_indices = @transform_19, window_bounds = array<i64: 1, 32>}, {pipeline_mode = #tpu.pipeline_mode<synchronous>, transform_indices = @transform_20, window_bounds = array<i64: 1, 32>}, {pipeline_mode = #tpu.pipeline_mode<synchronous>, transform_indices = @transform_21, window_bounds = array<i64: 1, 32>}, {pipeline_mode = #tpu.pipeline_mode<synchronous>, transform_indices = @transform_22, window_bounds = array<i64: 1, 32>}, {pipeline_mode = #tpu.pipeline_mode<synchronous>, transform_indices = @transform_23, window_bounds = array<i64: 1, 32>}, {pipeline_mode = #tpu.pipeline_mode<synchronous>, transform_indices = @transform_24, window_bounds = array<i64: 32, 64>}, {pipeline_mode = #tpu.pipeline_mode<synchronous>, transform_indices = @transform_25, window_bounds = array<i64: 1, 64>}, {pipeline_mode = #tpu.pipeline_mode<synchronous>, transform_indices = @transform_26, window_bounds = array<i64: 64, 32>}, {pipeline_mode = #tpu.pipeline_mode<synchronous>, transform_indices = @transform_27, window_bounds = array<i64: 1, 32>}, {transform_indices = @transform_28, window_bounds = array<i64: 1, 8, 32>}]} {
    %c0 = arith.constant 0 : index
    %c0_0 = arith.constant 0 : index
    %c0_1 = arith.constant 0 : index
    %0 = vector.load %arg1[%c0, %c0_0, %c0_1] : memref<1x8x32xf32, #tpu.memory_space<vmem>>, vector<1x8x32xf32>
    %1 = vector.shape_cast %0 : vector<1x8x32xf32> to vector<8x32xf32>
    %c0_2 = arith.constant 0 : index
    %c0_3 = arith.constant 0 : index
    %c0_4 = arith.constant 0 : index
    %2 = vector.load %arg2[%c0_2, %c0_3, %c0_4] : memref<1x8x32xf32, #tpu.memory_space<vmem>>, vector<1x8x32xf32>
    %3 = vector.shape_cast %2 : vector<1x8x32xf32> to vector<8x32xf32>
    %4 = arith.truncf %1 : vector<8x32xf32> to vector<8x32xbf16>
    %5 = arith.truncf %3 : vector<8x32xf32> to vector<8x32xbf16>
    %cst = arith.constant 0.000000e+00 : f32
    %6 = vector.broadcast %cst : f32 to vector<8x32xf32>
    %c0_5 = arith.constant 0 : index
    %c0_6 = arith.constant 0 : index
    %c0_7 = arith.constant 0 : index
    %7 = vector.load %arg3[%c0_5, %c0_6, %c0_7] : memref<4x32x8xbf16, #tpu.memory_space<vmem>>, vector<1x32x8xbf16>
    %8 = vector.shape_cast %7 : vector<1x32x8xbf16> to vector<32x8xbf16>
    %cst_8 = arith.constant dense<0.000000e+00> : vector<8x8xf32>
    %9 = tpu.matmul %4, %8, %cst_8 {dimension_numbers = #tpu.dot_dimension_numbers<[1], [0], [0], [1], [0, 0, 1, 1], [], []>} : vector<8x32xbf16>, vector<32x8xbf16>, vector<8x8xf32> -> vector<8x8xf32>
    %c0_9 = arith.constant 0 : index
    %c0_10 = arith.constant 0 : index
    %c0_11 = arith.constant 0 : index
    %10 = vector.load %arg4[%c0_9, %c0_10, %c0_11] : memref<4x1x8xf32, #tpu.memory_space<vmem>>, vector<1x1x8xf32>
    %11 = vector.shape_cast %10 : vector<1x1x8xf32> to vector<1x8xf32>
    %12 = vector.broadcast %11 : vector<1x8xf32> to vector<8x8xf32>
    %13 = arith.addf %9, %12 : vector<8x8xf32>
    %c0_12 = arith.constant 0 : index
    %c0_13 = arith.constant 0 : index
    %c0_14 = arith.constant 0 : index
    %14 = vector.load %arg5[%c0_12, %c0_13, %c0_14] : memref<4x32x8xbf16, #tpu.memory_space<vmem>>, vector<1x32x8xbf16>
    %15 = vector.shape_cast %14 : vector<1x32x8xbf16> to vector<32x8xbf16>
    %cst_15 = arith.constant dense<0.000000e+00> : vector<8x8xf32>
    %16 = tpu.matmul %4, %15, %cst_15 {dimension_numbers = #tpu.dot_dimension_numbers<[1], [0], [0], [1], [0, 0, 1, 1], [], []>} : vector<8x32xbf16>, vector<32x8xbf16>, vector<8x8xf32> -> vector<8x8xf32>
    %c0_16 = arith.constant 0 : index
    %c0_17 = arith.constant 0 : index
    %c0_18 = arith.constant 0 : index
    %17 = vector.load %arg6[%c0_16, %c0_17, %c0_18] : memref<4x1x8xf32, #tpu.memory_space<vmem>>, vector<1x1x8xf32>
    %18 = vector.shape_cast %17 : vector<1x1x8xf32> to vector<1x8xf32>
    %19 = vector.broadcast %18 : vector<1x8xf32> to vector<8x8xf32>
    %20 = arith.addf %16, %19 : vector<8x8xf32>
    %c0_19 = arith.constant 0 : index
    %c0_20 = arith.constant 0 : index
    %c0_21 = arith.constant 0 : index
    %21 = vector.load %arg7[%c0_19, %c0_20, %c0_21] : memref<4x32x8xbf16, #tpu.memory_space<vmem>>, vector<1x32x8xbf16>
    %22 = vector.shape_cast %21 : vector<1x32x8xbf16> to vector<32x8xbf16>
    %cst_22 = arith.constant dense<0.000000e+00> : vector<8x8xf32>
    %23 = tpu.matmul %4, %22, %cst_22 {dimension_numbers = #tpu.dot_dimension_numbers<[1], [0], [0], [1], [0, 0, 1, 1], [], []>} : vector<8x32xbf16>, vector<32x8xbf16>, vector<8x8xf32> -> vector<8x8xf32>
    %c0_23 = arith.constant 0 : index
    %c0_24 = arith.constant 0 : index
    %c0_25 = arith.constant 0 : index
    %24 = vector.load %arg8[%c0_23, %c0_24, %c0_25] : memref<4x1x8xf32, #tpu.memory_space<vmem>>, vector<1x1x8xf32>
    %25 = vector.shape_cast %24 : vector<1x1x8xf32> to vector<1x8xf32>
    %26 = vector.broadcast %25 : vector<1x8xf32> to vector<8x8xf32>
    %27 = arith.addf %23, %26 : vector<8x8xf32>
    %28 = arith.truncf %13 : vector<8x8xf32> to vector<8x8xbf16>
    %29 = arith.truncf %20 : vector<8x8xf32> to vector<8x8xbf16>
    %cst_26 = arith.constant dense<0.000000e+00> : vector<8x8xf32>
    %30 = tpu.matmul %28, %29, %cst_26 {dimension_numbers = #tpu.dot_dimension_numbers<[1], [1], [0], [0], [0, 0, 1, 0], [], []>} : vector<8x8xbf16>, vector<8x8xbf16>, vector<8x8xf32> -> vector<8x8xf32>
    %cst_27 = arith.constant 0.353553385 : f32
    %31 = vector.broadcast %cst_27 : f32 to vector<8x8xf32>
    %32 = arith.mulf %30, %31 : vector<8x8xf32>
    %cst_28 = arith.constant dense<0xFF800000> : vector<8xf32>
    %33 = vector.multi_reduction <maximumf>, %32, %cst_28 [1] : vector<8x8xf32> to vector<8xf32>
    %34 = vector.shape_cast %33 : vector<8xf32> to vector<8x1xf32>
    %35 = vector.broadcast %34 : vector<8x1xf32> to vector<8x8xf32>
    %36 = arith.subf %32, %35 : vector<8x8xf32>
    %37 = math.exp %36 : vector<8x8xf32>
    %cst_29 = arith.constant dense<0.000000e+00> : vector<8xf32>
    %38 = vector.multi_reduction <add>, %37, %cst_29 [1] : vector<8x8xf32> to vector<8xf32>
    %39 = vector.shape_cast %38 : vector<8xf32> to vector<8x1xf32>
    %40 = tpu.reciprocal %39 {approx = true} : vector<8x1xf32> -> vector<8x1xf32>
    %41 = vector.broadcast %40 : vector<8x1xf32> to vector<8x8xf32>
    %42 = arith.mulf %37, %41 : vector<8x8xf32>
    %43 = arith.truncf %42 : vector<8x8xf32> to vector<8x8xbf16>
    %44 = arith.truncf %27 : vector<8x8xf32> to vector<8x8xbf16>
    %cst_30 = arith.constant dense<0.000000e+00> : vector<8x8xf32>
    %45 = tpu.matmul %43, %44, %cst_30 {dimension_numbers = #tpu.dot_dimension_numbers<[1], [0], [0], [1], [0, 0, 1, 1], [], []>} : vector<8x8xbf16>, vector<8x8xbf16>, vector<8x8xf32> -> vector<8x8xf32>
    %46 = arith.truncf %45 : vector<8x8xf32> to vector<8x8xbf16>
    %c0_31 = arith.constant 0 : index
    %c0_32 = arith.constant 0 : index
    %c0_33 = arith.constant 0 : index
    %47 = vector.load %arg9[%c0_31, %c0_32, %c0_33] : memref<4x8x32xbf16, #tpu.memory_space<vmem>>, vector<1x8x32xbf16>
    %48 = vector.shape_cast %47 : vector<1x8x32xbf16> to vector<8x32xbf16>
    %cst_34 = arith.constant dense<0.000000e+00> : vector<8x32xf32>
    %49 = tpu.matmul %46, %48, %cst_34 {dimension_numbers = #tpu.dot_dimension_numbers<[1], [0], [0], [1], [0, 0, 1, 1], [], []>} : vector<8x8xbf16>, vector<8x32xbf16>, vector<8x32xf32> -> vector<8x32xf32>
    %50 = arith.addf %6, %49 : vector<8x32xf32>
    %c1 = arith.constant 1 : index
    %c0_35 = arith.constant 0 : index
    %c0_36 = arith.constant 0 : index
    %51 = vector.load %arg3[%c1, %c0_35, %c0_36] : memref<4x32x8xbf16, #tpu.memory_space<vmem>>, vector<1x32x8xbf16>
    %52 = vector.shape_cast %51 : vector<1x32x8xbf16> to vector<32x8xbf16>
    %cst_37 = arith.constant dense<0.000000e+00> : vector<8x8xf32>
    %53 = tpu.matmul %4, %52, %cst_37 {dimension_numbers = #tpu.dot_dimension_numbers<[1], [0], [0], [1], [0, 0, 1, 1], [], []>} : vector<8x32xbf16>, vector<32x8xbf16>, vector<8x8xf32> -> vector<8x8xf32>
    %c1_38 = arith.constant 1 : index
    %c0_39 = arith.constant 0 : index
    %c0_40 = arith.constant 0 : index
    %54 = vector.load %arg4[%c1_38, %c0_39, %c0_40] : memref<4x1x8xf32, #tpu.memory_space<vmem>>, vector<1x1x8xf32>
    %55 = vector.shape_cast %54 : vector<1x1x8xf32> to vector<1x8xf32>
    %56 = vector.broadcast %55 : vector<1x8xf32> to vector<8x8xf32>
    %57 = arith.addf %53, %56 : vector<8x8xf32>
    %c1_41 = arith.constant 1 : index
    %c0_42 = arith.constant 0 : index
    %c0_43 = arith.constant 0 : index
    %58 = vector.load %arg5[%c1_41, %c0_42, %c0_43] : memref<4x32x8xbf16, #tpu.memory_space<vmem>>, vector<1x32x8xbf16>
    %59 = vector.shape_cast %58 : vector<1x32x8xbf16> to vector<32x8xbf16>
    %cst_44 = arith.constant dense<0.000000e+00> : vector<8x8xf32>
    %60 = tpu.matmul %4, %59, %cst_44 {dimension_numbers = #tpu.dot_dimension_numbers<[1], [0], [0], [1], [0, 0, 1, 1], [], []>} : vector<8x32xbf16>, vector<32x8xbf16>, vector<8x8xf32> -> vector<8x8xf32>
    %c1_45 = arith.constant 1 : index
    %c0_46 = arith.constant 0 : index
    %c0_47 = arith.constant 0 : index
    %61 = vector.load %arg6[%c1_45, %c0_46, %c0_47] : memref<4x1x8xf32, #tpu.memory_space<vmem>>, vector<1x1x8xf32>
    %62 = vector.shape_cast %61 : vector<1x1x8xf32> to vector<1x8xf32>
    %63 = vector.broadcast %62 : vector<1x8xf32> to vector<8x8xf32>
    %64 = arith.addf %60, %63 : vector<8x8xf32>
    %c1_48 = arith.constant 1 : index
    %c0_49 = arith.constant 0 : index
    %c0_50 = arith.constant 0 : index
    %65 = vector.load %arg7[%c1_48, %c0_49, %c0_50] : memref<4x32x8xbf16, #tpu.memory_space<vmem>>, vector<1x32x8xbf16>
    %66 = vector.shape_cast %65 : vector<1x32x8xbf16> to vector<32x8xbf16>
    %cst_51 = arith.constant dense<0.000000e+00> : vector<8x8xf32>
    %67 = tpu.matmul %4, %66, %cst_51 {dimension_numbers = #tpu.dot_dimension_numbers<[1], [0], [0], [1], [0, 0, 1, 1], [], []>} : vector<8x32xbf16>, vector<32x8xbf16>, vector<8x8xf32> -> vector<8x8xf32>
    %c1_52 = arith.constant 1 : index
    %c0_53 = arith.constant 0 : index
    %c0_54 = arith.constant 0 : index
    %68 = vector.load %arg8[%c1_52, %c0_53, %c0_54] : memref<4x1x8xf32, #tpu.memory_space<vmem>>, vector<1x1x8xf32>
    %69 = vector.shape_cast %68 : vector<1x1x8xf32> to vector<1x8xf32>
    %70 = vector.broadcast %69 : vector<1x8xf32> to vector<8x8xf32>
    %71 = arith.addf %67, %70 : vector<8x8xf32>
    %72 = arith.truncf %57 : vector<8x8xf32> to vector<8x8xbf16>
    %73 = arith.truncf %64 : vector<8x8xf32> to vector<8x8xbf16>
    %cst_55 = arith.constant dense<0.000000e+00> : vector<8x8xf32>
    %74 = tpu.matmul %72, %73, %cst_55 {dimension_numbers = #tpu.dot_dimension_numbers<[1], [1], [0], [0], [0, 0, 1, 0], [], []>} : vector<8x8xbf16>, vector<8x8xbf16>, vector<8x8xf32> -> vector<8x8xf32>
    %cst_56 = arith.constant 0.353553385 : f32
    %75 = vector.broadcast %cst_56 : f32 to vector<8x8xf32>
    %76 = arith.mulf %74, %75 : vector<8x8xf32>
    %cst_57 = arith.constant dense<0xFF800000> : vector<8xf32>
    %77 = vector.multi_reduction <maximumf>, %76, %cst_57 [1] : vector<8x8xf32> to vector<8xf32>
    %78 = vector.shape_cast %77 : vector<8xf32> to vector<8x1xf32>
    %79 = vector.broadcast %78 : vector<8x1xf32> to vector<8x8xf32>
    %80 = arith.subf %76, %79 : vector<8x8xf32>
    %81 = math.exp %80 : vector<8x8xf32>
    %cst_58 = arith.constant dense<0.000000e+00> : vector<8xf32>
    %82 = vector.multi_reduction <add>, %81, %cst_58 [1] : vector<8x8xf32> to vector<8xf32>
    %83 = vector.shape_cast %82 : vector<8xf32> to vector<8x1xf32>
    %84 = tpu.reciprocal %83 {approx = true} : vector<8x1xf32> -> vector<8x1xf32>
    %85 = vector.broadcast %84 : vector<8x1xf32> to vector<8x8xf32>
    %86 = arith.mulf %81, %85 : vector<8x8xf32>
    %87 = arith.truncf %86 : vector<8x8xf32> to vector<8x8xbf16>
    %88 = arith.truncf %71 : vector<8x8xf32> to vector<8x8xbf16>
    %cst_59 = arith.constant dense<0.000000e+00> : vector<8x8xf32>
    %89 = tpu.matmul %87, %88, %cst_59 {dimension_numbers = #tpu.dot_dimension_numbers<[1], [0], [0], [1], [0, 0, 1, 1], [], []>} : vector<8x8xbf16>, vector<8x8xbf16>, vector<8x8xf32> -> vector<8x8xf32>
    %90 = arith.truncf %89 : vector<8x8xf32> to vector<8x8xbf16>
    %c1_60 = arith.constant 1 : index
    %c0_61 = arith.constant 0 : index
    %c0_62 = arith.constant 0 : index
    %91 = vector.load %arg9[%c1_60, %c0_61, %c0_62] : memref<4x8x32xbf16, #tpu.memory_space<vmem>>, vector<1x8x32xbf16>
    %92 = vector.shape_cast %91 : vector<1x8x32xbf16> to vector<8x32xbf16>
    %cst_63 = arith.constant dense<0.000000e+00> : vector<8x32xf32>
    %93 = tpu.matmul %90, %92, %cst_63 {dimension_numbers = #tpu.dot_dimension_numbers<[1], [0], [0], [1], [0, 0, 1, 1], [], []>} : vector<8x8xbf16>, vector<8x32xbf16>, vector<8x32xf32> -> vector<8x32xf32>
    %94 = arith.addf %50, %93 : vector<8x32xf32>
    %c2 = arith.constant 2 : index
    %c0_64 = arith.constant 0 : index
    %c0_65 = arith.constant 0 : index
    %95 = vector.load %arg3[%c2, %c0_64, %c0_65] : memref<4x32x8xbf16, #tpu.memory_space<vmem>>, vector<1x32x8xbf16>
    %96 = vector.shape_cast %95 : vector<1x32x8xbf16> to vector<32x8xbf16>
    %cst_66 = arith.constant dense<0.000000e+00> : vector<8x8xf32>
    %97 = tpu.matmul %4, %96, %cst_66 {dimension_numbers = #tpu.dot_dimension_numbers<[1], [0], [0], [1], [0, 0, 1, 1], [], []>} : vector<8x32xbf16>, vector<32x8xbf16>, vector<8x8xf32> -> vector<8x8xf32>
    %c2_67 = arith.constant 2 : index
    %c0_68 = arith.constant 0 : index
    %c0_69 = arith.constant 0 : index
    %98 = vector.load %arg4[%c2_67, %c0_68, %c0_69] : memref<4x1x8xf32, #tpu.memory_space<vmem>>, vector<1x1x8xf32>
    %99 = vector.shape_cast %98 : vector<1x1x8xf32> to vector<1x8xf32>
    %100 = vector.broadcast %99 : vector<1x8xf32> to vector<8x8xf32>
    %101 = arith.addf %97, %100 : vector<8x8xf32>
    %c2_70 = arith.constant 2 : index
    %c0_71 = arith.constant 0 : index
    %c0_72 = arith.constant 0 : index
    %102 = vector.load %arg5[%c2_70, %c0_71, %c0_72] : memref<4x32x8xbf16, #tpu.memory_space<vmem>>, vector<1x32x8xbf16>
    %103 = vector.shape_cast %102 : vector<1x32x8xbf16> to vector<32x8xbf16>
    %cst_73 = arith.constant dense<0.000000e+00> : vector<8x8xf32>
    %104 = tpu.matmul %4, %103, %cst_73 {dimension_numbers = #tpu.dot_dimension_numbers<[1], [0], [0], [1], [0, 0, 1, 1], [], []>} : vector<8x32xbf16>, vector<32x8xbf16>, vector<8x8xf32> -> vector<8x8xf32>
    %c2_74 = arith.constant 2 : index
    %c0_75 = arith.constant 0 : index
    %c0_76 = arith.constant 0 : index
    %105 = vector.load %arg6[%c2_74, %c0_75, %c0_76] : memref<4x1x8xf32, #tpu.memory_space<vmem>>, vector<1x1x8xf32>
    %106 = vector.shape_cast %105 : vector<1x1x8xf32> to vector<1x8xf32>
    %107 = vector.broadcast %106 : vector<1x8xf32> to vector<8x8xf32>
    %108 = arith.addf %104, %107 : vector<8x8xf32>
    %c2_77 = arith.constant 2 : index
    %c0_78 = arith.constant 0 : index
    %c0_79 = arith.constant 0 : index
    %109 = vector.load %arg7[%c2_77, %c0_78, %c0_79] : memref<4x32x8xbf16, #tpu.memory_space<vmem>>, vector<1x32x8xbf16>
    %110 = vector.shape_cast %109 : vector<1x32x8xbf16> to vector<32x8xbf16>
    %cst_80 = arith.constant dense<0.000000e+00> : vector<8x8xf32>
    %111 = tpu.matmul %4, %110, %cst_80 {dimension_numbers = #tpu.dot_dimension_numbers<[1], [0], [0], [1], [0, 0, 1, 1], [], []>} : vector<8x32xbf16>, vector<32x8xbf16>, vector<8x8xf32> -> vector<8x8xf32>
    %c2_81 = arith.constant 2 : index
    %c0_82 = arith.constant 0 : index
    %c0_83 = arith.constant 0 : index
    %112 = vector.load %arg8[%c2_81, %c0_82, %c0_83] : memref<4x1x8xf32, #tpu.memory_space<vmem>>, vector<1x1x8xf32>
    %113 = vector.shape_cast %112 : vector<1x1x8xf32> to vector<1x8xf32>
    %114 = vector.broadcast %113 : vector<1x8xf32> to vector<8x8xf32>
    %115 = arith.addf %111, %114 : vector<8x8xf32>
    %116 = arith.truncf %101 : vector<8x8xf32> to vector<8x8xbf16>
    %117 = arith.truncf %108 : vector<8x8xf32> to vector<8x8xbf16>
    %cst_84 = arith.constant dense<0.000000e+00> : vector<8x8xf32>
    %118 = tpu.matmul %116, %117, %cst_84 {dimension_numbers = #tpu.dot_dimension_numbers<[1], [1], [0], [0], [0, 0, 1, 0], [], []>} : vector<8x8xbf16>, vector<8x8xbf16>, vector<8x8xf32> -> vector<8x8xf32>
    %cst_85 = arith.constant 0.353553385 : f32
    %119 = vector.broadcast %cst_85 : f32 to vector<8x8xf32>
    %120 = arith.mulf %118, %119 : vector<8x8xf32>
    %cst_86 = arith.constant dense<0xFF800000> : vector<8xf32>
    %121 = vector.multi_reduction <maximumf>, %120, %cst_86 [1] : vector<8x8xf32> to vector<8xf32>
    %122 = vector.shape_cast %121 : vector<8xf32> to vector<8x1xf32>
    %123 = vector.broadcast %122 : vector<8x1xf32> to vector<8x8xf32>
    %124 = arith.subf %120, %123 : vector<8x8xf32>
    %125 = math.exp %124 : vector<8x8xf32>
    %cst_87 = arith.constant dense<0.000000e+00> : vector<8xf32>
    %126 = vector.multi_reduction <add>, %125, %cst_87 [1] : vector<8x8xf32> to vector<8xf32>
    %127 = vector.shape_cast %126 : vector<8xf32> to vector<8x1xf32>
    %128 = tpu.reciprocal %127 {approx = true} : vector<8x1xf32> -> vector<8x1xf32>
    %129 = vector.broadcast %128 : vector<8x1xf32> to vector<8x8xf32>
    %130 = arith.mulf %125, %129 : vector<8x8xf32>
    %131 = arith.truncf %130 : vector<8x8xf32> to vector<8x8xbf16>
    %132 = arith.truncf %115 : vector<8x8xf32> to vector<8x8xbf16>
    %cst_88 = arith.constant dense<0.000000e+00> : vector<8x8xf32>
    %133 = tpu.matmul %131, %132, %cst_88 {dimension_numbers = #tpu.dot_dimension_numbers<[1], [0], [0], [1], [0, 0, 1, 1], [], []>} : vector<8x8xbf16>, vector<8x8xbf16>, vector<8x8xf32> -> vector<8x8xf32>
    %134 = arith.truncf %133 : vector<8x8xf32> to vector<8x8xbf16>
    %c2_89 = arith.constant 2 : index
    %c0_90 = arith.constant 0 : index
    %c0_91 = arith.constant 0 : index
    %135 = vector.load %arg9[%c2_89, %c0_90, %c0_91] : memref<4x8x32xbf16, #tpu.memory_space<vmem>>, vector<1x8x32xbf16>
    %136 = vector.shape_cast %135 : vector<1x8x32xbf16> to vector<8x32xbf16>
    %cst_92 = arith.constant dense<0.000000e+00> : vector<8x32xf32>
    %137 = tpu.matmul %134, %136, %cst_92 {dimension_numbers = #tpu.dot_dimension_numbers<[1], [0], [0], [1], [0, 0, 1, 1], [], []>} : vector<8x8xbf16>, vector<8x32xbf16>, vector<8x32xf32> -> vector<8x32xf32>
    %138 = arith.addf %94, %137 : vector<8x32xf32>
    %c3 = arith.constant 3 : index
    %c0_93 = arith.constant 0 : index
    %c0_94 = arith.constant 0 : index
    %139 = vector.load %arg3[%c3, %c0_93, %c0_94] : memref<4x32x8xbf16, #tpu.memory_space<vmem>>, vector<1x32x8xbf16>
    %140 = vector.shape_cast %139 : vector<1x32x8xbf16> to vector<32x8xbf16>
    %cst_95 = arith.constant dense<0.000000e+00> : vector<8x8xf32>
    %141 = tpu.matmul %4, %140, %cst_95 {dimension_numbers = #tpu.dot_dimension_numbers<[1], [0], [0], [1], [0, 0, 1, 1], [], []>} : vector<8x32xbf16>, vector<32x8xbf16>, vector<8x8xf32> -> vector<8x8xf32>
    %c3_96 = arith.constant 3 : index
    %c0_97 = arith.constant 0 : index
    %c0_98 = arith.constant 0 : index
    %142 = vector.load %arg4[%c3_96, %c0_97, %c0_98] : memref<4x1x8xf32, #tpu.memory_space<vmem>>, vector<1x1x8xf32>
    %143 = vector.shape_cast %142 : vector<1x1x8xf32> to vector<1x8xf32>
    %144 = vector.broadcast %143 : vector<1x8xf32> to vector<8x8xf32>
    %145 = arith.addf %141, %144 : vector<8x8xf32>
    %c3_99 = arith.constant 3 : index
    %c0_100 = arith.constant 0 : index
    %c0_101 = arith.constant 0 : index
    %146 = vector.load %arg5[%c3_99, %c0_100, %c0_101] : memref<4x32x8xbf16, #tpu.memory_space<vmem>>, vector<1x32x8xbf16>
    %147 = vector.shape_cast %146 : vector<1x32x8xbf16> to vector<32x8xbf16>
    %cst_102 = arith.constant dense<0.000000e+00> : vector<8x8xf32>
    %148 = tpu.matmul %4, %147, %cst_102 {dimension_numbers = #tpu.dot_dimension_numbers<[1], [0], [0], [1], [0, 0, 1, 1], [], []>} : vector<8x32xbf16>, vector<32x8xbf16>, vector<8x8xf32> -> vector<8x8xf32>
    %c3_103 = arith.constant 3 : index
    %c0_104 = arith.constant 0 : index
    %c0_105 = arith.constant 0 : index
    %149 = vector.load %arg6[%c3_103, %c0_104, %c0_105] : memref<4x1x8xf32, #tpu.memory_space<vmem>>, vector<1x1x8xf32>
    %150 = vector.shape_cast %149 : vector<1x1x8xf32> to vector<1x8xf32>
    %151 = vector.broadcast %150 : vector<1x8xf32> to vector<8x8xf32>
    %152 = arith.addf %148, %151 : vector<8x8xf32>
    %c3_106 = arith.constant 3 : index
    %c0_107 = arith.constant 0 : index
    %c0_108 = arith.constant 0 : index
    %153 = vector.load %arg7[%c3_106, %c0_107, %c0_108] : memref<4x32x8xbf16, #tpu.memory_space<vmem>>, vector<1x32x8xbf16>
    %154 = vector.shape_cast %153 : vector<1x32x8xbf16> to vector<32x8xbf16>
    %cst_109 = arith.constant dense<0.000000e+00> : vector<8x8xf32>
    %155 = tpu.matmul %4, %154, %cst_109 {dimension_numbers = #tpu.dot_dimension_numbers<[1], [0], [0], [1], [0, 0, 1, 1], [], []>} : vector<8x32xbf16>, vector<32x8xbf16>, vector<8x8xf32> -> vector<8x8xf32>
    %c3_110 = arith.constant 3 : index
    %c0_111 = arith.constant 0 : index
    %c0_112 = arith.constant 0 : index
    %156 = vector.load %arg8[%c3_110, %c0_111, %c0_112] : memref<4x1x8xf32, #tpu.memory_space<vmem>>, vector<1x1x8xf32>
    %157 = vector.shape_cast %156 : vector<1x1x8xf32> to vector<1x8xf32>
    %158 = vector.broadcast %157 : vector<1x8xf32> to vector<8x8xf32>
    %159 = arith.addf %155, %158 : vector<8x8xf32>
    %160 = arith.truncf %145 : vector<8x8xf32> to vector<8x8xbf16>
    %161 = arith.truncf %152 : vector<8x8xf32> to vector<8x8xbf16>
    %cst_113 = arith.constant dense<0.000000e+00> : vector<8x8xf32>
    %162 = tpu.matmul %160, %161, %cst_113 {dimension_numbers = #tpu.dot_dimension_numbers<[1], [1], [0], [0], [0, 0, 1, 0], [], []>} : vector<8x8xbf16>, vector<8x8xbf16>, vector<8x8xf32> -> vector<8x8xf32>
    %cst_114 = arith.constant 0.353553385 : f32
    %163 = vector.broadcast %cst_114 : f32 to vector<8x8xf32>
    %164 = arith.mulf %162, %163 : vector<8x8xf32>
    %cst_115 = arith.constant dense<0xFF800000> : vector<8xf32>
    %165 = vector.multi_reduction <maximumf>, %164, %cst_115 [1] : vector<8x8xf32> to vector<8xf32>
    %166 = vector.shape_cast %165 : vector<8xf32> to vector<8x1xf32>
    %167 = vector.broadcast %166 : vector<8x1xf32> to vector<8x8xf32>
    %168 = arith.subf %164, %167 : vector<8x8xf32>
    %169 = math.exp %168 : vector<8x8xf32>
    %cst_116 = arith.constant dense<0.000000e+00> : vector<8xf32>
    %170 = vector.multi_reduction <add>, %169, %cst_116 [1] : vector<8x8xf32> to vector<8xf32>
    %171 = vector.shape_cast %170 : vector<8xf32> to vector<8x1xf32>
    %172 = tpu.reciprocal %171 {approx = true} : vector<8x1xf32> -> vector<8x1xf32>
    %173 = vector.broadcast %172 : vector<8x1xf32> to vector<8x8xf32>
    %174 = arith.mulf %169, %173 : vector<8x8xf32>
    %175 = arith.truncf %174 : vector<8x8xf32> to vector<8x8xbf16>
    %176 = arith.truncf %159 : vector<8x8xf32> to vector<8x8xbf16>
    %cst_117 = arith.constant dense<0.000000e+00> : vector<8x8xf32>
    %177 = tpu.matmul %175, %176, %cst_117 {dimension_numbers = #tpu.dot_dimension_numbers<[1], [0], [0], [1], [0, 0, 1, 1], [], []>} : vector<8x8xbf16>, vector<8x8xbf16>, vector<8x8xf32> -> vector<8x8xf32>
    %178 = arith.truncf %177 : vector<8x8xf32> to vector<8x8xbf16>
    %c3_118 = arith.constant 3 : index
    %c0_119 = arith.constant 0 : index
    %c0_120 = arith.constant 0 : index
    %179 = vector.load %arg9[%c3_118, %c0_119, %c0_120] : memref<4x8x32xbf16, #tpu.memory_space<vmem>>, vector<1x8x32xbf16>
    %180 = vector.shape_cast %179 : vector<1x8x32xbf16> to vector<8x32xbf16>
    %cst_121 = arith.constant dense<0.000000e+00> : vector<8x32xf32>
    %181 = tpu.matmul %178, %180, %cst_121 {dimension_numbers = #tpu.dot_dimension_numbers<[1], [0], [0], [1], [0, 0, 1, 1], [], []>} : vector<8x8xbf16>, vector<8x32xbf16>, vector<8x32xf32> -> vector<8x32xf32>
    %182 = arith.addf %138, %181 : vector<8x32xf32>
    %c0_122 = arith.constant 0 : index
    %c0_123 = arith.constant 0 : index
    %183 = vector.load %arg10[%c0_122, %c0_123] : memref<1x32xf32, #tpu.memory_space<vmem>>, vector<1x32xf32>
    %184 = vector.broadcast %183 : vector<1x32xf32> to vector<8x32xf32>
    %185 = arith.addf %182, %184 : vector<8x32xf32>
    %186 = arith.addf %1, %185 : vector<8x32xf32>
    %cst_124 = arith.constant dense<0.000000e+00> : vector<8xf32>
    %187 = vector.multi_reduction <add>, %186, %cst_124 [1] : vector<8x32xf32> to vector<8xf32>
    %188 = vector.shape_cast %187 : vector<8xf32> to vector<8x1xf32>
    %cst_125 = arith.constant 3.200000e+01 : f32
    %189 = vector.broadcast %cst_125 : f32 to vector<8x1xf32>
    %190 = arith.divf %188, %189 : vector<8x1xf32>
    %191 = vector.broadcast %190 : vector<8x1xf32> to vector<8x32xf32>
    %192 = arith.subf %186, %191 : vector<8x32xf32>
    %193 = arith.mulf %192, %192 : vector<8x32xf32>
    %cst_126 = arith.constant dense<0.000000e+00> : vector<8xf32>
    %194 = vector.multi_reduction <add>, %193, %cst_126 [1] : vector<8x32xf32> to vector<8xf32>
    %195 = vector.shape_cast %194 : vector<8xf32> to vector<8x1xf32>
    %cst_127 = arith.constant 3.200000e+01 : f32
    %196 = vector.broadcast %cst_127 : f32 to vector<8x1xf32>
    %197 = arith.divf %195, %196 : vector<8x1xf32>
    %198 = vector.broadcast %190 : vector<8x1xf32> to vector<8x32xf32>
    %199 = arith.subf %186, %198 : vector<8x32xf32>
    %cst_128 = arith.constant 9.99999974E-6 : f32
    %200 = vector.broadcast %cst_128 : f32 to vector<8x1xf32>
    %201 = arith.addf %197, %200 : vector<8x1xf32>
    %202 = math.rsqrt %201 : vector<8x1xf32>
    %203 = vector.broadcast %202 : vector<8x1xf32> to vector<8x32xf32>
    %204 = arith.mulf %199, %203 : vector<8x32xf32>
    %c0_129 = arith.constant 0 : index
    %c0_130 = arith.constant 0 : index
    %205 = vector.load %arg19[%c0_129, %c0_130] : memref<1x32xf32, #tpu.memory_space<vmem>>, vector<1x32xf32>
    %206 = vector.broadcast %205 : vector<1x32xf32> to vector<8x32xf32>
    %207 = arith.mulf %204, %206 : vector<8x32xf32>
    %c0_131 = arith.constant 0 : index
    %c0_132 = arith.constant 0 : index
    %208 = vector.load %arg20[%c0_131, %c0_132] : memref<1x32xf32, #tpu.memory_space<vmem>>, vector<1x32xf32>
    %209 = vector.broadcast %208 : vector<1x32xf32> to vector<8x32xf32>
    %210 = arith.addf %207, %209 : vector<8x32xf32>
    %211 = arith.truncf %210 : vector<8x32xf32> to vector<8x32xbf16>
    %cst_133 = arith.constant 0.000000e+00 : f32
    %212 = vector.broadcast %cst_133 : f32 to vector<8x32xf32>
    %c0_134 = arith.constant 0 : index
    %c0_135 = arith.constant 0 : index
    %c0_136 = arith.constant 0 : index
    %213 = vector.load %arg11[%c0_134, %c0_135, %c0_136] : memref<4x32x8xbf16, #tpu.memory_space<vmem>>, vector<1x32x8xbf16>
    %214 = vector.shape_cast %213 : vector<1x32x8xbf16> to vector<32x8xbf16>
    %cst_137 = arith.constant dense<0.000000e+00> : vector<8x8xf32>
    %215 = tpu.matmul %211, %214, %cst_137 {dimension_numbers = #tpu.dot_dimension_numbers<[1], [0], [0], [1], [0, 0, 1, 1], [], []>} : vector<8x32xbf16>, vector<32x8xbf16>, vector<8x8xf32> -> vector<8x8xf32>
    %c0_138 = arith.constant 0 : index
    %c0_139 = arith.constant 0 : index
    %c0_140 = arith.constant 0 : index
    %216 = vector.load %arg12[%c0_138, %c0_139, %c0_140] : memref<4x1x8xf32, #tpu.memory_space<vmem>>, vector<1x1x8xf32>
    %217 = vector.shape_cast %216 : vector<1x1x8xf32> to vector<1x8xf32>
    %218 = vector.broadcast %217 : vector<1x8xf32> to vector<8x8xf32>
    %219 = arith.addf %215, %218 : vector<8x8xf32>
    %c0_141 = arith.constant 0 : index
    %c0_142 = arith.constant 0 : index
    %c0_143 = arith.constant 0 : index
    %220 = vector.load %arg13[%c0_141, %c0_142, %c0_143] : memref<4x32x8xbf16, #tpu.memory_space<vmem>>, vector<1x32x8xbf16>
    %221 = vector.shape_cast %220 : vector<1x32x8xbf16> to vector<32x8xbf16>
    %cst_144 = arith.constant dense<0.000000e+00> : vector<8x8xf32>
    %222 = tpu.matmul %5, %221, %cst_144 {dimension_numbers = #tpu.dot_dimension_numbers<[1], [0], [0], [1], [0, 0, 1, 1], [], []>} : vector<8x32xbf16>, vector<32x8xbf16>, vector<8x8xf32> -> vector<8x8xf32>
    %c0_145 = arith.constant 0 : index
    %c0_146 = arith.constant 0 : index
    %c0_147 = arith.constant 0 : index
    %223 = vector.load %arg14[%c0_145, %c0_146, %c0_147] : memref<4x1x8xf32, #tpu.memory_space<vmem>>, vector<1x1x8xf32>
    %224 = vector.shape_cast %223 : vector<1x1x8xf32> to vector<1x8xf32>
    %225 = vector.broadcast %224 : vector<1x8xf32> to vector<8x8xf32>
    %226 = arith.addf %222, %225 : vector<8x8xf32>
    %c0_148 = arith.constant 0 : index
    %c0_149 = arith.constant 0 : index
    %c0_150 = arith.constant 0 : index
    %227 = vector.load %arg15[%c0_148, %c0_149, %c0_150] : memref<4x32x8xbf16, #tpu.memory_space<vmem>>, vector<1x32x8xbf16>
    %228 = vector.shape_cast %227 : vector<1x32x8xbf16> to vector<32x8xbf16>
    %cst_151 = arith.constant dense<0.000000e+00> : vector<8x8xf32>
    %229 = tpu.matmul %5, %228, %cst_151 {dimension_numbers = #tpu.dot_dimension_numbers<[1], [0], [0], [1], [0, 0, 1, 1], [], []>} : vector<8x32xbf16>, vector<32x8xbf16>, vector<8x8xf32> -> vector<8x8xf32>
    %c0_152 = arith.constant 0 : index
    %c0_153 = arith.constant 0 : index
    %c0_154 = arith.constant 0 : index
    %230 = vector.load %arg16[%c0_152, %c0_153, %c0_154] : memref<4x1x8xf32, #tpu.memory_space<vmem>>, vector<1x1x8xf32>
    %231 = vector.shape_cast %230 : vector<1x1x8xf32> to vector<1x8xf32>
    %232 = vector.broadcast %231 : vector<1x8xf32> to vector<8x8xf32>
    %233 = arith.addf %229, %232 : vector<8x8xf32>
    %234 = arith.truncf %219 : vector<8x8xf32> to vector<8x8xbf16>
    %235 = arith.truncf %226 : vector<8x8xf32> to vector<8x8xbf16>
    %cst_155 = arith.constant dense<0.000000e+00> : vector<8x8xf32>
    %236 = tpu.matmul %234, %235, %cst_155 {dimension_numbers = #tpu.dot_dimension_numbers<[1], [1], [0], [0], [0, 0, 1, 0], [], []>} : vector<8x8xbf16>, vector<8x8xbf16>, vector<8x8xf32> -> vector<8x8xf32>
    %cst_156 = arith.constant 0.353553385 : f32
    %237 = vector.broadcast %cst_156 : f32 to vector<8x8xf32>
    %238 = arith.mulf %236, %237 : vector<8x8xf32>
    %cst_157 = arith.constant dense<0xFF800000> : vector<8xf32>
    %239 = vector.multi_reduction <maximumf>, %238, %cst_157 [1] : vector<8x8xf32> to vector<8xf32>
    %240 = vector.shape_cast %239 : vector<8xf32> to vector<8x1xf32>
    %241 = vector.broadcast %240 : vector<8x1xf32> to vector<8x8xf32>
    %242 = arith.subf %238, %241 : vector<8x8xf32>
    %243 = math.exp %242 : vector<8x8xf32>
    %cst_158 = arith.constant dense<0.000000e+00> : vector<8xf32>
    %244 = vector.multi_reduction <add>, %243, %cst_158 [1] : vector<8x8xf32> to vector<8xf32>
    %245 = vector.shape_cast %244 : vector<8xf32> to vector<8x1xf32>
    %246 = tpu.reciprocal %245 {approx = true} : vector<8x1xf32> -> vector<8x1xf32>
    %247 = vector.broadcast %246 : vector<8x1xf32> to vector<8x8xf32>
    %248 = arith.mulf %243, %247 : vector<8x8xf32>
    %249 = arith.truncf %248 : vector<8x8xf32> to vector<8x8xbf16>
    %250 = arith.truncf %233 : vector<8x8xf32> to vector<8x8xbf16>
    %cst_159 = arith.constant dense<0.000000e+00> : vector<8x8xf32>
    %251 = tpu.matmul %249, %250, %cst_159 {dimension_numbers = #tpu.dot_dimension_numbers<[1], [0], [0], [1], [0, 0, 1, 1], [], []>} : vector<8x8xbf16>, vector<8x8xbf16>, vector<8x8xf32> -> vector<8x8xf32>
    %252 = arith.truncf %251 : vector<8x8xf32> to vector<8x8xbf16>
    %c0_160 = arith.constant 0 : index
    %c0_161 = arith.constant 0 : index
    %c0_162 = arith.constant 0 : index
    %253 = vector.load %arg17[%c0_160, %c0_161, %c0_162] : memref<4x8x32xbf16, #tpu.memory_space<vmem>>, vector<1x8x32xbf16>
    %254 = vector.shape_cast %253 : vector<1x8x32xbf16> to vector<8x32xbf16>
    %cst_163 = arith.constant dense<0.000000e+00> : vector<8x32xf32>
    %255 = tpu.matmul %252, %254, %cst_163 {dimension_numbers = #tpu.dot_dimension_numbers<[1], [0], [0], [1], [0, 0, 1, 1], [], []>} : vector<8x8xbf16>, vector<8x32xbf16>, vector<8x32xf32> -> vector<8x32xf32>
    %256 = arith.addf %212, %255 : vector<8x32xf32>
    %c1_164 = arith.constant 1 : index
    %c0_165 = arith.constant 0 : index
    %c0_166 = arith.constant 0 : index
    %257 = vector.load %arg11[%c1_164, %c0_165, %c0_166] : memref<4x32x8xbf16, #tpu.memory_space<vmem>>, vector<1x32x8xbf16>
    %258 = vector.shape_cast %257 : vector<1x32x8xbf16> to vector<32x8xbf16>
    %cst_167 = arith.constant dense<0.000000e+00> : vector<8x8xf32>
    %259 = tpu.matmul %211, %258, %cst_167 {dimension_numbers = #tpu.dot_dimension_numbers<[1], [0], [0], [1], [0, 0, 1, 1], [], []>} : vector<8x32xbf16>, vector<32x8xbf16>, vector<8x8xf32> -> vector<8x8xf32>
    %c1_168 = arith.constant 1 : index
    %c0_169 = arith.constant 0 : index
    %c0_170 = arith.constant 0 : index
    %260 = vector.load %arg12[%c1_168, %c0_169, %c0_170] : memref<4x1x8xf32, #tpu.memory_space<vmem>>, vector<1x1x8xf32>
    %261 = vector.shape_cast %260 : vector<1x1x8xf32> to vector<1x8xf32>
    %262 = vector.broadcast %261 : vector<1x8xf32> to vector<8x8xf32>
    %263 = arith.addf %259, %262 : vector<8x8xf32>
    %c1_171 = arith.constant 1 : index
    %c0_172 = arith.constant 0 : index
    %c0_173 = arith.constant 0 : index
    %264 = vector.load %arg13[%c1_171, %c0_172, %c0_173] : memref<4x32x8xbf16, #tpu.memory_space<vmem>>, vector<1x32x8xbf16>
    %265 = vector.shape_cast %264 : vector<1x32x8xbf16> to vector<32x8xbf16>
    %cst_174 = arith.constant dense<0.000000e+00> : vector<8x8xf32>
    %266 = tpu.matmul %5, %265, %cst_174 {dimension_numbers = #tpu.dot_dimension_numbers<[1], [0], [0], [1], [0, 0, 1, 1], [], []>} : vector<8x32xbf16>, vector<32x8xbf16>, vector<8x8xf32> -> vector<8x8xf32>
    %c1_175 = arith.constant 1 : index
    %c0_176 = arith.constant 0 : index
    %c0_177 = arith.constant 0 : index
    %267 = vector.load %arg14[%c1_175, %c0_176, %c0_177] : memref<4x1x8xf32, #tpu.memory_space<vmem>>, vector<1x1x8xf32>
    %268 = vector.shape_cast %267 : vector<1x1x8xf32> to vector<1x8xf32>
    %269 = vector.broadcast %268 : vector<1x8xf32> to vector<8x8xf32>
    %270 = arith.addf %266, %269 : vector<8x8xf32>
    %c1_178 = arith.constant 1 : index
    %c0_179 = arith.constant 0 : index
    %c0_180 = arith.constant 0 : index
    %271 = vector.load %arg15[%c1_178, %c0_179, %c0_180] : memref<4x32x8xbf16, #tpu.memory_space<vmem>>, vector<1x32x8xbf16>
    %272 = vector.shape_cast %271 : vector<1x32x8xbf16> to vector<32x8xbf16>
    %cst_181 = arith.constant dense<0.000000e+00> : vector<8x8xf32>
    %273 = tpu.matmul %5, %272, %cst_181 {dimension_numbers = #tpu.dot_dimension_numbers<[1], [0], [0], [1], [0, 0, 1, 1], [], []>} : vector<8x32xbf16>, vector<32x8xbf16>, vector<8x8xf32> -> vector<8x8xf32>
    %c1_182 = arith.constant 1 : index
    %c0_183 = arith.constant 0 : index
    %c0_184 = arith.constant 0 : index
    %274 = vector.load %arg16[%c1_182, %c0_183, %c0_184] : memref<4x1x8xf32, #tpu.memory_space<vmem>>, vector<1x1x8xf32>
    %275 = vector.shape_cast %274 : vector<1x1x8xf32> to vector<1x8xf32>
    %276 = vector.broadcast %275 : vector<1x8xf32> to vector<8x8xf32>
    %277 = arith.addf %273, %276 : vector<8x8xf32>
    %278 = arith.truncf %263 : vector<8x8xf32> to vector<8x8xbf16>
    %279 = arith.truncf %270 : vector<8x8xf32> to vector<8x8xbf16>
    %cst_185 = arith.constant dense<0.000000e+00> : vector<8x8xf32>
    %280 = tpu.matmul %278, %279, %cst_185 {dimension_numbers = #tpu.dot_dimension_numbers<[1], [1], [0], [0], [0, 0, 1, 0], [], []>} : vector<8x8xbf16>, vector<8x8xbf16>, vector<8x8xf32> -> vector<8x8xf32>
    %cst_186 = arith.constant 0.353553385 : f32
    %281 = vector.broadcast %cst_186 : f32 to vector<8x8xf32>
    %282 = arith.mulf %280, %281 : vector<8x8xf32>
    %cst_187 = arith.constant dense<0xFF800000> : vector<8xf32>
    %283 = vector.multi_reduction <maximumf>, %282, %cst_187 [1] : vector<8x8xf32> to vector<8xf32>
    %284 = vector.shape_cast %283 : vector<8xf32> to vector<8x1xf32>
    %285 = vector.broadcast %284 : vector<8x1xf32> to vector<8x8xf32>
    %286 = arith.subf %282, %285 : vector<8x8xf32>
    %287 = math.exp %286 : vector<8x8xf32>
    %cst_188 = arith.constant dense<0.000000e+00> : vector<8xf32>
    %288 = vector.multi_reduction <add>, %287, %cst_188 [1] : vector<8x8xf32> to vector<8xf32>
    %289 = vector.shape_cast %288 : vector<8xf32> to vector<8x1xf32>
    %290 = tpu.reciprocal %289 {approx = true} : vector<8x1xf32> -> vector<8x1xf32>
    %291 = vector.broadcast %290 : vector<8x1xf32> to vector<8x8xf32>
    %292 = arith.mulf %287, %291 : vector<8x8xf32>
    %293 = arith.truncf %292 : vector<8x8xf32> to vector<8x8xbf16>
    %294 = arith.truncf %277 : vector<8x8xf32> to vector<8x8xbf16>
    %cst_189 = arith.constant dense<0.000000e+00> : vector<8x8xf32>
    %295 = tpu.matmul %293, %294, %cst_189 {dimension_numbers = #tpu.dot_dimension_numbers<[1], [0], [0], [1], [0, 0, 1, 1], [], []>} : vector<8x8xbf16>, vector<8x8xbf16>, vector<8x8xf32> -> vector<8x8xf32>
    %296 = arith.truncf %295 : vector<8x8xf32> to vector<8x8xbf16>
    %c1_190 = arith.constant 1 : index
    %c0_191 = arith.constant 0 : index
    %c0_192 = arith.constant 0 : index
    %297 = vector.load %arg17[%c1_190, %c0_191, %c0_192] : memref<4x8x32xbf16, #tpu.memory_space<vmem>>, vector<1x8x32xbf16>
    %298 = vector.shape_cast %297 : vector<1x8x32xbf16> to vector<8x32xbf16>
    %cst_193 = arith.constant dense<0.000000e+00> : vector<8x32xf32>
    %299 = tpu.matmul %296, %298, %cst_193 {dimension_numbers = #tpu.dot_dimension_numbers<[1], [0], [0], [1], [0, 0, 1, 1], [], []>} : vector<8x8xbf16>, vector<8x32xbf16>, vector<8x32xf32> -> vector<8x32xf32>
    %300 = arith.addf %256, %299 : vector<8x32xf32>
    %c2_194 = arith.constant 2 : index
    %c0_195 = arith.constant 0 : index
    %c0_196 = arith.constant 0 : index
    %301 = vector.load %arg11[%c2_194, %c0_195, %c0_196] : memref<4x32x8xbf16, #tpu.memory_space<vmem>>, vector<1x32x8xbf16>
    %302 = vector.shape_cast %301 : vector<1x32x8xbf16> to vector<32x8xbf16>
    %cst_197 = arith.constant dense<0.000000e+00> : vector<8x8xf32>
    %303 = tpu.matmul %211, %302, %cst_197 {dimension_numbers = #tpu.dot_dimension_numbers<[1], [0], [0], [1], [0, 0, 1, 1], [], []>} : vector<8x32xbf16>, vector<32x8xbf16>, vector<8x8xf32> -> vector<8x8xf32>
    %c2_198 = arith.constant 2 : index
    %c0_199 = arith.constant 0 : index
    %c0_200 = arith.constant 0 : index
    %304 = vector.load %arg12[%c2_198, %c0_199, %c0_200] : memref<4x1x8xf32, #tpu.memory_space<vmem>>, vector<1x1x8xf32>
    %305 = vector.shape_cast %304 : vector<1x1x8xf32> to vector<1x8xf32>
    %306 = vector.broadcast %305 : vector<1x8xf32> to vector<8x8xf32>
    %307 = arith.addf %303, %306 : vector<8x8xf32>
    %c2_201 = arith.constant 2 : index
    %c0_202 = arith.constant 0 : index
    %c0_203 = arith.constant 0 : index
    %308 = vector.load %arg13[%c2_201, %c0_202, %c0_203] : memref<4x32x8xbf16, #tpu.memory_space<vmem>>, vector<1x32x8xbf16>
    %309 = vector.shape_cast %308 : vector<1x32x8xbf16> to vector<32x8xbf16>
    %cst_204 = arith.constant dense<0.000000e+00> : vector<8x8xf32>
    %310 = tpu.matmul %5, %309, %cst_204 {dimension_numbers = #tpu.dot_dimension_numbers<[1], [0], [0], [1], [0, 0, 1, 1], [], []>} : vector<8x32xbf16>, vector<32x8xbf16>, vector<8x8xf32> -> vector<8x8xf32>
    %c2_205 = arith.constant 2 : index
    %c0_206 = arith.constant 0 : index
    %c0_207 = arith.constant 0 : index
    %311 = vector.load %arg14[%c2_205, %c0_206, %c0_207] : memref<4x1x8xf32, #tpu.memory_space<vmem>>, vector<1x1x8xf32>
    %312 = vector.shape_cast %311 : vector<1x1x8xf32> to vector<1x8xf32>
    %313 = vector.broadcast %312 : vector<1x8xf32> to vector<8x8xf32>
    %314 = arith.addf %310, %313 : vector<8x8xf32>
    %c2_208 = arith.constant 2 : index
    %c0_209 = arith.constant 0 : index
    %c0_210 = arith.constant 0 : index
    %315 = vector.load %arg15[%c2_208, %c0_209, %c0_210] : memref<4x32x8xbf16, #tpu.memory_space<vmem>>, vector<1x32x8xbf16>
    %316 = vector.shape_cast %315 : vector<1x32x8xbf16> to vector<32x8xbf16>
    %cst_211 = arith.constant dense<0.000000e+00> : vector<8x8xf32>
    %317 = tpu.matmul %5, %316, %cst_211 {dimension_numbers = #tpu.dot_dimension_numbers<[1], [0], [0], [1], [0, 0, 1, 1], [], []>} : vector<8x32xbf16>, vector<32x8xbf16>, vector<8x8xf32> -> vector<8x8xf32>
    %c2_212 = arith.constant 2 : index
    %c0_213 = arith.constant 0 : index
    %c0_214 = arith.constant 0 : index
    %318 = vector.load %arg16[%c2_212, %c0_213, %c0_214] : memref<4x1x8xf32, #tpu.memory_space<vmem>>, vector<1x1x8xf32>
    %319 = vector.shape_cast %318 : vector<1x1x8xf32> to vector<1x8xf32>
    %320 = vector.broadcast %319 : vector<1x8xf32> to vector<8x8xf32>
    %321 = arith.addf %317, %320 : vector<8x8xf32>
    %322 = arith.truncf %307 : vector<8x8xf32> to vector<8x8xbf16>
    %323 = arith.truncf %314 : vector<8x8xf32> to vector<8x8xbf16>
    %cst_215 = arith.constant dense<0.000000e+00> : vector<8x8xf32>
    %324 = tpu.matmul %322, %323, %cst_215 {dimension_numbers = #tpu.dot_dimension_numbers<[1], [1], [0], [0], [0, 0, 1, 0], [], []>} : vector<8x8xbf16>, vector<8x8xbf16>, vector<8x8xf32> -> vector<8x8xf32>
    %cst_216 = arith.constant 0.353553385 : f32
    %325 = vector.broadcast %cst_216 : f32 to vector<8x8xf32>
    %326 = arith.mulf %324, %325 : vector<8x8xf32>
    %cst_217 = arith.constant dense<0xFF800000> : vector<8xf32>
    %327 = vector.multi_reduction <maximumf>, %326, %cst_217 [1] : vector<8x8xf32> to vector<8xf32>
    %328 = vector.shape_cast %327 : vector<8xf32> to vector<8x1xf32>
    %329 = vector.broadcast %328 : vector<8x1xf32> to vector<8x8xf32>
    %330 = arith.subf %326, %329 : vector<8x8xf32>
    %331 = math.exp %330 : vector<8x8xf32>
    %cst_218 = arith.constant dense<0.000000e+00> : vector<8xf32>
    %332 = vector.multi_reduction <add>, %331, %cst_218 [1] : vector<8x8xf32> to vector<8xf32>
    %333 = vector.shape_cast %332 : vector<8xf32> to vector<8x1xf32>
    %334 = tpu.reciprocal %333 {approx = true} : vector<8x1xf32> -> vector<8x1xf32>
    %335 = vector.broadcast %334 : vector<8x1xf32> to vector<8x8xf32>
    %336 = arith.mulf %331, %335 : vector<8x8xf32>
    %337 = arith.truncf %336 : vector<8x8xf32> to vector<8x8xbf16>
    %338 = arith.truncf %321 : vector<8x8xf32> to vector<8x8xbf16>
    %cst_219 = arith.constant dense<0.000000e+00> : vector<8x8xf32>
    %339 = tpu.matmul %337, %338, %cst_219 {dimension_numbers = #tpu.dot_dimension_numbers<[1], [0], [0], [1], [0, 0, 1, 1], [], []>} : vector<8x8xbf16>, vector<8x8xbf16>, vector<8x8xf32> -> vector<8x8xf32>
    %340 = arith.truncf %339 : vector<8x8xf32> to vector<8x8xbf16>
    %c2_220 = arith.constant 2 : index
    %c0_221 = arith.constant 0 : index
    %c0_222 = arith.constant 0 : index
    %341 = vector.load %arg17[%c2_220, %c0_221, %c0_222] : memref<4x8x32xbf16, #tpu.memory_space<vmem>>, vector<1x8x32xbf16>
    %342 = vector.shape_cast %341 : vector<1x8x32xbf16> to vector<8x32xbf16>
    %cst_223 = arith.constant dense<0.000000e+00> : vector<8x32xf32>
    %343 = tpu.matmul %340, %342, %cst_223 {dimension_numbers = #tpu.dot_dimension_numbers<[1], [0], [0], [1], [0, 0, 1, 1], [], []>} : vector<8x8xbf16>, vector<8x32xbf16>, vector<8x32xf32> -> vector<8x32xf32>
    %344 = arith.addf %300, %343 : vector<8x32xf32>
    %c3_224 = arith.constant 3 : index
    %c0_225 = arith.constant 0 : index
    %c0_226 = arith.constant 0 : index
    %345 = vector.load %arg11[%c3_224, %c0_225, %c0_226] : memref<4x32x8xbf16, #tpu.memory_space<vmem>>, vector<1x32x8xbf16>
    %346 = vector.shape_cast %345 : vector<1x32x8xbf16> to vector<32x8xbf16>
    %cst_227 = arith.constant dense<0.000000e+00> : vector<8x8xf32>
    %347 = tpu.matmul %211, %346, %cst_227 {dimension_numbers = #tpu.dot_dimension_numbers<[1], [0], [0], [1], [0, 0, 1, 1], [], []>} : vector<8x32xbf16>, vector<32x8xbf16>, vector<8x8xf32> -> vector<8x8xf32>
    %c3_228 = arith.constant 3 : index
    %c0_229 = arith.constant 0 : index
    %c0_230 = arith.constant 0 : index
    %348 = vector.load %arg12[%c3_228, %c0_229, %c0_230] : memref<4x1x8xf32, #tpu.memory_space<vmem>>, vector<1x1x8xf32>
    %349 = vector.shape_cast %348 : vector<1x1x8xf32> to vector<1x8xf32>
    %350 = vector.broadcast %349 : vector<1x8xf32> to vector<8x8xf32>
    %351 = arith.addf %347, %350 : vector<8x8xf32>
    %c3_231 = arith.constant 3 : index
    %c0_232 = arith.constant 0 : index
    %c0_233 = arith.constant 0 : index
    %352 = vector.load %arg13[%c3_231, %c0_232, %c0_233] : memref<4x32x8xbf16, #tpu.memory_space<vmem>>, vector<1x32x8xbf16>
    %353 = vector.shape_cast %352 : vector<1x32x8xbf16> to vector<32x8xbf16>
    %cst_234 = arith.constant dense<0.000000e+00> : vector<8x8xf32>
    %354 = tpu.matmul %5, %353, %cst_234 {dimension_numbers = #tpu.dot_dimension_numbers<[1], [0], [0], [1], [0, 0, 1, 1], [], []>} : vector<8x32xbf16>, vector<32x8xbf16>, vector<8x8xf32> -> vector<8x8xf32>
    %c3_235 = arith.constant 3 : index
    %c0_236 = arith.constant 0 : index
    %c0_237 = arith.constant 0 : index
    %355 = vector.load %arg14[%c3_235, %c0_236, %c0_237] : memref<4x1x8xf32, #tpu.memory_space<vmem>>, vector<1x1x8xf32>
    %356 = vector.shape_cast %355 : vector<1x1x8xf32> to vector<1x8xf32>
    %357 = vector.broadcast %356 : vector<1x8xf32> to vector<8x8xf32>
    %358 = arith.addf %354, %357 : vector<8x8xf32>
    %c3_238 = arith.constant 3 : index
    %c0_239 = arith.constant 0 : index
    %c0_240 = arith.constant 0 : index
    %359 = vector.load %arg15[%c3_238, %c0_239, %c0_240] : memref<4x32x8xbf16, #tpu.memory_space<vmem>>, vector<1x32x8xbf16>
    %360 = vector.shape_cast %359 : vector<1x32x8xbf16> to vector<32x8xbf16>
    %cst_241 = arith.constant dense<0.000000e+00> : vector<8x8xf32>
    %361 = tpu.matmul %5, %360, %cst_241 {dimension_numbers = #tpu.dot_dimension_numbers<[1], [0], [0], [1], [0, 0, 1, 1], [], []>} : vector<8x32xbf16>, vector<32x8xbf16>, vector<8x8xf32> -> vector<8x8xf32>
    %c3_242 = arith.constant 3 : index
    %c0_243 = arith.constant 0 : index
    %c0_244 = arith.constant 0 : index
    %362 = vector.load %arg16[%c3_242, %c0_243, %c0_244] : memref<4x1x8xf32, #tpu.memory_space<vmem>>, vector<1x1x8xf32>
    %363 = vector.shape_cast %362 : vector<1x1x8xf32> to vector<1x8xf32>
    %364 = vector.broadcast %363 : vector<1x8xf32> to vector<8x8xf32>
    %365 = arith.addf %361, %364 : vector<8x8xf32>
    %366 = arith.truncf %351 : vector<8x8xf32> to vector<8x8xbf16>
    %367 = arith.truncf %358 : vector<8x8xf32> to vector<8x8xbf16>
    %cst_245 = arith.constant dense<0.000000e+00> : vector<8x8xf32>
    %368 = tpu.matmul %366, %367, %cst_245 {dimension_numbers = #tpu.dot_dimension_numbers<[1], [1], [0], [0], [0, 0, 1, 0], [], []>} : vector<8x8xbf16>, vector<8x8xbf16>, vector<8x8xf32> -> vector<8x8xf32>
    %cst_246 = arith.constant 0.353553385 : f32
    %369 = vector.broadcast %cst_246 : f32 to vector<8x8xf32>
    %370 = arith.mulf %368, %369 : vector<8x8xf32>
    %cst_247 = arith.constant dense<0xFF800000> : vector<8xf32>
    %371 = vector.multi_reduction <maximumf>, %370, %cst_247 [1] : vector<8x8xf32> to vector<8xf32>
    %372 = vector.shape_cast %371 : vector<8xf32> to vector<8x1xf32>
    %373 = vector.broadcast %372 : vector<8x1xf32> to vector<8x8xf32>
    %374 = arith.subf %370, %373 : vector<8x8xf32>
    %375 = math.exp %374 : vector<8x8xf32>
    %cst_248 = arith.constant dense<0.000000e+00> : vector<8xf32>
    %376 = vector.multi_reduction <add>, %375, %cst_248 [1] : vector<8x8xf32> to vector<8xf32>
    %377 = vector.shape_cast %376 : vector<8xf32> to vector<8x1xf32>
    %378 = tpu.reciprocal %377 {approx = true} : vector<8x1xf32> -> vector<8x1xf32>
    %379 = vector.broadcast %378 : vector<8x1xf32> to vector<8x8xf32>
    %380 = arith.mulf %375, %379 : vector<8x8xf32>
    %381 = arith.truncf %380 : vector<8x8xf32> to vector<8x8xbf16>
    %382 = arith.truncf %365 : vector<8x8xf32> to vector<8x8xbf16>
    %cst_249 = arith.constant dense<0.000000e+00> : vector<8x8xf32>
    %383 = tpu.matmul %381, %382, %cst_249 {dimension_numbers = #tpu.dot_dimension_numbers<[1], [0], [0], [1], [0, 0, 1, 1], [], []>} : vector<8x8xbf16>, vector<8x8xbf16>, vector<8x8xf32> -> vector<8x8xf32>
    %384 = arith.truncf %383 : vector<8x8xf32> to vector<8x8xbf16>
    %c3_250 = arith.constant 3 : index
    %c0_251 = arith.constant 0 : index
    %c0_252 = arith.constant 0 : index
    %385 = vector.load %arg17[%c3_250, %c0_251, %c0_252] : memref<4x8x32xbf16, #tpu.memory_space<vmem>>, vector<1x8x32xbf16>
    %386 = vector.shape_cast %385 : vector<1x8x32xbf16> to vector<8x32xbf16>
    %cst_253 = arith.constant dense<0.000000e+00> : vector<8x32xf32>
    %387 = tpu.matmul %384, %386, %cst_253 {dimension_numbers = #tpu.dot_dimension_numbers<[1], [0], [0], [1], [0, 0, 1, 1], [], []>} : vector<8x8xbf16>, vector<8x32xbf16>, vector<8x32xf32> -> vector<8x32xf32>
    %388 = arith.addf %344, %387 : vector<8x32xf32>
    %c0_254 = arith.constant 0 : index
    %c0_255 = arith.constant 0 : index
    %389 = vector.load %arg18[%c0_254, %c0_255] : memref<1x32xf32, #tpu.memory_space<vmem>>, vector<1x32xf32>
    %390 = vector.broadcast %389 : vector<1x32xf32> to vector<8x32xf32>
    %391 = arith.addf %388, %390 : vector<8x32xf32>
    %392 = arith.addf %210, %391 : vector<8x32xf32>
    %cst_256 = arith.constant dense<0.000000e+00> : vector<8xf32>
    %393 = vector.multi_reduction <add>, %392, %cst_256 [1] : vector<8x32xf32> to vector<8xf32>
    %394 = vector.shape_cast %393 : vector<8xf32> to vector<8x1xf32>
    %cst_257 = arith.constant 3.200000e+01 : f32
    %395 = vector.broadcast %cst_257 : f32 to vector<8x1xf32>
    %396 = arith.divf %394, %395 : vector<8x1xf32>
    %397 = vector.broadcast %396 : vector<8x1xf32> to vector<8x32xf32>
    %398 = arith.subf %392, %397 : vector<8x32xf32>
    %399 = arith.mulf %398, %398 : vector<8x32xf32>
    %cst_258 = arith.constant dense<0.000000e+00> : vector<8xf32>
    %400 = vector.multi_reduction <add>, %399, %cst_258 [1] : vector<8x32xf32> to vector<8xf32>
    %401 = vector.shape_cast %400 : vector<8xf32> to vector<8x1xf32>
    %cst_259 = arith.constant 3.200000e+01 : f32
    %402 = vector.broadcast %cst_259 : f32 to vector<8x1xf32>
    %403 = arith.divf %401, %402 : vector<8x1xf32>
    %404 = vector.broadcast %396 : vector<8x1xf32> to vector<8x32xf32>
    %405 = arith.subf %392, %404 : vector<8x32xf32>
    %cst_260 = arith.constant 9.99999974E-6 : f32
    %406 = vector.broadcast %cst_260 : f32 to vector<8x1xf32>
    %407 = arith.addf %403, %406 : vector<8x1xf32>
    %408 = math.rsqrt %407 : vector<8x1xf32>
    %409 = vector.broadcast %408 : vector<8x1xf32> to vector<8x32xf32>
    %410 = arith.mulf %405, %409 : vector<8x32xf32>
    %c0_261 = arith.constant 0 : index
    %c0_262 = arith.constant 0 : index
    %411 = vector.load %arg21[%c0_261, %c0_262] : memref<1x32xf32, #tpu.memory_space<vmem>>, vector<1x32xf32>
    %412 = vector.broadcast %411 : vector<1x32xf32> to vector<8x32xf32>
    %413 = arith.mulf %410, %412 : vector<8x32xf32>
    %c0_263 = arith.constant 0 : index
    %c0_264 = arith.constant 0 : index
    %414 = vector.load %arg22[%c0_263, %c0_264] : memref<1x32xf32, #tpu.memory_space<vmem>>, vector<1x32xf32>
    %415 = vector.broadcast %414 : vector<1x32xf32> to vector<8x32xf32>
    %416 = arith.addf %413, %415 : vector<8x32xf32>
    %417 = arith.truncf %416 : vector<8x32xf32> to vector<8x32xbf16>
    %c0_265 = arith.constant 0 : index
    %c0_266 = arith.constant 0 : index
    %418 = vector.load %arg25[%c0_265, %c0_266] : memref<32x64xbf16, #tpu.memory_space<vmem>>, vector<32x64xbf16>
    %cst_267 = arith.constant dense<0.000000e+00> : vector<8x64xf32>
    %419 = tpu.matmul %417, %418, %cst_267 {dimension_numbers = #tpu.dot_dimension_numbers<[1], [0], [0], [1], [0, 0, 1, 1], [], []>} : vector<8x32xbf16>, vector<32x64xbf16>, vector<8x64xf32> -> vector<8x64xf32>
    %c0_268 = arith.constant 0 : index
    %c0_269 = arith.constant 0 : index
    %420 = vector.load %arg26[%c0_268, %c0_269] : memref<1x64xf32, #tpu.memory_space<vmem>>, vector<1x64xf32>
    %421 = vector.broadcast %420 : vector<1x64xf32> to vector<8x64xf32>
    %422 = arith.addf %419, %421 : vector<8x64xf32>
    %cst_270 = arith.constant 0.000000e+00 : f32
    %423 = vector.broadcast %cst_270 : f32 to vector<8x64xf32>
    %424 = arith.maximumf %422, %423 : vector<8x64xf32>
    %425 = arith.truncf %424 : vector<8x64xf32> to vector<8x64xbf16>
    %c0_271 = arith.constant 0 : index
    %c0_272 = arith.constant 0 : index
    %426 = vector.load %arg27[%c0_271, %c0_272] : memref<64x32xbf16, #tpu.memory_space<vmem>>, vector<64x32xbf16>
    %cst_273 = arith.constant dense<0.000000e+00> : vector<8x32xf32>
    %427 = tpu.matmul %425, %426, %cst_273 {dimension_numbers = #tpu.dot_dimension_numbers<[1], [0], [0], [1], [0, 0, 1, 1], [], []>} : vector<8x64xbf16>, vector<64x32xbf16>, vector<8x32xf32> -> vector<8x32xf32>
    %c0_274 = arith.constant 0 : index
    %c0_275 = arith.constant 0 : index
    %428 = vector.load %arg28[%c0_274, %c0_275] : memref<1x32xf32, #tpu.memory_space<vmem>>, vector<1x32xf32>
    %429 = vector.broadcast %428 : vector<1x32xf32> to vector<8x32xf32>
    %430 = arith.addf %427, %429 : vector<8x32xf32>
    %431 = arith.addf %416, %430 : vector<8x32xf32>
    %cst_276 = arith.constant dense<0.000000e+00> : vector<8xf32>
    %432 = vector.multi_reduction <add>, %431, %cst_276 [1] : vector<8x32xf32> to vector<8xf32>
    %433 = vector.shape_cast %432 : vector<8xf32> to vector<8x1xf32>
    %cst_277 = arith.constant 3.200000e+01 : f32
    %434 = vector.broadcast %cst_277 : f32 to vector<8x1xf32>
    %435 = arith.divf %433, %434 : vector<8x1xf32>
    %436 = vector.broadcast %435 : vector<8x1xf32> to vector<8x32xf32>
    %437 = arith.subf %431, %436 : vector<8x32xf32>
    %438 = arith.mulf %437, %437 : vector<8x32xf32>
    %cst_278 = arith.constant dense<0.000000e+00> : vector<8xf32>
    %439 = vector.multi_reduction <add>, %438, %cst_278 [1] : vector<8x32xf32> to vector<8xf32>
    %440 = vector.shape_cast %439 : vector<8xf32> to vector<8x1xf32>
    %cst_279 = arith.constant 3.200000e+01 : f32
    %441 = vector.broadcast %cst_279 : f32 to vector<8x1xf32>
    %442 = arith.divf %440, %441 : vector<8x1xf32>
    %443 = vector.broadcast %435 : vector<8x1xf32> to vector<8x32xf32>
    %444 = arith.subf %431, %443 : vector<8x32xf32>
    %cst_280 = arith.constant 9.99999974E-6 : f32
    %445 = vector.broadcast %cst_280 : f32 to vector<8x1xf32>
    %446 = arith.addf %442, %445 : vector<8x1xf32>
    %447 = math.rsqrt %446 : vector<8x1xf32>
    %448 = vector.broadcast %447 : vector<8x1xf32> to vector<8x32xf32>
    %449 = arith.mulf %444, %448 : vector<8x32xf32>
    %c0_281 = arith.constant 0 : index
    %c0_282 = arith.constant 0 : index
    %450 = vector.load %arg23[%c0_281, %c0_282] : memref<1x32xf32, #tpu.memory_space<vmem>>, vector<1x32xf32>
    %451 = vector.broadcast %450 : vector<1x32xf32> to vector<8x32xf32>
    %452 = arith.mulf %449, %451 : vector<8x32xf32>
    %c0_283 = arith.constant 0 : index
    %c0_284 = arith.constant 0 : index
    %453 = vector.load %arg24[%c0_283, %c0_284] : memref<1x32xf32, #tpu.memory_space<vmem>>, vector<1x32xf32>
    %454 = vector.broadcast %453 : vector<1x32xf32> to vector<8x32xf32>
    %455 = arith.addf %452, %454 : vector<8x32xf32>
    %c0_285 = arith.constant 0 : index
    %c0_286 = arith.constant 0 : index
    %c0_287 = arith.constant 0 : index
    %456 = vector.load %arg29[%c0_285, %c0_286, %c0_287] : memref<1x8x32xf32, #tpu.memory_space<vmem>>, vector<1x8x32xf32>
    %457 = vector.shape_cast %456 : vector<1x8x32xf32> to vector<8x32xf32>
    %458 = vector.shape_cast %455 : vector<8x32xf32> to vector<1x8x32xf32>
    tpu.vector_store %arg29[%c0_285, %c0_286, %c0_287], %458 {strides = array<i32>} : memref<1x8x32xf32, #tpu.memory_space<vmem>>, vector<1x8x32xf32>,
    return
  }
  func.func @transform_0(%arg0: i32) -> (i32, i32, i32) {
    %c0_i32 = arith.constant 0 : i32
    %c0_i32_0 = arith.constant 0 : i32
    %c0_i32_1 = arith.constant 0 : i32
    return %arg0, %c0_i32, %c0_i32_0 : i32, i32, i32
  }
  func.func @transform_1(%arg0: i32) -> (i32, i32, i32) {
    %c0_i32 = arith.constant 0 : i32
    %c0_i32_0 = arith.constant 0 : i32
    %c0_i32_1 = arith.constant 0 : i32
    return %arg0, %c0_i32, %c0_i32_0 : i32, i32, i32
  }
  func.func @transform_2(%arg0: i32) -> (i32, i32, i32) {
    %c0_i32 = arith.constant 0 : i32
    %c0_i32_0 = arith.constant 0 : i32
    %c0_i32_1 = arith.constant 0 : i32
    %c0_i32_2 = arith.constant 0 : i32
    return %c0_i32, %c0_i32_0, %c0_i32_1 : i32, i32, i32
  }
  func.func @transform_3(%arg0: i32) -> (i32, i32, i32) {
    %c0_i32 = arith.constant 0 : i32
    %c0_i32_0 = arith.constant 0 : i32
    %c0_i32_1 = arith.constant 0 : i32
    %c0_i32_2 = arith.constant 0 : i32
    return %c0_i32, %c0_i32_0, %c0_i32_1 : i32, i32, i32
  }
  func.func @transform_4(%arg0: i32) -> (i32, i32, i32) {
    %c0_i32 = arith.constant 0 : i32
    %c0_i32_0 = arith.constant 0 : i32
    %c0_i32_1 = arith.constant 0 : i32
    %c0_i32_2 = arith.constant 0 : i32
    return %c0_i32, %c0_i32_0, %c0_i32_1 : i32, i32, i32
  }
  func.func @transform_5(%arg0: i32) -> (i32, i32, i32) {
    %c0_i32 = arith.constant 0 : i32
    %c0_i32_0 = arith.constant 0 : i32
    %c0_i32_1 = arith.constant 0 : i32
    %c0_i32_2 = arith.constant 0 : i32
    return %c0_i32, %c0_i32_0, %c0_i32_1 : i32, i32, i32
  }
  func.func @transform_6(%arg0: i32) -> (i32, i32, i32) {
    %c0_i32 = arith.constant 0 : i32
    %c0_i32_0 = arith.constant 0 : i32
    %c0_i32_1 = arith.constant 0 : i32
    %c0_i32_2 = arith.constant 0 : i32
    return %c0_i32, %c0_i32_0, %c0_i32_1 : i32, i32, i32
  }
  func.func @transform_7(%arg0: i32) -> (i32, i32, i32) {
    %c0_i32 = arith.constant 0 : i32
    %c0_i32_0 = arith.constant 0 : i32
    %c0_i32_1 = arith.constant 0 : i32
    %c0_i32_2 = arith.constant 0 : i32
    return %c0_i32, %c0_i32_0, %c0_i32_1 : i32, i32, i32
  }
  func.func @transform_8(%arg0: i32) -> (i32, i32, i32) {
    %c0_i32 = arith.constant 0 : i32
    %c0_i32_0 = arith.constant 0 : i32
    %c0_i32_1 = arith.constant 0 : i32
    %c0_i32_2 = arith.constant 0 : i32
    return %c0_i32, %c0_i32_0, %c0_i32_1 : i32, i32, i32
  }
  func.func @transform_9(%arg0: i32) -> (i32, i32) {
    %c0_i32 = arith.constant 0 : i32
    %c0_i32_0 = arith.constant 0 : i32
    %c0_i32_1 = arith.constant 0 : i32
    return %c0_i32, %c0_i32_0 : i32, i32
  }
  func.func @transform_10(%arg0: i32) -> (i32, i32, i32) {
    %c0_i32 = arith.constant 0 : i32
    %c0_i32_0 = arith.constant 0 : i32
    %c0_i32_1 = arith.constant 0 : i32
    %c0_i32_2 = arith.constant 0 : i32
    return %c0_i32, %c0_i32_0, %c0_i32_1 : i32, i32, i32
  }
  func.func @transform_11(%arg0: i32) -> (i32, i32, i32) {
    %c0_i32 = arith.constant 0 : i32
    %c0_i32_0 = arith.constant 0 : i32
    %c0_i32_1 = arith.constant 0 : i32
    %c0_i32_2 = arith.constant 0 : i32
    return %c0_i32, %c0_i32_0, %c0_i32_1 : i32, i32, i32
  }
  func.func @transform_12(%arg0: i32) -> (i32, i32, i32) {
    %c0_i32 = arith.constant 0 : i32
    %c0_i32_0 = arith.constant 0 : i32
    %c0_i32_1 = arith.constant 0 : i32
    %c0_i32_2 = arith.constant 0 : i32
    return %c0_i32, %c0_i32_0, %c0_i32_1 : i32, i32, i32
  }
  func.func @transform_13(%arg0: i32) -> (i32, i32, i32) {
    %c0_i32 = arith.constant 0 : i32
    %c0_i32_0 = arith.constant 0 : i32
    %c0_i32_1 = arith.constant 0 : i32
    %c0_i32_2 = arith.constant 0 : i32
    return %c0_i32, %c0_i32_0, %c0_i32_1 : i32, i32, i32
  }
  func.func @transform_14(%arg0: i32) -> (i32, i32, i32) {
    %c0_i32 = arith.constant 0 : i32
    %c0_i32_0 = arith.constant 0 : i32
    %c0_i32_1 = arith.constant 0 : i32
    %c0_i32_2 = arith.constant 0 : i32
    return %c0_i32, %c0_i32_0, %c0_i32_1 : i32, i32, i32
  }
  func.func @transform_15(%arg0: i32) -> (i32, i32, i32) {
    %c0_i32 = arith.constant 0 : i32
    %c0_i32_0 = arith.constant 0 : i32
    %c0_i32_1 = arith.constant 0 : i32
    %c0_i32_2 = arith.constant 0 : i32
    return %c0_i32, %c0_i32_0, %c0_i32_1 : i32, i32, i32
  }
  func.func @transform_16(%arg0: i32) -> (i32, i32, i32) {
    %c0_i32 = arith.constant 0 : i32
    %c0_i32_0 = arith.constant 0 : i32
    %c0_i32_1 = arith.constant 0 : i32
    %c0_i32_2 = arith.constant 0 : i32
    return %c0_i32, %c0_i32_0, %c0_i32_1 : i32, i32, i32
  }
  func.func @transform_17(%arg0: i32) -> (i32, i32) {
    %c0_i32 = arith.constant 0 : i32
    %c0_i32_0 = arith.constant 0 : i32
    %c0_i32_1 = arith.constant 0 : i32
    return %c0_i32, %c0_i32_0 : i32, i32
  }
  func.func @transform_18(%arg0: i32) -> (i32, i32) {
    %c0_i32 = arith.constant 0 : i32
    %c0_i32_0 = arith.constant 0 : i32
    %c0_i32_1 = arith.constant 0 : i32
    return %c0_i32, %c0_i32_0 : i32, i32
  }
  func.func @transform_19(%arg0: i32) -> (i32, i32) {
    %c0_i32 = arith.constant 0 : i32
    %c0_i32_0 = arith.constant 0 : i32
    %c0_i32_1 = arith.constant 0 : i32
    return %c0_i32, %c0_i32_0 : i32, i32
  }
  func.func @transform_20(%arg0: i32) -> (i32, i32) {
    %c0_i32 = arith.constant 0 : i32
    %c0_i32_0 = arith.constant 0 : i32
    %c0_i32_1 = arith.constant 0 : i32
    return %c0_i32, %c0_i32_0 : i32, i32
  }
  func.func @transform_21(%arg0: i32) -> (i32, i32) {
    %c0_i32 = arith.constant 0 : i32
    %c0_i32_0 = arith.constant 0 : i32
    %c0_i32_1 = arith.constant 0 : i32
    return %c0_i32, %c0_i32_0 : i32, i32
  }
  func.func @transform_22(%arg0: i32) -> (i32, i32) {
    %c0_i32 = arith.constant 0 : i32
    %c0_i32_0 = arith.constant 0 : i32
    %c0_i32_1 = arith.constant 0 : i32
    return %c0_i32, %c0_i32_0 : i32, i32
  }
  func.func @transform_23(%arg0: i32) -> (i32, i32) {
    %c0_i32 = arith.constant 0 : i32
    %c0_i32_0 = arith.constant 0 : i32
    %c0_i32_1 = arith.constant 0 : i32
    return %c0_i32, %c0_i32_0 : i32, i32
  }
  func.func @transform_24(%arg0: i32) -> (i32, i32) {
    %c0_i32 = arith.constant 0 : i32
    %c0_i32_0 = arith.constant 0 : i32
    %c0_i32_1 = arith.constant 0 : i32
    return %c0_i32, %c0_i32_0 : i32, i32
  }
  func.func @transform_25(%arg0: i32) -> (i32, i32) {
    %c0_i32 = arith.constant 0 : i32
    %c0_i32_0 = arith.constant 0 : i32
    %c0_i32_1 = arith.constant 0 : i32
    return %c0_i32, %c0_i32_0 : i32, i32
  }
  func.func @transform_26(%arg0: i32) -> (i32, i32) {
    %c0_i32 = arith.constant 0 : i32
    %c0_i32_0 = arith.constant 0 : i32
    %c0_i32_1 = arith.constant 0 : i32
    return %c0_i32, %c0_i32_0 : i32, i32
  }
  func.func @transform_27(%arg0: i32) -> (i32, i32) {
    %c0_i32 = arith.constant 0 : i32
    %c0_i32_0 = arith.constant 0 : i32
    %c0_i32_1 = arith.constant 0 : i32
    return %c0_i32, %c0_i32_0 : i32, i32
  }
  func.func @transform_28(%arg0: i32) -> (i32, i32, i32) {
    %c0_i32 = arith.constant 0 : i32
    %c0_i32_0 = arith.constant 0 : i32
    %c0_i32_1 = arith.constant 0 : i32
    return %arg0, %c0_i32, %c0_i32_0 : i32, i32, i32
  }
}

</mosaic_0001>

<llo_original>
// kernel: custom_transformer_forward.8
$region0: #{custom_transformer_forward.8}
  #allocation0 [shape = 'u32[]', space=smem, size = 0x4, offset = 0x4, fixed_abs, tag = 'smem constant byte address 0x4 - core index']
  #allocation1 [shape = 'u32[144,128]{1,0:T(1,128)}', space=vmem, size = 0x12000, scoped, tag = 'internal scratch']
  %s0 = inlined_call_operand.vmem [shape: f32[2,8,32], index: 0, kind: input, shape index: {}]
  %s1 = inlined_call_operand.vmem [shape: f32[1,32], index: 1, kind: input, shape index: {}]
  %s2 = inlined_call_operand.vmem [shape: f32[1,32], index: 2, kind: input, shape index: {}]
  %s3 = inlined_call_operand.vmem [shape: f32[2,8,32], index: 3, kind: output, shape index: {}]
  %s4 = sld [smem:[#allocation0]]
  $region45: #{custom_transformer_forward.8} parent=0
    _
  %s6 = ssub.s32 1, %s4
  %s7 = scalar_select 0, %s6, %s4
  loop: start=0, step=1, limit=4
  $region2: #{custom_transformer_forward.8} parent=0 // loop_pre_header
    _
  $region3: #{custom_transformer_forward.8} parent=0 // loop_header
    %s9 = sphi 0, %s13
    %p10 = scmp.ge.s32.totalorder %s9, 4
    %s19 = sphi 0, %s21
    %s22 = sphi 0, %s19
    %s23 = sphi 0, %s22
    %s39 = sphi 0, %s23
    %s43 = sphi 0, %s43
    %s45 = sphi 0, %s43
    %s46 = sphi 0, %s45
    %s60 = sphi 0, %s46
    %s64 = sphi 0, %s64
    %s66 = sphi 0, %s64
    %s67 = sphi 0, %s66
    %s81 = sphi 0, %s67
    %s87 = sphi 0, %s89
    %s90 = sphi 0, %s87
    %s91 = sphi 0, %s90
    %s107 = sphi 0, %s91
  $region4: #{custom_transformer_forward.8} parent=0 // loop_header_branch
    %12 = sbr.rel (%p10) target = $region8
  $region5: #{custom_transformer_forward.8} parent=0 // loop_body
    %s14 = ssub.s32 %s9, 1
    %s15 = ssub.s32 %s9, 2
    %s16 = sadd.s32 %s9, 1
    %s17 = ssub.s32 %s9, %s16
    %p18 = scmp.eq.s32.totalorder %s17, 0
    %s20 = sadd.s32 %s19, 1
    %s21 = scalar_select %p18, %s19, %s20
    %p24 = pneg %p18
    %p25 = scmp.eq.s32.totalorder %s9, 1
    %p26 = por %p24, %p25
    %p27 = scmp.ne.s32.totalorder %s19, %s22
    %p28 = scmp.eq.s32.totalorder %s9, 0
    %p29 = por %p27, %p28
    %p30 = scmp.ne.s32.totalorder %s19, %s22
    %p31 = scmp.eq.s32.totalorder %s14, 1
    %p32 = por %p30, %p31
    %p33 = scmp.ne.s32.totalorder %s22, %s23
    %p34 = scmp.eq.s32.totalorder %s14, 0
    %p35 = por %p33, %p34
    %p36 = scmp.ne.s32.totalorder %s22, %s23
    %p37 = scmp.eq.s32.totalorder %s15, 1
    %p38 = por %p36, %p37
    %p40 = scmp.ne.s32.totalorder %s23, %s39
    %p41 = scmp.eq.s32.totalorder %s15, 0
    %p42 = por %p40, %p41
    %s44 = sadd.s32 %s43, 1
    %p47 = scmp.eq.s32.totalorder %s9, 1
    %p48 = scmp.ne.s32.totalorder %s43, %s45
    %p49 = scmp.eq.s32.totalorder %s9, 0
    %p50 = por %p48, %p49
    %p51 = scmp.ne.s32.totalorder %s43, %s45
    %p52 = scmp.eq.s32.totalorder %s14, 1
    %p53 = por %p51, %p52
    %p54 = scmp.ne.s32.totalorder %s45, %s46
    %p55 = scmp.eq.s32.totalorder %s14, 0
    %p56 = por %p54, %p55
    %p57 = scmp.ne.s32.totalorder %s45, %s46
    %p58 = scmp.eq.s32.totalorder %s15, 1
    %p59 = por %p57, %p58
    %p61 = scmp.ne.s32.totalorder %s46, %s60
    %p62 = scmp.eq.s32.totalorder %s15, 0
    %p63 = por %p61, %p62
    %s65 = sadd.s32 %s64, 1
    %p68 = scmp.eq.s32.totalorder %s9, 1
    %p69 = scmp.ne.s32.totalorder %s64, %s66
    %p70 = scmp.eq.s32.totalorder %s9, 0
    %p71 = por %p69, %p70
    %p72 = scmp.ne.s32.totalorder %s64, %s66
    %p73 = scmp.eq.s32.totalorder %s14, 1
    %p74 = por %p72, %p73
    %p75 = scmp.ne.s32.totalorder %s66, %s67
    %p76 = scmp.eq.s32.totalorder %s14, 0
    %p77 = por %p75, %p76
    %p78 = scmp.ne.s32.totalorder %s66, %s67
    %p79 = scmp.eq.s32.totalorder %s15, 1
    %p80 = por %p78, %p79
    %p82 = scmp.ne.s32.totalorder %s67, %s81
    %p83 = scmp.eq.s32.totalorder %s15, 0
    %p84 = por %p82, %p83
    %s85 = ssub.s32 %s9, %s16
    %p86 = scmp.eq.s32.totalorder %s85, 0
    %s88 = sadd.s32 %s87, 1
    %s89 = scalar_select %p86, %s87, %s88
    %p92 = pneg %p86
    %p93 = scmp.eq.s32.totalorder %s9, 1
    %p94 = por %p92, %p93
    %p95 = scmp.ne.s32.totalorder %s87, %s90
    %p96 = scmp.eq.s32.totalorder %s9, 0
    %p97 = por %p95, %p96
    %p98 = scmp.ne.s32.totalorder %s87, %s90
    %p99 = scmp.eq.s32.totalorder %s14, 1
    %p100 = por %p98, %p99
    %p101 = scmp.ne.s32.totalorder %s90, %s91
    %p102 = scmp.eq.s32.totalorder %s14, 0
    %p103 = por %p101, %p102
    %p104 = scmp.ne.s32.totalorder %s90, %s91
    %p105 = scmp.eq.s32.totalorder %s15, 1
    %p106 = por %p104, %p105
    %p108 = scmp.ne.s32.totalorder %s91, %s107
    %p109 = scmp.eq.s32.totalorder %s15, 0
    %p110 = por %p108, %p109
    %p111 = scmp.le.s32.totalorder 1, %s9
    %p112 = scmp.lt.s32.totalorder %s9, 3
    %p113 = pnand %p111, %p112
    %p114 = pneg %p113
    // Predicated region
    $region9: #{custom_transformer_forward.8} parent=5 // pred_check
      _
    $region10: #{custom_transformer_forward.8} parent=5 // pred_check_branch
      %116 = sbr.rel (%p113) target = $region12
    $region11: #{custom_transformer_forward.8} parent=5 // pred_region
      %s117 = ssub.s32 %s9, 1
      // Predicated region
      $region13: #{custom_transformer_forward.8} parent=11 // pred_check
        %p118 = pneg %p56
      $region14: #{custom_transformer_forward.8} parent=11 // pred_check_branch
        %120 = sbr.rel (%p118) target = $region16
      $region15: #{custom_transformer_forward.8} parent=11 // pred_region
        _
      $region16: #{custom_transformer_forward.8} parent=11 // pred_fallthru
        _
      // Predicated region
      $region17: #{custom_transformer_forward.8} parent=11 // pred_check
        %p121 = pneg %p77
      $region18: #{custom_transformer_forward.8} parent=11 // pred_check_branch
        %123 = sbr.rel (%p121) target = $region20
      $region19: #{custom_transformer_forward.8} parent=11 // pred_region
        _
      $region20: #{custom_transformer_forward.8} parent=11 // pred_fallthru
        _
    $region12: #{custom_transformer_forward.8} parent=5 // pred_fallthru
      _
    %p124 = scmp.lt.s32.totalorder %s9, 2
    // Predicated region
    $region21: #{custom_transformer_forward.8} parent=5 // pred_check
      %p125 = pneg %p124
    $region22: #{custom_transformer_forward.8} parent=5 // pred_check_branch
      %127 = sbr.rel (%p125) target = $region24
    $region23: #{custom_transformer_forward.8} parent=5 // pred_region
      // Predicated region
      $region25: #{custom_transformer_forward.8} parent=23 // pred_check
        %p128 = pneg %p29
      $region26: #{custom_transformer_forward.8} parent=23 // pred_check_branch
        %130 = sbr.rel (%p128) target = $region28
      $region27: #{custom_transformer_forward.8} parent=23 // pred_region
        %p131 = scmp.lt.s32.totalorder %s9, 1
        %s132 = scalar_select %p131, %s9, 1
        %s133 = smul.addr %s132, 8
        %s134 = scalar_lea.vmem %s0, %s133
      $region28: #{custom_transformer_forward.8} parent=23 // pred_fallthru
        _
    $region24: #{custom_transformer_forward.8} parent=5 // pred_fallthru
      _
    %p135 = scmp.le.s32.totalorder 1, %s9
    %p136 = scmp.lt.s32.totalorder %s9, 3
    %p137 = pnand %p135, %p136
    %p138 = pneg %p137
    // Predicated region
    $region29: #{custom_transformer_forward.8} parent=5 // pred_check
      _
    $region30: #{custom_transformer_forward.8} parent=5 // pred_check_branch
      %140 = sbr.rel (%p137) target = $region32
    $region31: #{custom_transformer_forward.8} parent=5 // pred_region
      %s141 = ssub.s32 %s9, 1
      %p142 = scmp.lt.s32.totalorder %s14, 1
      %s143 = scalar_select %p142, %s14, 1
      %s144 = smul.addr %s143, 8
      %s145 = scalar_lea.vmem %s0, %s144
      %p146 = pneg %p35
      %p147 = pneg %p32
      %p148 = pneg %p56
      %p149 = pneg %p53
      %p150 = pneg %p77
      %p151 = pneg %p74
      %p152 = pneg %p103
      %p153 = pneg %p100
      %p154 = scmp.lt.s32.totalorder %s14, 1
      %s155 = scalar_select %p154, %s14, 1
      %s156 = smul.addr %s155, 8
      %s157 = scalar_lea.vmem %s3, %s156
      %p158 = scmp.lt.s32.totalorder %s14, 1
      %s159 = scalar_select %p158, %s14, 1
      %s160 = smul.addr %s159, 8
      %s161 = scalar_lea.vmem %s0, %s160
      %p162 = scmp.lt.s32.totalorder %s14, 1
      %s163 = scalar_select %p162, %s14, 1
      %s164 = smul.addr %s163, 8
      %s165 = scalar_lea.vmem %s3, %s164
      %v166 = vld [vmem:[%s161] sm:$0xff]
      %vm167 = vcmask 261120
      %v168 = vsel %vm167, %v166, 0.0
      %169 = vadd.xlane.f32.xlu0 %v168
      %v170 = vpop.xlane.xlu0 %169
      %v171 = vrcp.pop 32.0
      %v172 = vmul.f32 %v170, %v171
      %v173 = vsub.f32 %v166, %v172
      %v174 = vmul.f32 %v173, %v173
      %v175 = vsel %vm167, %v174, 0.0
      %176 = vadd.xlane.f32.xlu0 %v175
      %v177 = vpop.xlane.xlu0 %176
      %v178 = vmul.f32 %v177, %v171
      %v179 = vadd.f32 %v178, 1e-05
      %v180 = vrsqrt.pop %v179
      %v181 = vmul.f32 %v173, %v180
      %v182 = vld [vmem:[%s1] sm:$0x1]
      %v184 = vlaneseq
      %v185 = vshrl.u32 %v184, 7
      %v186 = vsub.s32 0, %v185
      %v187 = vrot.slane %v182, %v186
      %v189 = vmul.f32 %v181, %v187
      %v190 = vld [vmem:[%s2] sm:$0x1]
      %v192 = vlaneseq
      %v193 = vshrl.u32 %v192, 7
      %v194 = vsub.s32 0, %v193
      %v195 = vrot.slane %v190, %v194
      %v197 = vadd.f32 %v189, %v195
      %198 = vst.msk [vmem:[%s165] sm:$0xff] %vm167, %v197
      %p199 = scmp.lt.s32.totalorder %s14, 1
      %s200 = scalar_select %p199, %s14, 1
      %s201 = smul.addr %s200, 8
      %s202 = scalar_lea.vmem %s3, %s201
      // Predicated region
      $region33: #{custom_transformer_forward.8} parent=31 // pred_check
        %p203 = pneg %p100
      $region34: #{custom_transformer_forward.8} parent=31 // pred_check_branch
        %205 = sbr.rel (%p203) target = $region36
      $region35: #{custom_transformer_forward.8} parent=31 // pred_region
        _
      $region36: #{custom_transformer_forward.8} parent=31 // pred_fallthru
        _
    $region32: #{custom_transformer_forward.8} parent=5 // pred_fallthru
      _
    %p206 = scmp.le.s32.totalorder 2, %s9
    // Predicated region
    $region37: #{custom_transformer_forward.8} parent=5 // pred_check
      %p207 = pneg %p206
    $region38: #{custom_transformer_forward.8} parent=5 // pred_check_branch
      %209 = sbr.rel (%p207) target = $region40
    $region39: #{custom_transformer_forward.8} parent=5 // pred_region
      %s210 = ssub.s32 %s9, 2
      // Predicated region
      $region41: #{custom_transformer_forward.8} parent=39 // pred_check
        %p211 = pneg %p106
      $region42: #{custom_transformer_forward.8} parent=39 // pred_check_branch
        %213 = sbr.rel (%p211) target = $region44
      $region43: #{custom_transformer_forward.8} parent=39 // pred_region
        %p214 = scmp.lt.s32.totalorder %s15, 1
        %s215 = scalar_select %p214, %s15, 1
        %s216 = smul.addr %s215, 8
        %s217 = scalar_lea.vmem %s3, %s216
      $region44: #{custom_transformer_forward.8} parent=39 // pred_fallthru
        _
    $region40: #{custom_transformer_forward.8} parent=5 // pred_fallthru
      _
  $region6: #{custom_transformer_forward.8} parent=0 // loop_footer
    %s13 = sadd.s32 1, %s9
  $region7: #{custom_transformer_forward.8} parent=0 // loop_footer_branch
    %8 = sbr.rel target = $region3
  $region8: #{custom_transformer_forward.8} parent=0 // loop_exit
    _

// kernel: custom_transformer_forward.11
$region0: #{custom_transformer_forward.11}
  #allocation0 [shape = 'u32[]', space=smem, size = 0x4, offset = 0x4, fixed_abs, tag = 'smem constant byte address 0x4 - core index']
  #allocation1 [shape = 'u32[144,128]{1,0:T(1,128)}', space=vmem, size = 0x12000, scoped, tag = 'internal scratch']
  %s0 = inlined_call_operand.vmem [shape: f32[2,8,32], index: 0, kind: input, shape index: {}]
  %s1 = inlined_call_operand.vmem [shape: f32[1,32], index: 1, kind: input, shape index: {}]
  %s2 = inlined_call_operand.vmem [shape: f32[1,32], index: 2, kind: input, shape index: {}]
  %s3 = inlined_call_operand.vmem [shape: bf16[32,16], index: 3, kind: input, shape index: {}]
  %s4 = inlined_call_operand.vmem [shape: f32[1,16], index: 4, kind: input, shape index: {}]
  %s5 = inlined_call_operand.hbm [shape: f32[2,8,16], index: 5, kind: output, shape index: {}]
  %s6 = sld [smem:[#allocation0]]
  $region53: #{custom_transformer_forward.11} parent=0
    _
  %s8 = ssub.s32 1, %s6
  %s9 = scalar_select 0, %s8, %s6
  $region1: #{custom_transformer_forward.11} parent=0
    #allocation2 [shape = 'u8[8192]{0}', space=vmem, size = 0x2000, scoped, tag = 'output window, operand 0']
    #allocation3 [shape = 's32[2]{0}', space=sflag, size = 0x8, scoped, tag = 'scoped memory for custom_transformer_forward.11']
    %10 = vsyncpa [#allocation3], 0
    %s11 = scalar_lea.sflag [#allocation3], 1
    %12 = vsyncpa %s11, 0
    loop: start=0, step=1, limit=4
    $region2: #{custom_transformer_forward.11} parent=1 // loop_pre_header
      _
    $region3: #{custom_transformer_forward.11} parent=1 // loop_header
      %s14 = sphi 0, %s18
      %p15 = scmp.ge.s32.totalorder %s14, 4
      %s24 = sphi 0, %s26
      %s27 = sphi 0, %s24
      %s28 = sphi 0, %s27
      %s44 = sphi 0, %s28
      %s48 = sphi 0, %s48
      %s50 = sphi 0, %s48
      %s51 = sphi 0, %s50
      %s65 = sphi 0, %s51
      %s69 = sphi 0, %s69
      %s71 = sphi 0, %s69
      %s72 = sphi 0, %s71
      %s86 = sphi 0, %s72
      %s90 = sphi 0, %s90
      %s92 = sphi 0, %s90
      %s93 = sphi 0, %s92
      %s107 = sphi 0, %s93
      %s111 = sphi 0, %s111
      %s113 = sphi 0, %s111
      %s114 = sphi 0, %s113
      %s128 = sphi 0, %s114
      %s134 = sphi 0, %s136
      %s137 = sphi 0, %s134
      %s138 = sphi 0, %s137
      %s154 = sphi 0, %s138
    $region4: #{custom_transformer_forward.11} parent=1 // loop_header_branch
      %17 = sbr.rel (%p15) target = $region8
    $region5: #{custom_transformer_forward.11} parent=1 // loop_body
      %s19 = ssub.s32 %s14, 1
      %s20 = ssub.s32 %s14, 2
      %s21 = sadd.s32 %s14, 1
      %s22 = ssub.s32 %s14, %s21
      %p23 = scmp.eq.s32.totalorder %s22, 0
      %s25 = sadd.s32 %s24, 1
      %s26 = scalar_select %p23, %s24, %s25
      %p29 = pneg %p23
      %p30 = scmp.eq.s32.totalorder %s14, 1
      %p31 = por %p29, %p30
      %p32 = scmp.ne.s32.totalorder %s24, %s27
      %p33 = scmp.eq.s32.totalorder %s14, 0
      %p34 = por %p32, %p33
      %p35 = scmp.ne.s32.totalorder %s24, %s27
      %p36 = scmp.eq.s32.totalorder %s19, 1
      %p37 = por %p35, %p36
      %p38 = scmp.ne.s32.totalorder %s27, %s28
      %p39 = scmp.eq.s32.totalorder %s19, 0
      %p40 = por %p38, %p39
      %p41 = scmp.ne.s32.totalorder %s27, %s28
      %p42 = scmp.eq.s32.totalorder %s20, 1
      %p43 = por %p41, %p42
      %p45 = scmp.ne.s32.totalorder %s28, %s44
      %p46 = scmp.eq.s32.totalorder %s20, 0
      %p47 = por %p45, %p46
      %s49 = sadd.s32 %s48, 1
      %p52 = scmp.eq.s32.totalorder %s14, 1
      %p53 = scmp.ne.s32.totalorder %s48, %s50
      %p54 = scmp.eq.s32.totalorder %s14, 0
      %p55 = por %p53, %p54
      %p56 = scmp.ne.s32.totalorder %s48, %s50
      %p57 = scmp.eq.s32.totalorder %s19, 1
      %p58 = por %p56, %p57
      %p59 = scmp.ne.s32.totalorder %s50, %s51
      %p60 = scmp.eq.s32.totalorder %s19, 0
      %p61 = por %p59, %p60
      %p62 = scmp.ne.s32.totalorder %s50, %s51
      %p63 = scmp.eq.s32.totalorder %s20, 1
      %p64 = por %p62, %p63
      %p66 = scmp.ne.s32.totalorder %s51, %s65
      %p67 = scmp.eq.s32.totalorder %s20, 0
      %p68 = por %p66, %p67
      %s70 = sadd.s32 %s69, 1
      %p73 = scmp.eq.s32.totalorder %s14, 1
      %p74 = scmp.ne.s32.totalorder %s69, %s71
      %p75 = scmp.eq.s32.totalorder %s14, 0
      %p76 = por %p74, %p75
      %p77 = scmp.ne.s32.totalorder %s69, %s71
      %p78 = scmp.eq.s32.totalorder %s19, 1
      %p79 = por %p77, %p78
      %p80 = scmp.ne.s32.totalorder %s71, %s72
      %p81 = scmp.eq.s32.totalorder %s19, 0
      %p82 = por %p80, %p81
      %p83 = scmp.ne.s32.totalorder %s71, %s72
      %p84 = scmp.eq.s32.totalorder %s20, 1
      %p85 = por %p83, %p84
      %p87 = scmp.ne.s32.totalorder %s72, %s86
      %p88 = scmp.eq.s32.totalorder %s20, 0
      %p89 = por %p87, %p88
      %s91 = sadd.s32 %s90, 1
      %p94 = scmp.eq.s32.totalorder %s14, 1
      %p95 = scmp.ne.s32.totalorder %s90, %s92
      %p96 = scmp.eq.s32.totalorder %s14, 0
      %p97 = por %p95, %p96
      %p98 = scmp.ne.s32.totalorder %s90, %s92
      %p99 = scmp.eq.s32.totalorder %s19, 1
      %p100 = por %p98, %p99
      %p101 = scmp.ne.s32.totalorder %s92, %s93
      %p102 = scmp.eq.s32.totalorder %s19, 0
      %p103 = por %p101, %p102
      %p104 = scmp.ne.s32.totalorder %s92, %s93
      %p105 = scmp.eq.s32.totalorder %s20, 1
      %p106 = por %p104, %p105
      %p108 = scmp.ne.s32.totalorder %s93, %s107
      %p109 = scmp.eq.s32.totalorder %s20, 0
      %p110 = por %p108, %p109
      %s112 = sadd.s32 %s111, 1
      %p115 = scmp.eq.s32.totalorder %s14, 1
      %p116 = scmp.ne.s32.totalorder %s111, %s113
      %p117 = scmp.eq.s32.totalorder %s14, 0
      %p118 = por %p116, %p117
      %p119 = scmp.ne.s32.totalorder %s111, %s113
      %p120 = scmp.eq.s32.totalorder %s19, 1
      %p121 = por %p119, %p120
      %p122 = scmp.ne.s32.totalorder %s113, %s114
      %p123 = scmp.eq.s32.totalorder %s19, 0
      %p124 = por %p122, %p123
      %p125 = scmp.ne.s32.totalorder %s113, %s114
      %p126 = scmp.eq.s32.totalorder %s20, 1
      %p127 = por %p125, %p126
      %p129 = scmp.ne.s32.totalorder %s114, %s128
      %p130 = scmp.eq.s32.totalorder %s20, 0
      %p131 = por %p129, %p130
      %s132 = ssub.s32 %s14, %s21
      %p133 = scmp.eq.s32.totalorder %s132, 0
      %s135 = sadd.s32 %s134, 1
      %s136 = scalar_select %p133, %s134, %s135
      %p139 = pneg %p133
      %p140 = scmp.eq.s32.totalorder %s14, 1
      %p141 = por %p139, %p140
      %p142 = scmp.ne.s32.totalorder %s134, %s137
      %p143 = scmp.eq.s32.totalorder %s14, 0
      %p144 = por %p142, %p143
      %p145 = scmp.ne.s32.totalorder %s134, %s137
      %p146 = scmp.eq.s32.totalorder %s19, 1
      %p147 = por %p145, %p146
      %p148 = scmp.ne.s32.totalorder %s137, %s138
      %p149 = scmp.eq.s32.totalorder %s19, 0
      %p150 = por %p148, %p149
      %p151 = scmp.ne.s32.totalorder %s137, %s138
      %p152 = scmp.eq.s32.totalorder %s20, 1
      %p153 = por %p151, %p152
      %p155 = scmp.ne.s32.totalorder %s138, %s154
      %p156 = scmp.eq.s32.totalorder %s20, 0
      %p157 = por %p155, %p156
      %p158 = scmp.le.s32.totalorder 1, %s14
      %p159 = scmp.lt.s32.totalorder %s14, 3
      %p160 = pnand %p158, %p159
      %p161 = pneg %p160
      // Predicated region
      $region9: #{custom_transformer_forward.11} parent=5 // pred_check
        _
      $region10: #{custom_transformer_forward.11} parent=5 // pred_check_branch
        %163 = sbr.rel (%p160) target = $region12
      $region11: #{custom_transformer_forward.11} parent=5 // pred_region
        %s164 = ssub.s32 %s14, 1
        // Predicated region
        $region13: #{custom_transformer_forward.11} parent=11 // pred_check
          %p165 = pneg %p61
        $region14: #{custom_transformer_forward.11} parent=11 // pred_check_branch
          %167 = sbr.rel (%p165) target = $region16
        $region15: #{custom_transformer_forward.11} parent=11 // pred_region
          _
        $region16: #{custom_transformer_forward.11} parent=11 // pred_fallthru
          _
        // Predicated region
        $region17: #{custom_transformer_forward.11} parent=11 // pred_check
          %p168 = pneg %p82
        $region18: #{custom_transformer_forward.11} parent=11 // pred_check_branch
          %170 = sbr.rel (%p168) target = $region20
        $region19: #{custom_transformer_forward.11} parent=11 // pred_region
          _
        $region20: #{custom_transformer_forward.11} parent=11 // pred_fallthru
          _
        // Predicated region
        $region21: #{custom_transformer_forward.11} parent=11 // pred_check
          %p171 = pneg %p103
        $region22: #{custom_transformer_forward.11} parent=11 // pred_check_branch
          %173 = sbr.rel (%p171) target = $region24
        $region23: #{custom_transformer_forward.11} parent=11 // pred_region
          _
        $region24: #{custom_transformer_forward.11} parent=11 // pred_fallthru
          _
        // Predicated region
        $region25: #{custom_transformer_forward.11} parent=11 // pred_check
          %p174 = pneg %p124
        $region26: #{custom_transformer_forward.11} parent=11 // pred_check_branch
          %176 = sbr.rel (%p174) target = $region28
        $region27: #{custom_transformer_forward.11} parent=11 // pred_region
          _
        $region28: #{custom_transformer_forward.11} parent=11 // pred_fallthru
          _
      $region12: #{custom_transformer_forward.11} parent=5 // pred_fallthru
        _
      %p177 = scmp.lt.s32.totalorder %s14, 2
      // Predicated region
      $region29: #{custom_transformer_forward.11} parent=5 // pred_check
        %p178 = pneg %p177
      $region30: #{custom_transformer_forward.11} parent=5 // pred_check_branch
        %180 = sbr.rel (%p178) target = $region32
      $region31: #{custom_transformer_forward.11} parent=5 // pred_region
        // Predicated region
        $region33: #{custom_transformer_forward.11} parent=31 // pred_check
          %p181 = pneg %p34
        $region34: #{custom_transformer_forward.11} parent=31 // pred_check_branch
          %183 = sbr.rel (%p181) target = $region36
        $region35: #{custom_transformer_forward.11} parent=31 // pred_region
          %p184 = scmp.lt.s32.totalorder %s14, 1
          %s185 = scalar_select %p184, %s14, 1
          %s186 = smul.addr %s185, 8
          %s187 = scalar_lea.vmem %s0, %s186
        $region36: #{custom_transformer_forward.11} parent=31 // pred_fallthru
          _
      $region32: #{custom_transformer_forward.11} parent=5 // pred_fallthru
        _
      %p188 = scmp.le.s32.totalorder 1, %s14
      %p189 = scmp.lt.s32.totalorder %s14, 3
      %p190 = pnand %p188, %p189
      %p191 = pneg %p190
      // Predicated region
      $region37: #{custom_transformer_forward.11} parent=5 // pred_check
        _
      $region38: #{custom_transformer_forward.11} parent=5 // pred_check_branch
        %193 = sbr.rel (%p190) target = $region40
      $region39: #{custom_transformer_forward.11} parent=5 // pred_region
        %s194 = ssub.s32 %s14, 1
        %p195 = scmp.lt.s32.totalorder %s19, 1
        %s196 = scalar_select %p195, %s19, 1
        %s197 = smul.addr %s196, 8
        %s198 = scalar_lea.vmem %s0, %s197
        %p199 = pneg %p40
        %p200 = pneg %p37
        %p201 = pneg %p61
        %p202 = pneg %p58
        %p203 = pneg %p82
        %p204 = pneg %p79
        %p205 = pneg %p103
        %p206 = pneg %p100
        %p207 = pneg %p124
        %p208 = pneg %p121
        %p209 = pneg %p150
        %p210 = pneg %p147
        %s211 = sand.u32 %s137, 1
        %s212 = scalar_lea.sflag [#allocation3], %s211
        %s213 = sand.u32 %s137, 1
        %s214 = smul.addr %s213, 8
        %s215 = scalar_lea.vmem [#allocation2], %s214
        %p216 = scmp.lt.s32.totalorder %s19, 1
        %s217 = scalar_select %p216, %s19, 1
        %s218 = smul.addr %s217, 8
        %s219 = scalar_lea.vmem %s0, %s218
        %v221 = vld [vmem:[%s219] sm:$0xff]
        %vm222 = vcmask 261120
        %v223 = vsel %vm222, %v221, 0.0
        %224 = vadd.xlane.f32.xlu0 %v223
        %v225 = vpop.xlane.xlu0 %224
        %v226 = vrcp.pop 32.0
        %v227 = vmul.f32 %v225, %v226
        %v228 = vsub.f32 %v221, %v227
        %v229 = vmul.f32 %v228, %v228
        %v230 = vsel %vm222, %v229, 0.0
        %231 = vadd.xlane.f32.xlu0 %v230
        %v232 = vpop.xlane.xlu0 %231
        %v233 = vmul.f32 %v232, %v226
        %v234 = vadd.f32 %v233, 1e-05
        %v235 = vrsqrt.pop %v234
        %v236 = vmul.f32 %v228, %v235
        %v237 = vld [vmem:[%s1] sm:$0x1]
        %v239 = vlaneseq
        %v240 = vshrl.u32 %v239, 7
        %v241 = vsub.s32 0, %v240
        %v242 = vrot.slane %v237, %v241
        %v244 = vmul.f32 %v236, %v242
        %v245 = vld [vmem:[%s2] sm:$0x1]
        %v247 = vlaneseq
        %v248 = vshrl.u32 %v247, 7
        %v249 = vsub.s32 0, %v248
        %v250 = vrot.slane %v245, %v249
        %v252 = vadd.f32 %v244, %v250
        %v253 = vpack.c.bf16 %v252, %v252
        %v254 = vld [vmem:[%s3] sm:$0xf]
        %v255 = vld [vmem:[%s3 + $0x4] sm:$0xf]
        %v256 = vld [vmem:[%s3 + $0x8] sm:$0xf]
        %v257 = vld [vmem:[%s3 + $0xc] sm:$0xf]
        %v258 = vld [vmem:[%s4] sm:$0x1]
        %v260 = vlaneseq
        %v261 = vshrl.u32 %v260, 7
        %v262 = vsub.s32 0, %v261
        %v263 = vrot.slane %v258, %v262
        %v269 = vunpack.c.l.b16 %v254
        %v270 = vunpack.c.l.b16 %v255
        %v271 = vunpack.c.l.b16 %v256
        %v272 = vunpack.c.l.b16 %v257
        %v273 = vpack.c.b16 %v270, %v269
        %v274 = vpack.c.b16 %v272, %v271
        %v278 = vsel %vm222, %v253, 0
        %280 = vmatprep.subr.bf16.mxu0 0
        %281 = vmatpush1.bf16.msra.mxu0 0
        %282 = vmatprep.subr.bf16.mxu0 0
        %283 = vmatpush1.bf16.msra.mxu0 0
        %284 = vmatprep.subr.bf16.mxu0 0
        %285 = vmatpush1.bf16.msra.mxu0 0
        %286 = vmatprep.subr.bf16.mxu0 0
        %287 = vmatpush1.bf16.msra.mxu0 0
        %288 = vmatprep.subr.bf16.mxu0 0
        %289 = vmatpush1.bf16.msra.mxu0 0
        %290 = vmatprep.subr.bf16.mxu0 0
        %291 = vmatpush1.bf16.msra.mxu0 0
        %292 = vmatprep.subr.bf16.mxu0 0
        %293 = vmatpush1.bf16.msra.mxu0 %v274
        %294 = vmatprep.subr.bf16.mxu0 0
        %295 = vmatpush1.bf16.msra.mxu0 %v273
        %296 = vmatprep.subr.bf16.mxu0 0
        %297 = vmatpush2.bf16.msra.mxu0 0
        %298 = vmatprep.subr.bf16.mxu0 0
        %299 = vmatpush2.bf16.msra.mxu0 0
        %300 = vmatprep.subr.bf16.mxu0 0
        %301 = vmatpush2.bf16.msra.mxu0 0
        %302 = vmatprep.subr.bf16.mxu0 0
        %303 = vmatpush2.bf16.msra.mxu0 0
        %304 = vmatprep.subr.bf16.mxu0 0
        %305 = vmatpush2.bf16.msra.mxu0 0
        %306 = vmatprep.subr.bf16.mxu0 0
        %307 = vmatpush2.bf16.msra.mxu0 0
        %308 = vmatprep.subr.bf16.mxu0 0
        %309 = vmatpush2.bf16.msra.mxu0 0
        %310 = vmatprep.subr.bf16.mxu0 0
        %311 = vmatpush2.bf16.msra.mxu0 0
        %312 = vmatprep.mubr.bf16.mxu0 0
        %313 = vmatmul.mubr.bf16.gmra.mxu0 %v278
        %v314 = vpop.f32.mrf.mxu0
        %v315 = vadd.f32 %v263, %v314
        %v316 = vpop.f32.mrf.mxu0
        %v317 = vpop.f32.mrf.mxu0
        %v318 = vpop.f32.mrf.mxu0
        %319 = vdwg.mxu0
        %vm320 = vcmask 130048
        %321 = vst.msk [vmem:[%s215] sm:$0xff] %vm320, %v315
        %s322 = sand.u32 %s137, 1
        %s323 = scalar_lea.sflag [#allocation3], %s322
        %s324 = sand.u32 %s137, 1
        %s325 = smul.addr %s324, 8
        %s326 = scalar_lea.vmem [#allocation2], %s325
        // Predicated region
        $region41: #{custom_transformer_forward.11} parent=39 // pred_check
          %p327 = pneg %p147
        $region42: #{custom_transformer_forward.11} parent=39 // pred_check_branch
          %329 = sbr.rel (%p327) target = $region44
        $region43: #{custom_transformer_forward.11} parent=39 // pred_region
          %s331 = ssub.s32 128, 128
          %332 = vsyncadd %s323, %s331
          %s333 = smul.addr %s19, 128
          %s334 = scalar_lea.hbm %s5, %s333
          %s336 = sshll.u32 %s326, 4
          %s337 = int_to_ptr.vmem [resolvable:$true] %s336
          %339 = dma.vmem_to_hbm [thread:$0]  %s337, 128, %s334, %s323
        $region44: #{custom_transformer_forward.11} parent=39 // pred_fallthru
          _
      $region40: #{custom_transformer_forward.11} parent=5 // pred_fallthru
        _
      %p340 = scmp.le.s32.totalorder 2, %s14
      // Predicated region
      $region45: #{custom_transformer_forward.11} parent=5 // pred_check
        %p341 = pneg %p340
      $region46: #{custom_transformer_forward.11} parent=5 // pred_check_branch
        %343 = sbr.rel (%p341) target = $region48
      $region47: #{custom_transformer_forward.11} parent=5 // pred_region
        %s344 = ssub.s32 %s14, 2
        // Predicated region
        $region49: #{custom_transformer_forward.11} parent=47 // pred_check
          %p345 = pneg %p153
        $region50: #{custom_transformer_forward.11} parent=47 // pred_check_branch
          %347 = sbr.rel (%p345) target = $region52
        $region51: #{custom_transformer_forward.11} parent=47 // pred_region
          %s348 = sand.u32 %s138, 1
          %s349 = scalar_lea.sflag [#allocation3], %s348
          %s350 = sand.u32 %s138, 1
          %s351 = smul.addr %s350, 8
          %s352 = scalar_lea.vmem [#allocation2], %s351
          %353 = dma.done %s349, 128
        $region52: #{custom_transformer_forward.11} parent=47 // pred_fallthru
          _
      $region48: #{custom_transformer_forward.11} parent=5 // pred_fallthru
        _
    $region6: #{custom_transformer_forward.11} parent=1 // loop_footer
      %s18 = sadd.s32 1, %s14
    $region7: #{custom_transformer_forward.11} parent=1 // loop_footer_branch
      %13 = sbr.rel target = $region3
    $region8: #{custom_transformer_forward.11} parent=1 // loop_exit
      _
    %354 = vsyncpa [#allocation3], 1
    %s355 = scalar_lea.sflag [#allocation3], 1
    %356 = vsyncpa %s355, 1

// kernel: custom_transformer_forward.6
$region0: #{custom_transformer_forward.6}
  #allocation0 [shape = 'u32[]', space=smem, size = 0x4, offset = 0x4, fixed_abs, tag = 'smem constant byte address 0x4 - core index']
  #allocation1 [shape = 'u32[144,128]{1,0:T(1,128)}', space=vmem, size = 0x12000, scoped, tag = 'internal scratch']
  %s0 = inlined_call_operand.vmem [shape: f32[2,8,32], index: 0, kind: input, shape index: {}]
  %s1 = inlined_call_operand.vmem [shape: bf16[4,32,8], index: 1, kind: input, shape index: {}]
  %s2 = inlined_call_operand.vmem [shape: f32[4,1,8], index: 2, kind: input, shape index: {}]
  %s3 = inlined_call_operand.vmem [shape: bf16[4,32,8], index: 3, kind: input, shape index: {}]
  %s4 = inlined_call_operand.vmem [shape: f32[4,1,8], index: 4, kind: input, shape index: {}]
  %s5 = inlined_call_operand.vmem [shape: bf16[4,32,8], index: 5, kind: input, shape index: {}]
  %s6 = inlined_call_operand.vmem [shape: f32[4,1,8], index: 6, kind: input, shape index: {}]
  %s7 = inlined_call_operand.vmem [shape: bf16[4,8,32], index: 7, kind: input, shape index: {}]
  %s8 = inlined_call_operand.vmem [shape: f32[1,32], index: 8, kind: input, shape index: {}]
  %s9 = inlined_call_operand.vmem [shape: f32[1,32], index: 9, kind: input, shape index: {}]
  %s10 = inlined_call_operand.vmem [shape: f32[1,32], index: 10, kind: input, shape index: {}]
  %s11 = inlined_call_operand.vmem [shape: f32[1,32], index: 11, kind: input, shape index: {}]
  %s12 = inlined_call_operand.vmem [shape: f32[1,32], index: 12, kind: input, shape index: {}]
  %s13 = inlined_call_operand.vmem [shape: bf16[32,64], index: 13, kind: input, shape index: {}]
  %s14 = inlined_call_operand.vmem [shape: f32[1,64], index: 14, kind: input, shape index: {}]
  %s15 = inlined_call_operand.vmem [shape: bf16[64,32], index: 15, kind: input, shape index: {}]
  %s16 = inlined_call_operand.vmem [shape: f32[1,32], index: 16, kind: input, shape index: {}]
  %s17 = inlined_call_operand.vmem [shape: f32[2,8,32], index: 17, kind: output, shape index: {}]
  %s18 = sld [smem:[#allocation0]]
  $region101: #{custom_transformer_forward.6} parent=0
    _
  %s20 = ssub.s32 1, %s18
  %s21 = scalar_select 0, %s20, %s18
  loop: start=0, step=1, limit=4
  $region2: #{custom_transformer_forward.6} parent=0 // loop_pre_header
    _
  $region3: #{custom_transformer_forward.6} parent=0 // loop_header
    %s23 = sphi 0, %s27
    %p24 = scmp.ge.s32.totalorder %s23, 4
    %s33 = sphi 0, %s35
    %s36 = sphi 0, %s33
    %s37 = sphi 0, %s36
    %s53 = sphi 0, %s37
    %s57 = sphi 0, %s57
    %s59 = sphi 0, %s57
    %s60 = sphi 0, %s59
    %s74 = sphi 0, %s60
    %s78 = sphi 0, %s78
    %s80 = sphi 0, %s78
    %s81 = sphi 0, %s80
    %s95 = sphi 0, %s81
    %s99 = sphi 0, %s99
    %s101 = sphi 0, %s99
    %s102 = sphi 0, %s101
    %s116 = sphi 0, %s102
    %s120 = sphi 0, %s120
    %s122 = sphi 0, %s120
    %s123 = sphi 0, %s122
    %s137 = sphi 0, %s123
    %s141 = sphi 0, %s141
    %s143 = sphi 0, %s141
    %s144 = sphi 0, %s143
    %s158 = sphi 0, %s144
    %s162 = sphi 0, %s162
    %s164 = sphi 0, %s162
    %s165 = sphi 0, %s164
    %s179 = sphi 0, %s165
    %s183 = sphi 0, %s183
    %s185 = sphi 0, %s183
    %s186 = sphi 0, %s185
    %s200 = sphi 0, %s186
    %s204 = sphi 0, %s204
    %s206 = sphi 0, %s204
    %s207 = sphi 0, %s206
    %s221 = sphi 0, %s207
    %s225 = sphi 0, %s225
    %s227 = sphi 0, %s225
    %s228 = sphi 0, %s227
    %s242 = sphi 0, %s228
    %s246 = sphi 0, %s246
    %s248 = sphi 0, %s246
    %s249 = sphi 0, %s248
    %s263 = sphi 0, %s249
    %s267 = sphi 0, %s267
    %s269 = sphi 0, %s267
    %s270 = sphi 0, %s269
    %s284 = sphi 0, %s270
    %s288 = sphi 0, %s288
    %s290 = sphi 0, %s288
    %s291 = sphi 0, %s290
    %s305 = sphi 0, %s291
    %s309 = sphi 0, %s309
    %s311 = sphi 0, %s309
    %s312 = sphi 0, %s311
    %s326 = sphi 0, %s312
    %s330 = sphi 0, %s330
    %s332 = sphi 0, %s330
    %s333 = sphi 0, %s332
    %s347 = sphi 0, %s333
    %s351 = sphi 0, %s351
    %s353 = sphi 0, %s351
    %s354 = sphi 0, %s353
    %s368 = sphi 0, %s354
    %s372 = sphi 0, %s372
    %s374 = sphi 0, %s372
    %s375 = sphi 0, %s374
    %s389 = sphi 0, %s375
    %s395 = sphi 0, %s397
    %s398 = sphi 0, %s395
    %s399 = sphi 0, %s398
    %s415 = sphi 0, %s399
  $region4: #{custom_transformer_forward.6} parent=0 // loop_header_branch
    %26 = sbr.rel (%p24) target = $region8
  $region5: #{custom_transformer_forward.6} parent=0 // loop_body
    %s28 = ssub.s32 %s23, 1
    %s29 = ssub.s32 %s23, 2
    %s30 = sadd.s32 %s23, 1
    %s31 = ssub.s32 %s23, %s30
    %p32 = scmp.eq.s32.totalorder %s31, 0
    %s34 = sadd.s32 %s33, 1
    %s35 = scalar_select %p32, %s33, %s34
    %p38 = pneg %p32
    %p39 = scmp.eq.s32.totalorder %s23, 1
    %p40 = por %p38, %p39
    %p41 = scmp.ne.s32.totalorder %s33, %s36
    %p42 = scmp.eq.s32.totalorder %s23, 0
    %p43 = por %p41, %p42
    %p44 = scmp.ne.s32.totalorder %s33, %s36
    %p45 = scmp.eq.s32.totalorder %s28, 1
    %p46 = por %p44, %p45
    %p47 = scmp.ne.s32.totalorder %s36, %s37
    %p48 = scmp.eq.s32.totalorder %s28, 0
    %p49 = por %p47, %p48
    %p50 = scmp.ne.s32.totalorder %s36, %s37
    %p51 = scmp.eq.s32.totalorder %s29, 1
    %p52 = por %p50, %p51
    %p54 = scmp.ne.s32.totalorder %s37, %s53
    %p55 = scmp.eq.s32.totalorder %s29, 0
    %p56 = por %p54, %p55
    %s58 = sadd.s32 %s57, 1
    %p61 = scmp.eq.s32.totalorder %s23, 1
    %p62 = scmp.ne.s32.totalorder %s57, %s59
    %p63 = scmp.eq.s32.totalorder %s23, 0
    %p64 = por %p62, %p63
    %p65 = scmp.ne.s32.totalorder %s57, %s59
    %p66 = scmp.eq.s32.totalorder %s28, 1
    %p67 = por %p65, %p66
    %p68 = scmp.ne.s32.totalorder %s59, %s60
    %p69 = scmp.eq.s32.totalorder %s28, 0
    %p70 = por %p68, %p69
    %p71 = scmp.ne.s32.totalorder %s59, %s60
    %p72 = scmp.eq.s32.totalorder %s29, 1
    %p73 = por %p71, %p72
    %p75 = scmp.ne.s32.totalorder %s60, %s74
    %p76 = scmp.eq.s32.totalorder %s29, 0
    %p77 = por %p75, %p76
    %s79 = sadd.s32 %s78, 1
    %p82 = scmp.eq.s32.totalorder %s23, 1
    %p83 = scmp.ne.s32.totalorder %s78, %s80
    %p84 = scmp.eq.s32.totalorder %s23, 0
    %p85 = por %p83, %p84
    %p86 = scmp.ne.s32.totalorder %s78, %s80
    %p87 = scmp.eq.s32.totalorder %s28, 1
    %p88 = por %p86, %p87
    %p89 = scmp.ne.s32.totalorder %s80, %s81
    %p90 = scmp.eq.s32.totalorder %s28, 0
    %p91 = por %p89, %p90
    %p92 = scmp.ne.s32.totalorder %s80, %s81
    %p93 = scmp.eq.s32.totalorder %s29, 1
    %p94 = por %p92, %p93
    %p96 = scmp.ne.s32.totalorder %s81, %s95
    %p97 = scmp.eq.s32.totalorder %s29, 0
    %p98 = por %p96, %p97
    %s100 = sadd.s32 %s99, 1
    %p103 = scmp.eq.s32.totalorder %s23, 1
    %p104 = scmp.ne.s32.totalorder %s99, %s101
    %p105 = scmp.eq.s32.totalorder %s23, 0
    %p106 = por %p104, %p105
    %p107 = scmp.ne.s32.totalorder %s99, %s101
    %p108 = scmp.eq.s32.totalorder %s28, 1
    %p109 = por %p107, %p108
    %p110 = scmp.ne.s32.totalorder %s101, %s102
    %p111 = scmp.eq.s32.totalorder %s28, 0
    %p112 = por %p110, %p111
    %p113 = scmp.ne.s32.totalorder %s101, %s102
    %p114 = scmp.eq.s32.totalorder %s29, 1
    %p115 = por %p113, %p114
    %p117 = scmp.ne.s32.totalorder %s102, %s116
    %p118 = scmp.eq.s32.totalorder %s29, 0
    %p119 = por %p117, %p118
    %s121 = sadd.s32 %s120, 1
    %p124 = scmp.eq.s32.totalorder %s23, 1
    %p125 = scmp.ne.s32.totalorder %s120, %s122
    %p126 = scmp.eq.s32.totalorder %s23, 0
    %p127 = por %p125, %p126
    %p128 = scmp.ne.s32.totalorder %s120, %s122
    %p129 = scmp.eq.s32.totalorder %s28, 1
    %p130 = por %p128, %p129
    %p131 = scmp.ne.s32.totalorder %s122, %s123
    %p132 = scmp.eq.s32.totalorder %s28, 0
    %p133 = por %p131, %p132
    %p134 = scmp.ne.s32.totalorder %s122, %s123
    %p135 = scmp.eq.s32.totalorder %s29, 1
    %p136 = por %p134, %p135
    %p138 = scmp.ne.s32.totalorder %s123, %s137
    %p139 = scmp.eq.s32.totalorder %s29, 0
    %p140 = por %p138, %p139
    %s142 = sadd.s32 %s141, 1
    %p145 = scmp.eq.s32.totalorder %s23, 1
    %p146 = scmp.ne.s32.totalorder %s141, %s143
    %p147 = scmp.eq.s32.totalorder %s23, 0
    %p148 = por %p146, %p147
    %p149 = scmp.ne.s32.totalorder %s141, %s143
    %p150 = scmp.eq.s32.totalorder %s28, 1
    %p151 = por %p149, %p150
    %p152 = scmp.ne.s32.totalorder %s143, %s144
    %p153 = scmp.eq.s32.totalorder %s28, 0
    %p154 = por %p152, %p153
    %p155 = scmp.ne.s32.totalorder %s143, %s144
    %p156 = scmp.eq.s32.totalorder %s29, 1
    %p157 = por %p155, %p156
    %p159 = scmp.ne.s32.totalorder %s144, %s158
    %p160 = scmp.eq.s32.totalorder %s29, 0
    %p161 = por %p159, %p160
    %s163 = sadd.s32 %s162, 1
    %p166 = scmp.eq.s32.totalorder %s23, 1
    %p167 = scmp.ne.s32.totalorder %s162, %s164
    %p168 = scmp.eq.s32.totalorder %s23, 0
    %p169 = por %p167, %p168
    %p170 = scmp.ne.s32.totalorder %s162, %s164
    %p171 = scmp.eq.s32.totalorder %s28, 1
    %p172 = por %p170, %p171
    %p173 = scmp.ne.s32.totalorder %s164, %s165
    %p174 = scmp.eq.s32.totalorder %s28, 0
    %p175 = por %p173, %p174
    %p176 = scmp.ne.s32.totalorder %s164, %s165
    %p177 = scmp.eq.s32.totalorder %s29, 1
    %p178 = por %p176, %p177
    %p180 = scmp.ne.s32.totalorder %s165, %s179
    %p181 = scmp.eq.s32.totalorder %s29, 0
    %p182 = por %p180, %p181
    %s184 = sadd.s32 %s183, 1
    %p187 = scmp.eq.s32.totalorder %s23, 1
    %p188 = scmp.ne.s32.totalorder %s183, %s185
    %p189 = scmp.eq.s32.totalorder %s23, 0
    %p190 = por %p188, %p189
    %p191 = scmp.ne.s32.totalorder %s183, %s185
    %p192 = scmp.eq.s32.totalorder %s28, 1
    %p193 = por %p191, %p192
    %p194 = scmp.ne.s32.totalorder %s185, %s186
    %p195 = scmp.eq.s32.totalorder %s28, 0
    %p196 = por %p194, %p195
    %p197 = scmp.ne.s32.totalorder %s185, %s186
    %p198 = scmp.eq.s32.totalorder %s29, 1
    %p199 = por %p197, %p198
    %p201 = scmp.ne.s32.totalorder %s186, %s200
    %p202 = scmp.eq.s32.totalorder %s29, 0
    %p203 = por %p201, %p202
    %s205 = sadd.s32 %s204, 1
    %p208 = scmp.eq.s32.totalorder %s23, 1
    %p209 = scmp.ne.s32.totalorder %s204, %s206
    %p210 = scmp.eq.s32.totalorder %s23, 0
    %p211 = por %p209, %p210
    %p212 = scmp.ne.s32.totalorder %s204, %s206
    %p213 = scmp.eq.s32.totalorder %s28, 1
    %p214 = por %p212, %p213
    %p215 = scmp.ne.s32.totalorder %s206, %s207
    %p216 = scmp.eq.s32.totalorder %s28, 0
    %p217 = por %p215, %p216
    %p218 = scmp.ne.s32.totalorder %s206, %s207
    %p219 = scmp.eq.s32.totalorder %s29, 1
    %p220 = por %p218, %p219
    %p222 = scmp.ne.s32.totalorder %s207, %s221
    %p223 = scmp.eq.s32.totalorder %s29, 0
    %p224 = por %p222, %p223
    %s226 = sadd.s32 %s225, 1
    %p229 = scmp.eq.s32.totalorder %s23, 1
    %p230 = scmp.ne.s32.totalorder %s225, %s227
    %p231 = scmp.eq.s32.totalorder %s23, 0
    %p232 = por %p230, %p231
    %p233 = scmp.ne.s32.totalorder %s225, %s227
    %p234 = scmp.eq.s32.totalorder %s28, 1
    %p235 = por %p233, %p234
    %p236 = scmp.ne.s32.totalorder %s227, %s228
    %p237 = scmp.eq.s32.totalorder %s28, 0
    %p238 = por %p236, %p237
    %p239 = scmp.ne.s32.totalorder %s227, %s228
    %p240 = scmp.eq.s32.totalorder %s29, 1
    %p241 = por %p239, %p240
    %p243 = scmp.ne.s32.totalorder %s228, %s242
    %p244 = scmp.eq.s32.totalorder %s29, 0
    %p245 = por %p243, %p244
    %s247 = sadd.s32 %s246, 1
    %p250 = scmp.eq.s32.totalorder %s23, 1
    %p251 = scmp.ne.s32.totalorder %s246, %s248
    %p252 = scmp.eq.s32.totalorder %s23, 0
    %p253 = por %p251, %p252
    %p254 = scmp.ne.s32.totalorder %s246, %s248
    %p255 = scmp.eq.s32.totalorder %s28, 1
    %p256 = por %p254, %p255
    %p257 = scmp.ne.s32.totalorder %s248, %s249
    %p258 = scmp.eq.s32.totalorder %s28, 0
    %p259 = por %p257, %p258
    %p260 = scmp.ne.s32.totalorder %s248, %s249
    %p261 = scmp.eq.s32.totalorder %s29, 1
    %p262 = por %p260, %p261
    %p264 = scmp.ne.s32.totalorder %s249, %s263
    %p265 = scmp.eq.s32.totalorder %s29, 0
    %p266 = por %p264, %p265
    %s268 = sadd.s32 %s267, 1
    %p271 = scmp.eq.s32.totalorder %s23, 1
    %p272 = scmp.ne.s32.totalorder %s267, %s269
    %p273 = scmp.eq.s32.totalorder %s23, 0
    %p274 = por %p272, %p273
    %p275 = scmp.ne.s32.totalorder %s267, %s269
    %p276 = scmp.eq.s32.totalorder %s28, 1
    %p277 = por %p275, %p276
    %p278 = scmp.ne.s32.totalorder %s269, %s270
    %p279 = scmp.eq.s32.totalorder %s28, 0
    %p280 = por %p278, %p279
    %p281 = scmp.ne.s32.totalorder %s269, %s270
    %p282 = scmp.eq.s32.totalorder %s29, 1
    %p283 = por %p281, %p282
    %p285 = scmp.ne.s32.totalorder %s270, %s284
    %p286 = scmp.eq.s32.totalorder %s29, 0
    %p287 = por %p285, %p286
    %s289 = sadd.s32 %s288, 1
    %p292 = scmp.eq.s32.totalorder %s23, 1
    %p293 = scmp.ne.s32.totalorder %s288, %s290
    %p294 = scmp.eq.s32.totalorder %s23, 0
    %p295 = por %p293, %p294
    %p296 = scmp.ne.s32.totalorder %s288, %s290
    %p297 = scmp.eq.s32.totalorder %s28, 1
    %p298 = por %p296, %p297
    %p299 = scmp.ne.s32.totalorder %s290, %s291
    %p300 = scmp.eq.s32.totalorder %s28, 0
    %p301 = por %p299, %p300
    %p302 = scmp.ne.s32.totalorder %s290, %s291
    %p303 = scmp.eq.s32.totalorder %s29, 1
    %p304 = por %p302, %p303
    %p306 = scmp.ne.s32.totalorder %s291, %s305
    %p307 = scmp.eq.s32.totalorder %s29, 0
    %p308 = por %p306, %p307
    %s310 = sadd.s32 %s309, 1
    %p313 = scmp.eq.s32.totalorder %s23, 1
    %p314 = scmp.ne.s32.totalorder %s309, %s311
    %p315 = scmp.eq.s32.totalorder %s23, 0
    %p316 = por %p314, %p315
    %p317 = scmp.ne.s32.totalorder %s309, %s311
    %p318 = scmp.eq.s32.totalorder %s28, 1
    %p319 = por %p317, %p318
    %p320 = scmp.ne.s32.totalorder %s311, %s312
    %p321 = scmp.eq.s32.totalorder %s28, 0
    %p322 = por %p320, %p321
    %p323 = scmp.ne.s32.totalorder %s311, %s312
    %p324 = scmp.eq.s32.totalorder %s29, 1
    %p325 = por %p323, %p324
    %p327 = scmp.ne.s32.totalorder %s312, %s326
    %p328 = scmp.eq.s32.totalorder %s29, 0
    %p329 = por %p327, %p328
    %s331 = sadd.s32 %s330, 1
    %p334 = scmp.eq.s32.totalorder %s23, 1
    %p335 = scmp.ne.s32.totalorder %s330, %s332
    %p336 = scmp.eq.s32.totalorder %s23, 0
    %p337 = por %p335, %p336
    %p338 = scmp.ne.s32.totalorder %s330, %s332
    %p339 = scmp.eq.s32.totalorder %s28, 1
    %p340 = por %p338, %p339
    %p341 = scmp.ne.s32.totalorder %s332, %s333
    %p342 = scmp.eq.s32.totalorder %s28, 0
    %p343 = por %p341, %p342
    %p344 = scmp.ne.s32.totalorder %s332, %s333
    %p345 = scmp.eq.s32.totalorder %s29, 1
    %p346 = por %p344, %p345
    %p348 = scmp.ne.s32.totalorder %s333, %s347
    %p349 = scmp.eq.s32.totalorder %s29, 0
    %p350 = por %p348, %p349
    %s352 = sadd.s32 %s351, 1
    %p355 = scmp.eq.s32.totalorder %s23, 1
    %p356 = scmp.ne.s32.totalorder %s351, %s353
    %p357 = scmp.eq.s32.totalorder %s23, 0
    %p358 = por %p356, %p357
    %p359 = scmp.ne.s32.totalorder %s351, %s353
    %p360 = scmp.eq.s32.totalorder %s28, 1
    %p361 = por %p359, %p360
    %p362 = scmp.ne.s32.totalorder %s353, %s354
    %p363 = scmp.eq.s32.totalorder %s28, 0
    %p364 = por %p362, %p363
    %p365 = scmp.ne.s32.totalorder %s353, %s354
    %p366 = scmp.eq.s32.totalorder %s29, 1
    %p367 = por %p365, %p366
    %p369 = scmp.ne.s32.totalorder %s354, %s368
    %p370 = scmp.eq.s32.totalorder %s29, 0
    %p371 = por %p369, %p370
    %s373 = sadd.s32 %s372, 1
    %p376 = scmp.eq.s32.totalorder %s23, 1
    %p377 = scmp.ne.s32.totalorder %s372, %s374
    %p378 = scmp.eq.s32.totalorder %s23, 0
    %p379 = por %p377, %p378
    %p380 = scmp.ne.s32.totalorder %s372, %s374
    %p381 = scmp.eq.s32.totalorder %s28, 1
    %p382 = por %p380, %p381
    %p383 = scmp.ne.s32.totalorder %s374, %s375
    %p384 = scmp.eq.s32.totalorder %s28, 0
    %p385 = por %p383, %p384
    %p386 = scmp.ne.s32.totalorder %s374, %s375
    %p387 = scmp.eq.s32.totalorder %s29, 1
    %p388 = por %p386, %p387
    %p390 = scmp.ne.s32.totalorder %s375, %s389
    %p391 = scmp.eq.s32.totalorder %s29, 0
    %p392 = por %p390, %p391
    %s393 = ssub.s32 %s23, %s30
    %p394 = scmp.eq.s32.totalorder %s393, 0
    %s396 = sadd.s32 %s395, 1
    %s397 = scalar_select %p394, %s395, %s396
    %p400 = pneg %p394
    %p401 = scmp.eq.s32.totalorder %s23, 1
    %p402 = por %p400, %p401
    %p403 = scmp.ne.s32.totalorder %s395, %s398
    %p404 = scmp.eq.s32.totalorder %s23, 0
    %p405 = por %p403, %p404
    %p406 = scmp.ne.s32.totalorder %s395, %s398
    %p407 = scmp.eq.s32.totalorder %s28, 1
    %p408 = por %p406, %p407
    %p409 = scmp.ne.s32.totalorder %s398, %s399
    %p410 = scmp.eq.s32.totalorder %s28, 0
    %p411 = por %p409, %p410
    %p412 = scmp.ne.s32.totalorder %s398, %s399
    %p413 = scmp.eq.s32.totalorder %s29, 1
    %p414 = por %p412, %p413
    %p416 = scmp.ne.s32.totalorder %s399, %s415
    %p417 = scmp.eq.s32.totalorder %s29, 0
    %p418 = por %p416, %p417
    %p419 = scmp.le.s32.totalorder 1, %s23
    %p420 = scmp.lt.s32.totalorder %s23, 3
    %p421 = pnand %p419, %p420
    %p422 = pneg %p421
    // Predicated region
    $region9: #{custom_transformer_forward.6} parent=5 // pred_check
      _
    $region10: #{custom_transformer_forward.6} parent=5 // pred_check_branch
      %424 = sbr.rel (%p421) target = $region12
    $region11: #{custom_transformer_forward.6} parent=5 // pred_region
      %s425 = ssub.s32 %s23, 1
      // Predicated region
      $region13: #{custom_transformer_forward.6} parent=11 // pred_check
        %p426 = pneg %p70
      $region14: #{custom_transformer_forward.6} parent=11 // pred_check_branch
        %428 = sbr.rel (%p426) target = $region16
      $region15: #{custom_transformer_forward.6} parent=11 // pred_region
        _
      $region16: #{custom_transformer_forward.6} parent=11 // pred_fallthru
        _
      // Predicated region
      $region17: #{custom_transformer_forward.6} parent=11 // pred_check
        %p429 = pneg %p91
      $region18: #{custom_transformer_forward.6} parent=11 // pred_check_branch
        %431 = sbr.rel (%p429) target = $region20
      $region19: #{custom_transformer_forward.6} parent=11 // pred_region
        _
      $region20: #{custom_transformer_forward.6} parent=11 // pred_fallthru
        _
      // Predicated region
      $region21: #{custom_transformer_forward.6} parent=11 // pred_check
        %p432 = pneg %p112
      $region22: #{custom_transformer_forward.6} parent=11 // pred_check_branch
        %434 = sbr.rel (%p432) target = $region24
      $region23: #{custom_transformer_forward.6} parent=11 // pred_region
        _
      $region24: #{custom_transformer_forward.6} parent=11 // pred_fallthru
        _
      // Predicated region
      $region25: #{custom_transformer_forward.6} parent=11 // pred_check
        %p435 = pneg %p133
      $region26: #{custom_transformer_forward.6} parent=11 // pred_check_branch
        %437 = sbr.rel (%p435) target = $region28
      $region27: #{custom_transformer_forward.6} parent=11 // pred_region
        _
      $region28: #{custom_transformer_forward.6} parent=11 // pred_fallthru
        _
      // Predicated region
      $region29: #{custom_transformer_forward.6} parent=11 // pred_check
        %p438 = pneg %p154
      $region30: #{custom_transformer_forward.6} parent=11 // pred_check_branch
        %440 = sbr.rel (%p438) target = $region32
      $region31: #{custom_transformer_forward.6} parent=11 // pred_region
        _
      $region32: #{custom_transformer_forward.6} parent=11 // pred_fallthru
        _
      // Predicated region
      $region33: #{custom_transformer_forward.6} parent=11 // pred_check
        %p441 = pneg %p175
      $region34: #{custom_transformer_forward.6} parent=11 // pred_check_branch
        %443 = sbr.rel (%p441) target = $region36
      $region35: #{custom_transformer_forward.6} parent=11 // pred_region
        _
      $region36: #{custom_transformer_forward.6} parent=11 // pred_fallthru
        _
      // Predicated region
      $region37: #{custom_transformer_forward.6} parent=11 // pred_check
        %p444 = pneg %p196
      $region38: #{custom_transformer_forward.6} parent=11 // pred_check_branch
        %446 = sbr.rel (%p444) target = $region40
      $region39: #{custom_transformer_forward.6} parent=11 // pred_region
        _
      $region40: #{custom_transformer_forward.6} parent=11 // pred_fallthru
        _
      // Predicated region
      $region41: #{custom_transformer_forward.6} parent=11 // pred_check
        %p447 = pneg %p217
      $region42: #{custom_transformer_forward.6} parent=11 // pred_check_branch
        %449 = sbr.rel (%p447) target = $region44
      $region43: #{custom_transformer_forward.6} parent=11 // pred_region
        _
      $region44: #{custom_transformer_forward.6} parent=11 // pred_fallthru
        _
      // Predicated region
      $region45: #{custom_transformer_forward.6} parent=11 // pred_check
        %p450 = pneg %p238
      $region46: #{custom_transformer_forward.6} parent=11 // pred_check_branch
        %452 = sbr.rel (%p450) target = $region48
      $region47: #{custom_transformer_forward.6} parent=11 // pred_region
        _
      $region48: #{custom_transformer_forward.6} parent=11 // pred_fallthru
        _
      // Predicated region
      $region49: #{custom_transformer_forward.6} parent=11 // pred_check
        %p453 = pneg %p259
      $region50: #{custom_transformer_forward.6} parent=11 // pred_check_branch
        %455 = sbr.rel (%p453) target = $region52
      $region51: #{custom_transformer_forward.6} parent=11 // pred_region
        _
      $region52: #{custom_transformer_forward.6} parent=11 // pred_fallthru
        _
      // Predicated region
      $region53: #{custom_transformer_forward.6} parent=11 // pred_check
        %p456 = pneg %p280
      $region54: #{custom_transformer_forward.6} parent=11 // pred_check_branch
        %458 = sbr.rel (%p456) target = $region56
      $region55: #{custom_transformer_forward.6} parent=11 // pred_region
        _
      $region56: #{custom_transformer_forward.6} parent=11 // pred_fallthru
        _
      // Predicated region
      $region57: #{custom_transformer_forward.6} parent=11 // pred_check
        %p459 = pneg %p301
      $region58: #{custom_transformer_forward.6} parent=11 // pred_check_branch
        %461 = sbr.rel (%p459) target = $region60
      $region59: #{custom_transformer_forward.6} parent=11 // pred_region
        _
      $region60: #{custom_transformer_forward.6} parent=11 // pred_fallthru
        _
      // Predicated region
      $region61: #{custom_transformer_forward.6} parent=11 // pred_check
        %p462 = pneg %p322
      $region62: #{custom_transformer_forward.6} parent=11 // pred_check_branch
        %464 = sbr.rel (%p462) target = $region64
      $region63: #{custom_transformer_forward.6} parent=11 // pred_region
        _
      $region64: #{custom_transformer_forward.6} parent=11 // pred_fallthru
        _
      // Predicated region
      $region65: #{custom_transformer_forward.6} parent=11 // pred_check
        %p465 = pneg %p343
      $region66: #{custom_transformer_forward.6} parent=11 // pred_check_branch
        %467 = sbr.rel (%p465) target = $region68
      $region67: #{custom_transformer_forward.6} parent=11 // pred_region
        _
      $region68: #{custom_transformer_forward.6} parent=11 // pred_fallthru
        _
      // Predicated region
      $region69: #{custom_transformer_forward.6} parent=11 // pred_check
        %p468 = pneg %p364
      $region70: #{custom_transformer_forward.6} parent=11 // pred_check_branch
        %470 = sbr.rel (%p468) target = $region72
      $region71: #{custom_transformer_forward.6} parent=11 // pred_region
        _
      $region72: #{custom_transformer_forward.6} parent=11 // pred_fallthru
        _
      // Predicated region
      $region73: #{custom_transformer_forward.6} parent=11 // pred_check
        %p471 = pneg %p385
      $region74: #{custom_transformer_forward.6} parent=11 // pred_check_branch
        %473 = sbr.rel (%p471) target = $region76
      $region75: #{custom_transformer_forward.6} parent=11 // pred_region
        _
      $region76: #{custom_transformer_forward.6} parent=11 // pred_fallthru
        _
    $region12: #{custom_transformer_forward.6} parent=5 // pred_fallthru
      _
    %p474 = scmp.lt.s32.totalorder %s23, 2
    // Predicated region
    $region77: #{custom_transformer_forward.6} parent=5 // pred_check
      %p475 = pneg %p474
    $region78: #{custom_transformer_forward.6} parent=5 // pred_check_branch
      %477 = sbr.rel (%p475) target = $region80
    $region79: #{custom_transformer_forward.6} parent=5 // pred_region
      // Predicated region
      $region81: #{custom_transformer_forward.6} parent=79 // pred_check
        %p478 = pneg %p43
      $region82: #{custom_transformer_forward.6} parent=79 // pred_check_branch
        %480 = sbr.rel (%p478) target = $region84
      $region83: #{custom_transformer_forward.6} parent=79 // pred_region
        %p481 = scmp.lt.s32.totalorder %s23, 1
        %s482 = scalar_select %p481, %s23, 1
        %s483 = smul.addr %s482, 8
        %s484 = scalar_lea.vmem %s0, %s483
      $region84: #{custom_transformer_forward.6} parent=79 // pred_fallthru
        _
    $region80: #{custom_transformer_forward.6} parent=5 // pred_fallthru
      _
    %p485 = scmp.le.s32.totalorder 1, %s23
    %p486 = scmp.lt.s32.totalorder %s23, 3
    %p487 = pnand %p485, %p486
    %p488 = pneg %p487
    // Predicated region
    $region85: #{custom_transformer_forward.6} parent=5 // pred_check
      _
    $region86: #{custom_transformer_forward.6} parent=5 // pred_check_branch
      %490 = sbr.rel (%p487) target = $region88
    $region87: #{custom_transformer_forward.6} parent=5 // pred_region
      %s491 = ssub.s32 %s23, 1
      %p492 = scmp.lt.s32.totalorder %s28, 1
      %s493 = scalar_select %p492, %s28, 1
      %s494 = smul.addr %s493, 8
      %s495 = scalar_lea.vmem %s0, %s494
      %p496 = pneg %p49
      %p497 = pneg %p46
      %p498 = pneg %p70
      %p499 = pneg %p67
      %p500 = pneg %p91
      %p501 = pneg %p88
      %p502 = pneg %p112
      %p503 = pneg %p109
      %p504 = pneg %p133
      %p505 = pneg %p130
      %p506 = pneg %p154
      %p507 = pneg %p151
      %p508 = pneg %p175
      %p509 = pneg %p172
      %p510 = pneg %p196
      %p511 = pneg %p193
      %p512 = pneg %p217
      %p513 = pneg %p214
      %p514 = pneg %p238
      %p515 = pneg %p235
      %p516 = pneg %p259
      %p517 = pneg %p256
      %p518 = pneg %p280
      %p519 = pneg %p277
      %p520 = pneg %p301
      %p521 = pneg %p298
      %p522 = pneg %p322
      %p523 = pneg %p319
      %p524 = pneg %p343
      %p525 = pneg %p340
      %p526 = pneg %p364
      %p527 = pneg %p361
      %p528 = pneg %p385
      %p529 = pneg %p382
      %p530 = pneg %p411
      %p531 = pneg %p408
      %p532 = scmp.lt.s32.totalorder %s28, 1
      %s533 = scalar_select %p532, %s28, 1
      %s534 = smul.addr %s533, 8
      %s535 = scalar_lea.vmem %s17, %s534
      %p536 = scmp.lt.s32.totalorder %s28, 1
      %s537 = scalar_select %p536, %s28, 1
      %s538 = smul.addr %s537, 8
      %s539 = scalar_lea.vmem %s0, %s538
      %p540 = scmp.lt.s32.totalorder %s28, 1
      %s541 = scalar_select %p540, %s28, 1
      %s542 = smul.addr %s541, 8
      %s543 = scalar_lea.vmem %s17, %s542
      %v545 = vld [vmem:[%s539] sm:$0xff]
      %v546 = vpack.c.bf16 %v545, %v545
      %v547 = vld [vmem:[%s1] sm:$0xf]
      %v548 = vld [vmem:[%s1 + $0x4] sm:$0xf]
      %v549 = vld [vmem:[%s1 + $0x8] sm:$0xf]
      %v550 = vld [vmem:[%s1 + $0xc] sm:$0xf]
      %v551 = vld [vmem:[%s2] sm:$0x1]
      %v553 = vlaneseq
      %v554 = vshrl.u32 %v553, 7
      %v555 = vsub.s32 0, %v554
      %v556 = vrot.slane %v551, %v555
      %v562 = vunpack.c.l.b16 %v547
      %v563 = vunpack.c.l.b16 %v548
      %v564 = vunpack.c.l.b16 %v549
      %v565 = vunpack.c.l.b16 %v550
      %v566 = vpack.c.b16 %v563, %v562
      %v567 = vpack.c.b16 %v565, %v564
      %vm570 = vcmask 261120
      %v572 = vsel %vm570, %v546, 0
      %574 = vmatprep.subr.bf16.mxu0 0
      %575 = vmatpush1.bf16.msra.mxu0 0
      %576 = vmatprep.subr.bf16.mxu0 0
      %577 = vmatpush1.bf16.msra.mxu0 0
      %578 = vmatprep.subr.bf16.mxu0 0
      %579 = vmatpush1.bf16.msra.mxu0 0
      %580 = vmatprep.subr.bf16.mxu0 0
      %581 = vmatpush1.bf16.msra.mxu0 0
      %582 = vmatprep.subr.bf16.mxu0 0
      %583 = vmatpush1.bf16.msra.mxu0 0
      %584 = vmatprep.subr.bf16.mxu0 0
      %585 = vmatpush1.bf16.msra.mxu0 0
      %586 = vmatprep.subr.bf16.mxu0 0
      %587 = vmatpush1.bf16.msra.mxu0 %v567
      %588 = vmatprep.subr.bf16.mxu0 0
      %589 = vmatpush1.bf16.msra.mxu0 %v566
      %590 = vmatprep.subr.bf16.mxu0 0
      %591 = vmatpush2.bf16.msra.mxu0 0
      %592 = vmatprep.subr.bf16.mxu0 0
      %593 = vmatpush2.bf16.msra.mxu0 0
      %594 = vmatprep.subr.bf16.mxu0 0
      %595 = vmatpush2.bf16.msra.mxu0 0
      %596 = vmatprep.subr.bf16.mxu0 0
      %597 = vmatpush2.bf16.msra.mxu0 0
      %598 = vmatprep.subr.bf16.mxu0 0
      %599 = vmatpush2.bf16.msra.mxu0 0
      %600 = vmatprep.subr.bf16.mxu0 0
      %601 = vmatpush2.bf16.msra.mxu0 0
      %602 = vmatprep.subr.bf16.mxu0 0
      %603 = vmatpush2.bf16.msra.mxu0 0
      %604 = vmatprep.subr.bf16.mxu0 0
      %605 = vmatpush2.bf16.msra.mxu0 0
      %606 = vmatprep.mubr.bf16.mxu0 0
      %607 = vmatmul.mubr.bf16.gmra.mxu0 %v572
      %v608 = vpop.f32.mrf.mxu0
      %v609 = vadd.f32 %v556, %v608
      %v610 = vpop.f32.mrf.mxu0
      %v611 = vpop.f32.mrf.mxu0
      %v612 = vpop.f32.mrf.mxu0
      %613 = vdwg.mxu0
      %v614 = vld [vmem:[%s3] sm:$0xf]
      %v615 = vld [vmem:[%s3 + $0x4] sm:$0xf]
      %v616 = vld [vmem:[%s3 + $0x8] sm:$0xf]
      %v617 = vld [vmem:[%s3 + $0xc] sm:$0xf]
      %v618 = vld [vmem:[%s4] sm:$0x1]
      %v620 = vlaneseq
      %v621 = vshrl.u32 %v620, 7
      %v622 = vsub.s32 0, %v621
      %v623 = vrot.slane %v618, %v622
      %v629 = vunpack.c.l.b16 %v614
      %v630 = vunpack.c.l.b16 %v615
      %v631 = vunpack.c.l.b16 %v616
      %v632 = vunpack.c.l.b16 %v617
      %v633 = vpack.c.b16 %v630, %v629
      %v634 = vpack.c.b16 %v632, %v631
      %637 = vmatprep.subr.bf16.mxu0 0
      %638 = vmatpush1.bf16.msra.mxu0 0
      %639 = vmatprep.subr.bf16.mxu0 0
      %640 = vmatpush1.bf16.msra.mxu0 0
      %641 = vmatprep.subr.bf16.mxu0 0
      %642 = vmatpush1.bf16.msra.mxu0 0
      %643 = vmatprep.subr.bf16.mxu0 0
      %644 = vmatpush1.bf16.msra.mxu0 0
      %645 = vmatprep.subr.bf16.mxu0 0
      %646 = vmatpush1.bf16.msra.mxu0 0
      %647 = vmatprep.subr.bf16.mxu0 0
      %648 = vmatpush1.bf16.msra.mxu0 0
      %649 = vmatprep.subr.bf16.mxu0 0
      %650 = vmatpush1.bf16.msra.mxu0 %v634
      %651 = vmatprep.subr.bf16.mxu0 0
      %652 = vmatpush1.bf16.msra.mxu0 %v633
      %653 = vmatprep.subr.bf16.mxu0 0
      %654 = vmatpush2.bf16.msra.mxu0 0
      %655 = vmatprep.subr.bf16.mxu0 0
      %656 = vmatpush2.bf16.msra.mxu0 0
      %657 = vmatprep.subr.bf16.mxu0 0
      %658 = vmatpush2.bf16.msra.mxu0 0
      %659 = vmatprep.subr.bf16.mxu0 0
      %660 = vmatpush2.bf16.msra.mxu0 0
      %661 = vmatprep.subr.bf16.mxu0 0
      %662 = vmatpush2.bf16.msra.mxu0 0
      %663 = vmatprep.subr.bf16.mxu0 0
      %664 = vmatpush2.bf16.msra.mxu0 0
      %665 = vmatprep.subr.bf16.mxu0 0
      %666 = vmatpush2.bf16.msra.mxu0 0
      %667 = vmatprep.subr.bf16.mxu0 0
      %668 = vmatpush2.bf16.msra.mxu0 0
      %669 = vmatprep.mubr.bf16.mxu0 0
      %670 = vmatmul.mubr.bf16.gmra.mxu0 %v572
      %v671 = vpop.f32.mrf.mxu0
      %v672 = vadd.f32 %v623, %v671
      %v673 = vpop.f32.mrf.mxu0
      %v674 = vpop.f32.mrf.mxu0
      %v675 = vpop.f32.mrf.mxu0
      %676 = vdwg.mxu0
      %v677 = vld [vmem:[%s5] sm:$0xf]
      %v678 = vld [vmem:[%s5 + $0x4] sm:$0xf]
      %v679 = vld [vmem:[%s5 + $0x8] sm:$0xf]
      %v680 = vld [vmem:[%s5 + $0xc] sm:$0xf]
      %v681 = vld [vmem:[%s6] sm:$0x1]
      %v683 = vlaneseq
      %v684 = vshrl.u32 %v683, 7
      %v685 = vsub.s32 0, %v684
      %v686 = vrot.slane %v681, %v685
      %v692 = vunpack.c.l.b16 %v677
      %v693 = vunpack.c.l.b16 %v678
      %v694 = vunpack.c.l.b16 %v679
      %v695 = vunpack.c.l.b16 %v680
      %v696 = vpack.c.b16 %v693, %v692
      %v697 = vpack.c.b16 %v695, %v694
      %700 = vmatprep.subr.bf16.mxu0 0
      %701 = vmatpush1.bf16.msra.mxu0 0
      %702 = vmatprep.subr.bf16.mxu0 0
      %703 = vmatpush1.bf16.msra.mxu0 0
      %704 = vmatprep.subr.bf16.mxu0 0
      %705 = vmatpush1.bf16.msra.mxu0 0
      %706 = vmatprep.subr.bf16.mxu0 0
      %707 = vmatpush1.bf16.msra.mxu0 0
      %708 = vmatprep.subr.bf16.mxu0 0
      %709 = vmatpush1.bf16.msra.mxu0 0
      %710 = vmatprep.subr.bf16.mxu0 0
      %711 = vmatpush1.bf16.msra.mxu0 0
      %712 = vmatprep.subr.bf16.mxu0 0
      %713 = vmatpush1.bf16.msra.mxu0 %v697
      %714 = vmatprep.subr.bf16.mxu0 0
      %715 = vmatpush1.bf16.msra.mxu0 %v696
      %716 = vmatprep.subr.bf16.mxu0 0
      %717 = vmatpush2.bf16.msra.mxu0 0
      %718 = vmatprep.subr.bf16.mxu0 0
      %719 = vmatpush2.bf16.msra.mxu0 0
      %720 = vmatprep.subr.bf16.mxu0 0
      %721 = vmatpush2.bf16.msra.mxu0 0
      %722 = vmatprep.subr.bf16.mxu0 0
      %723 = vmatpush2.bf16.msra.mxu0 0
      %724 = vmatprep.subr.bf16.mxu0 0
      %725 = vmatpush2.bf16.msra.mxu0 0
      %726 = vmatprep.subr.bf16.mxu0 0
      %727 = vmatpush2.bf16.msra.mxu0 0
      %728 = vmatprep.subr.bf16.mxu0 0
      %729 = vmatpush2.bf16.msra.mxu0 0
      %730 = vmatprep.subr.bf16.mxu0 0
      %731 = vmatpush2.bf16.msra.mxu0 0
      %732 = vmatprep.mubr.bf16.mxu0 0
      %733 = vmatmul.mubr.bf16.gmra.mxu0 %v572
      %v734 = vpop.f32.mrf.mxu0
      %v735 = vadd.f32 %v686, %v734
      %v736 = vpop.f32.mrf.mxu0
      %v737 = vpop.f32.mrf.mxu0
      %v738 = vpop.f32.mrf.mxu0
      %739 = vdwg.mxu0
      %v740 = vpack.c.bf16 %v609, %v609
      %v741 = vpack.c.bf16 %v672, %v672
      %vm742 = vcmask 64512
      %v744 = vsel %vm742, %v740, 0
      %v747 = vsel %vm742, %v741, 0
      %749 = vmatprep.subr.bf16.mxu0 0
      %750 = vmatpush1.bf16.xpose.msra.mxu0 0
      %751 = vmatprep.subr.bf16.mxu0 0
      %752 = vmatpush1.bf16.xpose.msra.mxu0 0
      %753 = vmatprep.subr.bf16.mxu0 0
      %754 = vmatpush1.bf16.xpose.msra.mxu0 0
      %755 = vmatprep.subr.bf16.mxu0 0
      %756 = vmatpush1.bf16.xpose.msra.mxu0 0
      %757 = vmatprep.subr.bf16.mxu0 0
      %758 = vmatpush1.bf16.xpose.msra.mxu0 0
      %759 = vmatprep.subr.bf16.mxu0 0
      %760 = vmatpush1.bf16.xpose.msra.mxu0 0
      %761 = vmatprep.subr.bf16.mxu0 0
      %762 = vmatpush1.bf16.xpose.msra.mxu0 0
      %763 = vmatprep.subr.bf16.mxu0 0
      %764 = vmatpush1.bf16.xpose.msra.mxu0 %v747
      %765 = vmatprep.subr.bf16.mxu0 0
      %766 = vmatpush2.bf16.xpose.msra.mxu0 0
      %767 = vmatprep.subr.bf16.mxu0 0
      %768 = vmatpush2.bf16.xpose.msra.mxu0 0
      %769 = vmatprep.subr.bf16.mxu0 0
      %770 = vmatpush2.bf16.xpose.msra.mxu0 0
      %771 = vmatprep.subr.bf16.mxu0 0
      %772 = vmatpush2.bf16.xpose.msra.mxu0 0
      %773 = vmatprep.subr.bf16.mxu0 0
      %774 = vmatpush2.bf16.xpose.msra.mxu0 0
      %775 = vmatprep.subr.bf16.mxu0 0
      %776 = vmatpush2.bf16.xpose.msra.mxu0 0
      %777 = vmatprep.subr.bf16.mxu0 0
      %778 = vmatpush2.bf16.xpose.msra.mxu0 0
      %779 = vmatprep.subr.bf16.mxu0 0
      %780 = vmatpush2.bf16.xpose.msra.mxu0 0
      %781 = vmatprep.mubr.bf16.mxu0 0
      %782 = vmatmul.mubr.bf16.gmra.mxu0 %v744
      %v783 = vpop.f32.mrf.mxu0
      %v784 = vadd.f32 0.0, %v783
      %v785 = vpop.f32.mrf.mxu0
      %v786 = vpop.f32.mrf.mxu0
      %v787 = vpop.f32.mrf.mxu0
      %788 = vdwg.mxu0
      %v789 = vmul.f32 %v784, 0.35355338
      %v790 = vsel %vm742, %v789, -inf
      %791 = vmax.xlane.f32.xlu0 %v790
      %v792 = vpop.xlane.xlu0 %791
      %v793 = vsub.f32 %v789, %v792
      %v794 = vmul.f32 %v793, 1.442695
      %v795 = vpow.pop %v794
      %v796 = vsel %vm742, %v795, 0.0
      %797 = vadd.xlane.f32.xlu0 %v796
      %v798 = vpop.xlane.xlu0 %797
      %v799 = vrcp.pop %v798
      %v800 = vmul.f32 %v795, %v799
      %v801 = vpack.c.bf16 %v800, %v800
      %v802 = vpack.c.bf16 %v735, %v735
      %v804 = vsel %vm742, %v801, 0
      %vm806 = vcmask 1043456
      %v808 = vsel %vm806, %v802, 0
      %810 = vmatprep.subr.bf16.mxu0 0
      %811 = vmatpush1.bf16.msra.mxu0 0
      %812 = vmatprep.subr.bf16.mxu0 0
      %813 = vmatpush1.bf16.msra.mxu0 0
      %814 = vmatprep.subr.bf16.mxu0 0
      %815 = vmatpush1.bf16.msra.mxu0 0
      %816 = vmatprep.subr.bf16.mxu0 0
      %817 = vmatpush1.bf16.msra.mxu0 0
      %818 = vmatprep.subr.bf16.mxu0 0
      %819 = vmatpush1.bf16.msra.mxu0 0
      %820 = vmatprep.subr.bf16.mxu0 0
      %821 = vmatpush1.bf16.msra.mxu0 0
      %822 = vmatprep.subr.bf16.mxu0 0
      %823 = vmatpush1.bf16.msra.mxu0 0
      %824 = vmatprep.subr.bf16.mxu0 0
      %825 = vmatpush1.bf16.msra.mxu0 %v808
      %826 = vmatprep.subr.bf16.mxu0 0
      %827 = vmatpush2.bf16.msra.mxu0 0
      %828 = vmatprep.subr.bf16.mxu0 0
      %829 = vmatpush2.bf16.msra.mxu0 0
      %830 = vmatprep.subr.bf16.mxu0 0
      %831 = vmatpush2.bf16.msra.mxu0 0
      %832 = vmatprep.subr.bf16.mxu0 0
      %833 = vmatpush2.bf16.msra.mxu0 0
      %834 = vmatprep.subr.bf16.mxu0 0
      %835 = vmatpush2.bf16.msra.mxu0 0
      %836 = vmatprep.subr.bf16.mxu0 0
      %837 = vmatpush2.bf16.msra.mxu0 0
      %838 = vmatprep.subr.bf16.mxu0 0
      %839 = vmatpush2.bf16.msra.mxu0 0
      %840 = vmatprep.subr.bf16.mxu0 0
      %841 = vmatpush2.bf16.msra.mxu0 0
      %842 = vmatprep.mubr.bf16.mxu0 0
      %843 = vmatmul.mubr.bf16.gmra.mxu0 %v804
      %v844 = vpop.f32.mrf.mxu0
      %v845 = vadd.f32 0.0, %v844
      %v846 = vpop.f32.mrf.mxu0
      %v847 = vpop.f32.mrf.mxu0
      %v848 = vpop.f32.mrf.mxu0
      %849 = vdwg.mxu0
      %v850 = vpack.c.bf16 %v845, %v845
      %v851 = vld [vmem:[%s7] sm:$0xf]
      %s852 = scalar_lea.vmem %s1, 16
      %v853 = vld [vmem:[%s852] sm:$0xf]
      %v854 = vld [vmem:[%s852 + $0x4] sm:$0xf]
      %v855 = vld [vmem:[%s852 + $0x8] sm:$0xf]
      %v856 = vld [vmem:[%s852 + $0xc] sm:$0xf]
      %s857 = scalar_lea.vmem %s2, 1
      %v858 = vld [vmem:[%s857] sm:$0x1]
      %v860 = vlaneseq
      %v861 = vshrl.u32 %v860, 7
      %v862 = vsub.s32 0, %v861
      %v863 = vrot.slane %v858, %v862
      %v869 = vunpack.c.l.b16 %v853
      %v870 = vunpack.c.l.b16 %v854
      %v871 = vunpack.c.l.b16 %v855
      %v872 = vunpack.c.l.b16 %v856
      %v873 = vpack.c.b16 %v870, %v869
      %v874 = vpack.c.b16 %v872, %v871
      %877 = vmatprep.subr.bf16.mxu0 0
      %878 = vmatpush1.bf16.msra.mxu0 0
      %879 = vmatprep.subr.bf16.mxu0 0
      %880 = vmatpush1.bf16.msra.mxu0 0
      %881 = vmatprep.subr.bf16.mxu0 0
      %882 = vmatpush1.bf16.msra.mxu0 0
      %883 = vmatprep.subr.bf16.mxu0 0
      %884 = vmatpush1.bf16.msra.mxu0 0
      %885 = vmatprep.subr.bf16.mxu0 0
      %886 = vmatpush1.bf16.msra.mxu0 0
      %887 = vmatprep.subr.bf16.mxu0 0
      %888 = vmatpush1.bf16.msra.mxu0 0
      %889 = vmatprep.subr.bf16.mxu0 0
      %890 = vmatpush1.bf16.msra.mxu0 %v874
      %891 = vmatprep.subr.bf16.mxu0 0
      %892 = vmatpush1.bf16.msra.mxu0 %v873
      %893 = vmatprep.subr.bf16.mxu0 0
      %894 = vmatpush2.bf16.msra.mxu0 0
      %895 = vmatprep.subr.bf16.mxu0 0
      %896 = vmatpush2.bf16.msra.mxu0 0
      %897 = vmatprep.subr.bf16.mxu0 0
      %898 = vmatpush2.bf16.msra.mxu0 0
      %899 = vmatprep.subr.bf16.mxu0 0
      %900 = vmatpush2.bf16.msra.mxu0 0
      %901 = vmatprep.subr.bf16.mxu0 0
      %902 = vmatpush2.bf16.msra.mxu0 0
      %903 = vmatprep.subr.bf16.mxu0 0
      %904 = vmatpush2.bf16.msra.mxu0 0
      %905 = vmatprep.subr.bf16.mxu0 0
      %906 = vmatpush2.bf16.msra.mxu0 0
      %907 = vmatprep.subr.bf16.mxu0 0
      %908 = vmatpush2.bf16.msra.mxu0 0
      %909 = vmatprep.mubr.bf16.mxu0 0
      %910 = vmatmul.mubr.bf16.gmra.mxu0 %v572
      %v911 = vpop.f32.mrf.mxu0
      %v912 = vadd.f32 %v863, %v911
      %v913 = vpop.f32.mrf.mxu0
      %v914 = vpop.f32.mrf.mxu0
      %v915 = vpop.f32.mrf.mxu0
      %916 = vdwg.mxu0
      %s917 = scalar_lea.vmem %s3, 16
      %v918 = vld [vmem:[%s917] sm:$0xf]
      %v919 = vld [vmem:[%s917 + $0x4] sm:$0xf]
      %v920 = vld [vmem:[%s917 + $0x8] sm:$0xf]
      %v921 = vld [vmem:[%s917 + $0xc] sm:$0xf]
      %s922 = scalar_lea.vmem %s4, 1
      %v923 = vld [vmem:[%s922] sm:$0x1]
      %v925 = vlaneseq
      %v926 = vshrl.u32 %v925, 7
      %v927 = vsub.s32 0, %v926
      %v928 = vrot.slane %v923, %v927
      %v934 = vunpack.c.l.b16 %v918
      %v935 = vunpack.c.l.b16 %v919
      %v936 = vunpack.c.l.b16 %v920
      %v937 = vunpack.c.l.b16 %v921
      %v938 = vpack.c.b16 %v935, %v934
      %v939 = vpack.c.b16 %v937, %v936
      %942 = vmatprep.subr.bf16.mxu0 0
      %943 = vmatpush1.bf16.msra.mxu0 0
      %944 = vmatprep.subr.bf16.mxu0 0
      %945 = vmatpush1.bf16.msra.mxu0 0
      %946 = vmatprep.subr.bf16.mxu0 0
      %947 = vmatpush1.bf16.msra.mxu0 0
      %948 = vmatprep.subr.bf16.mxu0 0
      %949 = vmatpush1.bf16.msra.mxu0 0
      %950 = vmatprep.subr.bf16.mxu0 0
      %951 = vmatpush1.bf16.msra.mxu0 0
      %952 = vmatprep.subr.bf16.mxu0 0
      %953 = vmatpush1.bf16.msra.mxu0 0
      %954 = vmatprep.subr.bf16.mxu0 0
      %955 = vmatpush1.bf16.msra.mxu0 %v939
      %956 = vmatprep.subr.bf16.mxu0 0
      %957 = vmatpush1.bf16.msra.mxu0 %v938
      %958 = vmatprep.subr.bf16.mxu0 0
      %959 = vmatpush2.bf16.msra.mxu0 0
      %960 = vmatprep.subr.bf16.mxu0 0
      %961 = vmatpush2.bf16.msra.mxu0 0
      %962 = vmatprep.subr.bf16.mxu0 0
      %963 = vmatpush2.bf16.msra.mxu0 0
      %964 = vmatprep.subr.bf16.mxu0 0
      %965 = vmatpush2.bf16.msra.mxu0 0
      %966 = vmatprep.subr.bf16.mxu0 0
      %967 = vmatpush2.bf16.msra.mxu0 0
      %968 = vmatprep.subr.bf16.mxu0 0
      %969 = vmatpush2.bf16.msra.mxu0 0
      %970 = vmatprep.subr.bf16.mxu0 0
      %971 = vmatpush2.bf16.msra.mxu0 0
      %972 = vmatprep.subr.bf16.mxu0 0
      %973 = vmatpush2.bf16.msra.mxu0 0
      %974 = vmatprep.mubr.bf16.mxu0 0
      %975 = vmatmul.mubr.bf16.gmra.mxu0 %v572
      %v976 = vpop.f32.mrf.mxu0
      %v977 = vadd.f32 %v928, %v976
      %v978 = vpop.f32.mrf.mxu0
      %v979 = vpop.f32.mrf.mxu0
      %v980 = vpop.f32.mrf.mxu0
      %981 = vdwg.mxu0
      %s982 = scalar_lea.vmem %s5, 16
      %v983 = vld [vmem:[%s982] sm:$0xf]
      %v984 = vld [vmem:[%s982 + $0x4] sm:$0xf]
      %v985 = vld [vmem:[%s982 + $0x8] sm:$0xf]
      %v986 = vld [vmem:[%s982 + $0xc] sm:$0xf]
      %s987 = scalar_lea.vmem %s6, 1
      %v988 = vld [vmem:[%s987] sm:$0x1]
      %v990 = vlaneseq
      %v991 = vshrl.u32 %v990, 7
      %v992 = vsub.s32 0, %v991
      %v993 = vrot.slane %v988, %v992
      %v999 = vunpack.c.l.b16 %v983
      %v1000 = vunpack.c.l.b16 %v984
      %v1001 = vunpack.c.l.b16 %v985
      %v1002 = vunpack.c.l.b16 %v986
      %v1003 = vpack.c.b16 %v1000, %v999
      %v1004 = vpack.c.b16 %v1002, %v1001
      %1007 = vmatprep.subr.bf16.mxu0 0
      %1008 = vmatpush1.bf16.msra.mxu0 0
      %1009 = vmatprep.subr.bf16.mxu0 0
      %1010 = vmatpush1.bf16.msra.mxu0 0
      %1011 = vmatprep.subr.bf16.mxu0 0
      %1012 = vmatpush1.bf16.msra.mxu0 0
      %1013 = vmatprep.subr.bf16.mxu0 0
      %1014 = vmatpush1.bf16.msra.mxu0 0
      %1015 = vmatprep.subr.bf16.mxu0 0
      %1016 = vmatpush1.bf16.msra.mxu0 0
      %1017 = vmatprep.subr.bf16.mxu0 0
      %1018 = vmatpush1.bf16.msra.mxu0 0
      %1019 = vmatprep.subr.bf16.mxu0 0
      %1020 = vmatpush1.bf16.msra.mxu0 %v1004
      %1021 = vmatprep.subr.bf16.mxu0 0
      %1022 = vmatpush1.bf16.msra.mxu0 %v1003
      %1023 = vmatprep.subr.bf16.mxu0 0
      %1024 = vmatpush2.bf16.msra.mxu0 0
      %1025 = vmatprep.subr.bf16.mxu0 0
      %1026 = vmatpush2.bf16.msra.mxu0 0
      %1027 = vmatprep.subr.bf16.mxu0 0
      %1028 = vmatpush2.bf16.msra.mxu0 0
      %1029 = vmatprep.subr.bf16.mxu0 0
      %1030 = vmatpush2.bf16.msra.mxu0 0
      %1031 = vmatprep.subr.bf16.mxu0 0
      %1032 = vmatpush2.bf16.msra.mxu0 0
      %1033 = vmatprep.subr.bf16.mxu0 0
      %1034 = vmatpush2.bf16.msra.mxu0 0
      %1035 = vmatprep.subr.bf16.mxu0 0
      %1036 = vmatpush2.bf16.msra.mxu0 0
      %1037 = vmatprep.subr.bf16.mxu0 0
      %1038 = vmatpush2.bf16.msra.mxu0 0
      %1039 = vmatprep.mubr.bf16.mxu0 0
      %1040 = vmatmul.mubr.bf16.gmra.mxu0 %v572
      %v1041 = vpop.f32.mrf.mxu0
      %v1042 = vadd.f32 %v993, %v1041
      %v1043 = vpop.f32.mrf.mxu0
      %v1044 = vpop.f32.mrf.mxu0
      %v1045 = vpop.f32.mrf.mxu0
      %1046 = vdwg.mxu0
      %v1047 = vpack.c.bf16 %v912, %v912
      %v1048 = vpack.c.bf16 %v977, %v977
      %v1050 = vsel %vm742, %v1047, 0
      %v1053 = vsel %vm742, %v1048, 0
      %1055 = vmatprep.subr.bf16.mxu0 0
      %1056 = vmatpush1.bf16.xpose.msra.mxu0 0
      %1057 = vmatprep.subr.bf16.mxu0 0
      %1058 = vmatpush1.bf16.xpose.msra.mxu0 0
      %1059 = vmatprep.subr.bf16.mxu0 0
      %1060 = vmatpush1.bf16.xpose.msra.mxu0 0
      %1061 = vmatprep.subr.bf16.mxu0 0
      %1062 = vmatpush1.bf16.xpose.msra.mxu0 0
      %1063 = vmatprep.subr.bf16.mxu0 0
      %1064 = vmatpush1.bf16.xpose.msra.mxu0 0
      %1065 = vmatprep.subr.bf16.mxu0 0
      %1066 = vmatpush1.bf16.xpose.msra.mxu0 0
      %1067 = vmatprep.subr.bf16.mxu0 0
      %1068 = vmatpush1.bf16.xpose.msra.mxu0 0
      %1069 = vmatprep.subr.bf16.mxu0 0
      %1070 = vmatpush1.bf16.xpose.msra.mxu0 %v1053
      %1071 = vmatprep.subr.bf16.mxu0 0
      %1072 = vmatpush2.bf16.xpose.msra.mxu0 0
      %1073 = vmatprep.subr.bf16.mxu0 0
      %1074 = vmatpush2.bf16.xpose.msra.mxu0 0
      %1075 = vmatprep.subr.bf16.mxu0 0
      %1076 = vmatpush2.bf16.xpose.msra.mxu0 0
      %1077 = vmatprep.subr.bf16.mxu0 0
      %1078 = vmatpush2.bf16.xpose.msra.mxu0 0
      %1079 = vmatprep.subr.bf16.mxu0 0
      %1080 = vmatpush2.bf16.xpose.msra.mxu0 0
      %1081 = vmatprep.subr.bf16.mxu0 0
      %1082 = vmatpush2.bf16.xpose.msra.mxu0 0
      %1083 = vmatprep.subr.bf16.mxu0 0
      %1084 = vmatpush2.bf16.xpose.msra.mxu0 0
      %1085 = vmatprep.subr.bf16.mxu0 0
      %1086 = vmatpush2.bf16.xpose.msra.mxu0 0
      %1087 = vmatprep.mubr.bf16.mxu0 0
      %1088 = vmatmul.mubr.bf16.gmra.mxu0 %v1050
      %v1089 = vpop.f32.mrf.mxu0
      %v1090 = vadd.f32 0.0, %v1089
      %v1091 = vpop.f32.mrf.mxu0
      %v1092 = vpop.f32.mrf.mxu0
      %v1093 = vpop.f32.mrf.mxu0
      %1094 = vdwg.mxu0
      %v1095 = vmul.f32 %v1090, 0.35355338
      %v1096 = vsel %vm742, %v1095, -inf
      %1097 = vmax.xlane.f32.xlu0 %v1096
      %v1098 = vpop.xlane.xlu0 %1097
      %v1099 = vsub.f32 %v1095, %v1098
      %v1100 = vmul.f32 %v1099, 1.442695
      %v1101 = vpow.pop %v1100
      %v1102 = vsel %vm742, %v1101, 0.0
      %1103 = vadd.xlane.f32.xlu0 %v1102
      %v1104 = vpop.xlane.xlu0 %1103
      %v1105 = vrcp.pop %v1104
      %v1106 = vmul.f32 %v1101, %v1105
      %v1107 = vpack.c.bf16 %v1106, %v1106
      %v1108 = vpack.c.bf16 %v1042, %v1042
      %v1110 = vsel %vm742, %v1107, 0
      %v1113 = vsel %vm806, %v1108, 0
      %1115 = vmatprep.subr.bf16.mxu0 0
      %1116 = vmatpush1.bf16.msra.mxu0 0
      %1117 = vmatprep.subr.bf16.mxu0 0
      %1118 = vmatpush1.bf16.msra.mxu0 0
      %1119 = vmatprep.subr.bf16.mxu0 0
      %1120 = vmatpush1.bf16.msra.mxu0 0
      %1121 = vmatprep.subr.bf16.mxu0 0
      %1122 = vmatpush1.bf16.msra.mxu0 0
      %1123 = vmatprep.subr.bf16.mxu0 0
      %1124 = vmatpush1.bf16.msra.mxu0 0
      %1125 = vmatprep.subr.bf16.mxu0 0
      %1126 = vmatpush1.bf16.msra.mxu0 0
      %1127 = vmatprep.subr.bf16.mxu0 0
      %1128 = vmatpush1.bf16.msra.mxu0 0
      %1129 = vmatprep.subr.bf16.mxu0 0
      %1130 = vmatpush1.bf16.msra.mxu0 %v1113
      %1131 = vmatprep.subr.bf16.mxu0 0
      %1132 = vmatpush2.bf16.msra.mxu0 0
      %1133 = vmatprep.subr.bf16.mxu0 0
      %1134 = vmatpush2.bf16.msra.mxu0 0
      %1135 = vmatprep.subr.bf16.mxu0 0
      %1136 = vmatpush2.bf16.msra.mxu0 0
      %1137 = vmatprep.subr.bf16.mxu0 0
      %1138 = vmatpush2.bf16.msra.mxu0 0
      %1139 = vmatprep.subr.bf16.mxu0 0
      %1140 = vmatpush2.bf16.msra.mxu0 0
      %1141 = vmatprep.subr.bf16.mxu0 0
      %1142 = vmatpush2.bf16.msra.mxu0 0
      %1143 = vmatprep.subr.bf16.mxu0 0
      %1144 = vmatpush2.bf16.msra.mxu0 0
      %1145 = vmatprep.subr.bf16.mxu0 0
      %1146 = vmatpush2.bf16.msra.mxu0 0
      %1147 = vmatprep.mubr.bf16.mxu0 0
      %1148 = vmatmul.mubr.bf16.gmra.mxu0 %v1110
      %v1149 = vpop.f32.mrf.mxu0
      %v1150 = vadd.f32 0.0, %v1149
      %v1151 = vpop.f32.mrf.mxu0
      %v1152 = vpop.f32.mrf.mxu0
      %v1153 = vpop.f32.mrf.mxu0
      %1154 = vdwg.mxu0
      %v1155 = vpack.c.bf16 %v1150, %v1150
      %s1156 = scalar_lea.vmem %s7, 4
      %v1157 = vld [vmem:[%s1156] sm:$0xf]
      %v1159 = vsel %vm742, %v1155, 0
      %v1162 = vsel %vm806, %v1157, 0
      %1164 = vmatprep.subr.bf16.mxu0 0
      %1165 = vmatpush1.bf16.msra.mxu0 0
      %1166 = vmatprep.subr.bf16.mxu0 0
      %1167 = vmatpush1.bf16.msra.mxu0 0
      %1168 = vmatprep.subr.bf16.mxu0 0
      %1169 = vmatpush1.bf16.msra.mxu0 0
      %1170 = vmatprep.subr.bf16.mxu0 0
      %1171 = vmatpush1.bf16.msra.mxu0 0
      %1172 = vmatprep.subr.bf16.mxu0 0
      %1173 = vmatpush1.bf16.msra.mxu0 0
      %1174 = vmatprep.subr.bf16.mxu0 0
      %1175 = vmatpush1.bf16.msra.mxu0 0
      %1176 = vmatprep.subr.bf16.mxu0 0
      %1177 = vmatpush1.bf16.msra.mxu0 0
      %1178 = vmatprep.subr.bf16.mxu0 0
      %1179 = vmatpush1.bf16.msra.mxu0 %v1162
      %1180 = vmatprep.subr.bf16.mxu0 0
      %1181 = vmatpush2.bf16.msra.mxu0 0
      %1182 = vmatprep.subr.bf16.mxu0 0
      %1183 = vmatpush2.bf16.msra.mxu0 0
      %1184 = vmatprep.subr.bf16.mxu0 0
      %1185 = vmatpush2.bf16.msra.mxu0 0
      %1186 = vmatprep.subr.bf16.mxu0 0
      %1187 = vmatpush2.bf16.msra.mxu0 0
      %1188 = vmatprep.subr.bf16.mxu0 0
      %1189 = vmatpush2.bf16.msra.mxu0 0
      %1190 = vmatprep.subr.bf16.mxu0 0
      %1191 = vmatpush2.bf16.msra.mxu0 0
      %1192 = vmatprep.subr.bf16.mxu0 0
      %1193 = vmatpush2.bf16.msra.mxu0 0
      %1194 = vmatprep.subr.bf16.mxu0 0
      %1195 = vmatpush2.bf16.msra.mxu0 0
      %1196 = vmatprep.mubr.bf16.mxu0 0
      %1197 = vmatmul.mubr.bf16.gmra.mxu0 %v1159
      %v1198 = vpop.f32.mrf.mxu0
      %v1199 = vadd.f32 0.0, %v1198
      %v1200 = vpop.f32.mrf.mxu0
      %v1201 = vpop.f32.mrf.mxu0
      %v1202 = vpop.f32.mrf.mxu0
      %1203 = vdwg.mxu0
      %v1205 = vsel %vm742, %v850, 0
      %v1208 = vsel %vm806, %v851, 0
      %1210 = vmatprep.subr.bf16.mxu0 0
      %1211 = vmatpush1.bf16.msra.mxu0 0
      %1212 = vmatprep.subr.bf16.mxu0 0
      %1213 = vmatpush1.bf16.msra.mxu0 0
      %1214 = vmatprep.subr.bf16.mxu0 0
      %1215 = vmatpush1.bf16.msra.mxu0 0
      %1216 = vmatprep.subr.bf16.mxu0 0
      %1217 = vmatpush1.bf16.msra.mxu0 0
      %1218 = vmatprep.subr.bf16.mxu0 0
      %1219 = vmatpush1.bf16.msra.mxu0 0
      %1220 = vmatprep.subr.bf16.mxu0 0
      %1221 = vmatpush1.bf16.msra.mxu0 0
      %1222 = vmatprep.subr.bf16.mxu0 0
      %1223 = vmatpush1.bf16.msra.mxu0 0
      %1224 = vmatprep.subr.bf16.mxu0 0
      %1225 = vmatpush1.bf16.msra.mxu0 %v1208
      %1226 = vmatprep.subr.bf16.mxu0 0
      %1227 = vmatpush2.bf16.msra.mxu0 0
      %1228 = vmatprep.subr.bf16.mxu0 0
      %1229 = vmatpush2.bf16.msra.mxu0 0
      %1230 = vmatprep.subr.bf16.mxu0 0
      %1231 = vmatpush2.bf16.msra.mxu0 0
      %1232 = vmatprep.subr.bf16.mxu0 0
      %1233 = vmatpush2.bf16.msra.mxu0 0
      %1234 = vmatprep.subr.bf16.mxu0 0
      %1235 = vmatpush2.bf16.msra.mxu0 0
      %1236 = vmatprep.subr.bf16.mxu0 0
      %1237 = vmatpush2.bf16.msra.mxu0 0
      %1238 = vmatprep.subr.bf16.mxu0 0
      %1239 = vmatpush2.bf16.msra.mxu0 0
      %1240 = vmatprep.subr.bf16.mxu0 0
      %1241 = vmatpush2.bf16.msra.mxu0 0
      %1242 = vmatprep.mubr.bf16.mxu0 0
      %1243 = vmatmul.mubr.bf16.gmra.mxu0 %v1205
      %v1244 = vpop.f32.mrf.mxu0
      %v1245 = vadd.f32 %v1199, %v1244
      %v1246 = vpop.f32.mrf.mxu0
      %v1247 = vpop.f32.mrf.mxu0
      %v1248 = vpop.f32.mrf.mxu0
      %1249 = vdwg.mxu0
      %s1250 = scalar_lea.vmem %s1, 32
      %v1251 = vld [vmem:[%s1250] sm:$0xf]
      %v1252 = vld [vmem:[%s1250 + $0x4] sm:$0xf]
      %v1253 = vld [vmem:[%s1250 + $0x8] sm:$0xf]
      %v1254 = vld [vmem:[%s1250 + $0xc] sm:$0xf]
      %s1255 = scalar_lea.vmem %s2, 2
      %v1256 = vld [vmem:[%s1255] sm:$0x1]
      %v1258 = vlaneseq
      %v1259 = vshrl.u32 %v1258, 7
      %v1260 = vsub.s32 0, %v1259
      %v1261 = vrot.slane %v1256, %v1260
      %v1267 = vunpack.c.l.b16 %v1251
      %v1268 = vunpack.c.l.b16 %v1252
      %v1269 = vunpack.c.l.b16 %v1253
      %v1270 = vunpack.c.l.b16 %v1254
      %v1271 = vpack.c.b16 %v1268, %v1267
      %v1272 = vpack.c.b16 %v1270, %v1269
      %1275 = vmatprep.subr.bf16.mxu0 0
      %1276 = vmatpush1.bf16.msra.mxu0 0
      %1277 = vmatprep.subr.bf16.mxu0 0
      %1278 = vmatpush1.bf16.msra.mxu0 0
      %1279 = vmatprep.subr.bf16.mxu0 0
      %1280 = vmatpush1.bf16.msra.mxu0 0
      %1281 = vmatprep.subr.bf16.mxu0 0
      %1282 = vmatpush1.bf16.msra.mxu0 0
      %1283 = vmatprep.subr.bf16.mxu0 0
      %1284 = vmatpush1.bf16.msra.mxu0 0
      %1285 = vmatprep.subr.bf16.mxu0 0
      %1286 = vmatpush1.bf16.msra.mxu0 0
      %1287 = vmatprep.subr.bf16.mxu0 0
      %1288 = vmatpush1.bf16.msra.mxu0 %v1272
      %1289 = vmatprep.subr.bf16.mxu0 0
      %1290 = vmatpush1.bf16.msra.mxu0 %v1271
      %1291 = vmatprep.subr.bf16.mxu0 0
      %1292 = vmatpush2.bf16.msra.mxu0 0
      %1293 = vmatprep.subr.bf16.mxu0 0
      %1294 = vmatpush2.bf16.msra.mxu0 0
      %1295 = vmatprep.subr.bf16.mxu0 0
      %1296 = vmatpush2.bf16.msra.mxu0 0
      %1297 = vmatprep.subr.bf16.mxu0 0
      %1298 = vmatpush2.bf16.msra.mxu0 0
      %1299 = vmatprep.subr.bf16.mxu0 0
      %1300 = vmatpush2.bf16.msra.mxu0 0
      %1301 = vmatprep.subr.bf16.mxu0 0
      %1302 = vmatpush2.bf16.msra.mxu0 0
      %1303 = vmatprep.subr.bf16.mxu0 0
      %1304 = vmatpush2.bf16.msra.mxu0 0
      %1305 = vmatprep.subr.bf16.mxu0 0
      %1306 = vmatpush2.bf16.msra.mxu0 0
      %1307 = vmatprep.mubr.bf16.mxu0 0
      %1308 = vmatmul.mubr.bf16.gmra.mxu0 %v572
      %v1309 = vpop.f32.mrf.mxu0
      %v1310 = vadd.f32 %v1261, %v1309
      %v1311 = vpop.f32.mrf.mxu0
      %v1312 = vpop.f32.mrf.mxu0
      %v1313 = vpop.f32.mrf.mxu0
      %1314 = vdwg.mxu0
      %s1315 = scalar_lea.vmem %s3, 32
      %v1316 = vld [vmem:[%s1315] sm:$0xf]
      %v1317 = vld [vmem:[%s1315 + $0x4] sm:$0xf]
      %v1318 = vld [vmem:[%s1315 + $0x8] sm:$0xf]
      %v1319 = vld [vmem:[%s1315 + $0xc] sm:$0xf]
      %s1320 = scalar_lea.vmem %s4, 2
      %v1321 = vld [vmem:[%s1320] sm:$0x1]
      %v1323 = vlaneseq
      %v1324 = vshrl.u32 %v1323, 7
      %v1325 = vsub.s32 0, %v1324
      %v1326 = vrot.slane %v1321, %v1325
      %v1332 = vunpack.c.l.b16 %v1316
      %v1333 = vunpack.c.l.b16 %v1317
      %v1334 = vunpack.c.l.b16 %v1318
      %v1335 = vunpack.c.l.b16 %v1319
      %v1336 = vpack.c.b16 %v1333, %v1332
      %v1337 = vpack.c.b16 %v1335, %v1334
      %1340 = vmatprep.subr.bf16.mxu0 0
      %1341 = vmatpush1.bf16.msra.mxu0 0
      %1342 = vmatprep.subr.bf16.mxu0 0
      %1343 = vmatpush1.bf16.msra.mxu0 0
      %1344 = vmatprep.subr.bf16.mxu0 0
      %1345 = vmatpush1.bf16.msra.mxu0 0
      %1346 = vmatprep.subr.bf16.mxu0 0
      %1347 = vmatpush1.bf16.msra.mxu0 0
      %1348 = vmatprep.subr.bf16.mxu0 0
      %1349 = vmatpush1.bf16.msra.mxu0 0
      %1350 = vmatprep.subr.bf16.mxu0 0
      %1351 = vmatpush1.bf16.msra.mxu0 0
      %1352 = vmatprep.subr.bf16.mxu0 0
      %1353 = vmatpush1.bf16.msra.mxu0 %v1337
      %1354 = vmatprep.subr.bf16.mxu0 0
      %1355 = vmatpush1.bf16.msra.mxu0 %v1336
      %1356 = vmatprep.subr.bf16.mxu0 0
      %1357 = vmatpush2.bf16.msra.mxu0 0
      %1358 = vmatprep.subr.bf16.mxu0 0
      %1359 = vmatpush2.bf16.msra.mxu0 0
      %1360 = vmatprep.subr.bf16.mxu0 0
      %1361 = vmatpush2.bf16.msra.mxu0 0
      %1362 = vmatprep.subr.bf16.mxu0 0
      %1363 = vmatpush2.bf16.msra.mxu0 0
      %1364 = vmatprep.subr.bf16.mxu0 0
      %1365 = vmatpush2.bf16.msra.mxu0 0
      %1366 = vmatprep.subr.bf16.mxu0 0
      %1367 = vmatpush2.bf16.msra.mxu0 0
      %1368 = vmatprep.subr.bf16.mxu0 0
      %1369 = vmatpush2.bf16.msra.mxu0 0
      %1370 = vmatprep.subr.bf16.mxu0 0
      %1371 = vmatpush2.bf16.msra.mxu0 0
      %1372 = vmatprep.mubr.bf16.mxu0 0
      %1373 = vmatmul.mubr.bf16.gmra.mxu0 %v572
      %v1374 = vpop.f32.mrf.mxu0
      %v1375 = vadd.f32 %v1326, %v1374
      %v1376 = vpop.f32.mrf.mxu0
      %v1377 = vpop.f32.mrf.mxu0
      %v1378 = vpop.f32.mrf.mxu0
      %1379 = vdwg.mxu0
      %s1380 = scalar_lea.vmem %s5, 32
      %v1381 = vld [vmem:[%s1380] sm:$0xf]
      %v1382 = vld [vmem:[%s1380 + $0x4] sm:$0xf]
      %v1383 = vld [vmem:[%s1380 + $0x8] sm:$0xf]
      %v1384 = vld [vmem:[%s1380 + $0xc] sm:$0xf]
      %s1385 = scalar_lea.vmem %s6, 2
      %v1386 = vld [vmem:[%s1385] sm:$0x1]
      %v1388 = vlaneseq
      %v1389 = vshrl.u32 %v1388, 7
      %v1390 = vsub.s32 0, %v1389
      %v1391 = vrot.slane %v1386, %v1390
      %v1397 = vunpack.c.l.b16 %v1381
      %v1398 = vunpack.c.l.b16 %v1382
      %v1399 = vunpack.c.l.b16 %v1383
      %v1400 = vunpack.c.l.b16 %v1384
      %v1401 = vpack.c.b16 %v1398, %v1397
      %v1402 = vpack.c.b16 %v1400, %v1399
      %1405 = vmatprep.subr.bf16.mxu0 0
      %1406 = vmatpush1.bf16.msra.mxu0 0
      %1407 = vmatprep.subr.bf16.mxu0 0
      %1408 = vmatpush1.bf16.msra.mxu0 0
      %1409 = vmatprep.subr.bf16.mxu0 0
      %1410 = vmatpush1.bf16.msra.mxu0 0
      %1411 = vmatprep.subr.bf16.mxu0 0
      %1412 = vmatpush1.bf16.msra.mxu0 0
      %1413 = vmatprep.subr.bf16.mxu0 0
      %1414 = vmatpush1.bf16.msra.mxu0 0
      %1415 = vmatprep.subr.bf16.mxu0 0
      %1416 = vmatpush1.bf16.msra.mxu0 0
      %1417 = vmatprep.subr.bf16.mxu0 0
      %1418 = vmatpush1.bf16.msra.mxu0 %v1402
      %1419 = vmatprep.subr.bf16.mxu0 0
      %1420 = vmatpush1.bf16.msra.mxu0 %v1401
      %1421 = vmatprep.subr.bf16.mxu0 0
      %1422 = vmatpush2.bf16.msra.mxu0 0
      %1423 = vmatprep.subr.bf16.mxu0 0
      %1424 = vmatpush2.bf16.msra.mxu0 0
      %1425 = vmatprep.subr.bf16.mxu0 0
      %1426 = vmatpush2.bf16.msra.mxu0 0
      %1427 = vmatprep.subr.bf16.mxu0 0
      %1428 = vmatpush2.bf16.msra.mxu0 0
      %1429 = vmatprep.subr.bf16.mxu0 0
      %1430 = vmatpush2.bf16.msra.mxu0 0
      %1431 = vmatprep.subr.bf16.mxu0 0
      %1432 = vmatpush2.bf16.msra.mxu0 0
      %1433 = vmatprep.subr.bf16.mxu0 0
      %1434 = vmatpush2.bf16.msra.mxu0 0
      %1435 = vmatprep.subr.bf16.mxu0 0
      %1436 = vmatpush2.bf16.msra.mxu0 0
      %1437 = vmatprep.mubr.bf16.mxu0 0
      %1438 = vmatmul.mubr.bf16.gmra.mxu0 %v572
      %v1439 = vpop.f32.mrf.mxu0
      %v1440 = vadd.f32 %v1391, %v1439
      %v1441 = vpop.f32.mrf.mxu0
      %v1442 = vpop.f32.mrf.mxu0
      %v1443 = vpop.f32.mrf.mxu0
      %1444 = vdwg.mxu0
      %v1445 = vpack.c.bf16 %v1310, %v1310
      %v1446 = vpack.c.bf16 %v1375, %v1375
      %v1448 = vsel %vm742, %v1445, 0
      %v1451 = vsel %vm742, %v1446, 0
      %1453 = vmatprep.subr.bf16.mxu0 0
      %1454 = vmatpush1.bf16.xpose.msra.mxu0 0
      %1455 = vmatprep.subr.bf16.mxu0 0
      %1456 = vmatpush1.bf16.xpose.msra.mxu0 0
      %1457 = vmatprep.subr.bf16.mxu0 0
      %1458 = vmatpush1.bf16.xpose.msra.mxu0 0
      %1459 = vmatprep.subr.bf16.mxu0 0
      %1460 = vmatpush1.bf16.xpose.msra.mxu0 0
      %1461 = vmatprep.subr.bf16.mxu0 0
      %1462 = vmatpush1.bf16.xpose.msra.mxu0 0
      %1463 = vmatprep.subr.bf16.mxu0 0
      %1464 = vmatpush1.bf16.xpose.msra.mxu0 0
      %1465 = vmatprep.subr.bf16.mxu0 0
      %1466 = vmatpush1.bf16.xpose.msra.mxu0 0
      %1467 = vmatprep.subr.bf16.mxu0 0
      %1468 = vmatpush1.bf16.xpose.msra.mxu0 %v1451
      %1469 = vmatprep.subr.bf16.mxu0 0
      %1470 = vmatpush2.bf16.xpose.msra.mxu0 0
      %1471 = vmatprep.subr.bf16.mxu0 0
      %1472 = vmatpush2.bf16.xpose.msra.mxu0 0
      %1473 = vmatprep.subr.bf16.mxu0 0
      %1474 = vmatpush2.bf16.xpose.msra.mxu0 0
      %1475 = vmatprep.subr.bf16.mxu0 0
      %1476 = vmatpush2.bf16.xpose.msra.mxu0 0
      %1477 = vmatprep.subr.bf16.mxu0 0
      %1478 = vmatpush2.bf16.xpose.msra.mxu0 0
      %1479 = vmatprep.subr.bf16.mxu0 0
      %1480 = vmatpush2.bf16.xpose.msra.mxu0 0
      %1481 = vmatprep.subr.bf16.mxu0 0
      %1482 = vmatpush2.bf16.xpose.msra.mxu0 0
      %1483 = vmatprep.subr.bf16.mxu0 0
      %1484 = vmatpush2.bf16.xpose.msra.mxu0 0
      %1485 = vmatprep.mubr.bf16.mxu0 0
      %1486 = vmatmul.mubr.bf16.gmra.mxu0 %v1448
      %v1487 = vpop.f32.mrf.mxu0
      %v1488 = vadd.f32 0.0, %v1487
      %v1489 = vpop.f32.mrf.mxu0
      %v1490 = vpop.f32.mrf.mxu0
      %v1491 = vpop.f32.mrf.mxu0
      %1492 = vdwg.mxu0
      %v1493 = vmul.f32 %v1488, 0.35355338
      %v1494 = vsel %vm742, %v1493, -inf
      %1495 = vmax.xlane.f32.xlu0 %v1494
      %v1496 = vpop.xlane.xlu0 %1495
      %v1497 = vsub.f32 %v1493, %v1496
      %v1498 = vmul.f32 %v1497, 1.442695
      %v1499 = vpow.pop %v1498
      %v1500 = vsel %vm742, %v1499, 0.0
      %1501 = vadd.xlane.f32.xlu0 %v1500
      %v1502 = vpop.xlane.xlu0 %1501
      %v1503 = vrcp.pop %v1502
      %v1504 = vmul.f32 %v1499, %v1503
      %v1505 = vpack.c.bf16 %v1504, %v1504
      %v1506 = vpack.c.bf16 %v1440, %v1440
      %v1508 = vsel %vm742, %v1505, 0
      %v1511 = vsel %vm806, %v1506, 0
      %1513 = vmatprep.subr.bf16.mxu0 0
      %1514 = vmatpush1.bf16.msra.mxu0 0
      %1515 = vmatprep.subr.bf16.mxu0 0
      %1516 = vmatpush1.bf16.msra.mxu0 0
      %1517 = vmatprep.subr.bf16.mxu0 0
      %1518 = vmatpush1.bf16.msra.mxu0 0
      %1519 = vmatprep.subr.bf16.mxu0 0
      %1520 = vmatpush1.bf16.msra.mxu0 0
      %1521 = vmatprep.subr.bf16.mxu0 0
      %1522 = vmatpush1.bf16.msra.mxu0 0
      %1523 = vmatprep.subr.bf16.mxu0 0
      %1524 = vmatpush1.bf16.msra.mxu0 0
      %1525 = vmatprep.subr.bf16.mxu0 0
      %1526 = vmatpush1.bf16.msra.mxu0 0
      %1527 = vmatprep.subr.bf16.mxu0 0
      %1528 = vmatpush1.bf16.msra.mxu0 %v1511
      %1529 = vmatprep.subr.bf16.mxu0 0
      %1530 = vmatpush2.bf16.msra.mxu0 0
      %1531 = vmatprep.subr.bf16.mxu0 0
      %1532 = vmatpush2.bf16.msra.mxu0 0
      %1533 = vmatprep.subr.bf16.mxu0 0
      %1534 = vmatpush2.bf16.msra.mxu0 0
      %1535 = vmatprep.subr.bf16.mxu0 0
      %1536 = vmatpush2.bf16.msra.mxu0 0
      %1537 = vmatprep.subr.bf16.mxu0 0
      %1538 = vmatpush2.bf16.msra.mxu0 0
      %1539 = vmatprep.subr.bf16.mxu0 0
      %1540 = vmatpush2.bf16.msra.mxu0 0
      %1541 = vmatprep.subr.bf16.mxu0 0
      %1542 = vmatpush2.bf16.msra.mxu0 0
      %1543 = vmatprep.subr.bf16.mxu0 0
      %1544 = vmatpush2.bf16.msra.mxu0 0
      %1545 = vmatprep.mubr.bf16.mxu0 0
      %1546 = vmatmul.mubr.bf16.gmra.mxu0 %v1508
      %v1547 = vpop.f32.mrf.mxu0
      %v1548 = vadd.f32 0.0, %v1547
      %v1549 = vpop.f32.mrf.mxu0
      %v1550 = vpop.f32.mrf.mxu0
      %v1551 = vpop.f32.mrf.mxu0
      %1552 = vdwg.mxu0
      %v1553 = vpack.c.bf16 %v1548, %v1548
      %s1554 = scalar_lea.vmem %s7, 8
      %v1555 = vld [vmem:[%s1554] sm:$0xf]
      %v1557 = vsel %vm742, %v1553, 0
      %v1560 = vsel %vm806, %v1555, 0
      %1562 = vmatprep.subr.bf16.mxu0 0
      %1563 = vmatpush1.bf16.msra.mxu0 0
      %1564 = vmatprep.subr.bf16.mxu0 0
      %1565 = vmatpush1.bf16.msra.mxu0 0
      %1566 = vmatprep.subr.bf16.mxu0 0
      %1567 = vmatpush1.bf16.msra.mxu0 0
      %1568 = vmatprep.subr.bf16.mxu0 0
      %1569 = vmatpush1.bf16.msra.mxu0 0
      %1570 = vmatprep.subr.bf16.mxu0 0
      %1571 = vmatpush1.bf16.msra.mxu0 0
      %1572 = vmatprep.subr.bf16.mxu0 0
      %1573 = vmatpush1.bf16.msra.mxu0 0
      %1574 = vmatprep.subr.bf16.mxu0 0
      %1575 = vmatpush1.bf16.msra.mxu0 0
      %1576 = vmatprep.subr.bf16.mxu0 0
      %1577 = vmatpush1.bf16.msra.mxu0 %v1560
      %1578 = vmatprep.subr.bf16.mxu0 0
      %1579 = vmatpush2.bf16.msra.mxu0 0
      %1580 = vmatprep.subr.bf16.mxu0 0
      %1581 = vmatpush2.bf16.msra.mxu0 0
      %1582 = vmatprep.subr.bf16.mxu0 0
      %1583 = vmatpush2.bf16.msra.mxu0 0
      %1584 = vmatprep.subr.bf16.mxu0 0
      %1585 = vmatpush2.bf16.msra.mxu0 0
      %1586 = vmatprep.subr.bf16.mxu0 0
      %1587 = vmatpush2.bf16.msra.mxu0 0
      %1588 = vmatprep.subr.bf16.mxu0 0
      %1589 = vmatpush2.bf16.msra.mxu0 0
      %1590 = vmatprep.subr.bf16.mxu0 0
      %1591 = vmatpush2.bf16.msra.mxu0 0
      %1592 = vmatprep.subr.bf16.mxu0 0
      %1593 = vmatpush2.bf16.msra.mxu0 0
      %1594 = vmatprep.mubr.bf16.mxu0 0
      %1595 = vmatmul.mubr.bf16.gmra.mxu0 %v1557
      %v1596 = vpop.f32.mrf.mxu0
      %v1597 = vadd.f32 0.0, %v1596
      %v1598 = vpop.f32.mrf.mxu0
      %v1599 = vpop.f32.mrf.mxu0
      %v1600 = vpop.f32.mrf.mxu0
      %1601 = vdwg.mxu0
      %v1602 = vadd.f32 %v1245, %v1597
      %s1603 = scalar_lea.vmem %s1, 48
      %v1604 = vld [vmem:[%s1603] sm:$0xf]
      %v1605 = vld [vmem:[%s1603 + $0x4] sm:$0xf]
      %v1606 = vld [vmem:[%s1603 + $0x8] sm:$0xf]
      %v1607 = vld [vmem:[%s1603 + $0xc] sm:$0xf]
      %s1608 = scalar_lea.vmem %s2, 3
      %v1609 = vld [vmem:[%s1608] sm:$0x1]
      %v1611 = vlaneseq
      %v1612 = vshrl.u32 %v1611, 7
      %v1613 = vsub.s32 0, %v1612
      %v1614 = vrot.slane %v1609, %v1613
      %v1620 = vunpack.c.l.b16 %v1604
      %v1621 = vunpack.c.l.b16 %v1605
      %v1622 = vunpack.c.l.b16 %v1606
      %v1623 = vunpack.c.l.b16 %v1607
      %v1624 = vpack.c.b16 %v1621, %v1620
      %v1625 = vpack.c.b16 %v1623, %v1622
      %1628 = vmatprep.subr.bf16.mxu0 0
      %1629 = vmatpush1.bf16.msra.mxu0 0
      %1630 = vmatprep.subr.bf16.mxu0 0
      %1631 = vmatpush1.bf16.msra.mxu0 0
      %1632 = vmatprep.subr.bf16.mxu0 0
      %1633 = vmatpush1.bf16.msra.mxu0 0
      %1634 = vmatprep.subr.bf16.mxu0 0
      %1635 = vmatpush1.bf16.msra.mxu0 0
      %1636 = vmatprep.subr.bf16.mxu0 0
      %1637 = vmatpush1.bf16.msra.mxu0 0
      %1638 = vmatprep.subr.bf16.mxu0 0
      %1639 = vmatpush1.bf16.msra.mxu0 0
      %1640 = vmatprep.subr.bf16.mxu0 0
      %1641 = vmatpush1.bf16.msra.mxu0 %v1625
      %1642 = vmatprep.subr.bf16.mxu0 0
      %1643 = vmatpush1.bf16.msra.mxu0 %v1624
      %1644 = vmatprep.subr.bf16.mxu0 0
      %1645 = vmatpush2.bf16.msra.mxu0 0
      %1646 = vmatprep.subr.bf16.mxu0 0
      %1647 = vmatpush2.bf16.msra.mxu0 0
      %1648 = vmatprep.subr.bf16.mxu0 0
      %1649 = vmatpush2.bf16.msra.mxu0 0
      %1650 = vmatprep.subr.bf16.mxu0 0
      %1651 = vmatpush2.bf16.msra.mxu0 0
      %1652 = vmatprep.subr.bf16.mxu0 0
      %1653 = vmatpush2.bf16.msra.mxu0 0
      %1654 = vmatprep.subr.bf16.mxu0 0
      %1655 = vmatpush2.bf16.msra.mxu0 0
      %1656 = vmatprep.subr.bf16.mxu0 0
      %1657 = vmatpush2.bf16.msra.mxu0 0
      %1658 = vmatprep.subr.bf16.mxu0 0
      %1659 = vmatpush2.bf16.msra.mxu0 0
      %1660 = vmatprep.mubr.bf16.mxu0 0
      %1661 = vmatmul.mubr.bf16.gmra.mxu0 %v572
      %v1662 = vpop.f32.mrf.mxu0
      %v1663 = vadd.f32 %v1614, %v1662
      %v1664 = vpop.f32.mrf.mxu0
      %v1665 = vpop.f32.mrf.mxu0
      %v1666 = vpop.f32.mrf.mxu0
      %1667 = vdwg.mxu0
      %s1668 = scalar_lea.vmem %s3, 48
      %v1669 = vld [vmem:[%s1668] sm:$0xf]
      %v1670 = vld [vmem:[%s1668 + $0x4] sm:$0xf]
      %v1671 = vld [vmem:[%s1668 + $0x8] sm:$0xf]
      %v1672 = vld [vmem:[%s1668 + $0xc] sm:$0xf]
      %s1673 = scalar_lea.vmem %s4, 3
      %v1674 = vld [vmem:[%s1673] sm:$0x1]
      %v1676 = vlaneseq
      %v1677 = vshrl.u32 %v1676, 7
      %v1678 = vsub.s32 0, %v1677
      %v1679 = vrot.slane %v1674, %v1678
      %v1685 = vunpack.c.l.b16 %v1669
      %v1686 = vunpack.c.l.b16 %v1670
      %v1687 = vunpack.c.l.b16 %v1671
      %v1688 = vunpack.c.l.b16 %v1672
      %v1689 = vpack.c.b16 %v1686, %v1685
      %v1690 = vpack.c.b16 %v1688, %v1687
      %1693 = vmatprep.subr.bf16.mxu0 0
      %1694 = vmatpush1.bf16.msra.mxu0 0
      %1695 = vmatprep.subr.bf16.mxu0 0
      %1696 = vmatpush1.bf16.msra.mxu0 0
      %1697 = vmatprep.subr.bf16.mxu0 0
      %1698 = vmatpush1.bf16.msra.mxu0 0
      %1699 = vmatprep.subr.bf16.mxu0 0
      %1700 = vmatpush1.bf16.msra.mxu0 0
      %1701 = vmatprep.subr.bf16.mxu0 0
      %1702 = vmatpush1.bf16.msra.mxu0 0
      %1703 = vmatprep.subr.bf16.mxu0 0
      %1704 = vmatpush1.bf16.msra.mxu0 0
      %1705 = vmatprep.subr.bf16.mxu0 0
      %1706 = vmatpush1.bf16.msra.mxu0 %v1690
      %1707 = vmatprep.subr.bf16.mxu0 0
      %1708 = vmatpush1.bf16.msra.mxu0 %v1689
      %1709 = vmatprep.subr.bf16.mxu0 0
      %1710 = vmatpush2.bf16.msra.mxu0 0
      %1711 = vmatprep.subr.bf16.mxu0 0
      %1712 = vmatpush2.bf16.msra.mxu0 0
      %1713 = vmatprep.subr.bf16.mxu0 0
      %1714 = vmatpush2.bf16.msra.mxu0 0
      %1715 = vmatprep.subr.bf16.mxu0 0
      %1716 = vmatpush2.bf16.msra.mxu0 0
      %1717 = vmatprep.subr.bf16.mxu0 0
      %1718 = vmatpush2.bf16.msra.mxu0 0
      %1719 = vmatprep.subr.bf16.mxu0 0
      %1720 = vmatpush2.bf16.msra.mxu0 0
      %1721 = vmatprep.subr.bf16.mxu0 0
      %1722 = vmatpush2.bf16.msra.mxu0 0
      %1723 = vmatprep.subr.bf16.mxu0 0
      %1724 = vmatpush2.bf16.msra.mxu0 0
      %1725 = vmatprep.mubr.bf16.mxu0 0
      %1726 = vmatmul.mubr.bf16.gmra.mxu0 %v572
      %v1727 = vpop.f32.mrf.mxu0
      %v1728 = vadd.f32 %v1679, %v1727
      %v1729 = vpop.f32.mrf.mxu0
      %v1730 = vpop.f32.mrf.mxu0
      %v1731 = vpop.f32.mrf.mxu0
      %1732 = vdwg.mxu0
      %s1733 = scalar_lea.vmem %s5, 48
      %v1734 = vld [vmem:[%s1733] sm:$0xf]
      %v1735 = vld [vmem:[%s1733 + $0x4] sm:$0xf]
      %v1736 = vld [vmem:[%s1733 + $0x8] sm:$0xf]
      %v1737 = vld [vmem:[%s1733 + $0xc] sm:$0xf]
      %s1738 = scalar_lea.vmem %s6, 3
      %v1739 = vld [vmem:[%s1738] sm:$0x1]
      %v1741 = vlaneseq
      %v1742 = vshrl.u32 %v1741, 7
      %v1743 = vsub.s32 0, %v1742
      %v1744 = vrot.slane %v1739, %v1743
      %v1750 = vunpack.c.l.b16 %v1734
      %v1751 = vunpack.c.l.b16 %v1735
      %v1752 = vunpack.c.l.b16 %v1736
      %v1753 = vunpack.c.l.b16 %v1737
      %v1754 = vpack.c.b16 %v1751, %v1750
      %v1755 = vpack.c.b16 %v1753, %v1752
      %1758 = vmatprep.subr.bf16.mxu0 0
      %1759 = vmatpush1.bf16.msra.mxu0 0
      %1760 = vmatprep.subr.bf16.mxu0 0
      %1761 = vmatpush1.bf16.msra.mxu0 0
      %1762 = vmatprep.subr.bf16.mxu0 0
      %1763 = vmatpush1.bf16.msra.mxu0 0
      %1764 = vmatprep.subr.bf16.mxu0 0
      %1765 = vmatpush1.bf16.msra.mxu0 0
      %1766 = vmatprep.subr.bf16.mxu0 0
      %1767 = vmatpush1.bf16.msra.mxu0 0
      %1768 = vmatprep.subr.bf16.mxu0 0
      %1769 = vmatpush1.bf16.msra.mxu0 0
      %1770 = vmatprep.subr.bf16.mxu0 0
      %1771 = vmatpush1.bf16.msra.mxu0 %v1755
      %1772 = vmatprep.subr.bf16.mxu0 0
      %1773 = vmatpush1.bf16.msra.mxu0 %v1754
      %1774 = vmatprep.subr.bf16.mxu0 0
      %1775 = vmatpush2.bf16.msra.mxu0 0
      %1776 = vmatprep.subr.bf16.mxu0 0
      %1777 = vmatpush2.bf16.msra.mxu0 0
      %1778 = vmatprep.subr.bf16.mxu0 0
      %1779 = vmatpush2.bf16.msra.mxu0 0
      %1780 = vmatprep.subr.bf16.mxu0 0
      %1781 = vmatpush2.bf16.msra.mxu0 0
      %1782 = vmatprep.subr.bf16.mxu0 0
      %1783 = vmatpush2.bf16.msra.mxu0 0
      %1784 = vmatprep.subr.bf16.mxu0 0
      %1785 = vmatpush2.bf16.msra.mxu0 0
      %1786 = vmatprep.subr.bf16.mxu0 0
      %1787 = vmatpush2.bf16.msra.mxu0 0
      %1788 = vmatprep.subr.bf16.mxu0 0
      %1789 = vmatpush2.bf16.msra.mxu0 0
      %1790 = vmatprep.mubr.bf16.mxu0 0
      %1791 = vmatmul.mubr.bf16.gmra.mxu0 %v572
      %v1792 = vpop.f32.mrf.mxu0
      %v1793 = vadd.f32 %v1744, %v1792
      %v1794 = vpop.f32.mrf.mxu0
      %v1795 = vpop.f32.mrf.mxu0
      %v1796 = vpop.f32.mrf.mxu0
      %1797 = vdwg.mxu0
      %v1798 = vpack.c.bf16 %v1663, %v1663
      %v1799 = vpack.c.bf16 %v1728, %v1728
      %v1801 = vsel %vm742, %v1798, 0
      %v1804 = vsel %vm742, %v1799, 0
      %1806 = vmatprep.subr.bf16.mxu0 0
      %1807 = vmatpush1.bf16.xpose.msra.mxu0 0
      %1808 = vmatprep.subr.bf16.mxu0 0
      %1809 = vmatpush1.bf16.xpose.msra.mxu0 0
      %1810 = vmatprep.subr.bf16.mxu0 0
      %1811 = vmatpush1.bf16.xpose.msra.mxu0 0
      %1812 = vmatprep.subr.bf16.mxu0 0
      %1813 = vmatpush1.bf16.xpose.msra.mxu0 0
      %1814 = vmatprep.subr.bf16.mxu0 0
      %1815 = vmatpush1.bf16.xpose.msra.mxu0 0
      %1816 = vmatprep.subr.bf16.mxu0 0
      %1817 = vmatpush1.bf16.xpose.msra.mxu0 0
      %1818 = vmatprep.subr.bf16.mxu0 0
      %1819 = vmatpush1.bf16.xpose.msra.mxu0 0
      %1820 = vmatprep.subr.bf16.mxu0 0
      %1821 = vmatpush1.bf16.xpose.msra.mxu0 %v1804
      %1822 = vmatprep.subr.bf16.mxu0 0
      %1823 = vmatpush2.bf16.xpose.msra.mxu0 0
      %1824 = vmatprep.subr.bf16.mxu0 0
      %1825 = vmatpush2.bf16.xpose.msra.mxu0 0
      %1826 = vmatprep.subr.bf16.mxu0 0
      %1827 = vmatpush2.bf16.xpose.msra.mxu0 0
      %1828 = vmatprep.subr.bf16.mxu0 0
      %1829 = vmatpush2.bf16.xpose.msra.mxu0 0
      %1830 = vmatprep.subr.bf16.mxu0 0
      %1831 = vmatpush2.bf16.xpose.msra.mxu0 0
      %1832 = vmatprep.subr.bf16.mxu0 0
      %1833 = vmatpush2.bf16.xpose.msra.mxu0 0
      %1834 = vmatprep.subr.bf16.mxu0 0
      %1835 = vmatpush2.bf16.xpose.msra.mxu0 0
      %1836 = vmatprep.subr.bf16.mxu0 0
      %1837 = vmatpush2.bf16.xpose.msra.mxu0 0
      %1838 = vmatprep.mubr.bf16.mxu0 0
      %1839 = vmatmul.mubr.bf16.gmra.mxu0 %v1801
      %v1840 = vpop.f32.mrf.mxu0
      %v1841 = vadd.f32 0.0, %v1840
      %v1842 = vpop.f32.mrf.mxu0
      %v1843 = vpop.f32.mrf.mxu0
      %v1844 = vpop.f32.mrf.mxu0
      %1845 = vdwg.mxu0
      %v1846 = vmul.f32 %v1841, 0.35355338
      %v1847 = vsel %vm742, %v1846, -inf
      %1848 = vmax.xlane.f32.xlu0 %v1847
      %v1849 = vpop.xlane.xlu0 %1848
      %v1850 = vsub.f32 %v1846, %v1849
      %v1851 = vmul.f32 %v1850, 1.442695
      %v1852 = vpow.pop %v1851
      %v1853 = vsel %vm742, %v1852, 0.0
      %1854 = vadd.xlane.f32.xlu0 %v1853
      %v1855 = vpop.xlane.xlu0 %1854
      %v1856 = vrcp.pop %v1855
      %v1857 = vmul.f32 %v1852, %v1856
      %v1858 = vpack.c.bf16 %v1857, %v1857
      %v1859 = vpack.c.bf16 %v1793, %v1793
      %v1861 = vsel %vm742, %v1858, 0
      %v1864 = vsel %vm806, %v1859, 0
      %1866 = vmatprep.subr.bf16.mxu0 0
      %1867 = vmatpush1.bf16.msra.mxu0 0
      %1868 = vmatprep.subr.bf16.mxu0 0
      %1869 = vmatpush1.bf16.msra.mxu0 0
      %1870 = vmatprep.subr.bf16.mxu0 0
      %1871 = vmatpush1.bf16.msra.mxu0 0
      %1872 = vmatprep.subr.bf16.mxu0 0
      %1873 = vmatpush1.bf16.msra.mxu0 0
      %1874 = vmatprep.subr.bf16.mxu0 0
      %1875 = vmatpush1.bf16.msra.mxu0 0
      %1876 = vmatprep.subr.bf16.mxu0 0
      %1877 = vmatpush1.bf16.msra.mxu0 0
      %1878 = vmatprep.subr.bf16.mxu0 0
      %1879 = vmatpush1.bf16.msra.mxu0 0
      %1880 = vmatprep.subr.bf16.mxu0 0
      %1881 = vmatpush1.bf16.msra.mxu0 %v1864
      %1882 = vmatprep.subr.bf16.mxu0 0
      %1883 = vmatpush2.bf16.msra.mxu0 0
      %1884 = vmatprep.subr.bf16.mxu0 0
      %1885 = vmatpush2.bf16.msra.mxu0 0
      %1886 = vmatprep.subr.bf16.mxu0 0
      %1887 = vmatpush2.bf16.msra.mxu0 0
      %1888 = vmatprep.subr.bf16.mxu0 0
      %1889 = vmatpush2.bf16.msra.mxu0 0
      %1890 = vmatprep.subr.bf16.mxu0 0
      %1891 = vmatpush2.bf16.msra.mxu0 0
      %1892 = vmatprep.subr.bf16.mxu0 0
      %1893 = vmatpush2.bf16.msra.mxu0 0
      %1894 = vmatprep.subr.bf16.mxu0 0
      %1895 = vmatpush2.bf16.msra.mxu0 0
      %1896 = vmatprep.subr.bf16.mxu0 0
      %1897 = vmatpush2.bf16.msra.mxu0 0
      %1898 = vmatprep.mubr.bf16.mxu0 0
      %1899 = vmatmul.mubr.bf16.gmra.mxu0 %v1861
      %v1900 = vpop.f32.mrf.mxu0
      %v1901 = vadd.f32 0.0, %v1900
      %v1902 = vpop.f32.mrf.mxu0
      %v1903 = vpop.f32.mrf.mxu0
      %v1904 = vpop.f32.mrf.mxu0
      %1905 = vdwg.mxu0
      %v1906 = vpack.c.bf16 %v1901, %v1901
      %s1907 = scalar_lea.vmem %s7, 12
      %v1908 = vld [vmem:[%s1907] sm:$0xf]
      %v1910 = vsel %vm742, %v1906, 0
      %v1913 = vsel %vm806, %v1908, 0
      %1915 = vmatprep.subr.bf16.mxu0 0
      %1916 = vmatpush1.bf16.msra.mxu0 0
      %1917 = vmatprep.subr.bf16.mxu0 0
      %1918 = vmatpush1.bf16.msra.mxu0 0
      %1919 = vmatprep.subr.bf16.mxu0 0
      %1920 = vmatpush1.bf16.msra.mxu0 0
      %1921 = vmatprep.subr.bf16.mxu0 0
      %1922 = vmatpush1.bf16.msra.mxu0 0
      %1923 = vmatprep.subr.bf16.mxu0 0
      %1924 = vmatpush1.bf16.msra.mxu0 0
      %1925 = vmatprep.subr.bf16.mxu0 0
      %1926 = vmatpush1.bf16.msra.mxu0 0
      %1927 = vmatprep.subr.bf16.mxu0 0
      %1928 = vmatpush1.bf16.msra.mxu0 0
      %1929 = vmatprep.subr.bf16.mxu0 0
      %1930 = vmatpush1.bf16.msra.mxu0 %v1913
      %1931 = vmatprep.subr.bf16.mxu0 0
      %1932 = vmatpush2.bf16.msra.mxu0 0
      %1933 = vmatprep.subr.bf16.mxu0 0
      %1934 = vmatpush2.bf16.msra.mxu0 0
      %1935 = vmatprep.subr.bf16.mxu0 0
      %1936 = vmatpush2.bf16.msra.mxu0 0
      %1937 = vmatprep.subr.bf16.mxu0 0
      %1938 = vmatpush2.bf16.msra.mxu0 0
      %1939 = vmatprep.subr.bf16.mxu0 0
      %1940 = vmatpush2.bf16.msra.mxu0 0
      %1941 = vmatprep.subr.bf16.mxu0 0
      %1942 = vmatpush2.bf16.msra.mxu0 0
      %1943 = vmatprep.subr.bf16.mxu0 0
      %1944 = vmatpush2.bf16.msra.mxu0 0
      %1945 = vmatprep.subr.bf16.mxu0 0
      %1946 = vmatpush2.bf16.msra.mxu0 0
      %1947 = vmatprep.mubr.bf16.mxu0 0
      %1948 = vmatmul.mubr.bf16.gmra.mxu0 %v1910
      %v1949 = vpop.f32.mrf.mxu0
      %v1950 = vadd.f32 0.0, %v1949
      %v1951 = vpop.f32.mrf.mxu0
      %v1952 = vpop.f32.mrf.mxu0
      %v1953 = vpop.f32.mrf.mxu0
      %1954 = vdwg.mxu0
      %v1955 = vadd.f32 %v1602, %v1950
      %v1956 = vld [vmem:[%s8] sm:$0x1]
      %v1958 = vlaneseq
      %v1959 = vshrl.u32 %v1958, 7
      %v1960 = vsub.s32 0, %v1959
      %v1961 = vrot.slane %v1956, %v1960
      %v1963 = vadd.f32 %v1955, %v1961
      %v1964 = vadd.f32 %v545, %v1963
      %v1965 = vsel %vm570, %v1964, 0.0
      %1966 = vadd.xlane.f32.xlu0 %v1965
      %v1967 = vpop.xlane.xlu0 %1966
      %v1968 = vrcp.pop 32.0
      %v1969 = vmul.f32 %v1967, %v1968
      %v1970 = vsub.f32 %v1964, %v1969
      %v1971 = vmul.f32 %v1970, %v1970
      %v1972 = vsel %vm570, %v1971, 0.0
      %1973 = vadd.xlane.f32.xlu0 %v1972
      %v1974 = vpop.xlane.xlu0 %1973
      %v1975 = vmul.f32 %v1974, %v1968
      %v1976 = vadd.f32 %v1975, 1e-05
      %v1977 = vrsqrt.pop %v1976
      %v1978 = vmul.f32 %v1970, %v1977
      %v1979 = vld [vmem:[%s9] sm:$0x1]
      %v1981 = vlaneseq
      %v1982 = vshrl.u32 %v1981, 7
      %v1983 = vsub.s32 0, %v1982
      %v1984 = vrot.slane %v1979, %v1983
      %v1986 = vmul.f32 %v1978, %v1984
      %v1987 = vld [vmem:[%s10] sm:$0x1]
      %v1989 = vlaneseq
      %v1990 = vshrl.u32 %v1989, 7
      %v1991 = vsub.s32 0, %v1990
      %v1992 = vrot.slane %v1987, %v1991
      %v1994 = vadd.f32 %v1986, %v1992
      %v1995 = vpack.c.bf16 %v1994, %v1994
      %v1996 = vld [vmem:[%s13] sm:$0xf]
      %v1997 = vld [vmem:[%s13 + $0x4] sm:$0xf]
      %v1998 = vld [vmem:[%s13 + $0x8] sm:$0xf]
      %v1999 = vld [vmem:[%s13 + $0xc] sm:$0xf]
      %v2000 = vld [vmem:[%s14] sm:$0x1]
      %v2002 = vlaneseq
      %v2003 = vshrl.u32 %v2002, 7
      %v2004 = vsub.s32 0, %v2003
      %v2005 = vrot.slane %v2000, %v2004
      %v2011 = vunpack.c.l.b16 %v1996
      %v2012 = vunpack.c.l.b16 %v1997
      %v2013 = vunpack.c.l.b16 %v1998
      %v2014 = vunpack.c.l.b16 %v1999
      %v2015 = vpack.c.b16 %v2012, %v2011
      %v2016 = vpack.c.b16 %v2014, %v2013
      %v2020 = vsel %vm570, %v1995, 0
      %2022 = vmatprep.subr.bf16.mxu0 0
      %2023 = vmatpush1.bf16.msra.mxu0 0
      %2024 = vmatprep.subr.bf16.mxu0 0
      %2025 = vmatpush1.bf16.msra.mxu0 0
      %2026 = vmatprep.subr.bf16.mxu0 0
      %2027 = vmatpush1.bf16.msra.mxu0 0
      %2028 = vmatprep.subr.bf16.mxu0 0
      %2029 = vmatpush1.bf16.msra.mxu0 0
      %2030 = vmatprep.subr.bf16.mxu0 0
      %2031 = vmatpush1.bf16.msra.mxu0 0
      %2032 = vmatprep.subr.bf16.mxu0 0
      %2033 = vmatpush1.bf16.msra.mxu0 0
      %2034 = vmatprep.subr.bf16.mxu0 0
      %2035 = vmatpush1.bf16.msra.mxu0 %v2016
      %2036 = vmatprep.subr.bf16.mxu0 0
      %2037 = vmatpush1.bf16.msra.mxu0 %v2015
      %2038 = vmatprep.subr.bf16.mxu0 0
      %2039 = vmatpush2.bf16.msra.mxu0 0
      %2040 = vmatprep.subr.bf16.mxu0 0
      %2041 = vmatpush2.bf16.msra.mxu0 0
      %2042 = vmatprep.subr.bf16.mxu0 0
      %2043 = vmatpush2.bf16.msra.mxu0 0
      %2044 = vmatprep.subr.bf16.mxu0 0
      %2045 = vmatpush2.bf16.msra.mxu0 0
      %2046 = vmatprep.subr.bf16.mxu0 0
      %2047 = vmatpush2.bf16.msra.mxu0 0
      %2048 = vmatprep.subr.bf16.mxu0 0
      %2049 = vmatpush2.bf16.msra.mxu0 0
      %2050 = vmatprep.subr.bf16.mxu0 0
      %2051 = vmatpush2.bf16.msra.mxu0 0
      %2052 = vmatprep.subr.bf16.mxu0 0
      %2053 = vmatpush2.bf16.msra.mxu0 0
      %2054 = vmatprep.mubr.bf16.mxu0 0
      %2055 = vmatmul.mubr.bf16.gmra.mxu0 %v2020
      %v2056 = vpop.f32.mrf.mxu0
      %v2057 = vadd.f32 %v2005, %v2056
      %v2058 = vpop.f32.mrf.mxu0
      %v2059 = vpop.f32.mrf.mxu0
      %v2060 = vpop.f32.mrf.mxu0
      %2061 = vdwg.mxu0
      %v2062 = vmax.f32 %v2057, 0.0
      %v2063 = vpack.c.bf16 %v2062, %v2062
      %v2064 = vld [vmem:[%s15] sm:$0xf]
      %v2065 = vld [vmem:[%s15 + $0x4] sm:$0xf]
      %v2066 = vld [vmem:[%s15 + $0x8] sm:$0xf]
      %v2067 = vld [vmem:[%s15 + $0xc] sm:$0xf]
      %v2068 = vld [vmem:[%s15 + $0x10] sm:$0xf]
      %v2069 = vld [vmem:[%s15 + $0x14] sm:$0xf]
      %v2070 = vld [vmem:[%s15 + $0x18] sm:$0xf]
      %v2071 = vld [vmem:[%s15 + $0x1c] sm:$0xf]
      %v2072 = vld [vmem:[%s16] sm:$0x1]
      %v2074 = vlaneseq
      %v2075 = vshrl.u32 %v2074, 7
      %v2076 = vsub.s32 0, %v2075
      %v2077 = vrot.slane %v2072, %v2076
      %v2087 = vunpack.c.l.b16 %v2064
      %v2088 = vunpack.c.l.b16 %v2065
      %v2089 = vunpack.c.l.b16 %v2066
      %v2090 = vunpack.c.l.b16 %v2067
      %v2091 = vunpack.c.l.b16 %v2068
      %v2092 = vunpack.c.l.b16 %v2069
      %v2093 = vunpack.c.l.b16 %v2070
      %v2094 = vunpack.c.l.b16 %v2071
      %v2095 = vpack.c.b16 %v2088, %v2087
      %v2096 = vpack.c.b16 %v2090, %v2089
      %v2097 = vpack.c.b16 %v2092, %v2091
      %v2098 = vpack.c.b16 %v2094, %v2093
      %vm2103 = vcmask 523264
      %v2105 = vsel %vm2103, %v2063, 0
      %2107 = vmatprep.subr.bf16.mxu0 0
      %2108 = vmatpush1.bf16.msra.mxu0 0
      %2109 = vmatprep.subr.bf16.mxu0 0
      %2110 = vmatpush1.bf16.msra.mxu0 0
      %2111 = vmatprep.subr.bf16.mxu0 0
      %2112 = vmatpush1.bf16.msra.mxu0 0
      %2113 = vmatprep.subr.bf16.mxu0 0
      %2114 = vmatpush1.bf16.msra.mxu0 0
      %2115 = vmatprep.subr.bf16.mxu0 0
      %2116 = vmatpush1.bf16.msra.mxu0 %v2098
      %2117 = vmatprep.subr.bf16.mxu0 0
      %2118 = vmatpush1.bf16.msra.mxu0 %v2097
      %2119 = vmatprep.subr.bf16.mxu0 0
      %2120 = vmatpush1.bf16.msra.mxu0 %v2096
      %2121 = vmatprep.subr.bf16.mxu0 0
      %2122 = vmatpush1.bf16.msra.mxu0 %v2095
      %2123 = vmatprep.subr.bf16.mxu0 0
      %2124 = vmatpush2.bf16.msra.mxu0 0
      %2125 = vmatprep.subr.bf16.mxu0 0
      %2126 = vmatpush2.bf16.msra.mxu0 0
      %2127 = vmatprep.subr.bf16.mxu0 0
      %2128 = vmatpush2.bf16.msra.mxu0 0
      %2129 = vmatprep.subr.bf16.mxu0 0
      %2130 = vmatpush2.bf16.msra.mxu0 0
      %2131 = vmatprep.subr.bf16.mxu0 0
      %2132 = vmatpush2.bf16.msra.mxu0 0
      %2133 = vmatprep.subr.bf16.mxu0 0
      %2134 = vmatpush2.bf16.msra.mxu0 0
      %2135 = vmatprep.subr.bf16.mxu0 0
      %2136 = vmatpush2.bf16.msra.mxu0 0
      %2137 = vmatprep.subr.bf16.mxu0 0
      %2138 = vmatpush2.bf16.msra.mxu0 0
      %2139 = vmatprep.mubr.bf16.mxu0 0
      %2140 = vmatmul.mubr.bf16.gmra.mxu0 %v2105
      %v2141 = vpop.f32.mrf.mxu0
      %v2142 = vadd.f32 %v2077, %v2141
      %v2143 = vpop.f32.mrf.mxu0
      %v2144 = vpop.f32.mrf.mxu0
      %v2145 = vpop.f32.mrf.mxu0
      %2146 = vdwg.mxu0
      %v2147 = vadd.f32 %v1994, %v2142
      %v2148 = vsel %vm570, %v2147, 0.0
      %2149 = vadd.xlane.f32.xlu0 %v2148
      %v2150 = vpop.xlane.xlu0 %2149
      %v2151 = vmul.f32 %v2150, %v1968
      %v2152 = vsub.f32 %v2147, %v2151
      %v2153 = vmul.f32 %v2152, %v2152
      %v2154 = vsel %vm570, %v2153, 0.0
      %2155 = vadd.xlane.f32.xlu0 %v2154
      %v2156 = vpop.xlane.xlu0 %2155
      %v2157 = vmul.f32 %v2156, %v1968
      %v2158 = vadd.f32 %v2157, 1e-05
      %v2159 = vrsqrt.pop %v2158
      %v2160 = vmul.f32 %v2152, %v2159
      %v2161 = vld [vmem:[%s11] sm:$0x1]
      %v2163 = vlaneseq
      %v2164 = vshrl.u32 %v2163, 7
      %v2165 = vsub.s32 0, %v2164
      %v2166 = vrot.slane %v2161, %v2165
      %v2168 = vmul.f32 %v2160, %v2166
      %v2169 = vld [vmem:[%s12] sm:$0x1]
      %v2171 = vlaneseq
      %v2172 = vshrl.u32 %v2171, 7
      %v2173 = vsub.s32 0, %v2172
      %v2174 = vrot.slane %v2169, %v2173
      %v2176 = vadd.f32 %v2168, %v2174
      %2177 = vst.msk [vmem:[%s543] sm:$0xff] %vm570, %v2176
      %p2178 = scmp.lt.s32.totalorder %s28, 1
      %s2179 = scalar_select %p2178, %s28, 1
      %s2180 = smul.addr %s2179, 8
      %s2181 = scalar_lea.vmem %s17, %s2180
      // Predicated region
      $region89: #{custom_transformer_forward.6} parent=87 // pred_check
        %p2182 = pneg %p408
      $region90: #{custom_transformer_forward.6} parent=87 // pred_check_branch
        %2184 = sbr.rel (%p2182) target = $region92
      $region91: #{custom_transformer_forward.6} parent=87 // pred_region
        _
      $region92: #{custom_transformer_forward.6} parent=87 // pred_fallthru
        _
    $region88: #{custom_transformer_forward.6} parent=5 // pred_fallthru
      _
    %p2185 = scmp.le.s32.totalorder 2, %s23
    // Predicated region
    $region93: #{custom_transformer_forward.6} parent=5 // pred_check
      %p2186 = pneg %p2185
    $region94: #{custom_transformer_forward.6} parent=5 // pred_check_branch
      %2188 = sbr.rel (%p2186) target = $region96
    $region95: #{custom_transformer_forward.6} parent=5 // pred_region
      %s2189 = ssub.s32 %s23, 2
      // Predicated region
      $region97: #{custom_transformer_forward.6} parent=95 // pred_check
        %p2190 = pneg %p414
      $region98: #{custom_transformer_forward.6} parent=95 // pred_check_branch
        %2192 = sbr.rel (%p2190) target = $region100
      $region99: #{custom_transformer_forward.6} parent=95 // pred_region
        %p2193 = scmp.lt.s32.totalorder %s29, 1
        %s2194 = scalar_select %p2193, %s29, 1
        %s2195 = smul.addr %s2194, 8
        %s2196 = scalar_lea.vmem %s17, %s2195
      $region100: #{custom_transformer_forward.6} parent=95 // pred_fallthru
        _
    $region96: #{custom_transformer_forward.6} parent=5 // pred_fallthru
      _
  $region6: #{custom_transformer_forward.6} parent=0 // loop_footer
    %s27 = sadd.s32 1, %s23
  $region7: #{custom_transformer_forward.6} parent=0 // loop_footer_branch
    %22 = sbr.rel target = $region3
  $region8: #{custom_transformer_forward.6} parent=0 // loop_exit
    _

// kernel: custom_transformer_forward.9
$region0: #{custom_transformer_forward.9}
  #allocation0 [shape = 'u32[]', space=smem, size = 0x4, offset = 0x4, fixed_abs, tag = 'smem constant byte address 0x4 - core index']
  #allocation1 [shape = 'u32[144,128]{1,0:T(1,128)}', space=vmem, size = 0x12000, scoped, tag = 'internal scratch']
  %s0 = inlined_call_operand.vmem [shape: f32[2,8,32], index: 0, kind: input, shape index: {}]
  %s1 = inlined_call_operand.vmem [shape: f32[2,8,32], index: 1, kind: input, shape index: {}]
  %s2 = inlined_call_operand.vmem [shape: bf16[4,32,8], index: 2, kind: input, shape index: {}]
  %s3 = inlined_call_operand.vmem [shape: f32[4,1,8], index: 3, kind: input, shape index: {}]
  %s4 = inlined_call_operand.vmem [shape: bf16[4,32,8], index: 4, kind: input, shape index: {}]
  %s5 = inlined_call_operand.vmem [shape: f32[4,1,8], index: 5, kind: input, shape index: {}]
  %s6 = inlined_call_operand.vmem [shape: bf16[4,32,8], index: 6, kind: input, shape index: {}]
  %s7 = inlined_call_operand.vmem [shape: f32[4,1,8], index: 7, kind: input, shape index: {}]
  %s8 = inlined_call_operand.vmem [shape: bf16[4,8,32], index: 8, kind: input, shape index: {}]
  %s9 = inlined_call_operand.vmem [shape: f32[1,32], index: 9, kind: input, shape index: {}]
  %s10 = inlined_call_operand.vmem [shape: bf16[4,32,8], index: 10, kind: input, shape index: {}]
  %s11 = inlined_call_operand.vmem [shape: f32[4,1,8], index: 11, kind: input, shape index: {}]
  %s12 = inlined_call_operand.vmem [shape: bf16[4,32,8], index: 12, kind: input, shape index: {}]
  %s13 = inlined_call_operand.vmem [shape: f32[4,1,8], index: 13, kind: input, shape index: {}]
  %s14 = inlined_call_operand.vmem [shape: bf16[4,32,8], index: 14, kind: input, shape index: {}]
  %s15 = inlined_call_operand.vmem [shape: f32[4,1,8], index: 15, kind: input, shape index: {}]
  %s16 = inlined_call_operand.vmem [shape: bf16[4,8,32], index: 16, kind: input, shape index: {}]
  %s17 = inlined_call_operand.vmem [shape: f32[1,32], index: 17, kind: input, shape index: {}]
  %s18 = inlined_call_operand.vmem [shape: f32[1,32], index: 18, kind: input, shape index: {}]
  %s19 = inlined_call_operand.vmem [shape: f32[1,32], index: 19, kind: input, shape index: {}]
  %s20 = inlined_call_operand.vmem [shape: f32[1,32], index: 20, kind: input, shape index: {}]
  %s21 = inlined_call_operand.vmem [shape: f32[1,32], index: 21, kind: input, shape index: {}]
  %s22 = inlined_call_operand.vmem [shape: f32[1,32], index: 22, kind: input, shape index: {}]
  %s23 = inlined_call_operand.vmem [shape: f32[1,32], index: 23, kind: input, shape index: {}]
  %s24 = inlined_call_operand.vmem [shape: bf16[32,64], index: 24, kind: input, shape index: {}]
  %s25 = inlined_call_operand.vmem [shape: f32[1,64], index: 25, kind: input, shape index: {}]
  %s26 = inlined_call_operand.vmem [shape: bf16[64,32], index: 26, kind: input, shape index: {}]
  %s27 = inlined_call_operand.vmem [shape: f32[1,32], index: 27, kind: input, shape index: {}]
  %s28 = inlined_call_operand.vmem [shape: f32[2,8,32], index: 28, kind: output, shape index: {}]
  %s29 = sld [smem:[#allocation0]]
  $region145: #{custom_transformer_forward.9} parent=0
    _
  %s31 = ssub.s32 1, %s29
  %s32 = scalar_select 0, %s31, %s29
  loop: start=0, step=1, limit=4
  $region2: #{custom_transformer_forward.9} parent=0 // loop_pre_header
    _
  $region3: #{custom_transformer_forward.9} parent=0 // loop_header
    %s34 = sphi 0, %s38
    %p35 = scmp.ge.s32.totalorder %s34, 4
    %s44 = sphi 0, %s46
    %s47 = sphi 0, %s44
    %s48 = sphi 0, %s47
    %s64 = sphi 0, %s48
    %s70 = sphi 0, %s72
    %s73 = sphi 0, %s70
    %s74 = sphi 0, %s73
    %s90 = sphi 0, %s74
    %s94 = sphi 0, %s94
    %s96 = sphi 0, %s94
    %s97 = sphi 0, %s96
    %s111 = sphi 0, %s97
    %s115 = sphi 0, %s115
    %s117 = sphi 0, %s115
    %s118 = sphi 0, %s117
    %s132 = sphi 0, %s118
    %s136 = sphi 0, %s136
    %s138 = sphi 0, %s136
    %s139 = sphi 0, %s138
    %s153 = sphi 0, %s139
    %s157 = sphi 0, %s157
    %s159 = sphi 0, %s157
    %s160 = sphi 0, %s159
    %s174 = sphi 0, %s160
    %s178 = sphi 0, %s178
    %s180 = sphi 0, %s178
    %s181 = sphi 0, %s180
    %s195 = sphi 0, %s181
    %s199 = sphi 0, %s199
    %s201 = sphi 0, %s199
    %s202 = sphi 0, %s201
    %s216 = sphi 0, %s202
    %s220 = sphi 0, %s220
    %s222 = sphi 0, %s220
    %s223 = sphi 0, %s222
    %s237 = sphi 0, %s223
    %s241 = sphi 0, %s241
    %s243 = sphi 0, %s241
    %s244 = sphi 0, %s243
    %s258 = sphi 0, %s244
    %s262 = sphi 0, %s262
    %s264 = sphi 0, %s262
    %s265 = sphi 0, %s264
    %s279 = sphi 0, %s265
    %s283 = sphi 0, %s283
    %s285 = sphi 0, %s283
    %s286 = sphi 0, %s285
    %s300 = sphi 0, %s286
    %s304 = sphi 0, %s304
    %s306 = sphi 0, %s304
    %s307 = sphi 0, %s306
    %s321 = sphi 0, %s307
    %s325 = sphi 0, %s325
    %s327 = sphi 0, %s325
    %s328 = sphi 0, %s327
    %s342 = sphi 0, %s328
    %s346 = sphi 0, %s346
    %s348 = sphi 0, %s346
    %s349 = sphi 0, %s348
    %s363 = sphi 0, %s349
    %s367 = sphi 0, %s367
    %s369 = sphi 0, %s367
    %s370 = sphi 0, %s369
    %s384 = sphi 0, %s370
    %s388 = sphi 0, %s388
    %s390 = sphi 0, %s388
    %s391 = sphi 0, %s390
    %s405 = sphi 0, %s391
    %s409 = sphi 0, %s409
    %s411 = sphi 0, %s409
    %s412 = sphi 0, %s411
    %s426 = sphi 0, %s412
    %s430 = sphi 0, %s430
    %s432 = sphi 0, %s430
    %s433 = sphi 0, %s432
    %s447 = sphi 0, %s433
    %s451 = sphi 0, %s451
    %s453 = sphi 0, %s451
    %s454 = sphi 0, %s453
    %s468 = sphi 0, %s454
    %s472 = sphi 0, %s472
    %s474 = sphi 0, %s472
    %s475 = sphi 0, %s474
    %s489 = sphi 0, %s475
    %s493 = sphi 0, %s493
    %s495 = sphi 0, %s493
    %s496 = sphi 0, %s495
    %s510 = sphi 0, %s496
    %s514 = sphi 0, %s514
    %s516 = sphi 0, %s514
    %s517 = sphi 0, %s516
    %s531 = sphi 0, %s517
    %s535 = sphi 0, %s535
    %s537 = sphi 0, %s535
    %s538 = sphi 0, %s537
    %s552 = sphi 0, %s538
    %s556 = sphi 0, %s556
    %s558 = sphi 0, %s556
    %s559 = sphi 0, %s558
    %s573 = sphi 0, %s559
    %s577 = sphi 0, %s577
    %s579 = sphi 0, %s577
    %s580 = sphi 0, %s579
    %s594 = sphi 0, %s580
    %s598 = sphi 0, %s598
    %s600 = sphi 0, %s598
    %s601 = sphi 0, %s600
    %s615 = sphi 0, %s601
    %s619 = sphi 0, %s619
    %s621 = sphi 0, %s619
    %s622 = sphi 0, %s621
    %s636 = sphi 0, %s622
    %s642 = sphi 0, %s644
    %s645 = sphi 0, %s642
    %s646 = sphi 0, %s645
    %s662 = sphi 0, %s646
  $region4: #{custom_transformer_forward.9} parent=0 // loop_header_branch
    %37 = sbr.rel (%p35) target = $region8
  $region5: #{custom_transformer_forward.9} parent=0 // loop_body
    %s39 = ssub.s32 %s34, 1
    %s40 = ssub.s32 %s34, 2
    %s41 = sadd.s32 %s34, 1
    %s42 = ssub.s32 %s34, %s41
    %p43 = scmp.eq.s32.totalorder %s42, 0
    %s45 = sadd.s32 %s44, 1
    %s46 = scalar_select %p43, %s44, %s45
    %p49 = pneg %p43
    %p50 = scmp.eq.s32.totalorder %s34, 1
    %p51 = por %p49, %p50
    %p52 = scmp.ne.s32.totalorder %s44, %s47
    %p53 = scmp.eq.s32.totalorder %s34, 0
    %p54 = por %p52, %p53
    %p55 = scmp.ne.s32.totalorder %s44, %s47
    %p56 = scmp.eq.s32.totalorder %s39, 1
    %p57 = por %p55, %p56
    %p58 = scmp.ne.s32.totalorder %s47, %s48
    %p59 = scmp.eq.s32.totalorder %s39, 0
    %p60 = por %p58, %p59
    %p61 = scmp.ne.s32.totalorder %s47, %s48
    %p62 = scmp.eq.s32.totalorder %s40, 1
    %p63 = por %p61, %p62
    %p65 = scmp.ne.s32.totalorder %s48, %s64
    %p66 = scmp.eq.s32.totalorder %s40, 0
    %p67 = por %p65, %p66
    %s68 = ssub.s32 %s34, %s41
    %p69 = scmp.eq.s32.totalorder %s68, 0
    %s71 = sadd.s32 %s70, 1
    %s72 = scalar_select %p69, %s70, %s71
    %p75 = pneg %p69
    %p76 = scmp.eq.s32.totalorder %s34, 1
    %p77 = por %p75, %p76
    %p78 = scmp.ne.s32.totalorder %s70, %s73
    %p79 = scmp.eq.s32.totalorder %s34, 0
    %p80 = por %p78, %p79
    %p81 = scmp.ne.s32.totalorder %s70, %s73
    %p82 = scmp.eq.s32.totalorder %s39, 1
    %p83 = por %p81, %p82
    %p84 = scmp.ne.s32.totalorder %s73, %s74
    %p85 = scmp.eq.s32.totalorder %s39, 0
    %p86 = por %p84, %p85
    %p87 = scmp.ne.s32.totalorder %s73, %s74
    %p88 = scmp.eq.s32.totalorder %s40, 1
    %p89 = por %p87, %p88
    %p91 = scmp.ne.s32.totalorder %s74, %s90
    %p92 = scmp.eq.s32.totalorder %s40, 0
    %p93 = por %p91, %p92
    %s95 = sadd.s32 %s94, 1
    %p98 = scmp.eq.s32.totalorder %s34, 1
    %p99 = scmp.ne.s32.totalorder %s94, %s96
    %p100 = scmp.eq.s32.totalorder %s34, 0
    %p101 = por %p99, %p100
    %p102 = scmp.ne.s32.totalorder %s94, %s96
    %p103 = scmp.eq.s32.totalorder %s39, 1
    %p104 = por %p102, %p103
    %p105 = scmp.ne.s32.totalorder %s96, %s97
    %p106 = scmp.eq.s32.totalorder %s39, 0
    %p107 = por %p105, %p106
    %p108 = scmp.ne.s32.totalorder %s96, %s97
    %p109 = scmp.eq.s32.totalorder %s40, 1
    %p110 = por %p108, %p109
    %p112 = scmp.ne.s32.totalorder %s97, %s111
    %p113 = scmp.eq.s32.totalorder %s40, 0
    %p114 = por %p112, %p113
    %s116 = sadd.s32 %s115, 1
    %p119 = scmp.eq.s32.totalorder %s34, 1
    %p120 = scmp.ne.s32.totalorder %s115, %s117
    %p121 = scmp.eq.s32.totalorder %s34, 0
    %p122 = por %p120, %p121
    %p123 = scmp.ne.s32.totalorder %s115, %s117
    %p124 = scmp.eq.s32.totalorder %s39, 1
    %p125 = por %p123, %p124
    %p126 = scmp.ne.s32.totalorder %s117, %s118
    %p127 = scmp.eq.s32.totalorder %s39, 0
    %p128 = por %p126, %p127
    %p129 = scmp.ne.s32.totalorder %s117, %s118
    %p130 = scmp.eq.s32.totalorder %s40, 1
    %p131 = por %p129, %p130
    %p133 = scmp.ne.s32.totalorder %s118, %s132
    %p134 = scmp.eq.s32.totalorder %s40, 0
    %p135 = por %p133, %p134
    %s137 = sadd.s32 %s136, 1
    %p140 = scmp.eq.s32.totalorder %s34, 1
    %p141 = scmp.ne.s32.totalorder %s136, %s138
    %p142 = scmp.eq.s32.totalorder %s34, 0
    %p143 = por %p141, %p142
    %p144 = scmp.ne.s32.totalorder %s136, %s138
    %p145 = scmp.eq.s32.totalorder %s39, 1
    %p146 = por %p144, %p145
    %p147 = scmp.ne.s32.totalorder %s138, %s139
    %p148 = scmp.eq.s32.totalorder %s39, 0
    %p149 = por %p147, %p148
    %p150 = scmp.ne.s32.totalorder %s138, %s139
    %p151 = scmp.eq.s32.totalorder %s40, 1
    %p152 = por %p150, %p151
    %p154 = scmp.ne.s32.totalorder %s139, %s153
    %p155 = scmp.eq.s32.totalorder %s40, 0
    %p156 = por %p154, %p155
    %s158 = sadd.s32 %s157, 1
    %p161 = scmp.eq.s32.totalorder %s34, 1
    %p162 = scmp.ne.s32.totalorder %s157, %s159
    %p163 = scmp.eq.s32.totalorder %s34, 0
    %p164 = por %p162, %p163
    %p165 = scmp.ne.s32.totalorder %s157, %s159
    %p166 = scmp.eq.s32.totalorder %s39, 1
    %p167 = por %p165, %p166
    %p168 = scmp.ne.s32.totalorder %s159, %s160
    %p169 = scmp.eq.s32.totalorder %s39, 0
    %p170 = por %p168, %p169
    %p171 = scmp.ne.s32.totalorder %s159, %s160
    %p172 = scmp.eq.s32.totalorder %s40, 1
    %p173 = por %p171, %p172
    %p175 = scmp.ne.s32.totalorder %s160, %s174
    %p176 = scmp.eq.s32.totalorder %s40, 0
    %p177 = por %p175, %p176
    %s179 = sadd.s32 %s178, 1
    %p182 = scmp.eq.s32.totalorder %s34, 1
    %p183 = scmp.ne.s32.totalorder %s178, %s180
    %p184 = scmp.eq.s32.totalorder %s34, 0
    %p185 = por %p183, %p184
    %p186 = scmp.ne.s32.totalorder %s178, %s180
    %p187 = scmp.eq.s32.totalorder %s39, 1
    %p188 = por %p186, %p187
    %p189 = scmp.ne.s32.totalorder %s180, %s181
    %p190 = scmp.eq.s32.totalorder %s39, 0
    %p191 = por %p189, %p190
    %p192 = scmp.ne.s32.totalorder %s180, %s181
    %p193 = scmp.eq.s32.totalorder %s40, 1
    %p194 = por %p192, %p193
    %p196 = scmp.ne.s32.totalorder %s181, %s195
    %p197 = scmp.eq.s32.totalorder %s40, 0
    %p198 = por %p196, %p197
    %s200 = sadd.s32 %s199, 1
    %p203 = scmp.eq.s32.totalorder %s34, 1
    %p204 = scmp.ne.s32.totalorder %s199, %s201
    %p205 = scmp.eq.s32.totalorder %s34, 0
    %p206 = por %p204, %p205
    %p207 = scmp.ne.s32.totalorder %s199, %s201
    %p208 = scmp.eq.s32.totalorder %s39, 1
    %p209 = por %p207, %p208
    %p210 = scmp.ne.s32.totalorder %s201, %s202
    %p211 = scmp.eq.s32.totalorder %s39, 0
    %p212 = por %p210, %p211
    %p213 = scmp.ne.s32.totalorder %s201, %s202
    %p214 = scmp.eq.s32.totalorder %s40, 1
    %p215 = por %p213, %p214
    %p217 = scmp.ne.s32.totalorder %s202, %s216
    %p218 = scmp.eq.s32.totalorder %s40, 0
    %p219 = por %p217, %p218
    %s221 = sadd.s32 %s220, 1
    %p224 = scmp.eq.s32.totalorder %s34, 1
    %p225 = scmp.ne.s32.totalorder %s220, %s222
    %p226 = scmp.eq.s32.totalorder %s34, 0
    %p227 = por %p225, %p226
    %p228 = scmp.ne.s32.totalorder %s220, %s222
    %p229 = scmp.eq.s32.totalorder %s39, 1
    %p230 = por %p228, %p229
    %p231 = scmp.ne.s32.totalorder %s222, %s223
    %p232 = scmp.eq.s32.totalorder %s39, 0
    %p233 = por %p231, %p232
    %p234 = scmp.ne.s32.totalorder %s222, %s223
    %p235 = scmp.eq.s32.totalorder %s40, 1
    %p236 = por %p234, %p235
    %p238 = scmp.ne.s32.totalorder %s223, %s237
    %p239 = scmp.eq.s32.totalorder %s40, 0
    %p240 = por %p238, %p239
    %s242 = sadd.s32 %s241, 1
    %p245 = scmp.eq.s32.totalorder %s34, 1
    %p246 = scmp.ne.s32.totalorder %s241, %s243
    %p247 = scmp.eq.s32.totalorder %s34, 0
    %p248 = por %p246, %p247
    %p249 = scmp.ne.s32.totalorder %s241, %s243
    %p250 = scmp.eq.s32.totalorder %s39, 1
    %p251 = por %p249, %p250
    %p252 = scmp.ne.s32.totalorder %s243, %s244
    %p253 = scmp.eq.s32.totalorder %s39, 0
    %p254 = por %p252, %p253
    %p255 = scmp.ne.s32.totalorder %s243, %s244
    %p256 = scmp.eq.s32.totalorder %s40, 1
    %p257 = por %p255, %p256
    %p259 = scmp.ne.s32.totalorder %s244, %s258
    %p260 = scmp.eq.s32.totalorder %s40, 0
    %p261 = por %p259, %p260
    %s263 = sadd.s32 %s262, 1
    %p266 = scmp.eq.s32.totalorder %s34, 1
    %p267 = scmp.ne.s32.totalorder %s262, %s264
    %p268 = scmp.eq.s32.totalorder %s34, 0
    %p269 = por %p267, %p268
    %p270 = scmp.ne.s32.totalorder %s262, %s264
    %p271 = scmp.eq.s32.totalorder %s39, 1
    %p272 = por %p270, %p271
    %p273 = scmp.ne.s32.totalorder %s264, %s265
    %p274 = scmp.eq.s32.totalorder %s39, 0
    %p275 = por %p273, %p274
    %p276 = scmp.ne.s32.totalorder %s264, %s265
    %p277 = scmp.eq.s32.totalorder %s40, 1
    %p278 = por %p276, %p277
    %p280 = scmp.ne.s32.totalorder %s265, %s279
    %p281 = scmp.eq.s32.totalorder %s40, 0
    %p282 = por %p280, %p281
    %s284 = sadd.s32 %s283, 1
    %p287 = scmp.eq.s32.totalorder %s34, 1
    %p288 = scmp.ne.s32.totalorder %s283, %s285
    %p289 = scmp.eq.s32.totalorder %s34, 0
    %p290 = por %p288, %p289
    %p291 = scmp.ne.s32.totalorder %s283, %s285
    %p292 = scmp.eq.s32.totalorder %s39, 1
    %p293 = por %p291, %p292
    %p294 = scmp.ne.s32.totalorder %s285, %s286
    %p295 = scmp.eq.s32.totalorder %s39, 0
    %p296 = por %p294, %p295
    %p297 = scmp.ne.s32.totalorder %s285, %s286
    %p298 = scmp.eq.s32.totalorder %s40, 1
    %p299 = por %p297, %p298
    %p301 = scmp.ne.s32.totalorder %s286, %s300
    %p302 = scmp.eq.s32.totalorder %s40, 0
    %p303 = por %p301, %p302
    %s305 = sadd.s32 %s304, 1
    %p308 = scmp.eq.s32.totalorder %s34, 1
    %p309 = scmp.ne.s32.totalorder %s304, %s306
    %p310 = scmp.eq.s32.totalorder %s34, 0
    %p311 = por %p309, %p310
    %p312 = scmp.ne.s32.totalorder %s304, %s306
    %p313 = scmp.eq.s32.totalorder %s39, 1
    %p314 = por %p312, %p313
    %p315 = scmp.ne.s32.totalorder %s306, %s307
    %p316 = scmp.eq.s32.totalorder %s39, 0
    %p317 = por %p315, %p316
    %p318 = scmp.ne.s32.totalorder %s306, %s307
    %p319 = scmp.eq.s32.totalorder %s40, 1
    %p320 = por %p318, %p319
    %p322 = scmp.ne.s32.totalorder %s307, %s321
    %p323 = scmp.eq.s32.totalorder %s40, 0
    %p324 = por %p322, %p323
    %s326 = sadd.s32 %s325, 1
    %p329 = scmp.eq.s32.totalorder %s34, 1
    %p330 = scmp.ne.s32.totalorder %s325, %s327
    %p331 = scmp.eq.s32.totalorder %s34, 0
    %p332 = por %p330, %p331
    %p333 = scmp.ne.s32.totalorder %s325, %s327
    %p334 = scmp.eq.s32.totalorder %s39, 1
    %p335 = por %p333, %p334
    %p336 = scmp.ne.s32.totalorder %s327, %s328
    %p337 = scmp.eq.s32.totalorder %s39, 0
    %p338 = por %p336, %p337
    %p339 = scmp.ne.s32.totalorder %s327, %s328
    %p340 = scmp.eq.s32.totalorder %s40, 1
    %p341 = por %p339, %p340
    %p343 = scmp.ne.s32.totalorder %s328, %s342
    %p344 = scmp.eq.s32.totalorder %s40, 0
    %p345 = por %p343, %p344
    %s347 = sadd.s32 %s346, 1
    %p350 = scmp.eq.s32.totalorder %s34, 1
    %p351 = scmp.ne.s32.totalorder %s346, %s348
    %p352 = scmp.eq.s32.totalorder %s34, 0
    %p353 = por %p351, %p352
    %p354 = scmp.ne.s32.totalorder %s346, %s348
    %p355 = scmp.eq.s32.totalorder %s39, 1
    %p356 = por %p354, %p355
    %p357 = scmp.ne.s32.totalorder %s348, %s349
    %p358 = scmp.eq.s32.totalorder %s39, 0
    %p359 = por %p357, %p358
    %p360 = scmp.ne.s32.totalorder %s348, %s349
    %p361 = scmp.eq.s32.totalorder %s40, 1
    %p362 = por %p360, %p361
    %p364 = scmp.ne.s32.totalorder %s349, %s363
    %p365 = scmp.eq.s32.totalorder %s40, 0
    %p366 = por %p364, %p365
    %s368 = sadd.s32 %s367, 1
    %p371 = scmp.eq.s32.totalorder %s34, 1
    %p372 = scmp.ne.s32.totalorder %s367, %s369
    %p373 = scmp.eq.s32.totalorder %s34, 0
    %p374 = por %p372, %p373
    %p375 = scmp.ne.s32.totalorder %s367, %s369
    %p376 = scmp.eq.s32.totalorder %s39, 1
    %p377 = por %p375, %p376
    %p378 = scmp.ne.s32.totalorder %s369, %s370
    %p379 = scmp.eq.s32.totalorder %s39, 0
    %p380 = por %p378, %p379
    %p381 = scmp.ne.s32.totalorder %s369, %s370
    %p382 = scmp.eq.s32.totalorder %s40, 1
    %p383 = por %p381, %p382
    %p385 = scmp.ne.s32.totalorder %s370, %s384
    %p386 = scmp.eq.s32.totalorder %s40, 0
    %p387 = por %p385, %p386
    %s389 = sadd.s32 %s388, 1
    %p392 = scmp.eq.s32.totalorder %s34, 1
    %p393 = scmp.ne.s32.totalorder %s388, %s390
    %p394 = scmp.eq.s32.totalorder %s34, 0
    %p395 = por %p393, %p394
    %p396 = scmp.ne.s32.totalorder %s388, %s390
    %p397 = scmp.eq.s32.totalorder %s39, 1
    %p398 = por %p396, %p397
    %p399 = scmp.ne.s32.totalorder %s390, %s391
    %p400 = scmp.eq.s32.totalorder %s39, 0
    %p401 = por %p399, %p400
    %p402 = scmp.ne.s32.totalorder %s390, %s391
    %p403 = scmp.eq.s32.totalorder %s40, 1
    %p404 = por %p402, %p403
    %p406 = scmp.ne.s32.totalorder %s391, %s405
    %p407 = scmp.eq.s32.totalorder %s40, 0
    %p408 = por %p406, %p407
    %s410 = sadd.s32 %s409, 1
    %p413 = scmp.eq.s32.totalorder %s34, 1
    %p414 = scmp.ne.s32.totalorder %s409, %s411
    %p415 = scmp.eq.s32.totalorder %s34, 0
    %p416 = por %p414, %p415
    %p417 = scmp.ne.s32.totalorder %s409, %s411
    %p418 = scmp.eq.s32.totalorder %s39, 1
    %p419 = por %p417, %p418
    %p420 = scmp.ne.s32.totalorder %s411, %s412
    %p421 = scmp.eq.s32.totalorder %s39, 0
    %p422 = por %p420, %p421
    %p423 = scmp.ne.s32.totalorder %s411, %s412
    %p424 = scmp.eq.s32.totalorder %s40, 1
    %p425 = por %p423, %p424
    %p427 = scmp.ne.s32.totalorder %s412, %s426
    %p428 = scmp.eq.s32.totalorder %s40, 0
    %p429 = por %p427, %p428
    %s431 = sadd.s32 %s430, 1
    %p434 = scmp.eq.s32.totalorder %s34, 1
    %p435 = scmp.ne.s32.totalorder %s430, %s432
    %p436 = scmp.eq.s32.totalorder %s34, 0
    %p437 = por %p435, %p436
    %p438 = scmp.ne.s32.totalorder %s430, %s432
    %p439 = scmp.eq.s32.totalorder %s39, 1
    %p440 = por %p438, %p439
    %p441 = scmp.ne.s32.totalorder %s432, %s433
    %p442 = scmp.eq.s32.totalorder %s39, 0
    %p443 = por %p441, %p442
    %p444 = scmp.ne.s32.totalorder %s432, %s433
    %p445 = scmp.eq.s32.totalorder %s40, 1
    %p446 = por %p444, %p445
    %p448 = scmp.ne.s32.totalorder %s433, %s447
    %p449 = scmp.eq.s32.totalorder %s40, 0
    %p450 = por %p448, %p449
    %s452 = sadd.s32 %s451, 1
    %p455 = scmp.eq.s32.totalorder %s34, 1
    %p456 = scmp.ne.s32.totalorder %s451, %s453
    %p457 = scmp.eq.s32.totalorder %s34, 0
    %p458 = por %p456, %p457
    %p459 = scmp.ne.s32.totalorder %s451, %s453
    %p460 = scmp.eq.s32.totalorder %s39, 1
    %p461 = por %p459, %p460
    %p462 = scmp.ne.s32.totalorder %s453, %s454
    %p463 = scmp.eq.s32.totalorder %s39, 0
    %p464 = por %p462, %p463
    %p465 = scmp.ne.s32.totalorder %s453, %s454
    %p466 = scmp.eq.s32.totalorder %s40, 1
    %p467 = por %p465, %p466
    %p469 = scmp.ne.s32.totalorder %s454, %s468
    %p470 = scmp.eq.s32.totalorder %s40, 0
    %p471 = por %p469, %p470
    %s473 = sadd.s32 %s472, 1
    %p476 = scmp.eq.s32.totalorder %s34, 1
    %p477 = scmp.ne.s32.totalorder %s472, %s474
    %p478 = scmp.eq.s32.totalorder %s34, 0
    %p479 = por %p477, %p478
    %p480 = scmp.ne.s32.totalorder %s472, %s474
    %p481 = scmp.eq.s32.totalorder %s39, 1
    %p482 = por %p480, %p481
    %p483 = scmp.ne.s32.totalorder %s474, %s475
    %p484 = scmp.eq.s32.totalorder %s39, 0
    %p485 = por %p483, %p484
    %p486 = scmp.ne.s32.totalorder %s474, %s475
    %p487 = scmp.eq.s32.totalorder %s40, 1
    %p488 = por %p486, %p487
    %p490 = scmp.ne.s32.totalorder %s475, %s489
    %p491 = scmp.eq.s32.totalorder %s40, 0
    %p492 = por %p490, %p491
    %s494 = sadd.s32 %s493, 1
    %p497 = scmp.eq.s32.totalorder %s34, 1
    %p498 = scmp.ne.s32.totalorder %s493, %s495
    %p499 = scmp.eq.s32.totalorder %s34, 0
    %p500 = por %p498, %p499
    %p501 = scmp.ne.s32.totalorder %s493, %s495
    %p502 = scmp.eq.s32.totalorder %s39, 1
    %p503 = por %p501, %p502
    %p504 = scmp.ne.s32.totalorder %s495, %s496
    %p505 = scmp.eq.s32.totalorder %s39, 0
    %p506 = por %p504, %p505
    %p507 = scmp.ne.s32.totalorder %s495, %s496
    %p508 = scmp.eq.s32.totalorder %s40, 1
    %p509 = por %p507, %p508
    %p511 = scmp.ne.s32.totalorder %s496, %s510
    %p512 = scmp.eq.s32.totalorder %s40, 0
    %p513 = por %p511, %p512
    %s515 = sadd.s32 %s514, 1
    %p518 = scmp.eq.s32.totalorder %s34, 1
    %p519 = scmp.ne.s32.totalorder %s514, %s516
    %p520 = scmp.eq.s32.totalorder %s34, 0
    %p521 = por %p519, %p520
    %p522 = scmp.ne.s32.totalorder %s514, %s516
    %p523 = scmp.eq.s32.totalorder %s39, 1
    %p524 = por %p522, %p523
    %p525 = scmp.ne.s32.totalorder %s516, %s517
    %p526 = scmp.eq.s32.totalorder %s39, 0
    %p527 = por %p525, %p526
    %p528 = scmp.ne.s32.totalorder %s516, %s517
    %p529 = scmp.eq.s32.totalorder %s40, 1
    %p530 = por %p528, %p529
    %p532 = scmp.ne.s32.totalorder %s517, %s531
    %p533 = scmp.eq.s32.totalorder %s40, 0
    %p534 = por %p532, %p533
    %s536 = sadd.s32 %s535, 1
    %p539 = scmp.eq.s32.totalorder %s34, 1
    %p540 = scmp.ne.s32.totalorder %s535, %s537
    %p541 = scmp.eq.s32.totalorder %s34, 0
    %p542 = por %p540, %p541
    %p543 = scmp.ne.s32.totalorder %s535, %s537
    %p544 = scmp.eq.s32.totalorder %s39, 1
    %p545 = por %p543, %p544
    %p546 = scmp.ne.s32.totalorder %s537, %s538
    %p547 = scmp.eq.s32.totalorder %s39, 0
    %p548 = por %p546, %p547
    %p549 = scmp.ne.s32.totalorder %s537, %s538
    %p550 = scmp.eq.s32.totalorder %s40, 1
    %p551 = por %p549, %p550
    %p553 = scmp.ne.s32.totalorder %s538, %s552
    %p554 = scmp.eq.s32.totalorder %s40, 0
    %p555 = por %p553, %p554
    %s557 = sadd.s32 %s556, 1
    %p560 = scmp.eq.s32.totalorder %s34, 1
    %p561 = scmp.ne.s32.totalorder %s556, %s558
    %p562 = scmp.eq.s32.totalorder %s34, 0
    %p563 = por %p561, %p562
    %p564 = scmp.ne.s32.totalorder %s556, %s558
    %p565 = scmp.eq.s32.totalorder %s39, 1
    %p566 = por %p564, %p565
    %p567 = scmp.ne.s32.totalorder %s558, %s559
    %p568 = scmp.eq.s32.totalorder %s39, 0
    %p569 = por %p567, %p568
    %p570 = scmp.ne.s32.totalorder %s558, %s559
    %p571 = scmp.eq.s32.totalorder %s40, 1
    %p572 = por %p570, %p571
    %p574 = scmp.ne.s32.totalorder %s559, %s573
    %p575 = scmp.eq.s32.totalorder %s40, 0
    %p576 = por %p574, %p575
    %s578 = sadd.s32 %s577, 1
    %p581 = scmp.eq.s32.totalorder %s34, 1
    %p582 = scmp.ne.s32.totalorder %s577, %s579
    %p583 = scmp.eq.s32.totalorder %s34, 0
    %p584 = por %p582, %p583
    %p585 = scmp.ne.s32.totalorder %s577, %s579
    %p586 = scmp.eq.s32.totalorder %s39, 1
    %p587 = por %p585, %p586
    %p588 = scmp.ne.s32.totalorder %s579, %s580
    %p589 = scmp.eq.s32.totalorder %s39, 0
    %p590 = por %p588, %p589
    %p591 = scmp.ne.s32.totalorder %s579, %s580
    %p592 = scmp.eq.s32.totalorder %s40, 1
    %p593 = por %p591, %p592
    %p595 = scmp.ne.s32.totalorder %s580, %s594
    %p596 = scmp.eq.s32.totalorder %s40, 0
    %p597 = por %p595, %p596
    %s599 = sadd.s32 %s598, 1
    %p602 = scmp.eq.s32.totalorder %s34, 1
    %p603 = scmp.ne.s32.totalorder %s598, %s600
    %p604 = scmp.eq.s32.totalorder %s34, 0
    %p605 = por %p603, %p604
    %p606 = scmp.ne.s32.totalorder %s598, %s600
    %p607 = scmp.eq.s32.totalorder %s39, 1
    %p608 = por %p606, %p607
    %p609 = scmp.ne.s32.totalorder %s600, %s601
    %p610 = scmp.eq.s32.totalorder %s39, 0
    %p611 = por %p609, %p610
    %p612 = scmp.ne.s32.totalorder %s600, %s601
    %p613 = scmp.eq.s32.totalorder %s40, 1
    %p614 = por %p612, %p613
    %p616 = scmp.ne.s32.totalorder %s601, %s615
    %p617 = scmp.eq.s32.totalorder %s40, 0
    %p618 = por %p616, %p617
    %s620 = sadd.s32 %s619, 1
    %p623 = scmp.eq.s32.totalorder %s34, 1
    %p624 = scmp.ne.s32.totalorder %s619, %s621
    %p625 = scmp.eq.s32.totalorder %s34, 0
    %p626 = por %p624, %p625
    %p627 = scmp.ne.s32.totalorder %s619, %s621
    %p628 = scmp.eq.s32.totalorder %s39, 1
    %p629 = por %p627, %p628
    %p630 = scmp.ne.s32.totalorder %s621, %s622
    %p631 = scmp.eq.s32.totalorder %s39, 0
    %p632 = por %p630, %p631
    %p633 = scmp.ne.s32.totalorder %s621, %s622
    %p634 = scmp.eq.s32.totalorder %s40, 1
    %p635 = por %p633, %p634
    %p637 = scmp.ne.s32.totalorder %s622, %s636
    %p638 = scmp.eq.s32.totalorder %s40, 0
    %p639 = por %p637, %p638
    %s640 = ssub.s32 %s34, %s41
    %p641 = scmp.eq.s32.totalorder %s640, 0
    %s643 = sadd.s32 %s642, 1
    %s644 = scalar_select %p641, %s642, %s643
    %p647 = pneg %p641
    %p648 = scmp.eq.s32.totalorder %s34, 1
    %p649 = por %p647, %p648
    %p650 = scmp.ne.s32.totalorder %s642, %s645
    %p651 = scmp.eq.s32.totalorder %s34, 0
    %p652 = por %p650, %p651
    %p653 = scmp.ne.s32.totalorder %s642, %s645
    %p654 = scmp.eq.s32.totalorder %s39, 1
    %p655 = por %p653, %p654
    %p656 = scmp.ne.s32.totalorder %s645, %s646
    %p657 = scmp.eq.s32.totalorder %s39, 0
    %p658 = por %p656, %p657
    %p659 = scmp.ne.s32.totalorder %s645, %s646
    %p660 = scmp.eq.s32.totalorder %s40, 1
    %p661 = por %p659, %p660
    %p663 = scmp.ne.s32.totalorder %s646, %s662
    %p664 = scmp.eq.s32.totalorder %s40, 0
    %p665 = por %p663, %p664
    %p666 = scmp.le.s32.totalorder 1, %s34
    %p667 = scmp.lt.s32.totalorder %s34, 3
    %p668 = pnand %p666, %p667
    %p669 = pneg %p668
    // Predicated region
    $region9: #{custom_transformer_forward.9} parent=5 // pred_check
      _
    $region10: #{custom_transformer_forward.9} parent=5 // pred_check_branch
      %671 = sbr.rel (%p668) target = $region12
    $region11: #{custom_transformer_forward.9} parent=5 // pred_region
      %s672 = ssub.s32 %s34, 1
      // Predicated region
      $region13: #{custom_transformer_forward.9} parent=11 // pred_check
        %p673 = pneg %p107
      $region14: #{custom_transformer_forward.9} parent=11 // pred_check_branch
        %675 = sbr.rel (%p673) target = $region16
      $region15: #{custom_transformer_forward.9} parent=11 // pred_region
        _
      $region16: #{custom_transformer_forward.9} parent=11 // pred_fallthru
        _
      // Predicated region
      $region17: #{custom_transformer_forward.9} parent=11 // pred_check
        %p676 = pneg %p128
      $region18: #{custom_transformer_forward.9} parent=11 // pred_check_branch
        %678 = sbr.rel (%p676) target = $region20
      $region19: #{custom_transformer_forward.9} parent=11 // pred_region
        _
      $region20: #{custom_transformer_forward.9} parent=11 // pred_fallthru
        _
      // Predicated region
      $region21: #{custom_transformer_forward.9} parent=11 // pred_check
        %p679 = pneg %p149
      $region22: #{custom_transformer_forward.9} parent=11 // pred_check_branch
        %681 = sbr.rel (%p679) target = $region24
      $region23: #{custom_transformer_forward.9} parent=11 // pred_region
        _
      $region24: #{custom_transformer_forward.9} parent=11 // pred_fallthru
        _
      // Predicated region
      $region25: #{custom_transformer_forward.9} parent=11 // pred_check
        %p682 = pneg %p170
      $region26: #{custom_transformer_forward.9} parent=11 // pred_check_branch
        %684 = sbr.rel (%p682) target = $region28
      $region27: #{custom_transformer_forward.9} parent=11 // pred_region
        _
      $region28: #{custom_transformer_forward.9} parent=11 // pred_fallthru
        _
      // Predicated region
      $region29: #{custom_transformer_forward.9} parent=11 // pred_check
        %p685 = pneg %p191
      $region30: #{custom_transformer_forward.9} parent=11 // pred_check_branch
        %687 = sbr.rel (%p685) target = $region32
      $region31: #{custom_transformer_forward.9} parent=11 // pred_region
        _
      $region32: #{custom_transformer_forward.9} parent=11 // pred_fallthru
        _
      // Predicated region
      $region33: #{custom_transformer_forward.9} parent=11 // pred_check
        %p688 = pneg %p212
      $region34: #{custom_transformer_forward.9} parent=11 // pred_check_branch
        %690 = sbr.rel (%p688) target = $region36
      $region35: #{custom_transformer_forward.9} parent=11 // pred_region
        _
      $region36: #{custom_transformer_forward.9} parent=11 // pred_fallthru
        _
      // Predicated region
      $region37: #{custom_transformer_forward.9} parent=11 // pred_check
        %p691 = pneg %p233
      $region38: #{custom_transformer_forward.9} parent=11 // pred_check_branch
        %693 = sbr.rel (%p691) target = $region40
      $region39: #{custom_transformer_forward.9} parent=11 // pred_region
        _
      $region40: #{custom_transformer_forward.9} parent=11 // pred_fallthru
        _
      // Predicated region
      $region41: #{custom_transformer_forward.9} parent=11 // pred_check
        %p694 = pneg %p254
      $region42: #{custom_transformer_forward.9} parent=11 // pred_check_branch
        %696 = sbr.rel (%p694) target = $region44
      $region43: #{custom_transformer_forward.9} parent=11 // pred_region
        _
      $region44: #{custom_transformer_forward.9} parent=11 // pred_fallthru
        _
      // Predicated region
      $region45: #{custom_transformer_forward.9} parent=11 // pred_check
        %p697 = pneg %p275
      $region46: #{custom_transformer_forward.9} parent=11 // pred_check_branch
        %699 = sbr.rel (%p697) target = $region48
      $region47: #{custom_transformer_forward.9} parent=11 // pred_region
        _
      $region48: #{custom_transformer_forward.9} parent=11 // pred_fallthru
        _
      // Predicated region
      $region49: #{custom_transformer_forward.9} parent=11 // pred_check
        %p700 = pneg %p296
      $region50: #{custom_transformer_forward.9} parent=11 // pred_check_branch
        %702 = sbr.rel (%p700) target = $region52
      $region51: #{custom_transformer_forward.9} parent=11 // pred_region
        _
      $region52: #{custom_transformer_forward.9} parent=11 // pred_fallthru
        _
      // Predicated region
      $region53: #{custom_transformer_forward.9} parent=11 // pred_check
        %p703 = pneg %p317
      $region54: #{custom_transformer_forward.9} parent=11 // pred_check_branch
        %705 = sbr.rel (%p703) target = $region56
      $region55: #{custom_transformer_forward.9} parent=11 // pred_region
        _
      $region56: #{custom_transformer_forward.9} parent=11 // pred_fallthru
        _
      // Predicated region
      $region57: #{custom_transformer_forward.9} parent=11 // pred_check
        %p706 = pneg %p338
      $region58: #{custom_transformer_forward.9} parent=11 // pred_check_branch
        %708 = sbr.rel (%p706) target = $region60
      $region59: #{custom_transformer_forward.9} parent=11 // pred_region
        _
      $region60: #{custom_transformer_forward.9} parent=11 // pred_fallthru
        _
      // Predicated region
      $region61: #{custom_transformer_forward.9} parent=11 // pred_check
        %p709 = pneg %p359
      $region62: #{custom_transformer_forward.9} parent=11 // pred_check_branch
        %711 = sbr.rel (%p709) target = $region64
      $region63: #{custom_transformer_forward.9} parent=11 // pred_region
        _
      $region64: #{custom_transformer_forward.9} parent=11 // pred_fallthru
        _
      // Predicated region
      $region65: #{custom_transformer_forward.9} parent=11 // pred_check
        %p712 = pneg %p380
      $region66: #{custom_transformer_forward.9} parent=11 // pred_check_branch
        %714 = sbr.rel (%p712) target = $region68
      $region67: #{custom_transformer_forward.9} parent=11 // pred_region
        _
      $region68: #{custom_transformer_forward.9} parent=11 // pred_fallthru
        _
      // Predicated region
      $region69: #{custom_transformer_forward.9} parent=11 // pred_check
        %p715 = pneg %p401
      $region70: #{custom_transformer_forward.9} parent=11 // pred_check_branch
        %717 = sbr.rel (%p715) target = $region72
      $region71: #{custom_transformer_forward.9} parent=11 // pred_region
        _
      $region72: #{custom_transformer_forward.9} parent=11 // pred_fallthru
        _
      // Predicated region
      $region73: #{custom_transformer_forward.9} parent=11 // pred_check
        %p718 = pneg %p422
      $region74: #{custom_transformer_forward.9} parent=11 // pred_check_branch
        %720 = sbr.rel (%p718) target = $region76
      $region75: #{custom_transformer_forward.9} parent=11 // pred_region
        _
      $region76: #{custom_transformer_forward.9} parent=11 // pred_fallthru
        _
      // Predicated region
      $region77: #{custom_transformer_forward.9} parent=11 // pred_check
        %p721 = pneg %p443
      $region78: #{custom_transformer_forward.9} parent=11 // pred_check_branch
        %723 = sbr.rel (%p721) target = $region80
      $region79: #{custom_transformer_forward.9} parent=11 // pred_region
        _
      $region80: #{custom_transformer_forward.9} parent=11 // pred_fallthru
        _
      // Predicated region
      $region81: #{custom_transformer_forward.9} parent=11 // pred_check
        %p724 = pneg %p464
      $region82: #{custom_transformer_forward.9} parent=11 // pred_check_branch
        %726 = sbr.rel (%p724) target = $region84
      $region83: #{custom_transformer_forward.9} parent=11 // pred_region
        _
      $region84: #{custom_transformer_forward.9} parent=11 // pred_fallthru
        _
      // Predicated region
      $region85: #{custom_transformer_forward.9} parent=11 // pred_check
        %p727 = pneg %p485
      $region86: #{custom_transformer_forward.9} parent=11 // pred_check_branch
        %729 = sbr.rel (%p727) target = $region88
      $region87: #{custom_transformer_forward.9} parent=11 // pred_region
        _
      $region88: #{custom_transformer_forward.9} parent=11 // pred_fallthru
        _
      // Predicated region
      $region89: #{custom_transformer_forward.9} parent=11 // pred_check
        %p730 = pneg %p506
      $region90: #{custom_transformer_forward.9} parent=11 // pred_check_branch
        %732 = sbr.rel (%p730) target = $region92
      $region91: #{custom_transformer_forward.9} parent=11 // pred_region
        _
      $region92: #{custom_transformer_forward.9} parent=11 // pred_fallthru
        _
      // Predicated region
      $region93: #{custom_transformer_forward.9} parent=11 // pred_check
        %p733 = pneg %p527
      $region94: #{custom_transformer_forward.9} parent=11 // pred_check_branch
        %735 = sbr.rel (%p733) target = $region96
      $region95: #{custom_transformer_forward.9} parent=11 // pred_region
        _
      $region96: #{custom_transformer_forward.9} parent=11 // pred_fallthru
        _
      // Predicated region
      $region97: #{custom_transformer_forward.9} parent=11 // pred_check
        %p736 = pneg %p548
      $region98: #{custom_transformer_forward.9} parent=11 // pred_check_branch
        %738 = sbr.rel (%p736) target = $region100
      $region99: #{custom_transformer_forward.9} parent=11 // pred_region
        _
      $region100: #{custom_transformer_forward.9} parent=11 // pred_fallthru
        _
      // Predicated region
      $region101: #{custom_transformer_forward.9} parent=11 // pred_check
        %p739 = pneg %p569
      $region102: #{custom_transformer_forward.9} parent=11 // pred_check_branch
        %741 = sbr.rel (%p739) target = $region104
      $region103: #{custom_transformer_forward.9} parent=11 // pred_region
        _
      $region104: #{custom_transformer_forward.9} parent=11 // pred_fallthru
        _
      // Predicated region
      $region105: #{custom_transformer_forward.9} parent=11 // pred_check
        %p742 = pneg %p590
      $region106: #{custom_transformer_forward.9} parent=11 // pred_check_branch
        %744 = sbr.rel (%p742) target = $region108
      $region107: #{custom_transformer_forward.9} parent=11 // pred_region
        _
      $region108: #{custom_transformer_forward.9} parent=11 // pred_fallthru
        _
      // Predicated region
      $region109: #{custom_transformer_forward.9} parent=11 // pred_check
        %p745 = pneg %p611
      $region110: #{custom_transformer_forward.9} parent=11 // pred_check_branch
        %747 = sbr.rel (%p745) target = $region112
      $region111: #{custom_transformer_forward.9} parent=11 // pred_region
        _
      $region112: #{custom_transformer_forward.9} parent=11 // pred_fallthru
        _
      // Predicated region
      $region113: #{custom_transformer_forward.9} parent=11 // pred_check
        %p748 = pneg %p632
      $region114: #{custom_transformer_forward.9} parent=11 // pred_check_branch
        %750 = sbr.rel (%p748) target = $region116
      $region115: #{custom_transformer_forward.9} parent=11 // pred_region
        _
      $region116: #{custom_transformer_forward.9} parent=11 // pred_fallthru
        _
    $region12: #{custom_transformer_forward.9} parent=5 // pred_fallthru
      _
    %p751 = scmp.lt.s32.totalorder %s34, 2
    // Predicated region
    $region117: #{custom_transformer_forward.9} parent=5 // pred_check
      %p752 = pneg %p751
    $region118: #{custom_transformer_forward.9} parent=5 // pred_check_branch
      %754 = sbr.rel (%p752) target = $region120
    $region119: #{custom_transformer_forward.9} parent=5 // pred_region
      // Predicated region
      $region121: #{custom_transformer_forward.9} parent=119 // pred_check
        %p755 = pneg %p54
      $region122: #{custom_transformer_forward.9} parent=119 // pred_check_branch
        %757 = sbr.rel (%p755) target = $region124
      $region123: #{custom_transformer_forward.9} parent=119 // pred_region
        %p758 = scmp.lt.s32.totalorder %s34, 1
        %s759 = scalar_select %p758, %s34, 1
        %s760 = smul.addr %s759, 8
        %s761 = scalar_lea.vmem %s0, %s760
      $region124: #{custom_transformer_forward.9} parent=119 // pred_fallthru
        _
      // Predicated region
      $region125: #{custom_transformer_forward.9} parent=119 // pred_check
        %p762 = pneg %p80
      $region126: #{custom_transformer_forward.9} parent=119 // pred_check_branch
        %764 = sbr.rel (%p762) target = $region128
      $region127: #{custom_transformer_forward.9} parent=119 // pred_region
        %p765 = scmp.lt.s32.totalorder %s34, 1
        %s766 = scalar_select %p765, %s34, 1
        %s767 = smul.addr %s766, 8
        %s768 = scalar_lea.vmem %s1, %s767
      $region128: #{custom_transformer_forward.9} parent=119 // pred_fallthru
        _
    $region120: #{custom_transformer_forward.9} parent=5 // pred_fallthru
      _
    %p769 = scmp.le.s32.totalorder 1, %s34
    %p770 = scmp.lt.s32.totalorder %s34, 3
    %p771 = pnand %p769, %p770
    %p772 = pneg %p771
    // Predicated region
    $region129: #{custom_transformer_forward.9} parent=5 // pred_check
      _
    $region130: #{custom_transformer_forward.9} parent=5 // pred_check_branch
      %774 = sbr.rel (%p771) target = $region132
    $region131: #{custom_transformer_forward.9} parent=5 // pred_region
      %s775 = ssub.s32 %s34, 1
      %p776 = scmp.lt.s32.totalorder %s39, 1
      %s777 = scalar_select %p776, %s39, 1
      %s778 = smul.addr %s777, 8
      %s779 = scalar_lea.vmem %s0, %s778
      %p780 = pneg %p60
      %p781 = pneg %p57
      %p782 = scmp.lt.s32.totalorder %s39, 1
      %s783 = scalar_select %p782, %s39, 1
      %s784 = smul.addr %s783, 8
      %s785 = scalar_lea.vmem %s1, %s784
      %p786 = pneg %p86
      %p787 = pneg %p83
      %p788 = pneg %p107
      %p789 = pneg %p104
      %p790 = pneg %p128
      %p791 = pneg %p125
      %p792 = pneg %p149
      %p793 = pneg %p146
      %p794 = pneg %p170
      %p795 = pneg %p167
      %p796 = pneg %p191
      %p797 = pneg %p188
      %p798 = pneg %p212
      %p799 = pneg %p209
      %p800 = pneg %p233
      %p801 = pneg %p230
      %p802 = pneg %p254
      %p803 = pneg %p251
      %p804 = pneg %p275
      %p805 = pneg %p272
      %p806 = pneg %p296
      %p807 = pneg %p293
      %p808 = pneg %p317
      %p809 = pneg %p314
      %p810 = pneg %p338
      %p811 = pneg %p335
      %p812 = pneg %p359
      %p813 = pneg %p356
      %p814 = pneg %p380
      %p815 = pneg %p377
      %p816 = pneg %p401
      %p817 = pneg %p398
      %p818 = pneg %p422
      %p819 = pneg %p419
      %p820 = pneg %p443
      %p821 = pneg %p440
      %p822 = pneg %p464
      %p823 = pneg %p461
      %p824 = pneg %p485
      %p825 = pneg %p482
      %p826 = pneg %p506
      %p827 = pneg %p503
      %p828 = pneg %p527
      %p829 = pneg %p524
      %p830 = pneg %p548
      %p831 = pneg %p545
      %p832 = pneg %p569
      %p833 = pneg %p566
      %p834 = pneg %p590
      %p835 = pneg %p587
      %p836 = pneg %p611
      %p837 = pneg %p608
      %p838 = pneg %p632
      %p839 = pneg %p629
      %p840 = pneg %p658
      %p841 = pneg %p655
      %p842 = scmp.lt.s32.totalorder %s39, 1
      %s843 = scalar_select %p842, %s39, 1
      %s844 = smul.addr %s843, 8
      %s845 = scalar_lea.vmem %s28, %s844
      %p846 = scmp.lt.s32.totalorder %s39, 1
      %s847 = scalar_select %p846, %s39, 1
      %s848 = smul.addr %s847, 8
      %s849 = scalar_lea.vmem %s0, %s848
      %p850 = scmp.lt.s32.totalorder %s39, 1
      %s851 = scalar_select %p850, %s39, 1
      %s852 = smul.addr %s851, 8
      %s853 = scalar_lea.vmem %s1, %s852
      %p854 = scmp.lt.s32.totalorder %s39, 1
      %s855 = scalar_select %p854, %s39, 1
      %s856 = smul.addr %s855, 8
      %s857 = scalar_lea.vmem %s28, %s856
      %v859 = vld [vmem:[%s849] sm:$0xff]
      %v860 = vld [vmem:[%s853] sm:$0xff]
      %v861 = vpack.c.bf16 %v859, %v859
      %v862 = vpack.c.bf16 %v860, %v860
      %v863 = vld [vmem:[%s2] sm:$0xf]
      %v864 = vld [vmem:[%s2 + $0x4] sm:$0xf]
      %v865 = vld [vmem:[%s2 + $0x8] sm:$0xf]
      %v866 = vld [vmem:[%s2 + $0xc] sm:$0xf]
      %v867 = vld [vmem:[%s3] sm:$0x1]
      %v869 = vlaneseq
      %v870 = vshrl.u32 %v869, 7
      %v871 = vsub.s32 0, %v870
      %v872 = vrot.slane %v867, %v871
      %v878 = vunpack.c.l.b16 %v863
      %v879 = vunpack.c.l.b16 %v864
      %v880 = vunpack.c.l.b16 %v865
      %v881 = vunpack.c.l.b16 %v866
      %v882 = vpack.c.b16 %v879, %v878
      %v883 = vpack.c.b16 %v881, %v880
      %vm886 = vcmask 261120
      %v888 = vsel %vm886, %v861, 0
      %890 = vmatprep.subr.bf16.mxu0 0
      %891 = vmatpush1.bf16.msra.mxu0 0
      %892 = vmatprep.subr.bf16.mxu0 0
      %893 = vmatpush1.bf16.msra.mxu0 0
      %894 = vmatprep.subr.bf16.mxu0 0
      %895 = vmatpush1.bf16.msra.mxu0 0
      %896 = vmatprep.subr.bf16.mxu0 0
      %897 = vmatpush1.bf16.msra.mxu0 0
      %898 = vmatprep.subr.bf16.mxu0 0
      %899 = vmatpush1.bf16.msra.mxu0 0
      %900 = vmatprep.subr.bf16.mxu0 0
      %901 = vmatpush1.bf16.msra.mxu0 0
      %902 = vmatprep.subr.bf16.mxu0 0
      %903 = vmatpush1.bf16.msra.mxu0 %v883
      %904 = vmatprep.subr.bf16.mxu0 0
      %905 = vmatpush1.bf16.msra.mxu0 %v882
      %906 = vmatprep.subr.bf16.mxu0 0
      %907 = vmatpush2.bf16.msra.mxu0 0
      %908 = vmatprep.subr.bf16.mxu0 0
      %909 = vmatpush2.bf16.msra.mxu0 0
      %910 = vmatprep.subr.bf16.mxu0 0
      %911 = vmatpush2.bf16.msra.mxu0 0
      %912 = vmatprep.subr.bf16.mxu0 0
      %913 = vmatpush2.bf16.msra.mxu0 0
      %914 = vmatprep.subr.bf16.mxu0 0
      %915 = vmatpush2.bf16.msra.mxu0 0
      %916 = vmatprep.subr.bf16.mxu0 0
      %917 = vmatpush2.bf16.msra.mxu0 0
      %918 = vmatprep.subr.bf16.mxu0 0
      %919 = vmatpush2.bf16.msra.mxu0 0
      %920 = vmatprep.subr.bf16.mxu0 0
      %921 = vmatpush2.bf16.msra.mxu0 0
      %922 = vmatprep.mubr.bf16.mxu0 0
      %923 = vmatmul.mubr.bf16.gmra.mxu0 %v888
      %v924 = vpop.f32.mrf.mxu0
      %v925 = vadd.f32 %v872, %v924
      %v926 = vpop.f32.mrf.mxu0
      %v927 = vpop.f32.mrf.mxu0
      %v928 = vpop.f32.mrf.mxu0
      %929 = vdwg.mxu0
      %v930 = vld [vmem:[%s4] sm:$0xf]
      %v931 = vld [vmem:[%s4 + $0x4] sm:$0xf]
      %v932 = vld [vmem:[%s4 + $0x8] sm:$0xf]
      %v933 = vld [vmem:[%s4 + $0xc] sm:$0xf]
      %v934 = vld [vmem:[%s5] sm:$0x1]
      %v936 = vlaneseq
      %v937 = vshrl.u32 %v936, 7
      %v938 = vsub.s32 0, %v937
      %v939 = vrot.slane %v934, %v938
      %v945 = vunpack.c.l.b16 %v930
      %v946 = vunpack.c.l.b16 %v931
      %v947 = vunpack.c.l.b16 %v932
      %v948 = vunpack.c.l.b16 %v933
      %v949 = vpack.c.b16 %v946, %v945
      %v950 = vpack.c.b16 %v948, %v947
      %953 = vmatprep.subr.bf16.mxu0 0
      %954 = vmatpush1.bf16.msra.mxu0 0
      %955 = vmatprep.subr.bf16.mxu0 0
      %956 = vmatpush1.bf16.msra.mxu0 0
      %957 = vmatprep.subr.bf16.mxu0 0
      %958 = vmatpush1.bf16.msra.mxu0 0
      %959 = vmatprep.subr.bf16.mxu0 0
      %960 = vmatpush1.bf16.msra.mxu0 0
      %961 = vmatprep.subr.bf16.mxu0 0
      %962 = vmatpush1.bf16.msra.mxu0 0
      %963 = vmatprep.subr.bf16.mxu0 0
      %964 = vmatpush1.bf16.msra.mxu0 0
      %965 = vmatprep.subr.bf16.mxu0 0
      %966 = vmatpush1.bf16.msra.mxu0 %v950
      %967 = vmatprep.subr.bf16.mxu0 0
      %968 = vmatpush1.bf16.msra.mxu0 %v949
      %969 = vmatprep.subr.bf16.mxu0 0
      %970 = vmatpush2.bf16.msra.mxu0 0
      %971 = vmatprep.subr.bf16.mxu0 0
      %972 = vmatpush2.bf16.msra.mxu0 0
      %973 = vmatprep.subr.bf16.mxu0 0
      %974 = vmatpush2.bf16.msra.mxu0 0
      %975 = vmatprep.subr.bf16.mxu0 0
      %976 = vmatpush2.bf16.msra.mxu0 0
      %977 = vmatprep.subr.bf16.mxu0 0
      %978 = vmatpush2.bf16.msra.mxu0 0
      %979 = vmatprep.subr.bf16.mxu0 0
      %980 = vmatpush2.bf16.msra.mxu0 0
      %981 = vmatprep.subr.bf16.mxu0 0
      %982 = vmatpush2.bf16.msra.mxu0 0
      %983 = vmatprep.subr.bf16.mxu0 0
      %984 = vmatpush2.bf16.msra.mxu0 0
      %985 = vmatprep.mubr.bf16.mxu0 0
      %986 = vmatmul.mubr.bf16.gmra.mxu0 %v888
      %v987 = vpop.f32.mrf.mxu0
      %v988 = vadd.f32 %v939, %v987
      %v989 = vpop.f32.mrf.mxu0
      %v990 = vpop.f32.mrf.mxu0
      %v991 = vpop.f32.mrf.mxu0
      %992 = vdwg.mxu0
      %v993 = vld [vmem:[%s6] sm:$0xf]
      %v994 = vld [vmem:[%s6 + $0x4] sm:$0xf]
      %v995 = vld [vmem:[%s6 + $0x8] sm:$0xf]
      %v996 = vld [vmem:[%s6 + $0xc] sm:$0xf]
      %v997 = vld [vmem:[%s7] sm:$0x1]
      %v999 = vlaneseq
      %v1000 = vshrl.u32 %v999, 7
      %v1001 = vsub.s32 0, %v1000
      %v1002 = vrot.slane %v997, %v1001
      %v1008 = vunpack.c.l.b16 %v993
      %v1009 = vunpack.c.l.b16 %v994
      %v1010 = vunpack.c.l.b16 %v995
      %v1011 = vunpack.c.l.b16 %v996
      %v1012 = vpack.c.b16 %v1009, %v1008
      %v1013 = vpack.c.b16 %v1011, %v1010
      %1016 = vmatprep.subr.bf16.mxu0 0
      %1017 = vmatpush1.bf16.msra.mxu0 0
      %1018 = vmatprep.subr.bf16.mxu0 0
      %1019 = vmatpush1.bf16.msra.mxu0 0
      %1020 = vmatprep.subr.bf16.mxu0 0
      %1021 = vmatpush1.bf16.msra.mxu0 0
      %1022 = vmatprep.subr.bf16.mxu0 0
      %1023 = vmatpush1.bf16.msra.mxu0 0
      %1024 = vmatprep.subr.bf16.mxu0 0
      %1025 = vmatpush1.bf16.msra.mxu0 0
      %1026 = vmatprep.subr.bf16.mxu0 0
      %1027 = vmatpush1.bf16.msra.mxu0 0
      %1028 = vmatprep.subr.bf16.mxu0 0
      %1029 = vmatpush1.bf16.msra.mxu0 %v1013
      %1030 = vmatprep.subr.bf16.mxu0 0
      %1031 = vmatpush1.bf16.msra.mxu0 %v1012
      %1032 = vmatprep.subr.bf16.mxu0 0
      %1033 = vmatpush2.bf16.msra.mxu0 0
      %1034 = vmatprep.subr.bf16.mxu0 0
      %1035 = vmatpush2.bf16.msra.mxu0 0
      %1036 = vmatprep.subr.bf16.mxu0 0
      %1037 = vmatpush2.bf16.msra.mxu0 0
      %1038 = vmatprep.subr.bf16.mxu0 0
      %1039 = vmatpush2.bf16.msra.mxu0 0
      %1040 = vmatprep.subr.bf16.mxu0 0
      %1041 = vmatpush2.bf16.msra.mxu0 0
      %1042 = vmatprep.subr.bf16.mxu0 0
      %1043 = vmatpush2.bf16.msra.mxu0 0
      %1044 = vmatprep.subr.bf16.mxu0 0
      %1045 = vmatpush2.bf16.msra.mxu0 0
      %1046 = vmatprep.subr.bf16.mxu0 0
      %1047 = vmatpush2.bf16.msra.mxu0 0
      %1048 = vmatprep.mubr.bf16.mxu0 0
      %1049 = vmatmul.mubr.bf16.gmra.mxu0 %v888
      %v1050 = vpop.f32.mrf.mxu0
      %v1051 = vadd.f32 %v1002, %v1050
      %v1052 = vpop.f32.mrf.mxu0
      %v1053 = vpop.f32.mrf.mxu0
      %v1054 = vpop.f32.mrf.mxu0
      %1055 = vdwg.mxu0
      %v1056 = vpack.c.bf16 %v925, %v925
      %v1057 = vpack.c.bf16 %v988, %v988
      %vm1058 = vcmask 64512
      %v1060 = vsel %vm1058, %v1056, 0
      %v1063 = vsel %vm1058, %v1057, 0
      %1065 = vmatprep.subr.bf16.mxu0 0
      %1066 = vmatpush1.bf16.xpose.msra.mxu0 0
      %1067 = vmatprep.subr.bf16.mxu0 0
      %1068 = vmatpush1.bf16.xpose.msra.mxu0 0
      %1069 = vmatprep.subr.bf16.mxu0 0
      %1070 = vmatpush1.bf16.xpose.msra.mxu0 0
      %1071 = vmatprep.subr.bf16.mxu0 0
      %1072 = vmatpush1.bf16.xpose.msra.mxu0 0
      %1073 = vmatprep.subr.bf16.mxu0 0
      %1074 = vmatpush1.bf16.xpose.msra.mxu0 0
      %1075 = vmatprep.subr.bf16.mxu0 0
      %1076 = vmatpush1.bf16.xpose.msra.mxu0 0
      %1077 = vmatprep.subr.bf16.mxu0 0
      %1078 = vmatpush1.bf16.xpose.msra.mxu0 0
      %1079 = vmatprep.subr.bf16.mxu0 0
      %1080 = vmatpush1.bf16.xpose.msra.mxu0 %v1063
      %1081 = vmatprep.subr.bf16.mxu0 0
      %1082 = vmatpush2.bf16.xpose.msra.mxu0 0
      %1083 = vmatprep.subr.bf16.mxu0 0
      %1084 = vmatpush2.bf16.xpose.msra.mxu0 0
      %1085 = vmatprep.subr.bf16.mxu0 0
      %1086 = vmatpush2.bf16.xpose.msra.mxu0 0
      %1087 = vmatprep.subr.bf16.mxu0 0
      %1088 = vmatpush2.bf16.xpose.msra.mxu0 0
      %1089 = vmatprep.subr.bf16.mxu0 0
      %1090 = vmatpush2.bf16.xpose.msra.mxu0 0
      %1091 = vmatprep.subr.bf16.mxu0 0
      %1092 = vmatpush2.bf16.xpose.msra.mxu0 0
      %1093 = vmatprep.subr.bf16.mxu0 0
      %1094 = vmatpush2.bf16.xpose.msra.mxu0 0
      %1095 = vmatprep.subr.bf16.mxu0 0
      %1096 = vmatpush2.bf16.xpose.msra.mxu0 0
      %1097 = vmatprep.mubr.bf16.mxu0 0
      %1098 = vmatmul.mubr.bf16.gmra.mxu0 %v1060
      %v1099 = vpop.f32.mrf.mxu0
      %v1100 = vadd.f32 0.0, %v1099
      %v1101 = vpop.f32.mrf.mxu0
      %v1102 = vpop.f32.mrf.mxu0
      %v1103 = vpop.f32.mrf.mxu0
      %1104 = vdwg.mxu0
      %v1105 = vmul.f32 %v1100, 0.35355338
      %v1106 = vsel %vm1058, %v1105, -inf
      %1107 = vmax.xlane.f32.xlu0 %v1106
      %v1108 = vpop.xlane.xlu0 %1107
      %v1109 = vsub.f32 %v1105, %v1108
      %v1110 = vmul.f32 %v1109, 1.442695
      %v1111 = vpow.pop %v1110
      %v1112 = vsel %vm1058, %v1111, 0.0
      %1113 = vadd.xlane.f32.xlu0 %v1112
      %v1114 = vpop.xlane.xlu0 %1113
      %v1115 = vrcp.pop %v1114
      %v1116 = vmul.f32 %v1111, %v1115
      %v1117 = vpack.c.bf16 %v1116, %v1116
      %v1118 = vpack.c.bf16 %v1051, %v1051
      %v1120 = vsel %vm1058, %v1117, 0
      %vm1122 = vcmask 1043456
      %v1124 = vsel %vm1122, %v1118, 0
      %1126 = vmatprep.subr.bf16.mxu0 0
      %1127 = vmatpush1.bf16.msra.mxu0 0
      %1128 = vmatprep.subr.bf16.mxu0 0
      %1129 = vmatpush1.bf16.msra.mxu0 0
      %1130 = vmatprep.subr.bf16.mxu0 0
      %1131 = vmatpush1.bf16.msra.mxu0 0
      %1132 = vmatprep.subr.bf16.mxu0 0
      %1133 = vmatpush1.bf16.msra.mxu0 0
      %1134 = vmatprep.subr.bf16.mxu0 0
      %1135 = vmatpush1.bf16.msra.mxu0 0
      %1136 = vmatprep.subr.bf16.mxu0 0
      %1137 = vmatpush1.bf16.msra.mxu0 0
      %1138 = vmatprep.subr.bf16.mxu0 0
      %1139 = vmatpush1.bf16.msra.mxu0 0
      %1140 = vmatprep.subr.bf16.mxu0 0
      %1141 = vmatpush1.bf16.msra.mxu0 %v1124
      %1142 = vmatprep.subr.bf16.mxu0 0
      %1143 = vmatpush2.bf16.msra.mxu0 0
      %1144 = vmatprep.subr.bf16.mxu0 0
      %1145 = vmatpush2.bf16.msra.mxu0 0
      %1146 = vmatprep.subr.bf16.mxu0 0
      %1147 = vmatpush2.bf16.msra.mxu0 0
      %1148 = vmatprep.subr.bf16.mxu0 0
      %1149 = vmatpush2.bf16.msra.mxu0 0
      %1150 = vmatprep.subr.bf16.mxu0 0
      %1151 = vmatpush2.bf16.msra.mxu0 0
      %1152 = vmatprep.subr.bf16.mxu0 0
      %1153 = vmatpush2.bf16.msra.mxu0 0
      %1154 = vmatprep.subr.bf16.mxu0 0
      %1155 = vmatpush2.bf16.msra.mxu0 0
      %1156 = vmatprep.subr.bf16.mxu0 0
      %1157 = vmatpush2.bf16.msra.mxu0 0
      %1158 = vmatprep.mubr.bf16.mxu0 0
      %1159 = vmatmul.mubr.bf16.gmra.mxu0 %v1120
      %v1160 = vpop.f32.mrf.mxu0
      %v1161 = vadd.f32 0.0, %v1160
      %v1162 = vpop.f32.mrf.mxu0
      %v1163 = vpop.f32.mrf.mxu0
      %v1164 = vpop.f32.mrf.mxu0
      %1165 = vdwg.mxu0
      %v1166 = vpack.c.bf16 %v1161, %v1161
      %v1167 = vld [vmem:[%s8] sm:$0xf]
      %s1168 = scalar_lea.vmem %s2, 16
      %v1169 = vld [vmem:[%s1168] sm:$0xf]
      %v1170 = vld [vmem:[%s1168 + $0x4] sm:$0xf]
      %v1171 = vld [vmem:[%s1168 + $0x8] sm:$0xf]
      %v1172 = vld [vmem:[%s1168 + $0xc] sm:$0xf]
      %s1173 = scalar_lea.vmem %s3, 1
      %v1174 = vld [vmem:[%s1173] sm:$0x1]
      %v1176 = vlaneseq
      %v1177 = vshrl.u32 %v1176, 7
      %v1178 = vsub.s32 0, %v1177
      %v1179 = vrot.slane %v1174, %v1178
      %v1185 = vunpack.c.l.b16 %v1169
      %v1186 = vunpack.c.l.b16 %v1170
      %v1187 = vunpack.c.l.b16 %v1171
      %v1188 = vunpack.c.l.b16 %v1172
      %v1189 = vpack.c.b16 %v1186, %v1185
      %v1190 = vpack.c.b16 %v1188, %v1187
      %1193 = vmatprep.subr.bf16.mxu0 0
      %1194 = vmatpush1.bf16.msra.mxu0 0
      %1195 = vmatprep.subr.bf16.mxu0 0
      %1196 = vmatpush1.bf16.msra.mxu0 0
      %1197 = vmatprep.subr.bf16.mxu0 0
      %1198 = vmatpush1.bf16.msra.mxu0 0
      %1199 = vmatprep.subr.bf16.mxu0 0
      %1200 = vmatpush1.bf16.msra.mxu0 0
      %1201 = vmatprep.subr.bf16.mxu0 0
      %1202 = vmatpush1.bf16.msra.mxu0 0
      %1203 = vmatprep.subr.bf16.mxu0 0
      %1204 = vmatpush1.bf16.msra.mxu0 0
      %1205 = vmatprep.subr.bf16.mxu0 0
      %1206 = vmatpush1.bf16.msra.mxu0 %v1190
      %1207 = vmatprep.subr.bf16.mxu0 0
      %1208 = vmatpush1.bf16.msra.mxu0 %v1189
      %1209 = vmatprep.subr.bf16.mxu0 0
      %1210 = vmatpush2.bf16.msra.mxu0 0
      %1211 = vmatprep.subr.bf16.mxu0 0
      %1212 = vmatpush2.bf16.msra.mxu0 0
      %1213 = vmatprep.subr.bf16.mxu0 0
      %1214 = vmatpush2.bf16.msra.mxu0 0
      %1215 = vmatprep.subr.bf16.mxu0 0
      %1216 = vmatpush2.bf16.msra.mxu0 0
      %1217 = vmatprep.subr.bf16.mxu0 0
      %1218 = vmatpush2.bf16.msra.mxu0 0
      %1219 = vmatprep.subr.bf16.mxu0 0
      %1220 = vmatpush2.bf16.msra.mxu0 0
      %1221 = vmatprep.subr.bf16.mxu0 0
      %1222 = vmatpush2.bf16.msra.mxu0 0
      %1223 = vmatprep.subr.bf16.mxu0 0
      %1224 = vmatpush2.bf16.msra.mxu0 0
      %1225 = vmatprep.mubr.bf16.mxu0 0
      %1226 = vmatmul.mubr.bf16.gmra.mxu0 %v888
      %v1227 = vpop.f32.mrf.mxu0
      %v1228 = vadd.f32 %v1179, %v1227
      %v1229 = vpop.f32.mrf.mxu0
      %v1230 = vpop.f32.mrf.mxu0
      %v1231 = vpop.f32.mrf.mxu0
      %1232 = vdwg.mxu0
      %s1233 = scalar_lea.vmem %s4, 16
      %v1234 = vld [vmem:[%s1233] sm:$0xf]
      %v1235 = vld [vmem:[%s1233 + $0x4] sm:$0xf]
      %v1236 = vld [vmem:[%s1233 + $0x8] sm:$0xf]
      %v1237 = vld [vmem:[%s1233 + $0xc] sm:$0xf]
      %s1238 = scalar_lea.vmem %s5, 1
      %v1239 = vld [vmem:[%s1238] sm:$0x1]
      %v1241 = vlaneseq
      %v1242 = vshrl.u32 %v1241, 7
      %v1243 = vsub.s32 0, %v1242
      %v1244 = vrot.slane %v1239, %v1243
      %v1250 = vunpack.c.l.b16 %v1234
      %v1251 = vunpack.c.l.b16 %v1235
      %v1252 = vunpack.c.l.b16 %v1236
      %v1253 = vunpack.c.l.b16 %v1237
      %v1254 = vpack.c.b16 %v1251, %v1250
      %v1255 = vpack.c.b16 %v1253, %v1252
      %1258 = vmatprep.subr.bf16.mxu0 0
      %1259 = vmatpush1.bf16.msra.mxu0 0
      %1260 = vmatprep.subr.bf16.mxu0 0
      %1261 = vmatpush1.bf16.msra.mxu0 0
      %1262 = vmatprep.subr.bf16.mxu0 0
      %1263 = vmatpush1.bf16.msra.mxu0 0
      %1264 = vmatprep.subr.bf16.mxu0 0
      %1265 = vmatpush1.bf16.msra.mxu0 0
      %1266 = vmatprep.subr.bf16.mxu0 0
      %1267 = vmatpush1.bf16.msra.mxu0 0
      %1268 = vmatprep.subr.bf16.mxu0 0
      %1269 = vmatpush1.bf16.msra.mxu0 0
      %1270 = vmatprep.subr.bf16.mxu0 0
      %1271 = vmatpush1.bf16.msra.mxu0 %v1255
      %1272 = vmatprep.subr.bf16.mxu0 0
      %1273 = vmatpush1.bf16.msra.mxu0 %v1254
      %1274 = vmatprep.subr.bf16.mxu0 0
      %1275 = vmatpush2.bf16.msra.mxu0 0
      %1276 = vmatprep.subr.bf16.mxu0 0
      %1277 = vmatpush2.bf16.msra.mxu0 0
      %1278 = vmatprep.subr.bf16.mxu0 0
      %1279 = vmatpush2.bf16.msra.mxu0 0
      %1280 = vmatprep.subr.bf16.mxu0 0
      %1281 = vmatpush2.bf16.msra.mxu0 0
      %1282 = vmatprep.subr.bf16.mxu0 0
      %1283 = vmatpush2.bf16.msra.mxu0 0
      %1284 = vmatprep.subr.bf16.mxu0 0
      %1285 = vmatpush2.bf16.msra.mxu0 0
      %1286 = vmatprep.subr.bf16.mxu0 0
      %1287 = vmatpush2.bf16.msra.mxu0 0
      %1288 = vmatprep.subr.bf16.mxu0 0
      %1289 = vmatpush2.bf16.msra.mxu0 0
      %1290 = vmatprep.mubr.bf16.mxu0 0
      %1291 = vmatmul.mubr.bf16.gmra.mxu0 %v888
      %v1292 = vpop.f32.mrf.mxu0
      %v1293 = vadd.f32 %v1244, %v1292
      %v1294 = vpop.f32.mrf.mxu0
      %v1295 = vpop.f32.mrf.mxu0
      %v1296 = vpop.f32.mrf.mxu0
      %1297 = vdwg.mxu0
      %s1298 = scalar_lea.vmem %s6, 16
      %v1299 = vld [vmem:[%s1298] sm:$0xf]
      %v1300 = vld [vmem:[%s1298 + $0x4] sm:$0xf]
      %v1301 = vld [vmem:[%s1298 + $0x8] sm:$0xf]
      %v1302 = vld [vmem:[%s1298 + $0xc] sm:$0xf]
      %s1303 = scalar_lea.vmem %s7, 1
      %v1304 = vld [vmem:[%s1303] sm:$0x1]
      %v1306 = vlaneseq
      %v1307 = vshrl.u32 %v1306, 7
      %v1308 = vsub.s32 0, %v1307
      %v1309 = vrot.slane %v1304, %v1308
      %v1315 = vunpack.c.l.b16 %v1299
      %v1316 = vunpack.c.l.b16 %v1300
      %v1317 = vunpack.c.l.b16 %v1301
      %v1318 = vunpack.c.l.b16 %v1302
      %v1319 = vpack.c.b16 %v1316, %v1315
      %v1320 = vpack.c.b16 %v1318, %v1317
      %1323 = vmatprep.subr.bf16.mxu0 0
      %1324 = vmatpush1.bf16.msra.mxu0 0
      %1325 = vmatprep.subr.bf16.mxu0 0
      %1326 = vmatpush1.bf16.msra.mxu0 0
      %1327 = vmatprep.subr.bf16.mxu0 0
      %1328 = vmatpush1.bf16.msra.mxu0 0
      %1329 = vmatprep.subr.bf16.mxu0 0
      %1330 = vmatpush1.bf16.msra.mxu0 0
      %1331 = vmatprep.subr.bf16.mxu0 0
      %1332 = vmatpush1.bf16.msra.mxu0 0
      %1333 = vmatprep.subr.bf16.mxu0 0
      %1334 = vmatpush1.bf16.msra.mxu0 0
      %1335 = vmatprep.subr.bf16.mxu0 0
      %1336 = vmatpush1.bf16.msra.mxu0 %v1320
      %1337 = vmatprep.subr.bf16.mxu0 0
      %1338 = vmatpush1.bf16.msra.mxu0 %v1319
      %1339 = vmatprep.subr.bf16.mxu0 0
      %1340 = vmatpush2.bf16.msra.mxu0 0
      %1341 = vmatprep.subr.bf16.mxu0 0
      %1342 = vmatpush2.bf16.msra.mxu0 0
      %1343 = vmatprep.subr.bf16.mxu0 0
      %1344 = vmatpush2.bf16.msra.mxu0 0
      %1345 = vmatprep.subr.bf16.mxu0 0
      %1346 = vmatpush2.bf16.msra.mxu0 0
      %1347 = vmatprep.subr.bf16.mxu0 0
      %1348 = vmatpush2.bf16.msra.mxu0 0
      %1349 = vmatprep.subr.bf16.mxu0 0
      %1350 = vmatpush2.bf16.msra.mxu0 0
      %1351 = vmatprep.subr.bf16.mxu0 0
      %1352 = vmatpush2.bf16.msra.mxu0 0
      %1353 = vmatprep.subr.bf16.mxu0 0
      %1354 = vmatpush2.bf16.msra.mxu0 0
      %1355 = vmatprep.mubr.bf16.mxu0 0
      %1356 = vmatmul.mubr.bf16.gmra.mxu0 %v888
      %v1357 = vpop.f32.mrf.mxu0
      %v1358 = vadd.f32 %v1309, %v1357
      %v1359 = vpop.f32.mrf.mxu0
      %v1360 = vpop.f32.mrf.mxu0
      %v1361 = vpop.f32.mrf.mxu0
      %1362 = vdwg.mxu0
      %v1363 = vpack.c.bf16 %v1228, %v1228
      %v1364 = vpack.c.bf16 %v1293, %v1293
      %v1366 = vsel %vm1058, %v1363, 0
      %v1369 = vsel %vm1058, %v1364, 0
      %1371 = vmatprep.subr.bf16.mxu0 0
      %1372 = vmatpush1.bf16.xpose.msra.mxu0 0
      %1373 = vmatprep.subr.bf16.mxu0 0
      %1374 = vmatpush1.bf16.xpose.msra.mxu0 0
      %1375 = vmatprep.subr.bf16.mxu0 0
      %1376 = vmatpush1.bf16.xpose.msra.mxu0 0
      %1377 = vmatprep.subr.bf16.mxu0 0
      %1378 = vmatpush1.bf16.xpose.msra.mxu0 0
      %1379 = vmatprep.subr.bf16.mxu0 0
      %1380 = vmatpush1.bf16.xpose.msra.mxu0 0
      %1381 = vmatprep.subr.bf16.mxu0 0
      %1382 = vmatpush1.bf16.xpose.msra.mxu0 0
      %1383 = vmatprep.subr.bf16.mxu0 0
      %1384 = vmatpush1.bf16.xpose.msra.mxu0 0
      %1385 = vmatprep.subr.bf16.mxu0 0
      %1386 = vmatpush1.bf16.xpose.msra.mxu0 %v1369
      %1387 = vmatprep.subr.bf16.mxu0 0
      %1388 = vmatpush2.bf16.xpose.msra.mxu0 0
      %1389 = vmatprep.subr.bf16.mxu0 0
      %1390 = vmatpush2.bf16.xpose.msra.mxu0 0
      %1391 = vmatprep.subr.bf16.mxu0 0
      %1392 = vmatpush2.bf16.xpose.msra.mxu0 0
      %1393 = vmatprep.subr.bf16.mxu0 0
      %1394 = vmatpush2.bf16.xpose.msra.mxu0 0
      %1395 = vmatprep.subr.bf16.mxu0 0
      %1396 = vmatpush2.bf16.xpose.msra.mxu0 0
      %1397 = vmatprep.subr.bf16.mxu0 0
      %1398 = vmatpush2.bf16.xpose.msra.mxu0 0
      %1399 = vmatprep.subr.bf16.mxu0 0
      %1400 = vmatpush2.bf16.xpose.msra.mxu0 0
      %1401 = vmatprep.subr.bf16.mxu0 0
      %1402 = vmatpush2.bf16.xpose.msra.mxu0 0
      %1403 = vmatprep.mubr.bf16.mxu0 0
      %1404 = vmatmul.mubr.bf16.gmra.mxu0 %v1366
      %v1405 = vpop.f32.mrf.mxu0
      %v1406 = vadd.f32 0.0, %v1405
      %v1407 = vpop.f32.mrf.mxu0
      %v1408 = vpop.f32.mrf.mxu0
      %v1409 = vpop.f32.mrf.mxu0
      %1410 = vdwg.mxu0
      %v1411 = vmul.f32 %v1406, 0.35355338
      %v1412 = vsel %vm1058, %v1411, -inf
      %1413 = vmax.xlane.f32.xlu0 %v1412
      %v1414 = vpop.xlane.xlu0 %1413
      %v1415 = vsub.f32 %v1411, %v1414
      %v1416 = vmul.f32 %v1415, 1.442695
      %v1417 = vpow.pop %v1416
      %v1418 = vsel %vm1058, %v1417, 0.0
      %1419 = vadd.xlane.f32.xlu0 %v1418
      %v1420 = vpop.xlane.xlu0 %1419
      %v1421 = vrcp.pop %v1420
      %v1422 = vmul.f32 %v1417, %v1421
      %v1423 = vpack.c.bf16 %v1422, %v1422
      %v1424 = vpack.c.bf16 %v1358, %v1358
      %v1426 = vsel %vm1058, %v1423, 0
      %v1429 = vsel %vm1122, %v1424, 0
      %1431 = vmatprep.subr.bf16.mxu0 0
      %1432 = vmatpush1.bf16.msra.mxu0 0
      %1433 = vmatprep.subr.bf16.mxu0 0
      %1434 = vmatpush1.bf16.msra.mxu0 0
      %1435 = vmatprep.subr.bf16.mxu0 0
      %1436 = vmatpush1.bf16.msra.mxu0 0
      %1437 = vmatprep.subr.bf16.mxu0 0
      %1438 = vmatpush1.bf16.msra.mxu0 0
      %1439 = vmatprep.subr.bf16.mxu0 0
      %1440 = vmatpush1.bf16.msra.mxu0 0
      %1441 = vmatprep.subr.bf16.mxu0 0
      %1442 = vmatpush1.bf16.msra.mxu0 0
      %1443 = vmatprep.subr.bf16.mxu0 0
      %1444 = vmatpush1.bf16.msra.mxu0 0
      %1445 = vmatprep.subr.bf16.mxu0 0
      %1446 = vmatpush1.bf16.msra.mxu0 %v1429
      %1447 = vmatprep.subr.bf16.mxu0 0
      %1448 = vmatpush2.bf16.msra.mxu0 0
      %1449 = vmatprep.subr.bf16.mxu0 0
      %1450 = vmatpush2.bf16.msra.mxu0 0
      %1451 = vmatprep.subr.bf16.mxu0 0
      %1452 = vmatpush2.bf16.msra.mxu0 0
      %1453 = vmatprep.subr.bf16.mxu0 0
      %1454 = vmatpush2.bf16.msra.mxu0 0
      %1455 = vmatprep.subr.bf16.mxu0 0
      %1456 = vmatpush2.bf16.msra.mxu0 0
      %1457 = vmatprep.subr.bf16.mxu0 0
      %1458 = vmatpush2.bf16.msra.mxu0 0
      %1459 = vmatprep.subr.bf16.mxu0 0
      %1460 = vmatpush2.bf16.msra.mxu0 0
      %1461 = vmatprep.subr.bf16.mxu0 0
      %1462 = vmatpush2.bf16.msra.mxu0 0
      %1463 = vmatprep.mubr.bf16.mxu0 0
      %1464 = vmatmul.mubr.bf16.gmra.mxu0 %v1426
      %v1465 = vpop.f32.mrf.mxu0
      %v1466 = vadd.f32 0.0, %v1465
      %v1467 = vpop.f32.mrf.mxu0
      %v1468 = vpop.f32.mrf.mxu0
      %v1469 = vpop.f32.mrf.mxu0
      %1470 = vdwg.mxu0
      %v1471 = vpack.c.bf16 %v1466, %v1466
      %s1472 = scalar_lea.vmem %s8, 4
      %v1473 = vld [vmem:[%s1472] sm:$0xf]
      %v1475 = vsel %vm1058, %v1471, 0
      %v1478 = vsel %vm1122, %v1473, 0
      %1480 = vmatprep.subr.bf16.mxu0 0
      %1481 = vmatpush1.bf16.msra.mxu0 0
      %1482 = vmatprep.subr.bf16.mxu0 0
      %1483 = vmatpush1.bf16.msra.mxu0 0
      %1484 = vmatprep.subr.bf16.mxu0 0
      %1485 = vmatpush1.bf16.msra.mxu0 0
      %1486 = vmatprep.subr.bf16.mxu0 0
      %1487 = vmatpush1.bf16.msra.mxu0 0
      %1488 = vmatprep.subr.bf16.mxu0 0
      %1489 = vmatpush1.bf16.msra.mxu0 0
      %1490 = vmatprep.subr.bf16.mxu0 0
      %1491 = vmatpush1.bf16.msra.mxu0 0
      %1492 = vmatprep.subr.bf16.mxu0 0
      %1493 = vmatpush1.bf16.msra.mxu0 0
      %1494 = vmatprep.subr.bf16.mxu0 0
      %1495 = vmatpush1.bf16.msra.mxu0 %v1478
      %1496 = vmatprep.subr.bf16.mxu0 0
      %1497 = vmatpush2.bf16.msra.mxu0 0
      %1498 = vmatprep.subr.bf16.mxu0 0
      %1499 = vmatpush2.bf16.msra.mxu0 0
      %1500 = vmatprep.subr.bf16.mxu0 0
      %1501 = vmatpush2.bf16.msra.mxu0 0
      %1502 = vmatprep.subr.bf16.mxu0 0
      %1503 = vmatpush2.bf16.msra.mxu0 0
      %1504 = vmatprep.subr.bf16.mxu0 0
      %1505 = vmatpush2.bf16.msra.mxu0 0
      %1506 = vmatprep.subr.bf16.mxu0 0
      %1507 = vmatpush2.bf16.msra.mxu0 0
      %1508 = vmatprep.subr.bf16.mxu0 0
      %1509 = vmatpush2.bf16.msra.mxu0 0
      %1510 = vmatprep.subr.bf16.mxu0 0
      %1511 = vmatpush2.bf16.msra.mxu0 0
      %1512 = vmatprep.mubr.bf16.mxu0 0
      %1513 = vmatmul.mubr.bf16.gmra.mxu0 %v1475
      %v1514 = vpop.f32.mrf.mxu0
      %v1515 = vadd.f32 0.0, %v1514
      %v1516 = vpop.f32.mrf.mxu0
      %v1517 = vpop.f32.mrf.mxu0
      %v1518 = vpop.f32.mrf.mxu0
      %1519 = vdwg.mxu0
      %v1521 = vsel %vm1058, %v1166, 0
      %v1524 = vsel %vm1122, %v1167, 0
      %1526 = vmatprep.subr.bf16.mxu0 0
      %1527 = vmatpush1.bf16.msra.mxu0 0
      %1528 = vmatprep.subr.bf16.mxu0 0
      %1529 = vmatpush1.bf16.msra.mxu0 0
      %1530 = vmatprep.subr.bf16.mxu0 0
      %1531 = vmatpush1.bf16.msra.mxu0 0
      %1532 = vmatprep.subr.bf16.mxu0 0
      %1533 = vmatpush1.bf16.msra.mxu0 0
      %1534 = vmatprep.subr.bf16.mxu0 0
      %1535 = vmatpush1.bf16.msra.mxu0 0
      %1536 = vmatprep.subr.bf16.mxu0 0
      %1537 = vmatpush1.bf16.msra.mxu0 0
      %1538 = vmatprep.subr.bf16.mxu0 0
      %1539 = vmatpush1.bf16.msra.mxu0 0
      %1540 = vmatprep.subr.bf16.mxu0 0
      %1541 = vmatpush1.bf16.msra.mxu0 %v1524
      %1542 = vmatprep.subr.bf16.mxu0 0
      %1543 = vmatpush2.bf16.msra.mxu0 0
      %1544 = vmatprep.subr.bf16.mxu0 0
      %1545 = vmatpush2.bf16.msra.mxu0 0
      %1546 = vmatprep.subr.bf16.mxu0 0
      %1547 = vmatpush2.bf16.msra.mxu0 0
      %1548 = vmatprep.subr.bf16.mxu0 0
      %1549 = vmatpush2.bf16.msra.mxu0 0
      %1550 = vmatprep.subr.bf16.mxu0 0
      %1551 = vmatpush2.bf16.msra.mxu0 0
      %1552 = vmatprep.subr.bf16.mxu0 0
      %1553 = vmatpush2.bf16.msra.mxu0 0
      %1554 = vmatprep.subr.bf16.mxu0 0
      %1555 = vmatpush2.bf16.msra.mxu0 0
      %1556 = vmatprep.subr.bf16.mxu0 0
      %1557 = vmatpush2.bf16.msra.mxu0 0
      %1558 = vmatprep.mubr.bf16.mxu0 0
      %1559 = vmatmul.mubr.bf16.gmra.mxu0 %v1521
      %v1560 = vpop.f32.mrf.mxu0
      %v1561 = vadd.f32 %v1515, %v1560
      %v1562 = vpop.f32.mrf.mxu0
      %v1563 = vpop.f32.mrf.mxu0
      %v1564 = vpop.f32.mrf.mxu0
      %1565 = vdwg.mxu0
      %s1566 = scalar_lea.vmem %s2, 32
      %v1567 = vld [vmem:[%s1566] sm:$0xf]
      %v1568 = vld [vmem:[%s1566 + $0x4] sm:$0xf]
      %v1569 = vld [vmem:[%s1566 + $0x8] sm:$0xf]
      %v1570 = vld [vmem:[%s1566 + $0xc] sm:$0xf]
      %s1571 = scalar_lea.vmem %s3, 2
      %v1572 = vld [vmem:[%s1571] sm:$0x1]
      %v1574 = vlaneseq
      %v1575 = vshrl.u32 %v1574, 7
      %v1576 = vsub.s32 0, %v1575
      %v1577 = vrot.slane %v1572, %v1576
      %v1583 = vunpack.c.l.b16 %v1567
      %v1584 = vunpack.c.l.b16 %v1568
      %v1585 = vunpack.c.l.b16 %v1569
      %v1586 = vunpack.c.l.b16 %v1570
      %v1587 = vpack.c.b16 %v1584, %v1583
      %v1588 = vpack.c.b16 %v1586, %v1585
      %1591 = vmatprep.subr.bf16.mxu0 0
      %1592 = vmatpush1.bf16.msra.mxu0 0
      %1593 = vmatprep.subr.bf16.mxu0 0
      %1594 = vmatpush1.bf16.msra.mxu0 0
      %1595 = vmatprep.subr.bf16.mxu0 0
      %1596 = vmatpush1.bf16.msra.mxu0 0
      %1597 = vmatprep.subr.bf16.mxu0 0
      %1598 = vmatpush1.bf16.msra.mxu0 0
      %1599 = vmatprep.subr.bf16.mxu0 0
      %1600 = vmatpush1.bf16.msra.mxu0 0
      %1601 = vmatprep.subr.bf16.mxu0 0
      %1602 = vmatpush1.bf16.msra.mxu0 0
      %1603 = vmatprep.subr.bf16.mxu0 0
      %1604 = vmatpush1.bf16.msra.mxu0 %v1588
      %1605 = vmatprep.subr.bf16.mxu0 0
      %1606 = vmatpush1.bf16.msra.mxu0 %v1587
      %1607 = vmatprep.subr.bf16.mxu0 0
      %1608 = vmatpush2.bf16.msra.mxu0 0
      %1609 = vmatprep.subr.bf16.mxu0 0
      %1610 = vmatpush2.bf16.msra.mxu0 0
      %1611 = vmatprep.subr.bf16.mxu0 0
      %1612 = vmatpush2.bf16.msra.mxu0 0
      %1613 = vmatprep.subr.bf16.mxu0 0
      %1614 = vmatpush2.bf16.msra.mxu0 0
      %1615 = vmatprep.subr.bf16.mxu0 0
      %1616 = vmatpush2.bf16.msra.mxu0 0
      %1617 = vmatprep.subr.bf16.mxu0 0
      %1618 = vmatpush2.bf16.msra.mxu0 0
      %1619 = vmatprep.subr.bf16.mxu0 0
      %1620 = vmatpush2.bf16.msra.mxu0 0
      %1621 = vmatprep.subr.bf16.mxu0 0
      %1622 = vmatpush2.bf16.msra.mxu0 0
      %1623 = vmatprep.mubr.bf16.mxu0 0
      %1624 = vmatmul.mubr.bf16.gmra.mxu0 %v888
      %v1625 = vpop.f32.mrf.mxu0
      %v1626 = vadd.f32 %v1577, %v1625
      %v1627 = vpop.f32.mrf.mxu0
      %v1628 = vpop.f32.mrf.mxu0
      %v1629 = vpop.f32.mrf.mxu0
      %1630 = vdwg.mxu0
      %s1631 = scalar_lea.vmem %s4, 32
      %v1632 = vld [vmem:[%s1631] sm:$0xf]
      %v1633 = vld [vmem:[%s1631 + $0x4] sm:$0xf]
      %v1634 = vld [vmem:[%s1631 + $0x8] sm:$0xf]
      %v1635 = vld [vmem:[%s1631 + $0xc] sm:$0xf]
      %s1636 = scalar_lea.vmem %s5, 2
      %v1637 = vld [vmem:[%s1636] sm:$0x1]
      %v1639 = vlaneseq
      %v1640 = vshrl.u32 %v1639, 7
      %v1641 = vsub.s32 0, %v1640
      %v1642 = vrot.slane %v1637, %v1641
      %v1648 = vunpack.c.l.b16 %v1632
      %v1649 = vunpack.c.l.b16 %v1633
      %v1650 = vunpack.c.l.b16 %v1634
      %v1651 = vunpack.c.l.b16 %v1635
      %v1652 = vpack.c.b16 %v1649, %v1648
      %v1653 = vpack.c.b16 %v1651, %v1650
      %1656 = vmatprep.subr.bf16.mxu0 0
      %1657 = vmatpush1.bf16.msra.mxu0 0
      %1658 = vmatprep.subr.bf16.mxu0 0
      %1659 = vmatpush1.bf16.msra.mxu0 0
      %1660 = vmatprep.subr.bf16.mxu0 0
      %1661 = vmatpush1.bf16.msra.mxu0 0
      %1662 = vmatprep.subr.bf16.mxu0 0
      %1663 = vmatpush1.bf16.msra.mxu0 0
      %1664 = vmatprep.subr.bf16.mxu0 0
      %1665 = vmatpush1.bf16.msra.mxu0 0
      %1666 = vmatprep.subr.bf16.mxu0 0
      %1667 = vmatpush1.bf16.msra.mxu0 0
      %1668 = vmatprep.subr.bf16.mxu0 0
      %1669 = vmatpush1.bf16.msra.mxu0 %v1653
      %1670 = vmatprep.subr.bf16.mxu0 0
      %1671 = vmatpush1.bf16.msra.mxu0 %v1652
      %1672 = vmatprep.subr.bf16.mxu0 0
      %1673 = vmatpush2.bf16.msra.mxu0 0
      %1674 = vmatprep.subr.bf16.mxu0 0
      %1675 = vmatpush2.bf16.msra.mxu0 0
      %1676 = vmatprep.subr.bf16.mxu0 0
      %1677 = vmatpush2.bf16.msra.mxu0 0
      %1678 = vmatprep.subr.bf16.mxu0 0
      %1679 = vmatpush2.bf16.msra.mxu0 0
      %1680 = vmatprep.subr.bf16.mxu0 0
      %1681 = vmatpush2.bf16.msra.mxu0 0
      %1682 = vmatprep.subr.bf16.mxu0 0
      %1683 = vmatpush2.bf16.msra.mxu0 0
      %1684 = vmatprep.subr.bf16.mxu0 0
      %1685 = vmatpush2.bf16.msra.mxu0 0
      %1686 = vmatprep.subr.bf16.mxu0 0
      %1687 = vmatpush2.bf16.msra.mxu0 0
      %1688 = vmatprep.mubr.bf16.mxu0 0
      %1689 = vmatmul.mubr.bf16.gmra.mxu0 %v888
      %v1690 = vpop.f32.mrf.mxu0
      %v1691 = vadd.f32 %v1642, %v1690
      %v1692 = vpop.f32.mrf.mxu0
      %v1693 = vpop.f32.mrf.mxu0
      %v1694 = vpop.f32.mrf.mxu0
      %1695 = vdwg.mxu0
      %s1696 = scalar_lea.vmem %s6, 32
      %v1697 = vld [vmem:[%s1696] sm:$0xf]
      %v1698 = vld [vmem:[%s1696 + $0x4] sm:$0xf]
      %v1699 = vld [vmem:[%s1696 + $0x8] sm:$0xf]
      %v1700 = vld [vmem:[%s1696 + $0xc] sm:$0xf]
      %s1701 = scalar_lea.vmem %s7, 2
      %v1702 = vld [vmem:[%s1701] sm:$0x1]
      %v1704 = vlaneseq
      %v1705 = vshrl.u32 %v1704, 7
      %v1706 = vsub.s32 0, %v1705
      %v1707 = vrot.slane %v1702, %v1706
      %v1713 = vunpack.c.l.b16 %v1697
      %v1714 = vunpack.c.l.b16 %v1698
      %v1715 = vunpack.c.l.b16 %v1699
      %v1716 = vunpack.c.l.b16 %v1700
      %v1717 = vpack.c.b16 %v1714, %v1713
      %v1718 = vpack.c.b16 %v1716, %v1715
      %1721 = vmatprep.subr.bf16.mxu0 0
      %1722 = vmatpush1.bf16.msra.mxu0 0
      %1723 = vmatprep.subr.bf16.mxu0 0
      %1724 = vmatpush1.bf16.msra.mxu0 0
      %1725 = vmatprep.subr.bf16.mxu0 0
      %1726 = vmatpush1.bf16.msra.mxu0 0
      %1727 = vmatprep.subr.bf16.mxu0 0
      %1728 = vmatpush1.bf16.msra.mxu0 0
      %1729 = vmatprep.subr.bf16.mxu0 0
      %1730 = vmatpush1.bf16.msra.mxu0 0
      %1731 = vmatprep.subr.bf16.mxu0 0
      %1732 = vmatpush1.bf16.msra.mxu0 0
      %1733 = vmatprep.subr.bf16.mxu0 0
      %1734 = vmatpush1.bf16.msra.mxu0 %v1718
      %1735 = vmatprep.subr.bf16.mxu0 0
      %1736 = vmatpush1.bf16.msra.mxu0 %v1717
      %1737 = vmatprep.subr.bf16.mxu0 0
      %1738 = vmatpush2.bf16.msra.mxu0 0
      %1739 = vmatprep.subr.bf16.mxu0 0
      %1740 = vmatpush2.bf16.msra.mxu0 0
      %1741 = vmatprep.subr.bf16.mxu0 0
      %1742 = vmatpush2.bf16.msra.mxu0 0
      %1743 = vmatprep.subr.bf16.mxu0 0
      %1744 = vmatpush2.bf16.msra.mxu0 0
      %1745 = vmatprep.subr.bf16.mxu0 0
      %1746 = vmatpush2.bf16.msra.mxu0 0
      %1747 = vmatprep.subr.bf16.mxu0 0
      %1748 = vmatpush2.bf16.msra.mxu0 0
      %1749 = vmatprep.subr.bf16.mxu0 0
      %1750 = vmatpush2.bf16.msra.mxu0 0
      %1751 = vmatprep.subr.bf16.mxu0 0
      %1752 = vmatpush2.bf16.msra.mxu0 0
      %1753 = vmatprep.mubr.bf16.mxu0 0
      %1754 = vmatmul.mubr.bf16.gmra.mxu0 %v888
      %v1755 = vpop.f32.mrf.mxu0
      %v1756 = vadd.f32 %v1707, %v1755
      %v1757 = vpop.f32.mrf.mxu0
      %v1758 = vpop.f32.mrf.mxu0
      %v1759 = vpop.f32.mrf.mxu0
      %1760 = vdwg.mxu0
      %v1761 = vpack.c.bf16 %v1626, %v1626
      %v1762 = vpack.c.bf16 %v1691, %v1691
      %v1764 = vsel %vm1058, %v1761, 0
      %v1767 = vsel %vm1058, %v1762, 0
      %1769 = vmatprep.subr.bf16.mxu0 0
      %1770 = vmatpush1.bf16.xpose.msra.mxu0 0
      %1771 = vmatprep.subr.bf16.mxu0 0
      %1772 = vmatpush1.bf16.xpose.msra.mxu0 0
      %1773 = vmatprep.subr.bf16.mxu0 0
      %1774 = vmatpush1.bf16.xpose.msra.mxu0 0
      %1775 = vmatprep.subr.bf16.mxu0 0
      %1776 = vmatpush1.bf16.xpose.msra.mxu0 0
      %1777 = vmatprep.subr.bf16.mxu0 0
      %1778 = vmatpush1.bf16.xpose.msra.mxu0 0
      %1779 = vmatprep.subr.bf16.mxu0 0
      %1780 = vmatpush1.bf16.xpose.msra.mxu0 0
      %1781 = vmatprep.subr.bf16.mxu0 0
      %1782 = vmatpush1.bf16.xpose.msra.mxu0 0
      %1783 = vmatprep.subr.bf16.mxu0 0
      %1784 = vmatpush1.bf16.xpose.msra.mxu0 %v1767
      %1785 = vmatprep.subr.bf16.mxu0 0
      %1786 = vmatpush2.bf16.xpose.msra.mxu0 0
      %1787 = vmatprep.subr.bf16.mxu0 0
      %1788 = vmatpush2.bf16.xpose.msra.mxu0 0
      %1789 = vmatprep.subr.bf16.mxu0 0
      %1790 = vmatpush2.bf16.xpose.msra.mxu0 0
      %1791 = vmatprep.subr.bf16.mxu0 0
      %1792 = vmatpush2.bf16.xpose.msra.mxu0 0
      %1793 = vmatprep.subr.bf16.mxu0 0
      %1794 = vmatpush2.bf16.xpose.msra.mxu0 0
      %1795 = vmatprep.subr.bf16.mxu0 0
      %1796 = vmatpush2.bf16.xpose.msra.mxu0 0
      %1797 = vmatprep.subr.bf16.mxu0 0
      %1798 = vmatpush2.bf16.xpose.msra.mxu0 0
      %1799 = vmatprep.subr.bf16.mxu0 0
      %1800 = vmatpush2.bf16.xpose.msra.mxu0 0
      %1801 = vmatprep.mubr.bf16.mxu0 0
      %1802 = vmatmul.mubr.bf16.gmra.mxu0 %v1764
      %v1803 = vpop.f32.mrf.mxu0
      %v1804 = vadd.f32 0.0, %v1803
      %v1805 = vpop.f32.mrf.mxu0
      %v1806 = vpop.f32.mrf.mxu0
      %v1807 = vpop.f32.mrf.mxu0
      %1808 = vdwg.mxu0
      %v1809 = vmul.f32 %v1804, 0.35355338
      %v1810 = vsel %vm1058, %v1809, -inf
      %1811 = vmax.xlane.f32.xlu0 %v1810
      %v1812 = vpop.xlane.xlu0 %1811
      %v1813 = vsub.f32 %v1809, %v1812
      %v1814 = vmul.f32 %v1813, 1.442695
      %v1815 = vpow.pop %v1814
      %v1816 = vsel %vm1058, %v1815, 0.0
      %1817 = vadd.xlane.f32.xlu0 %v1816
      %v1818 = vpop.xlane.xlu0 %1817
      %v1819 = vrcp.pop %v1818
      %v1820 = vmul.f32 %v1815, %v1819
      %v1821 = vpack.c.bf16 %v1820, %v1820
      %v1822 = vpack.c.bf16 %v1756, %v1756
      %v1824 = vsel %vm1058, %v1821, 0
      %v1827 = vsel %vm1122, %v1822, 0
      %1829 = vmatprep.subr.bf16.mxu0 0
      %1830 = vmatpush1.bf16.msra.mxu0 0
      %1831 = vmatprep.subr.bf16.mxu0 0
      %1832 = vmatpush1.bf16.msra.mxu0 0
      %1833 = vmatprep.subr.bf16.mxu0 0
      %1834 = vmatpush1.bf16.msra.mxu0 0
      %1835 = vmatprep.subr.bf16.mxu0 0
      %1836 = vmatpush1.bf16.msra.mxu0 0
      %1837 = vmatprep.subr.bf16.mxu0 0
      %1838 = vmatpush1.bf16.msra.mxu0 0
      %1839 = vmatprep.subr.bf16.mxu0 0
      %1840 = vmatpush1.bf16.msra.mxu0 0
      %1841 = vmatprep.subr.bf16.mxu0 0
      %1842 = vmatpush1.bf16.msra.mxu0 0
      %1843 = vmatprep.subr.bf16.mxu0 0
      %1844 = vmatpush1.bf16.msra.mxu0 %v1827
      %1845 = vmatprep.subr.bf16.mxu0 0
      %1846 = vmatpush2.bf16.msra.mxu0 0
      %1847 = vmatprep.subr.bf16.mxu0 0
      %1848 = vmatpush2.bf16.msra.mxu0 0
      %1849 = vmatprep.subr.bf16.mxu0 0
      %1850 = vmatpush2.bf16.msra.mxu0 0
      %1851 = vmatprep.subr.bf16.mxu0 0
      %1852 = vmatpush2.bf16.msra.mxu0 0
      %1853 = vmatprep.subr.bf16.mxu0 0
      %1854 = vmatpush2.bf16.msra.mxu0 0
      %1855 = vmatprep.subr.bf16.mxu0 0
      %1856 = vmatpush2.bf16.msra.mxu0 0
      %1857 = vmatprep.subr.bf16.mxu0 0
      %1858 = vmatpush2.bf16.msra.mxu0 0
      %1859 = vmatprep.subr.bf16.mxu0 0
      %1860 = vmatpush2.bf16.msra.mxu0 0
      %1861 = vmatprep.mubr.bf16.mxu0 0
      %1862 = vmatmul.mubr.bf16.gmra.mxu0 %v1824
      %v1863 = vpop.f32.mrf.mxu0
      %v1864 = vadd.f32 0.0, %v1863
      %v1865 = vpop.f32.mrf.mxu0
      %v1866 = vpop.f32.mrf.mxu0
      %v1867 = vpop.f32.mrf.mxu0
      %1868 = vdwg.mxu0
      %v1869 = vpack.c.bf16 %v1864, %v1864
      %s1870 = scalar_lea.vmem %s8, 8
      %v1871 = vld [vmem:[%s1870] sm:$0xf]
      %v1873 = vsel %vm1058, %v1869, 0
      %v1876 = vsel %vm1122, %v1871, 0
      %1878 = vmatprep.subr.bf16.mxu0 0
      %1879 = vmatpush1.bf16.msra.mxu0 0
      %1880 = vmatprep.subr.bf16.mxu0 0
      %1881 = vmatpush1.bf16.msra.mxu0 0
      %1882 = vmatprep.subr.bf16.mxu0 0
      %1883 = vmatpush1.bf16.msra.mxu0 0
      %1884 = vmatprep.subr.bf16.mxu0 0
      %1885 = vmatpush1.bf16.msra.mxu0 0
      %1886 = vmatprep.subr.bf16.mxu0 0
      %1887 = vmatpush1.bf16.msra.mxu0 0
      %1888 = vmatprep.subr.bf16.mxu0 0
      %1889 = vmatpush1.bf16.msra.mxu0 0
      %1890 = vmatprep.subr.bf16.mxu0 0
      %1891 = vmatpush1.bf16.msra.mxu0 0
      %1892 = vmatprep.subr.bf16.mxu0 0
      %1893 = vmatpush1.bf16.msra.mxu0 %v1876
      %1894 = vmatprep.subr.bf16.mxu0 0
      %1895 = vmatpush2.bf16.msra.mxu0 0
      %1896 = vmatprep.subr.bf16.mxu0 0
      %1897 = vmatpush2.bf16.msra.mxu0 0
      %1898 = vmatprep.subr.bf16.mxu0 0
      %1899 = vmatpush2.bf16.msra.mxu0 0
      %1900 = vmatprep.subr.bf16.mxu0 0
      %1901 = vmatpush2.bf16.msra.mxu0 0
      %1902 = vmatprep.subr.bf16.mxu0 0
      %1903 = vmatpush2.bf16.msra.mxu0 0
      %1904 = vmatprep.subr.bf16.mxu0 0
      %1905 = vmatpush2.bf16.msra.mxu0 0
      %1906 = vmatprep.subr.bf16.mxu0 0
      %1907 = vmatpush2.bf16.msra.mxu0 0
      %1908 = vmatprep.subr.bf16.mxu0 0
      %1909 = vmatpush2.bf16.msra.mxu0 0
      %1910 = vmatprep.mubr.bf16.mxu0 0
      %1911 = vmatmul.mubr.bf16.gmra.mxu0 %v1873
      %v1912 = vpop.f32.mrf.mxu0
      %v1913 = vadd.f32 0.0, %v1912
      %v1914 = vpop.f32.mrf.mxu0
      %v1915 = vpop.f32.mrf.mxu0
      %v1916 = vpop.f32.mrf.mxu0
      %1917 = vdwg.mxu0
      %v1918 = vadd.f32 %v1561, %v1913
      %s1919 = scalar_lea.vmem %s2, 48
      %v1920 = vld [vmem:[%s1919] sm:$0xf]
      %v1921 = vld [vmem:[%s1919 + $0x4] sm:$0xf]
      %v1922 = vld [vmem:[%s1919 + $0x8] sm:$0xf]
      %v1923 = vld [vmem:[%s1919 + $0xc] sm:$0xf]
      %s1924 = scalar_lea.vmem %s3, 3
      %v1925 = vld [vmem:[%s1924] sm:$0x1]
      %v1927 = vlaneseq
      %v1928 = vshrl.u32 %v1927, 7
      %v1929 = vsub.s32 0, %v1928
      %v1930 = vrot.slane %v1925, %v1929
      %v1936 = vunpack.c.l.b16 %v1920
      %v1937 = vunpack.c.l.b16 %v1921
      %v1938 = vunpack.c.l.b16 %v1922
      %v1939 = vunpack.c.l.b16 %v1923
      %v1940 = vpack.c.b16 %v1937, %v1936
      %v1941 = vpack.c.b16 %v1939, %v1938
      %1944 = vmatprep.subr.bf16.mxu0 0
      %1945 = vmatpush1.bf16.msra.mxu0 0
      %1946 = vmatprep.subr.bf16.mxu0 0
      %1947 = vmatpush1.bf16.msra.mxu0 0
      %1948 = vmatprep.subr.bf16.mxu0 0
      %1949 = vmatpush1.bf16.msra.mxu0 0
      %1950 = vmatprep.subr.bf16.mxu0 0
      %1951 = vmatpush1.bf16.msra.mxu0 0
      %1952 = vmatprep.subr.bf16.mxu0 0
      %1953 = vmatpush1.bf16.msra.mxu0 0
      %1954 = vmatprep.subr.bf16.mxu0 0
      %1955 = vmatpush1.bf16.msra.mxu0 0
      %1956 = vmatprep.subr.bf16.mxu0 0
      %1957 = vmatpush1.bf16.msra.mxu0 %v1941
      %1958 = vmatprep.subr.bf16.mxu0 0
      %1959 = vmatpush1.bf16.msra.mxu0 %v1940
      %1960 = vmatprep.subr.bf16.mxu0 0
      %1961 = vmatpush2.bf16.msra.mxu0 0
      %1962 = vmatprep.subr.bf16.mxu0 0
      %1963 = vmatpush2.bf16.msra.mxu0 0
      %1964 = vmatprep.subr.bf16.mxu0 0
      %1965 = vmatpush2.bf16.msra.mxu0 0
      %1966 = vmatprep.subr.bf16.mxu0 0
      %1967 = vmatpush2.bf16.msra.mxu0 0
      %1968 = vmatprep.subr.bf16.mxu0 0
      %1969 = vmatpush2.bf16.msra.mxu0 0
      %1970 = vmatprep.subr.bf16.mxu0 0
      %1971 = vmatpush2.bf16.msra.mxu0 0
      %1972 = vmatprep.subr.bf16.mxu0 0
      %1973 = vmatpush2.bf16.msra.mxu0 0
      %1974 = vmatprep.subr.bf16.mxu0 0
      %1975 = vmatpush2.bf16.msra.mxu0 0
      %1976 = vmatprep.mubr.bf16.mxu0 0
      %1977 = vmatmul.mubr.bf16.gmra.mxu0 %v888
      %v1978 = vpop.f32.mrf.mxu0
      %v1979 = vadd.f32 %v1930, %v1978
      %v1980 = vpop.f32.mrf.mxu0
      %v1981 = vpop.f32.mrf.mxu0
      %v1982 = vpop.f32.mrf.mxu0
      %1983 = vdwg.mxu0
      %s1984 = scalar_lea.vmem %s4, 48
      %v1985 = vld [vmem:[%s1984] sm:$0xf]
      %v1986 = vld [vmem:[%s1984 + $0x4] sm:$0xf]
      %v1987 = vld [vmem:[%s1984 + $0x8] sm:$0xf]
      %v1988 = vld [vmem:[%s1984 + $0xc] sm:$0xf]
      %s1989 = scalar_lea.vmem %s5, 3
      %v1990 = vld [vmem:[%s1989] sm:$0x1]
      %v1992 = vlaneseq
      %v1993 = vshrl.u32 %v1992, 7
      %v1994 = vsub.s32 0, %v1993
      %v1995 = vrot.slane %v1990, %v1994
      %v2001 = vunpack.c.l.b16 %v1985
      %v2002 = vunpack.c.l.b16 %v1986
      %v2003 = vunpack.c.l.b16 %v1987
      %v2004 = vunpack.c.l.b16 %v1988
      %v2005 = vpack.c.b16 %v2002, %v2001
      %v2006 = vpack.c.b16 %v2004, %v2003
      %2009 = vmatprep.subr.bf16.mxu0 0
      %2010 = vmatpush1.bf16.msra.mxu0 0
      %2011 = vmatprep.subr.bf16.mxu0 0
      %2012 = vmatpush1.bf16.msra.mxu0 0
      %2013 = vmatprep.subr.bf16.mxu0 0
      %2014 = vmatpush1.bf16.msra.mxu0 0
      %2015 = vmatprep.subr.bf16.mxu0 0
      %2016 = vmatpush1.bf16.msra.mxu0 0
      %2017 = vmatprep.subr.bf16.mxu0 0
      %2018 = vmatpush1.bf16.msra.mxu0 0
      %2019 = vmatprep.subr.bf16.mxu0 0
      %2020 = vmatpush1.bf16.msra.mxu0 0
      %2021 = vmatprep.subr.bf16.mxu0 0
      %2022 = vmatpush1.bf16.msra.mxu0 %v2006
      %2023 = vmatprep.subr.bf16.mxu0 0
      %2024 = vmatpush1.bf16.msra.mxu0 %v2005
      %2025 = vmatprep.subr.bf16.mxu0 0
      %2026 = vmatpush2.bf16.msra.mxu0 0
      %2027 = vmatprep.subr.bf16.mxu0 0
      %2028 = vmatpush2.bf16.msra.mxu0 0
      %2029 = vmatprep.subr.bf16.mxu0 0
      %2030 = vmatpush2.bf16.msra.mxu0 0
      %2031 = vmatprep.subr.bf16.mxu0 0
      %2032 = vmatpush2.bf16.msra.mxu0 0
      %2033 = vmatprep.subr.bf16.mxu0 0
      %2034 = vmatpush2.bf16.msra.mxu0 0
      %2035 = vmatprep.subr.bf16.mxu0 0
      %2036 = vmatpush2.bf16.msra.mxu0 0
      %2037 = vmatprep.subr.bf16.mxu0 0
      %2038 = vmatpush2.bf16.msra.mxu0 0
      %2039 = vmatprep.subr.bf16.mxu0 0
      %2040 = vmatpush2.bf16.msra.mxu0 0
      %2041 = vmatprep.mubr.bf16.mxu0 0
      %2042 = vmatmul.mubr.bf16.gmra.mxu0 %v888
      %v2043 = vpop.f32.mrf.mxu0
      %v2044 = vadd.f32 %v1995, %v2043
      %v2045 = vpop.f32.mrf.mxu0
      %v2046 = vpop.f32.mrf.mxu0
      %v2047 = vpop.f32.mrf.mxu0
      %2048 = vdwg.mxu0
      %s2049 = scalar_lea.vmem %s6, 48
      %v2050 = vld [vmem:[%s2049] sm:$0xf]
      %v2051 = vld [vmem:[%s2049 + $0x4] sm:$0xf]
      %v2052 = vld [vmem:[%s2049 + $0x8] sm:$0xf]
      %v2053 = vld [vmem:[%s2049 + $0xc] sm:$0xf]
      %s2054 = scalar_lea.vmem %s7, 3
      %v2055 = vld [vmem:[%s2054] sm:$0x1]
      %v2057 = vlaneseq
      %v2058 = vshrl.u32 %v2057, 7
      %v2059 = vsub.s32 0, %v2058
      %v2060 = vrot.slane %v2055, %v2059
      %v2066 = vunpack.c.l.b16 %v2050
      %v2067 = vunpack.c.l.b16 %v2051
      %v2068 = vunpack.c.l.b16 %v2052
      %v2069 = vunpack.c.l.b16 %v2053
      %v2070 = vpack.c.b16 %v2067, %v2066
      %v2071 = vpack.c.b16 %v2069, %v2068
      %2074 = vmatprep.subr.bf16.mxu0 0
      %2075 = vmatpush1.bf16.msra.mxu0 0
      %2076 = vmatprep.subr.bf16.mxu0 0
      %2077 = vmatpush1.bf16.msra.mxu0 0
      %2078 = vmatprep.subr.bf16.mxu0 0
      %2079 = vmatpush1.bf16.msra.mxu0 0
      %2080 = vmatprep.subr.bf16.mxu0 0
      %2081 = vmatpush1.bf16.msra.mxu0 0
      %2082 = vmatprep.subr.bf16.mxu0 0
      %2083 = vmatpush1.bf16.msra.mxu0 0
      %2084 = vmatprep.subr.bf16.mxu0 0
      %2085 = vmatpush1.bf16.msra.mxu0 0
      %2086 = vmatprep.subr.bf16.mxu0 0
      %2087 = vmatpush1.bf16.msra.mxu0 %v2071
      %2088 = vmatprep.subr.bf16.mxu0 0
      %2089 = vmatpush1.bf16.msra.mxu0 %v2070
      %2090 = vmatprep.subr.bf16.mxu0 0
      %2091 = vmatpush2.bf16.msra.mxu0 0
      %2092 = vmatprep.subr.bf16.mxu0 0
      %2093 = vmatpush2.bf16.msra.mxu0 0
      %2094 = vmatprep.subr.bf16.mxu0 0
      %2095 = vmatpush2.bf16.msra.mxu0 0
      %2096 = vmatprep.subr.bf16.mxu0 0
      %2097 = vmatpush2.bf16.msra.mxu0 0
      %2098 = vmatprep.subr.bf16.mxu0 0
      %2099 = vmatpush2.bf16.msra.mxu0 0
      %2100 = vmatprep.subr.bf16.mxu0 0
      %2101 = vmatpush2.bf16.msra.mxu0 0
      %2102 = vmatprep.subr.bf16.mxu0 0
      %2103 = vmatpush2.bf16.msra.mxu0 0
      %2104 = vmatprep.subr.bf16.mxu0 0
      %2105 = vmatpush2.bf16.msra.mxu0 0
      %2106 = vmatprep.mubr.bf16.mxu0 0
      %2107 = vmatmul.mubr.bf16.gmra.mxu0 %v888
      %v2108 = vpop.f32.mrf.mxu0
      %v2109 = vadd.f32 %v2060, %v2108
      %v2110 = vpop.f32.mrf.mxu0
      %v2111 = vpop.f32.mrf.mxu0
      %v2112 = vpop.f32.mrf.mxu0
      %2113 = vdwg.mxu0
      %v2114 = vpack.c.bf16 %v1979, %v1979
      %v2115 = vpack.c.bf16 %v2044, %v2044
      %v2117 = vsel %vm1058, %v2114, 0
      %v2120 = vsel %vm1058, %v2115, 0
      %2122 = vmatprep.subr.bf16.mxu0 0
      %2123 = vmatpush1.bf16.xpose.msra.mxu0 0
      %2124 = vmatprep.subr.bf16.mxu0 0
      %2125 = vmatpush1.bf16.xpose.msra.mxu0 0
      %2126 = vmatprep.subr.bf16.mxu0 0
      %2127 = vmatpush1.bf16.xpose.msra.mxu0 0
      %2128 = vmatprep.subr.bf16.mxu0 0
      %2129 = vmatpush1.bf16.xpose.msra.mxu0 0
      %2130 = vmatprep.subr.bf16.mxu0 0
      %2131 = vmatpush1.bf16.xpose.msra.mxu0 0
      %2132 = vmatprep.subr.bf16.mxu0 0
      %2133 = vmatpush1.bf16.xpose.msra.mxu0 0
      %2134 = vmatprep.subr.bf16.mxu0 0
      %2135 = vmatpush1.bf16.xpose.msra.mxu0 0
      %2136 = vmatprep.subr.bf16.mxu0 0
      %2137 = vmatpush1.bf16.xpose.msra.mxu0 %v2120
      %2138 = vmatprep.subr.bf16.mxu0 0
      %2139 = vmatpush2.bf16.xpose.msra.mxu0 0
      %2140 = vmatprep.subr.bf16.mxu0 0
      %2141 = vmatpush2.bf16.xpose.msra.mxu0 0
      %2142 = vmatprep.subr.bf16.mxu0 0
      %2143 = vmatpush2.bf16.xpose.msra.mxu0 0
      %2144 = vmatprep.subr.bf16.mxu0 0
      %2145 = vmatpush2.bf16.xpose.msra.mxu0 0
      %2146 = vmatprep.subr.bf16.mxu0 0
      %2147 = vmatpush2.bf16.xpose.msra.mxu0 0
      %2148 = vmatprep.subr.bf16.mxu0 0
      %2149 = vmatpush2.bf16.xpose.msra.mxu0 0
      %2150 = vmatprep.subr.bf16.mxu0 0
      %2151 = vmatpush2.bf16.xpose.msra.mxu0 0
      %2152 = vmatprep.subr.bf16.mxu0 0
      %2153 = vmatpush2.bf16.xpose.msra.mxu0 0
      %2154 = vmatprep.mubr.bf16.mxu0 0
      %2155 = vmatmul.mubr.bf16.gmra.mxu0 %v2117
      %v2156 = vpop.f32.mrf.mxu0
      %v2157 = vadd.f32 0.0, %v2156
      %v2158 = vpop.f32.mrf.mxu0
      %v2159 = vpop.f32.mrf.mxu0
      %v2160 = vpop.f32.mrf.mxu0
      %2161 = vdwg.mxu0
      %v2162 = vmul.f32 %v2157, 0.35355338
      %v2163 = vsel %vm1058, %v2162, -inf
      %2164 = vmax.xlane.f32.xlu0 %v2163
      %v2165 = vpop.xlane.xlu0 %2164
      %v2166 = vsub.f32 %v2162, %v2165
      %v2167 = vmul.f32 %v2166, 1.442695
      %v2168 = vpow.pop %v2167
      %v2169 = vsel %vm1058, %v2168, 0.0
      %2170 = vadd.xlane.f32.xlu0 %v2169
      %v2171 = vpop.xlane.xlu0 %2170
      %v2172 = vrcp.pop %v2171
      %v2173 = vmul.f32 %v2168, %v2172
      %v2174 = vpack.c.bf16 %v2173, %v2173
      %v2175 = vpack.c.bf16 %v2109, %v2109
      %v2177 = vsel %vm1058, %v2174, 0
      %v2180 = vsel %vm1122, %v2175, 0
      %2182 = vmatprep.subr.bf16.mxu0 0
      %2183 = vmatpush1.bf16.msra.mxu0 0
      %2184 = vmatprep.subr.bf16.mxu0 0
      %2185 = vmatpush1.bf16.msra.mxu0 0
      %2186 = vmatprep.subr.bf16.mxu0 0
      %2187 = vmatpush1.bf16.msra.mxu0 0
      %2188 = vmatprep.subr.bf16.mxu0 0
      %2189 = vmatpush1.bf16.msra.mxu0 0
      %2190 = vmatprep.subr.bf16.mxu0 0
      %2191 = vmatpush1.bf16.msra.mxu0 0
      %2192 = vmatprep.subr.bf16.mxu0 0
      %2193 = vmatpush1.bf16.msra.mxu0 0
      %2194 = vmatprep.subr.bf16.mxu0 0
      %2195 = vmatpush1.bf16.msra.mxu0 0
      %2196 = vmatprep.subr.bf16.mxu0 0
      %2197 = vmatpush1.bf16.msra.mxu0 %v2180
      %2198 = vmatprep.subr.bf16.mxu0 0
      %2199 = vmatpush2.bf16.msra.mxu0 0
      %2200 = vmatprep.subr.bf16.mxu0 0
      %2201 = vmatpush2.bf16.msra.mxu0 0
      %2202 = vmatprep.subr.bf16.mxu0 0
      %2203 = vmatpush2.bf16.msra.mxu0 0
      %2204 = vmatprep.subr.bf16.mxu0 0
      %2205 = vmatpush2.bf16.msra.mxu0 0
      %2206 = vmatprep.subr.bf16.mxu0 0
      %2207 = vmatpush2.bf16.msra.mxu0 0
      %2208 = vmatprep.subr.bf16.mxu0 0
      %2209 = vmatpush2.bf16.msra.mxu0 0
      %2210 = vmatprep.subr.bf16.mxu0 0
      %2211 = vmatpush2.bf16.msra.mxu0 0
      %2212 = vmatprep.subr.bf16.mxu0 0
      %2213 = vmatpush2.bf16.msra.mxu0 0
      %2214 = vmatprep.mubr.bf16.mxu0 0
      %2215 = vmatmul.mubr.bf16.gmra.mxu0 %v2177
      %v2216 = vpop.f32.mrf.mxu0
      %v2217 = vadd.f32 0.0, %v2216
      %v2218 = vpop.f32.mrf.mxu0
      %v2219 = vpop.f32.mrf.mxu0
      %v2220 = vpop.f32.mrf.mxu0
      %2221 = vdwg.mxu0
      %v2222 = vpack.c.bf16 %v2217, %v2217
      %s2223 = scalar_lea.vmem %s8, 12
      %v2224 = vld [vmem:[%s2223] sm:$0xf]
      %v2226 = vsel %vm1058, %v2222, 0
      %v2229 = vsel %vm1122, %v2224, 0
      %2231 = vmatprep.subr.bf16.mxu0 0
      %2232 = vmatpush1.bf16.msra.mxu0 0
      %2233 = vmatprep.subr.bf16.mxu0 0
      %2234 = vmatpush1.bf16.msra.mxu0 0
      %2235 = vmatprep.subr.bf16.mxu0 0
      %2236 = vmatpush1.bf16.msra.mxu0 0
      %2237 = vmatprep.subr.bf16.mxu0 0
      %2238 = vmatpush1.bf16.msra.mxu0 0
      %2239 = vmatprep.subr.bf16.mxu0 0
      %2240 = vmatpush1.bf16.msra.mxu0 0
      %2241 = vmatprep.subr.bf16.mxu0 0
      %2242 = vmatpush1.bf16.msra.mxu0 0
      %2243 = vmatprep.subr.bf16.mxu0 0
      %2244 = vmatpush1.bf16.msra.mxu0 0
      %2245 = vmatprep.subr.bf16.mxu0 0
      %2246 = vmatpush1.bf16.msra.mxu0 %v2229
      %2247 = vmatprep.subr.bf16.mxu0 0
      %2248 = vmatpush2.bf16.msra.mxu0 0
      %2249 = vmatprep.subr.bf16.mxu0 0
      %2250 = vmatpush2.bf16.msra.mxu0 0
      %2251 = vmatprep.subr.bf16.mxu0 0
      %2252 = vmatpush2.bf16.msra.mxu0 0
      %2253 = vmatprep.subr.bf16.mxu0 0
      %2254 = vmatpush2.bf16.msra.mxu0 0
      %2255 = vmatprep.subr.bf16.mxu0 0
      %2256 = vmatpush2.bf16.msra.mxu0 0
      %2257 = vmatprep.subr.bf16.mxu0 0
      %2258 = vmatpush2.bf16.msra.mxu0 0
      %2259 = vmatprep.subr.bf16.mxu0 0
      %2260 = vmatpush2.bf16.msra.mxu0 0
      %2261 = vmatprep.subr.bf16.mxu0 0
      %2262 = vmatpush2.bf16.msra.mxu0 0
      %2263 = vmatprep.mubr.bf16.mxu0 0
      %2264 = vmatmul.mubr.bf16.gmra.mxu0 %v2226
      %v2265 = vpop.f32.mrf.mxu0
      %v2266 = vadd.f32 0.0, %v2265
      %v2267 = vpop.f32.mrf.mxu0
      %v2268 = vpop.f32.mrf.mxu0
      %v2269 = vpop.f32.mrf.mxu0
      %2270 = vdwg.mxu0
      %v2271 = vadd.f32 %v1918, %v2266
      %v2272 = vld [vmem:[%s9] sm:$0x1]
      %v2274 = vlaneseq
      %v2275 = vshrl.u32 %v2274, 7
      %v2276 = vsub.s32 0, %v2275
      %v2277 = vrot.slane %v2272, %v2276
      %v2279 = vadd.f32 %v2271, %v2277
      %v2280 = vadd.f32 %v859, %v2279
      %v2281 = vsel %vm886, %v2280, 0.0
      %2282 = vadd.xlane.f32.xlu0 %v2281
      %v2283 = vpop.xlane.xlu0 %2282
      %v2284 = vrcp.pop 32.0
      %v2285 = vmul.f32 %v2283, %v2284
      %v2286 = vsub.f32 %v2280, %v2285
      %v2287 = vmul.f32 %v2286, %v2286
      %v2288 = vsel %vm886, %v2287, 0.0
      %2289 = vadd.xlane.f32.xlu0 %v2288
      %v2290 = vpop.xlane.xlu0 %2289
      %v2291 = vmul.f32 %v2290, %v2284
      %v2292 = vadd.f32 %v2291, 1e-05
      %v2293 = vrsqrt.pop %v2292
      %v2294 = vmul.f32 %v2286, %v2293
      %v2295 = vld [vmem:[%s18] sm:$0x1]
      %v2297 = vlaneseq
      %v2298 = vshrl.u32 %v2297, 7
      %v2299 = vsub.s32 0, %v2298
      %v2300 = vrot.slane %v2295, %v2299
      %v2302 = vmul.f32 %v2294, %v2300
      %v2303 = vld [vmem:[%s19] sm:$0x1]
      %v2305 = vlaneseq
      %v2306 = vshrl.u32 %v2305, 7
      %v2307 = vsub.s32 0, %v2306
      %v2308 = vrot.slane %v2303, %v2307
      %v2310 = vadd.f32 %v2302, %v2308
      %v2311 = vpack.c.bf16 %v2310, %v2310
      %v2312 = vld [vmem:[%s10] sm:$0xf]
      %v2313 = vld [vmem:[%s10 + $0x4] sm:$0xf]
      %v2314 = vld [vmem:[%s10 + $0x8] sm:$0xf]
      %v2315 = vld [vmem:[%s10 + $0xc] sm:$0xf]
      %v2316 = vld [vmem:[%s11] sm:$0x1]
      %v2318 = vlaneseq
      %v2319 = vshrl.u32 %v2318, 7
      %v2320 = vsub.s32 0, %v2319
      %v2321 = vrot.slane %v2316, %v2320
      %v2327 = vunpack.c.l.b16 %v2312
      %v2328 = vunpack.c.l.b16 %v2313
      %v2329 = vunpack.c.l.b16 %v2314
      %v2330 = vunpack.c.l.b16 %v2315
      %v2331 = vpack.c.b16 %v2328, %v2327
      %v2332 = vpack.c.b16 %v2330, %v2329
      %v2336 = vsel %vm886, %v2311, 0
      %2338 = vmatprep.subr.bf16.mxu0 0
      %2339 = vmatpush1.bf16.msra.mxu0 0
      %2340 = vmatprep.subr.bf16.mxu0 0
      %2341 = vmatpush1.bf16.msra.mxu0 0
      %2342 = vmatprep.subr.bf16.mxu0 0
      %2343 = vmatpush1.bf16.msra.mxu0 0
      %2344 = vmatprep.subr.bf16.mxu0 0
      %2345 = vmatpush1.bf16.msra.mxu0 0
      %2346 = vmatprep.subr.bf16.mxu0 0
      %2347 = vmatpush1.bf16.msra.mxu0 0
      %2348 = vmatprep.subr.bf16.mxu0 0
      %2349 = vmatpush1.bf16.msra.mxu0 0
      %2350 = vmatprep.subr.bf16.mxu0 0
      %2351 = vmatpush1.bf16.msra.mxu0 %v2332
      %2352 = vmatprep.subr.bf16.mxu0 0
      %2353 = vmatpush1.bf16.msra.mxu0 %v2331
      %2354 = vmatprep.subr.bf16.mxu0 0
      %2355 = vmatpush2.bf16.msra.mxu0 0
      %2356 = vmatprep.subr.bf16.mxu0 0
      %2357 = vmatpush2.bf16.msra.mxu0 0
      %2358 = vmatprep.subr.bf16.mxu0 0
      %2359 = vmatpush2.bf16.msra.mxu0 0
      %2360 = vmatprep.subr.bf16.mxu0 0
      %2361 = vmatpush2.bf16.msra.mxu0 0
      %2362 = vmatprep.subr.bf16.mxu0 0
      %2363 = vmatpush2.bf16.msra.mxu0 0
      %2364 = vmatprep.subr.bf16.mxu0 0
      %2365 = vmatpush2.bf16.msra.mxu0 0
      %2366 = vmatprep.subr.bf16.mxu0 0
      %2367 = vmatpush2.bf16.msra.mxu0 0
      %2368 = vmatprep.subr.bf16.mxu0 0
      %2369 = vmatpush2.bf16.msra.mxu0 0
      %2370 = vmatprep.mubr.bf16.mxu0 0
      %2371 = vmatmul.mubr.bf16.gmra.mxu0 %v2336
      %v2372 = vpop.f32.mrf.mxu0
      %v2373 = vadd.f32 %v2321, %v2372
      %v2374 = vpop.f32.mrf.mxu0
      %v2375 = vpop.f32.mrf.mxu0
      %v2376 = vpop.f32.mrf.mxu0
      %2377 = vdwg.mxu0
      %v2378 = vld [vmem:[%s12] sm:$0xf]
      %v2379 = vld [vmem:[%s12 + $0x4] sm:$0xf]
      %v2380 = vld [vmem:[%s12 + $0x8] sm:$0xf]
      %v2381 = vld [vmem:[%s12 + $0xc] sm:$0xf]
      %v2382 = vld [vmem:[%s13] sm:$0x1]
      %v2384 = vlaneseq
      %v2385 = vshrl.u32 %v2384, 7
      %v2386 = vsub.s32 0, %v2385
      %v2387 = vrot.slane %v2382, %v2386
      %v2393 = vunpack.c.l.b16 %v2378
      %v2394 = vunpack.c.l.b16 %v2379
      %v2395 = vunpack.c.l.b16 %v2380
      %v2396 = vunpack.c.l.b16 %v2381
      %v2397 = vpack.c.b16 %v2394, %v2393
      %v2398 = vpack.c.b16 %v2396, %v2395
      %v2402 = vsel %vm886, %v862, 0
      %2404 = vmatprep.subr.bf16.mxu0 0
      %2405 = vmatpush1.bf16.msra.mxu0 0
      %2406 = vmatprep.subr.bf16.mxu0 0
      %2407 = vmatpush1.bf16.msra.mxu0 0
      %2408 = vmatprep.subr.bf16.mxu0 0
      %2409 = vmatpush1.bf16.msra.mxu0 0
      %2410 = vmatprep.subr.bf16.mxu0 0
      %2411 = vmatpush1.bf16.msra.mxu0 0
      %2412 = vmatprep.subr.bf16.mxu0 0
      %2413 = vmatpush1.bf16.msra.mxu0 0
      %2414 = vmatprep.subr.bf16.mxu0 0
      %2415 = vmatpush1.bf16.msra.mxu0 0
      %2416 = vmatprep.subr.bf16.mxu0 0
      %2417 = vmatpush1.bf16.msra.mxu0 %v2398
      %2418 = vmatprep.subr.bf16.mxu0 0
      %2419 = vmatpush1.bf16.msra.mxu0 %v2397
      %2420 = vmatprep.subr.bf16.mxu0 0
      %2421 = vmatpush2.bf16.msra.mxu0 0
      %2422 = vmatprep.subr.bf16.mxu0 0
      %2423 = vmatpush2.bf16.msra.mxu0 0
      %2424 = vmatprep.subr.bf16.mxu0 0
      %2425 = vmatpush2.bf16.msra.mxu0 0
      %2426 = vmatprep.subr.bf16.mxu0 0
      %2427 = vmatpush2.bf16.msra.mxu0 0
      %2428 = vmatprep.subr.bf16.mxu0 0
      %2429 = vmatpush2.bf16.msra.mxu0 0
      %2430 = vmatprep.subr.bf16.mxu0 0
      %2431 = vmatpush2.bf16.msra.mxu0 0
      %2432 = vmatprep.subr.bf16.mxu0 0
      %2433 = vmatpush2.bf16.msra.mxu0 0
      %2434 = vmatprep.subr.bf16.mxu0 0
      %2435 = vmatpush2.bf16.msra.mxu0 0
      %2436 = vmatprep.mubr.bf16.mxu0 0
      %2437 = vmatmul.mubr.bf16.gmra.mxu0 %v2402
      %v2438 = vpop.f32.mrf.mxu0
      %v2439 = vadd.f32 %v2387, %v2438
      %v2440 = vpop.f32.mrf.mxu0
      %v2441 = vpop.f32.mrf.mxu0
      %v2442 = vpop.f32.mrf.mxu0
      %2443 = vdwg.mxu0
      %v2444 = vld [vmem:[%s14] sm:$0xf]
      %v2445 = vld [vmem:[%s14 + $0x4] sm:$0xf]
      %v2446 = vld [vmem:[%s14 + $0x8] sm:$0xf]
      %v2447 = vld [vmem:[%s14 + $0xc] sm:$0xf]
      %v2448 = vld [vmem:[%s15] sm:$0x1]
      %v2450 = vlaneseq
      %v2451 = vshrl.u32 %v2450, 7
      %v2452 = vsub.s32 0, %v2451
      %v2453 = vrot.slane %v2448, %v2452
      %v2459 = vunpack.c.l.b16 %v2444
      %v2460 = vunpack.c.l.b16 %v2445
      %v2461 = vunpack.c.l.b16 %v2446
      %v2462 = vunpack.c.l.b16 %v2447
      %v2463 = vpack.c.b16 %v2460, %v2459
      %v2464 = vpack.c.b16 %v2462, %v2461
      %2467 = vmatprep.subr.bf16.mxu0 0
      %2468 = vmatpush1.bf16.msra.mxu0 0
      %2469 = vmatprep.subr.bf16.mxu0 0
      %2470 = vmatpush1.bf16.msra.mxu0 0
      %2471 = vmatprep.subr.bf16.mxu0 0
      %2472 = vmatpush1.bf16.msra.mxu0 0
      %2473 = vmatprep.subr.bf16.mxu0 0
      %2474 = vmatpush1.bf16.msra.mxu0 0
      %2475 = vmatprep.subr.bf16.mxu0 0
      %2476 = vmatpush1.bf16.msra.mxu0 0
      %2477 = vmatprep.subr.bf16.mxu0 0
      %2478 = vmatpush1.bf16.msra.mxu0 0
      %2479 = vmatprep.subr.bf16.mxu0 0
      %2480 = vmatpush1.bf16.msra.mxu0 %v2464
      %2481 = vmatprep.subr.bf16.mxu0 0
      %2482 = vmatpush1.bf16.msra.mxu0 %v2463
      %2483 = vmatprep.subr.bf16.mxu0 0
      %2484 = vmatpush2.bf16.msra.mxu0 0
      %2485 = vmatprep.subr.bf16.mxu0 0
      %2486 = vmatpush2.bf16.msra.mxu0 0
      %2487 = vmatprep.subr.bf16.mxu0 0
      %2488 = vmatpush2.bf16.msra.mxu0 0
      %2489 = vmatprep.subr.bf16.mxu0 0
      %2490 = vmatpush2.bf16.msra.mxu0 0
      %2491 = vmatprep.subr.bf16.mxu0 0
      %2492 = vmatpush2.bf16.msra.mxu0 0
      %2493 = vmatprep.subr.bf16.mxu0 0
      %2494 = vmatpush2.bf16.msra.mxu0 0
      %2495 = vmatprep.subr.bf16.mxu0 0
      %2496 = vmatpush2.bf16.msra.mxu0 0
      %2497 = vmatprep.subr.bf16.mxu0 0
      %2498 = vmatpush2.bf16.msra.mxu0 0
      %2499 = vmatprep.mubr.bf16.mxu0 0
      %2500 = vmatmul.mubr.bf16.gmra.mxu0 %v2402
      %v2501 = vpop.f32.mrf.mxu0
      %v2502 = vadd.f32 %v2453, %v2501
      %v2503 = vpop.f32.mrf.mxu0
      %v2504 = vpop.f32.mrf.mxu0
      %v2505 = vpop.f32.mrf.mxu0
      %2506 = vdwg.mxu0
      %v2507 = vpack.c.bf16 %v2373, %v2373
      %v2508 = vpack.c.bf16 %v2439, %v2439
      %v2510 = vsel %vm1058, %v2507, 0
      %v2513 = vsel %vm1058, %v2508, 0
      %2515 = vmatprep.subr.bf16.mxu0 0
      %2516 = vmatpush1.bf16.xpose.msra.mxu0 0
      %2517 = vmatprep.subr.bf16.mxu0 0
      %2518 = vmatpush1.bf16.xpose.msra.mxu0 0
      %2519 = vmatprep.subr.bf16.mxu0 0
      %2520 = vmatpush1.bf16.xpose.msra.mxu0 0
      %2521 = vmatprep.subr.bf16.mxu0 0
      %2522 = vmatpush1.bf16.xpose.msra.mxu0 0
      %2523 = vmatprep.subr.bf16.mxu0 0
      %2524 = vmatpush1.bf16.xpose.msra.mxu0 0
      %2525 = vmatprep.subr.bf16.mxu0 0
      %2526 = vmatpush1.bf16.xpose.msra.mxu0 0
      %2527 = vmatprep.subr.bf16.mxu0 0
      %2528 = vmatpush1.bf16.xpose.msra.mxu0 0
      %2529 = vmatprep.subr.bf16.mxu0 0
      %2530 = vmatpush1.bf16.xpose.msra.mxu0 %v2513
      %2531 = vmatprep.subr.bf16.mxu0 0
      %2532 = vmatpush2.bf16.xpose.msra.mxu0 0
      %2533 = vmatprep.subr.bf16.mxu0 0
      %2534 = vmatpush2.bf16.xpose.msra.mxu0 0
      %2535 = vmatprep.subr.bf16.mxu0 0
      %2536 = vmatpush2.bf16.xpose.msra.mxu0 0
      %2537 = vmatprep.subr.bf16.mxu0 0
      %2538 = vmatpush2.bf16.xpose.msra.mxu0 0
      %2539 = vmatprep.subr.bf16.mxu0 0
      %2540 = vmatpush2.bf16.xpose.msra.mxu0 0
      %2541 = vmatprep.subr.bf16.mxu0 0
      %2542 = vmatpush2.bf16.xpose.msra.mxu0 0
      %2543 = vmatprep.subr.bf16.mxu0 0
      %2544 = vmatpush2.bf16.xpose.msra.mxu0 0
      %2545 = vmatprep.subr.bf16.mxu0 0
      %2546 = vmatpush2.bf16.xpose.msra.mxu0 0
      %2547 = vmatprep.mubr.bf16.mxu0 0
      %2548 = vmatmul.mubr.bf16.gmra.mxu0 %v2510
      %v2549 = vpop.f32.mrf.mxu0
      %v2550 = vadd.f32 0.0, %v2549
      %v2551 = vpop.f32.mrf.mxu0
      %v2552 = vpop.f32.mrf.mxu0
      %v2553 = vpop.f32.mrf.mxu0
      %2554 = vdwg.mxu0
      %v2555 = vmul.f32 %v2550, 0.35355338
      %v2556 = vsel %vm1058, %v2555, -inf
      %2557 = vmax.xlane.f32.xlu0 %v2556
      %v2558 = vpop.xlane.xlu0 %2557
      %v2559 = vsub.f32 %v2555, %v2558
      %v2560 = vmul.f32 %v2559, 1.442695
      %v2561 = vpow.pop %v2560
      %v2562 = vsel %vm1058, %v2561, 0.0
      %2563 = vadd.xlane.f32.xlu0 %v2562
      %v2564 = vpop.xlane.xlu0 %2563
      %v2565 = vrcp.pop %v2564
      %v2566 = vmul.f32 %v2561, %v2565
      %v2567 = vpack.c.bf16 %v2566, %v2566
      %v2568 = vpack.c.bf16 %v2502, %v2502
      %v2570 = vsel %vm1058, %v2567, 0
      %v2573 = vsel %vm1122, %v2568, 0
      %2575 = vmatprep.subr.bf16.mxu0 0
      %2576 = vmatpush1.bf16.msra.mxu0 0
      %2577 = vmatprep.subr.bf16.mxu0 0
      %2578 = vmatpush1.bf16.msra.mxu0 0
      %2579 = vmatprep.subr.bf16.mxu0 0
      %2580 = vmatpush1.bf16.msra.mxu0 0
      %2581 = vmatprep.subr.bf16.mxu0 0
      %2582 = vmatpush1.bf16.msra.mxu0 0
      %2583 = vmatprep.subr.bf16.mxu0 0
      %2584 = vmatpush1.bf16.msra.mxu0 0
      %2585 = vmatprep.subr.bf16.mxu0 0
      %2586 = vmatpush1.bf16.msra.mxu0 0
      %2587 = vmatprep.subr.bf16.mxu0 0
      %2588 = vmatpush1.bf16.msra.mxu0 0
      %2589 = vmatprep.subr.bf16.mxu0 0
      %2590 = vmatpush1.bf16.msra.mxu0 %v2573
      %2591 = vmatprep.subr.bf16.mxu0 0
      %2592 = vmatpush2.bf16.msra.mxu0 0
      %2593 = vmatprep.subr.bf16.mxu0 0
      %2594 = vmatpush2.bf16.msra.mxu0 0
      %2595 = vmatprep.subr.bf16.mxu0 0
      %2596 = vmatpush2.bf16.msra.mxu0 0
      %2597 = vmatprep.subr.bf16.mxu0 0
      %2598 = vmatpush2.bf16.msra.mxu0 0
      %2599 = vmatprep.subr.bf16.mxu0 0
      %2600 = vmatpush2.bf16.msra.mxu0 0
      %2601 = vmatprep.subr.bf16.mxu0 0
      %2602 = vmatpush2.bf16.msra.mxu0 0
      %2603 = vmatprep.subr.bf16.mxu0 0
      %2604 = vmatpush2.bf16.msra.mxu0 0
      %2605 = vmatprep.subr.bf16.mxu0 0
      %2606 = vmatpush2.bf16.msra.mxu0 0
      %2607 = vmatprep.mubr.bf16.mxu0 0
      %2608 = vmatmul.mubr.bf16.gmra.mxu0 %v2570
      %v2609 = vpop.f32.mrf.mxu0
      %v2610 = vadd.f32 0.0, %v2609
      %v2611 = vpop.f32.mrf.mxu0
      %v2612 = vpop.f32.mrf.mxu0
      %v2613 = vpop.f32.mrf.mxu0
      %2614 = vdwg.mxu0
      %v2615 = vpack.c.bf16 %v2610, %v2610
      %v2616 = vld [vmem:[%s16] sm:$0xf]
      %s2617 = scalar_lea.vmem %s10, 16
      %v2618 = vld [vmem:[%s2617] sm:$0xf]
      %v2619 = vld [vmem:[%s2617 + $0x4] sm:$0xf]
      %v2620 = vld [vmem:[%s2617 + $0x8] sm:$0xf]
      %v2621 = vld [vmem:[%s2617 + $0xc] sm:$0xf]
      %s2622 = scalar_lea.vmem %s11, 1
      %v2623 = vld [vmem:[%s2622] sm:$0x1]
      %v2625 = vlaneseq
      %v2626 = vshrl.u32 %v2625, 7
      %v2627 = vsub.s32 0, %v2626
      %v2628 = vrot.slane %v2623, %v2627
      %v2634 = vunpack.c.l.b16 %v2618
      %v2635 = vunpack.c.l.b16 %v2619
      %v2636 = vunpack.c.l.b16 %v2620
      %v2637 = vunpack.c.l.b16 %v2621
      %v2638 = vpack.c.b16 %v2635, %v2634
      %v2639 = vpack.c.b16 %v2637, %v2636
      %2642 = vmatprep.subr.bf16.mxu0 0
      %2643 = vmatpush1.bf16.msra.mxu0 0
      %2644 = vmatprep.subr.bf16.mxu0 0
      %2645 = vmatpush1.bf16.msra.mxu0 0
      %2646 = vmatprep.subr.bf16.mxu0 0
      %2647 = vmatpush1.bf16.msra.mxu0 0
      %2648 = vmatprep.subr.bf16.mxu0 0
      %2649 = vmatpush1.bf16.msra.mxu0 0
      %2650 = vmatprep.subr.bf16.mxu0 0
      %2651 = vmatpush1.bf16.msra.mxu0 0
      %2652 = vmatprep.subr.bf16.mxu0 0
      %2653 = vmatpush1.bf16.msra.mxu0 0
      %2654 = vmatprep.subr.bf16.mxu0 0
      %2655 = vmatpush1.bf16.msra.mxu0 %v2639
      %2656 = vmatprep.subr.bf16.mxu0 0
      %2657 = vmatpush1.bf16.msra.mxu0 %v2638
      %2658 = vmatprep.subr.bf16.mxu0 0
      %2659 = vmatpush2.bf16.msra.mxu0 0
      %2660 = vmatprep.subr.bf16.mxu0 0
      %2661 = vmatpush2.bf16.msra.mxu0 0
      %2662 = vmatprep.subr.bf16.mxu0 0
      %2663 = vmatpush2.bf16.msra.mxu0 0
      %2664 = vmatprep.subr.bf16.mxu0 0
      %2665 = vmatpush2.bf16.msra.mxu0 0
      %2666 = vmatprep.subr.bf16.mxu0 0
      %2667 = vmatpush2.bf16.msra.mxu0 0
      %2668 = vmatprep.subr.bf16.mxu0 0
      %2669 = vmatpush2.bf16.msra.mxu0 0
      %2670 = vmatprep.subr.bf16.mxu0 0
      %2671 = vmatpush2.bf16.msra.mxu0 0
      %2672 = vmatprep.subr.bf16.mxu0 0
      %2673 = vmatpush2.bf16.msra.mxu0 0
      %2674 = vmatprep.mubr.bf16.mxu0 0
      %2675 = vmatmul.mubr.bf16.gmra.mxu0 %v2336
      %v2676 = vpop.f32.mrf.mxu0
      %v2677 = vadd.f32 %v2628, %v2676
      %v2678 = vpop.f32.mrf.mxu0
      %v2679 = vpop.f32.mrf.mxu0
      %v2680 = vpop.f32.mrf.mxu0
      %2681 = vdwg.mxu0
      %s2682 = scalar_lea.vmem %s12, 16
      %v2683 = vld [vmem:[%s2682] sm:$0xf]
      %v2684 = vld [vmem:[%s2682 + $0x4] sm:$0xf]
      %v2685 = vld [vmem:[%s2682 + $0x8] sm:$0xf]
      %v2686 = vld [vmem:[%s2682 + $0xc] sm:$0xf]
      %s2687 = scalar_lea.vmem %s13, 1
      %v2688 = vld [vmem:[%s2687] sm:$0x1]
      %v2690 = vlaneseq
      %v2691 = vshrl.u32 %v2690, 7
      %v2692 = vsub.s32 0, %v2691
      %v2693 = vrot.slane %v2688, %v2692
      %v2699 = vunpack.c.l.b16 %v2683
      %v2700 = vunpack.c.l.b16 %v2684
      %v2701 = vunpack.c.l.b16 %v2685
      %v2702 = vunpack.c.l.b16 %v2686
      %v2703 = vpack.c.b16 %v2700, %v2699
      %v2704 = vpack.c.b16 %v2702, %v2701
      %2707 = vmatprep.subr.bf16.mxu0 0
      %2708 = vmatpush1.bf16.msra.mxu0 0
      %2709 = vmatprep.subr.bf16.mxu0 0
      %2710 = vmatpush1.bf16.msra.mxu0 0
      %2711 = vmatprep.subr.bf16.mxu0 0
      %2712 = vmatpush1.bf16.msra.mxu0 0
      %2713 = vmatprep.subr.bf16.mxu0 0
      %2714 = vmatpush1.bf16.msra.mxu0 0
      %2715 = vmatprep.subr.bf16.mxu0 0
      %2716 = vmatpush1.bf16.msra.mxu0 0
      %2717 = vmatprep.subr.bf16.mxu0 0
      %2718 = vmatpush1.bf16.msra.mxu0 0
      %2719 = vmatprep.subr.bf16.mxu0 0
      %2720 = vmatpush1.bf16.msra.mxu0 %v2704
      %2721 = vmatprep.subr.bf16.mxu0 0
      %2722 = vmatpush1.bf16.msra.mxu0 %v2703
      %2723 = vmatprep.subr.bf16.mxu0 0
      %2724 = vmatpush2.bf16.msra.mxu0 0
      %2725 = vmatprep.subr.bf16.mxu0 0
      %2726 = vmatpush2.bf16.msra.mxu0 0
      %2727 = vmatprep.subr.bf16.mxu0 0
      %2728 = vmatpush2.bf16.msra.mxu0 0
      %2729 = vmatprep.subr.bf16.mxu0 0
      %2730 = vmatpush2.bf16.msra.mxu0 0
      %2731 = vmatprep.subr.bf16.mxu0 0
      %2732 = vmatpush2.bf16.msra.mxu0 0
      %2733 = vmatprep.subr.bf16.mxu0 0
      %2734 = vmatpush2.bf16.msra.mxu0 0
      %2735 = vmatprep.subr.bf16.mxu0 0
      %2736 = vmatpush2.bf16.msra.mxu0 0
      %2737 = vmatprep.subr.bf16.mxu0 0
      %2738 = vmatpush2.bf16.msra.mxu0 0
      %2739 = vmatprep.mubr.bf16.mxu0 0
      %2740 = vmatmul.mubr.bf16.gmra.mxu0 %v2402
      %v2741 = vpop.f32.mrf.mxu0
      %v2742 = vadd.f32 %v2693, %v2741
      %v2743 = vpop.f32.mrf.mxu0
      %v2744 = vpop.f32.mrf.mxu0
      %v2745 = vpop.f32.mrf.mxu0
      %2746 = vdwg.mxu0
      %s2747 = scalar_lea.vmem %s14, 16
      %v2748 = vld [vmem:[%s2747] sm:$0xf]
      %v2749 = vld [vmem:[%s2747 + $0x4] sm:$0xf]
      %v2750 = vld [vmem:[%s2747 + $0x8] sm:$0xf]
      %v2751 = vld [vmem:[%s2747 + $0xc] sm:$0xf]
      %s2752 = scalar_lea.vmem %s15, 1
      %v2753 = vld [vmem:[%s2752] sm:$0x1]
      %v2755 = vlaneseq
      %v2756 = vshrl.u32 %v2755, 7
      %v2757 = vsub.s32 0, %v2756
      %v2758 = vrot.slane %v2753, %v2757
      %v2764 = vunpack.c.l.b16 %v2748
      %v2765 = vunpack.c.l.b16 %v2749
      %v2766 = vunpack.c.l.b16 %v2750
      %v2767 = vunpack.c.l.b16 %v2751
      %v2768 = vpack.c.b16 %v2765, %v2764
      %v2769 = vpack.c.b16 %v2767, %v2766
      %2772 = vmatprep.subr.bf16.mxu0 0
      %2773 = vmatpush1.bf16.msra.mxu0 0
      %2774 = vmatprep.subr.bf16.mxu0 0
      %2775 = vmatpush1.bf16.msra.mxu0 0
      %2776 = vmatprep.subr.bf16.mxu0 0
      %2777 = vmatpush1.bf16.msra.mxu0 0
      %2778 = vmatprep.subr.bf16.mxu0 0
      %2779 = vmatpush1.bf16.msra.mxu0 0
      %2780 = vmatprep.subr.bf16.mxu0 0
      %2781 = vmatpush1.bf16.msra.mxu0 0
      %2782 = vmatprep.subr.bf16.mxu0 0
      %2783 = vmatpush1.bf16.msra.mxu0 0
      %2784 = vmatprep.subr.bf16.mxu0 0
      %2785 = vmatpush1.bf16.msra.mxu0 %v2769
      %2786 = vmatprep.subr.bf16.mxu0 0
      %2787 = vmatpush1.bf16.msra.mxu0 %v2768
      %2788 = vmatprep.subr.bf16.mxu0 0
      %2789 = vmatpush2.bf16.msra.mxu0 0
      %2790 = vmatprep.subr.bf16.mxu0 0
      %2791 = vmatpush2.bf16.msra.mxu0 0
      %2792 = vmatprep.subr.bf16.mxu0 0
      %2793 = vmatpush2.bf16.msra.mxu0 0
      %2794 = vmatprep.subr.bf16.mxu0 0
      %2795 = vmatpush2.bf16.msra.mxu0 0
      %2796 = vmatprep.subr.bf16.mxu0 0
      %2797 = vmatpush2.bf16.msra.mxu0 0
      %2798 = vmatprep.subr.bf16.mxu0 0
      %2799 = vmatpush2.bf16.msra.mxu0 0
      %2800 = vmatprep.subr.bf16.mxu0 0
      %2801 = vmatpush2.bf16.msra.mxu0 0
      %2802 = vmatprep.subr.bf16.mxu0 0
      %2803 = vmatpush2.bf16.msra.mxu0 0
      %2804 = vmatprep.mubr.bf16.mxu0 0
      %2805 = vmatmul.mubr.bf16.gmra.mxu0 %v2402
      %v2806 = vpop.f32.mrf.mxu0
      %v2807 = vadd.f32 %v2758, %v2806
      %v2808 = vpop.f32.mrf.mxu0
      %v2809 = vpop.f32.mrf.mxu0
      %v2810 = vpop.f32.mrf.mxu0
      %2811 = vdwg.mxu0
      %v2812 = vpack.c.bf16 %v2677, %v2677
      %v2813 = vpack.c.bf16 %v2742, %v2742
      %v2815 = vsel %vm1058, %v2812, 0
      %v2818 = vsel %vm1058, %v2813, 0
      %2820 = vmatprep.subr.bf16.mxu0 0
      %2821 = vmatpush1.bf16.xpose.msra.mxu0 0
      %2822 = vmatprep.subr.bf16.mxu0 0
      %2823 = vmatpush1.bf16.xpose.msra.mxu0 0
      %2824 = vmatprep.subr.bf16.mxu0 0
      %2825 = vmatpush1.bf16.xpose.msra.mxu0 0
      %2826 = vmatprep.subr.bf16.mxu0 0
      %2827 = vmatpush1.bf16.xpose.msra.mxu0 0
      %2828 = vmatprep.subr.bf16.mxu0 0
      %2829 = vmatpush1.bf16.xpose.msra.mxu0 0
      %2830 = vmatprep.subr.bf16.mxu0 0
      %2831 = vmatpush1.bf16.xpose.msra.mxu0 0
      %2832 = vmatprep.subr.bf16.mxu0 0
      %2833 = vmatpush1.bf16.xpose.msra.mxu0 0
      %2834 = vmatprep.subr.bf16.mxu0 0
      %2835 = vmatpush1.bf16.xpose.msra.mxu0 %v2818
      %2836 = vmatprep.subr.bf16.mxu0 0
      %2837 = vmatpush2.bf16.xpose.msra.mxu0 0
      %2838 = vmatprep.subr.bf16.mxu0 0
      %2839 = vmatpush2.bf16.xpose.msra.mxu0 0
      %2840 = vmatprep.subr.bf16.mxu0 0
      %2841 = vmatpush2.bf16.xpose.msra.mxu0 0
      %2842 = vmatprep.subr.bf16.mxu0 0
      %2843 = vmatpush2.bf16.xpose.msra.mxu0 0
      %2844 = vmatprep.subr.bf16.mxu0 0
      %2845 = vmatpush2.bf16.xpose.msra.mxu0 0
      %2846 = vmatprep.subr.bf16.mxu0 0
      %2847 = vmatpush2.bf16.xpose.msra.mxu0 0
      %2848 = vmatprep.subr.bf16.mxu0 0
      %2849 = vmatpush2.bf16.xpose.msra.mxu0 0
      %2850 = vmatprep.subr.bf16.mxu0 0
      %2851 = vmatpush2.bf16.xpose.msra.mxu0 0
      %2852 = vmatprep.mubr.bf16.mxu0 0
      %2853 = vmatmul.mubr.bf16.gmra.mxu0 %v2815
      %v2854 = vpop.f32.mrf.mxu0
      %v2855 = vadd.f32 0.0, %v2854
      %v2856 = vpop.f32.mrf.mxu0
      %v2857 = vpop.f32.mrf.mxu0
      %v2858 = vpop.f32.mrf.mxu0
      %2859 = vdwg.mxu0
      %v2860 = vmul.f32 %v2855, 0.35355338
      %v2861 = vsel %vm1058, %v2860, -inf
      %2862 = vmax.xlane.f32.xlu0 %v2861
      %v2863 = vpop.xlane.xlu0 %2862
      %v2864 = vsub.f32 %v2860, %v2863
      %v2865 = vmul.f32 %v2864, 1.442695
      %v2866 = vpow.pop %v2865
      %v2867 = vsel %vm1058, %v2866, 0.0
      %2868 = vadd.xlane.f32.xlu0 %v2867
      %v2869 = vpop.xlane.xlu0 %2868
      %v2870 = vrcp.pop %v2869
      %v2871 = vmul.f32 %v2866, %v2870
      %v2872 = vpack.c.bf16 %v2871, %v2871
      %v2873 = vpack.c.bf16 %v2807, %v2807
      %v2875 = vsel %vm1058, %v2872, 0
      %v2878 = vsel %vm1122, %v2873, 0
      %2880 = vmatprep.subr.bf16.mxu0 0
      %2881 = vmatpush1.bf16.msra.mxu0 0
      %2882 = vmatprep.subr.bf16.mxu0 0
      %2883 = vmatpush1.bf16.msra.mxu0 0
      %2884 = vmatprep.subr.bf16.mxu0 0
      %2885 = vmatpush1.bf16.msra.mxu0 0
      %2886 = vmatprep.subr.bf16.mxu0 0
      %2887 = vmatpush1.bf16.msra.mxu0 0
      %2888 = vmatprep.subr.bf16.mxu0 0
      %2889 = vmatpush1.bf16.msra.mxu0 0
      %2890 = vmatprep.subr.bf16.mxu0 0
      %2891 = vmatpush1.bf16.msra.mxu0 0
      %2892 = vmatprep.subr.bf16.mxu0 0
      %2893 = vmatpush1.bf16.msra.mxu0 0
      %2894 = vmatprep.subr.bf16.mxu0 0
      %2895 = vmatpush1.bf16.msra.mxu0 %v2878
      %2896 = vmatprep.subr.bf16.mxu0 0
      %2897 = vmatpush2.bf16.msra.mxu0 0
      %2898 = vmatprep.subr.bf16.mxu0 0
      %2899 = vmatpush2.bf16.msra.mxu0 0
      %2900 = vmatprep.subr.bf16.mxu0 0
      %2901 = vmatpush2.bf16.msra.mxu0 0
      %2902 = vmatprep.subr.bf16.mxu0 0
      %2903 = vmatpush2.bf16.msra.mxu0 0
      %2904 = vmatprep.subr.bf16.mxu0 0
      %2905 = vmatpush2.bf16.msra.mxu0 0
      %2906 = vmatprep.subr.bf16.mxu0 0
      %2907 = vmatpush2.bf16.msra.mxu0 0
      %2908 = vmatprep.subr.bf16.mxu0 0
      %2909 = vmatpush2.bf16.msra.mxu0 0
      %2910 = vmatprep.subr.bf16.mxu0 0
      %2911 = vmatpush2.bf16.msra.mxu0 0
      %2912 = vmatprep.mubr.bf16.mxu0 0
      %2913 = vmatmul.mubr.bf16.gmra.mxu0 %v2875
      %v2914 = vpop.f32.mrf.mxu0
      %v2915 = vadd.f32 0.0, %v2914
      %v2916 = vpop.f32.mrf.mxu0
      %v2917 = vpop.f32.mrf.mxu0
      %v2918 = vpop.f32.mrf.mxu0
      %2919 = vdwg.mxu0
      %v2920 = vpack.c.bf16 %v2915, %v2915
      %s2921 = scalar_lea.vmem %s16, 4
      %v2922 = vld [vmem:[%s2921] sm:$0xf]
      %v2924 = vsel %vm1058, %v2920, 0
      %v2927 = vsel %vm1122, %v2922, 0
      %2929 = vmatprep.subr.bf16.mxu0 0
      %2930 = vmatpush1.bf16.msra.mxu0 0
      %2931 = vmatprep.subr.bf16.mxu0 0
      %2932 = vmatpush1.bf16.msra.mxu0 0
      %2933 = vmatprep.subr.bf16.mxu0 0
      %2934 = vmatpush1.bf16.msra.mxu0 0
      %2935 = vmatprep.subr.bf16.mxu0 0
      %2936 = vmatpush1.bf16.msra.mxu0 0
      %2937 = vmatprep.subr.bf16.mxu0 0
      %2938 = vmatpush1.bf16.msra.mxu0 0
      %2939 = vmatprep.subr.bf16.mxu0 0
      %2940 = vmatpush1.bf16.msra.mxu0 0
      %2941 = vmatprep.subr.bf16.mxu0 0
      %2942 = vmatpush1.bf16.msra.mxu0 0
      %2943 = vmatprep.subr.bf16.mxu0 0
      %2944 = vmatpush1.bf16.msra.mxu0 %v2927
      %2945 = vmatprep.subr.bf16.mxu0 0
      %2946 = vmatpush2.bf16.msra.mxu0 0
      %2947 = vmatprep.subr.bf16.mxu0 0
      %2948 = vmatpush2.bf16.msra.mxu0 0
      %2949 = vmatprep.subr.bf16.mxu0 0
      %2950 = vmatpush2.bf16.msra.mxu0 0
      %2951 = vmatprep.subr.bf16.mxu0 0
      %2952 = vmatpush2.bf16.msra.mxu0 0
      %2953 = vmatprep.subr.bf16.mxu0 0
      %2954 = vmatpush2.bf16.msra.mxu0 0
      %2955 = vmatprep.subr.bf16.mxu0 0
      %2956 = vmatpush2.bf16.msra.mxu0 0
      %2957 = vmatprep.subr.bf16.mxu0 0
      %2958 = vmatpush2.bf16.msra.mxu0 0
      %2959 = vmatprep.subr.bf16.mxu0 0
      %2960 = vmatpush2.bf16.msra.mxu0 0
      %2961 = vmatprep.mubr.bf16.mxu0 0
      %2962 = vmatmul.mubr.bf16.gmra.mxu0 %v2924
      %v2963 = vpop.f32.mrf.mxu0
      %v2964 = vadd.f32 0.0, %v2963
      %v2965 = vpop.f32.mrf.mxu0
      %v2966 = vpop.f32.mrf.mxu0
      %v2967 = vpop.f32.mrf.mxu0
      %2968 = vdwg.mxu0
      %v2970 = vsel %vm1058, %v2615, 0
      %v2973 = vsel %vm1122, %v2616, 0
      %2975 = vmatprep.subr.bf16.mxu0 0
      %2976 = vmatpush1.bf16.msra.mxu0 0
      %2977 = vmatprep.subr.bf16.mxu0 0
      %2978 = vmatpush1.bf16.msra.mxu0 0
      %2979 = vmatprep.subr.bf16.mxu0 0
      %2980 = vmatpush1.bf16.msra.mxu0 0
      %2981 = vmatprep.subr.bf16.mxu0 0
      %2982 = vmatpush1.bf16.msra.mxu0 0
      %2983 = vmatprep.subr.bf16.mxu0 0
      %2984 = vmatpush1.bf16.msra.mxu0 0
      %2985 = vmatprep.subr.bf16.mxu0 0
      %2986 = vmatpush1.bf16.msra.mxu0 0
      %2987 = vmatprep.subr.bf16.mxu0 0
      %2988 = vmatpush1.bf16.msra.mxu0 0
      %2989 = vmatprep.subr.bf16.mxu0 0
      %2990 = vmatpush1.bf16.msra.mxu0 %v2973
      %2991 = vmatprep.subr.bf16.mxu0 0
      %2992 = vmatpush2.bf16.msra.mxu0 0
      %2993 = vmatprep.subr.bf16.mxu0 0
      %2994 = vmatpush2.bf16.msra.mxu0 0
      %2995 = vmatprep.subr.bf16.mxu0 0
      %2996 = vmatpush2.bf16.msra.mxu0 0
      %2997 = vmatprep.subr.bf16.mxu0 0
      %2998 = vmatpush2.bf16.msra.mxu0 0
      %2999 = vmatprep.subr.bf16.mxu0 0
      %3000 = vmatpush2.bf16.msra.mxu0 0
      %3001 = vmatprep.subr.bf16.mxu0 0
      %3002 = vmatpush2.bf16.msra.mxu0 0
      %3003 = vmatprep.subr.bf16.mxu0 0
      %3004 = vmatpush2.bf16.msra.mxu0 0
      %3005 = vmatprep.subr.bf16.mxu0 0
      %3006 = vmatpush2.bf16.msra.mxu0 0
      %3007 = vmatprep.mubr.bf16.mxu0 0
      %3008 = vmatmul.mubr.bf16.gmra.mxu0 %v2970
      %v3009 = vpop.f32.mrf.mxu0
      %v3010 = vadd.f32 %v2964, %v3009
      %v3011 = vpop.f32.mrf.mxu0
      %v3012 = vpop.f32.mrf.mxu0
      %v3013 = vpop.f32.mrf.mxu0
      %3014 = vdwg.mxu0
      %s3015 = scalar_lea.vmem %s10, 32
      %v3016 = vld [vmem:[%s3015] sm:$0xf]
      %v3017 = vld [vmem:[%s3015 + $0x4] sm:$0xf]
      %v3018 = vld [vmem:[%s3015 + $0x8] sm:$0xf]
      %v3019 = vld [vmem:[%s3015 + $0xc] sm:$0xf]
      %s3020 = scalar_lea.vmem %s11, 2
      %v3021 = vld [vmem:[%s3020] sm:$0x1]
      %v3023 = vlaneseq
      %v3024 = vshrl.u32 %v3023, 7
      %v3025 = vsub.s32 0, %v3024
      %v3026 = vrot.slane %v3021, %v3025
      %v3032 = vunpack.c.l.b16 %v3016
      %v3033 = vunpack.c.l.b16 %v3017
      %v3034 = vunpack.c.l.b16 %v3018
      %v3035 = vunpack.c.l.b16 %v3019
      %v3036 = vpack.c.b16 %v3033, %v3032
      %v3037 = vpack.c.b16 %v3035, %v3034
      %3040 = vmatprep.subr.bf16.mxu0 0
      %3041 = vmatpush1.bf16.msra.mxu0 0
      %3042 = vmatprep.subr.bf16.mxu0 0
      %3043 = vmatpush1.bf16.msra.mxu0 0
      %3044 = vmatprep.subr.bf16.mxu0 0
      %3045 = vmatpush1.bf16.msra.mxu0 0
      %3046 = vmatprep.subr.bf16.mxu0 0
      %3047 = vmatpush1.bf16.msra.mxu0 0
      %3048 = vmatprep.subr.bf16.mxu0 0
      %3049 = vmatpush1.bf16.msra.mxu0 0
      %3050 = vmatprep.subr.bf16.mxu0 0
      %3051 = vmatpush1.bf16.msra.mxu0 0
      %3052 = vmatprep.subr.bf16.mxu0 0
      %3053 = vmatpush1.bf16.msra.mxu0 %v3037
      %3054 = vmatprep.subr.bf16.mxu0 0
      %3055 = vmatpush1.bf16.msra.mxu0 %v3036
      %3056 = vmatprep.subr.bf16.mxu0 0
      %3057 = vmatpush2.bf16.msra.mxu0 0
      %3058 = vmatprep.subr.bf16.mxu0 0
      %3059 = vmatpush2.bf16.msra.mxu0 0
      %3060 = vmatprep.subr.bf16.mxu0 0
      %3061 = vmatpush2.bf16.msra.mxu0 0
      %3062 = vmatprep.subr.bf16.mxu0 0
      %3063 = vmatpush2.bf16.msra.mxu0 0
      %3064 = vmatprep.subr.bf16.mxu0 0
      %3065 = vmatpush2.bf16.msra.mxu0 0
      %3066 = vmatprep.subr.bf16.mxu0 0
      %3067 = vmatpush2.bf16.msra.mxu0 0
      %3068 = vmatprep.subr.bf16.mxu0 0
      %3069 = vmatpush2.bf16.msra.mxu0 0
      %3070 = vmatprep.subr.bf16.mxu0 0
      %3071 = vmatpush2.bf16.msra.mxu0 0
      %3072 = vmatprep.mubr.bf16.mxu0 0
      %3073 = vmatmul.mubr.bf16.gmra.mxu0 %v2336
      %v3074 = vpop.f32.mrf.mxu0
      %v3075 = vadd.f32 %v3026, %v3074
      %v3076 = vpop.f32.mrf.mxu0
      %v3077 = vpop.f32.mrf.mxu0
      %v3078 = vpop.f32.mrf.mxu0
      %3079 = vdwg.mxu0
      %s3080 = scalar_lea.vmem %s12, 32
      %v3081 = vld [vmem:[%s3080] sm:$0xf]
      %v3082 = vld [vmem:[%s3080 + $0x4] sm:$0xf]
      %v3083 = vld [vmem:[%s3080 + $0x8] sm:$0xf]
      %v3084 = vld [vmem:[%s3080 + $0xc] sm:$0xf]
      %s3085 = scalar_lea.vmem %s13, 2
      %v3086 = vld [vmem:[%s3085] sm:$0x1]
      %v3088 = vlaneseq
      %v3089 = vshrl.u32 %v3088, 7
      %v3090 = vsub.s32 0, %v3089
      %v3091 = vrot.slane %v3086, %v3090
      %v3097 = vunpack.c.l.b16 %v3081
      %v3098 = vunpack.c.l.b16 %v3082
      %v3099 = vunpack.c.l.b16 %v3083
      %v3100 = vunpack.c.l.b16 %v3084
      %v3101 = vpack.c.b16 %v3098, %v3097
      %v3102 = vpack.c.b16 %v3100, %v3099
      %3105 = vmatprep.subr.bf16.mxu0 0
      %3106 = vmatpush1.bf16.msra.mxu0 0
      %3107 = vmatprep.subr.bf16.mxu0 0
      %3108 = vmatpush1.bf16.msra.mxu0 0
      %3109 = vmatprep.subr.bf16.mxu0 0
      %3110 = vmatpush1.bf16.msra.mxu0 0
      %3111 = vmatprep.subr.bf16.mxu0 0
      %3112 = vmatpush1.bf16.msra.mxu0 0
      %3113 = vmatprep.subr.bf16.mxu0 0
      %3114 = vmatpush1.bf16.msra.mxu0 0
      %3115 = vmatprep.subr.bf16.mxu0 0
      %3116 = vmatpush1.bf16.msra.mxu0 0
      %3117 = vmatprep.subr.bf16.mxu0 0
      %3118 = vmatpush1.bf16.msra.mxu0 %v3102
      %3119 = vmatprep.subr.bf16.mxu0 0
      %3120 = vmatpush1.bf16.msra.mxu0 %v3101
      %3121 = vmatprep.subr.bf16.mxu0 0
      %3122 = vmatpush2.bf16.msra.mxu0 0
      %3123 = vmatprep.subr.bf16.mxu0 0
      %3124 = vmatpush2.bf16.msra.mxu0 0
      %3125 = vmatprep.subr.bf16.mxu0 0
      %3126 = vmatpush2.bf16.msra.mxu0 0
      %3127 = vmatprep.subr.bf16.mxu0 0
      %3128 = vmatpush2.bf16.msra.mxu0 0
      %3129 = vmatprep.subr.bf16.mxu0 0
      %3130 = vmatpush2.bf16.msra.mxu0 0
      %3131 = vmatprep.subr.bf16.mxu0 0
      %3132 = vmatpush2.bf16.msra.mxu0 0
      %3133 = vmatprep.subr.bf16.mxu0 0
      %3134 = vmatpush2.bf16.msra.mxu0 0
      %3135 = vmatprep.subr.bf16.mxu0 0
      %3136 = vmatpush2.bf16.msra.mxu0 0
      %3137 = vmatprep.mubr.bf16.mxu0 0
      %3138 = vmatmul.mubr.bf16.gmra.mxu0 %v2402
      %v3139 = vpop.f32.mrf.mxu0
      %v3140 = vadd.f32 %v3091, %v3139
      %v3141 = vpop.f32.mrf.mxu0
      %v3142 = vpop.f32.mrf.mxu0
      %v3143 = vpop.f32.mrf.mxu0
      %3144 = vdwg.mxu0
      %s3145 = scalar_lea.vmem %s14, 32
      %v3146 = vld [vmem:[%s3145] sm:$0xf]
      %v3147 = vld [vmem:[%s3145 + $0x4] sm:$0xf]
      %v3148 = vld [vmem:[%s3145 + $0x8] sm:$0xf]
      %v3149 = vld [vmem:[%s3145 + $0xc] sm:$0xf]
      %s3150 = scalar_lea.vmem %s15, 2
      %v3151 = vld [vmem:[%s3150] sm:$0x1]
      %v3153 = vlaneseq
      %v3154 = vshrl.u32 %v3153, 7
      %v3155 = vsub.s32 0, %v3154
      %v3156 = vrot.slane %v3151, %v3155
      %v3162 = vunpack.c.l.b16 %v3146
      %v3163 = vunpack.c.l.b16 %v3147
      %v3164 = vunpack.c.l.b16 %v3148
      %v3165 = vunpack.c.l.b16 %v3149
      %v3166 = vpack.c.b16 %v3163, %v3162
      %v3167 = vpack.c.b16 %v3165, %v3164
      %3170 = vmatprep.subr.bf16.mxu0 0
      %3171 = vmatpush1.bf16.msra.mxu0 0
      %3172 = vmatprep.subr.bf16.mxu0 0
      %3173 = vmatpush1.bf16.msra.mxu0 0
      %3174 = vmatprep.subr.bf16.mxu0 0
      %3175 = vmatpush1.bf16.msra.mxu0 0
      %3176 = vmatprep.subr.bf16.mxu0 0
      %3177 = vmatpush1.bf16.msra.mxu0 0
      %3178 = vmatprep.subr.bf16.mxu0 0
      %3179 = vmatpush1.bf16.msra.mxu0 0
      %3180 = vmatprep.subr.bf16.mxu0 0
      %3181 = vmatpush1.bf16.msra.mxu0 0
      %3182 = vmatprep.subr.bf16.mxu0 0
      %3183 = vmatpush1.bf16.msra.mxu0 %v3167
      %3184 = vmatprep.subr.bf16.mxu0 0
      %3185 = vmatpush1.bf16.msra.mxu0 %v3166
      %3186 = vmatprep.subr.bf16.mxu0 0
      %3187 = vmatpush2.bf16.msra.mxu0 0
      %3188 = vmatprep.subr.bf16.mxu0 0
      %3189 = vmatpush2.bf16.msra.mxu0 0
      %3190 = vmatprep.subr.bf16.mxu0 0
      %3191 = vmatpush2.bf16.msra.mxu0 0
      %3192 = vmatprep.subr.bf16.mxu0 0
      %3193 = vmatpush2.bf16.msra.mxu0 0
      %3194 = vmatprep.subr.bf16.mxu0 0
      %3195 = vmatpush2.bf16.msra.mxu0 0
      %3196 = vmatprep.subr.bf16.mxu0 0
      %3197 = vmatpush2.bf16.msra.mxu0 0
      %3198 = vmatprep.subr.bf16.mxu0 0
      %3199 = vmatpush2.bf16.msra.mxu0 0
      %3200 = vmatprep.subr.bf16.mxu0 0
      %3201 = vmatpush2.bf16.msra.mxu0 0
      %3202 = vmatprep.mubr.bf16.mxu0 0
      %3203 = vmatmul.mubr.bf16.gmra.mxu0 %v2402
      %v3204 = vpop.f32.mrf.mxu0
      %v3205 = vadd.f32 %v3156, %v3204
      %v3206 = vpop.f32.mrf.mxu0
      %v3207 = vpop.f32.mrf.mxu0
      %v3208 = vpop.f32.mrf.mxu0
      %3209 = vdwg.mxu0
      %v3210 = vpack.c.bf16 %v3075, %v3075
      %v3211 = vpack.c.bf16 %v3140, %v3140
      %v3213 = vsel %vm1058, %v3210, 0
      %v3216 = vsel %vm1058, %v3211, 0
      %3218 = vmatprep.subr.bf16.mxu0 0
      %3219 = vmatpush1.bf16.xpose.msra.mxu0 0
      %3220 = vmatprep.subr.bf16.mxu0 0
      %3221 = vmatpush1.bf16.xpose.msra.mxu0 0
      %3222 = vmatprep.subr.bf16.mxu0 0
      %3223 = vmatpush1.bf16.xpose.msra.mxu0 0
      %3224 = vmatprep.subr.bf16.mxu0 0
      %3225 = vmatpush1.bf16.xpose.msra.mxu0 0
      %3226 = vmatprep.subr.bf16.mxu0 0
      %3227 = vmatpush1.bf16.xpose.msra.mxu0 0
      %3228 = vmatprep.subr.bf16.mxu0 0
      %3229 = vmatpush1.bf16.xpose.msra.mxu0 0
      %3230 = vmatprep.subr.bf16.mxu0 0
      %3231 = vmatpush1.bf16.xpose.msra.mxu0 0
      %3232 = vmatprep.subr.bf16.mxu0 0
      %3233 = vmatpush1.bf16.xpose.msra.mxu0 %v3216
      %3234 = vmatprep.subr.bf16.mxu0 0
      %3235 = vmatpush2.bf16.xpose.msra.mxu0 0
      %3236 = vmatprep.subr.bf16.mxu0 0
      %3237 = vmatpush2.bf16.xpose.msra.mxu0 0
      %3238 = vmatprep.subr.bf16.mxu0 0
      %3239 = vmatpush2.bf16.xpose.msra.mxu0 0
      %3240 = vmatprep.subr.bf16.mxu0 0
      %3241 = vmatpush2.bf16.xpose.msra.mxu0 0
      %3242 = vmatprep.subr.bf16.mxu0 0
      %3243 = vmatpush2.bf16.xpose.msra.mxu0 0
      %3244 = vmatprep.subr.bf16.mxu0 0
      %3245 = vmatpush2.bf16.xpose.msra.mxu0 0
      %3246 = vmatprep.subr.bf16.mxu0 0
      %3247 = vmatpush2.bf16.xpose.msra.mxu0 0
      %3248 = vmatprep.subr.bf16.mxu0 0
      %3249 = vmatpush2.bf16.xpose.msra.mxu0 0
      %3250 = vmatprep.mubr.bf16.mxu0 0
      %3251 = vmatmul.mubr.bf16.gmra.mxu0 %v3213
      %v3252 = vpop.f32.mrf.mxu0
      %v3253 = vadd.f32 0.0, %v3252
      %v3254 = vpop.f32.mrf.mxu0
      %v3255 = vpop.f32.mrf.mxu0
      %v3256 = vpop.f32.mrf.mxu0
      %3257 = vdwg.mxu0
      %v3258 = vmul.f32 %v3253, 0.35355338
      %v3259 = vsel %vm1058, %v3258, -inf
      %3260 = vmax.xlane.f32.xlu0 %v3259
      %v3261 = vpop.xlane.xlu0 %3260
      %v3262 = vsub.f32 %v3258, %v3261
      %v3263 = vmul.f32 %v3262, 1.442695
      %v3264 = vpow.pop %v3263
      %v3265 = vsel %vm1058, %v3264, 0.0
      %3266 = vadd.xlane.f32.xlu0 %v3265
      %v3267 = vpop.xlane.xlu0 %3266
      %v3268 = vrcp.pop %v3267
      %v3269 = vmul.f32 %v3264, %v3268
      %v3270 = vpack.c.bf16 %v3269, %v3269
      %v3271 = vpack.c.bf16 %v3205, %v3205
      %v3273 = vsel %vm1058, %v3270, 0
      %v3276 = vsel %vm1122, %v3271, 0
      %3278 = vmatprep.subr.bf16.mxu0 0
      %3279 = vmatpush1.bf16.msra.mxu0 0
      %3280 = vmatprep.subr.bf16.mxu0 0
      %3281 = vmatpush1.bf16.msra.mxu0 0
      %3282 = vmatprep.subr.bf16.mxu0 0
      %3283 = vmatpush1.bf16.msra.mxu0 0
      %3284 = vmatprep.subr.bf16.mxu0 0
      %3285 = vmatpush1.bf16.msra.mxu0 0
      %3286 = vmatprep.subr.bf16.mxu0 0
      %3287 = vmatpush1.bf16.msra.mxu0 0
      %3288 = vmatprep.subr.bf16.mxu0 0
      %3289 = vmatpush1.bf16.msra.mxu0 0
      %3290 = vmatprep.subr.bf16.mxu0 0
      %3291 = vmatpush1.bf16.msra.mxu0 0
      %3292 = vmatprep.subr.bf16.mxu0 0
      %3293 = vmatpush1.bf16.msra.mxu0 %v3276
      %3294 = vmatprep.subr.bf16.mxu0 0
      %3295 = vmatpush2.bf16.msra.mxu0 0
      %3296 = vmatprep.subr.bf16.mxu0 0
      %3297 = vmatpush2.bf16.msra.mxu0 0
      %3298 = vmatprep.subr.bf16.mxu0 0
      %3299 = vmatpush2.bf16.msra.mxu0 0
      %3300 = vmatprep.subr.bf16.mxu0 0
      %3301 = vmatpush2.bf16.msra.mxu0 0
      %3302 = vmatprep.subr.bf16.mxu0 0
      %3303 = vmatpush2.bf16.msra.mxu0 0
      %3304 = vmatprep.subr.bf16.mxu0 0
      %3305 = vmatpush2.bf16.msra.mxu0 0
      %3306 = vmatprep.subr.bf16.mxu0 0
      %3307 = vmatpush2.bf16.msra.mxu0 0
      %3308 = vmatprep.subr.bf16.mxu0 0
      %3309 = vmatpush2.bf16.msra.mxu0 0
      %3310 = vmatprep.mubr.bf16.mxu0 0
      %3311 = vmatmul.mubr.bf16.gmra.mxu0 %v3273
      %v3312 = vpop.f32.mrf.mxu0
      %v3313 = vadd.f32 0.0, %v3312
      %v3314 = vpop.f32.mrf.mxu0
      %v3315 = vpop.f32.mrf.mxu0
      %v3316 = vpop.f32.mrf.mxu0
      %3317 = vdwg.mxu0
      %v3318 = vpack.c.bf16 %v3313, %v3313
      %s3319 = scalar_lea.vmem %s16, 8
      %v3320 = vld [vmem:[%s3319] sm:$0xf]
      %v3322 = vsel %vm1058, %v3318, 0
      %v3325 = vsel %vm1122, %v3320, 0
      %3327 = vmatprep.subr.bf16.mxu0 0
      %3328 = vmatpush1.bf16.msra.mxu0 0
      %3329 = vmatprep.subr.bf16.mxu0 0
      %3330 = vmatpush1.bf16.msra.mxu0 0
      %3331 = vmatprep.subr.bf16.mxu0 0
      %3332 = vmatpush1.bf16.msra.mxu0 0
      %3333 = vmatprep.subr.bf16.mxu0 0
      %3334 = vmatpush1.bf16.msra.mxu0 0
      %3335 = vmatprep.subr.bf16.mxu0 0
      %3336 = vmatpush1.bf16.msra.mxu0 0
      %3337 = vmatprep.subr.bf16.mxu0 0
      %3338 = vmatpush1.bf16.msra.mxu0 0
      %3339 = vmatprep.subr.bf16.mxu0 0
      %3340 = vmatpush1.bf16.msra.mxu0 0
      %3341 = vmatprep.subr.bf16.mxu0 0
      %3342 = vmatpush1.bf16.msra.mxu0 %v3325
      %3343 = vmatprep.subr.bf16.mxu0 0
      %3344 = vmatpush2.bf16.msra.mxu0 0
      %3345 = vmatprep.subr.bf16.mxu0 0
      %3346 = vmatpush2.bf16.msra.mxu0 0
      %3347 = vmatprep.subr.bf16.mxu0 0
      %3348 = vmatpush2.bf16.msra.mxu0 0
      %3349 = vmatprep.subr.bf16.mxu0 0
      %3350 = vmatpush2.bf16.msra.mxu0 0
      %3351 = vmatprep.subr.bf16.mxu0 0
      %3352 = vmatpush2.bf16.msra.mxu0 0
      %3353 = vmatprep.subr.bf16.mxu0 0
      %3354 = vmatpush2.bf16.msra.mxu0 0
      %3355 = vmatprep.subr.bf16.mxu0 0
      %3356 = vmatpush2.bf16.msra.mxu0 0
      %3357 = vmatprep.subr.bf16.mxu0 0
      %3358 = vmatpush2.bf16.msra.mxu0 0
      %3359 = vmatprep.mubr.bf16.mxu0 0
      %3360 = vmatmul.mubr.bf16.gmra.mxu0 %v3322
      %v3361 = vpop.f32.mrf.mxu0
      %v3362 = vadd.f32 0.0, %v3361
      %v3363 = vpop.f32.mrf.mxu0
      %v3364 = vpop.f32.mrf.mxu0
      %v3365 = vpop.f32.mrf.mxu0
      %3366 = vdwg.mxu0
      %v3367 = vadd.f32 %v3010, %v3362
      %s3368 = scalar_lea.vmem %s10, 48
      %v3369 = vld [vmem:[%s3368] sm:$0xf]
      %v3370 = vld [vmem:[%s3368 + $0x4] sm:$0xf]
      %v3371 = vld [vmem:[%s3368 + $0x8] sm:$0xf]
      %v3372 = vld [vmem:[%s3368 + $0xc] sm:$0xf]
      %s3373 = scalar_lea.vmem %s11, 3
      %v3374 = vld [vmem:[%s3373] sm:$0x1]
      %v3376 = vlaneseq
      %v3377 = vshrl.u32 %v3376, 7
      %v3378 = vsub.s32 0, %v3377
      %v3379 = vrot.slane %v3374, %v3378
      %v3385 = vunpack.c.l.b16 %v3369
      %v3386 = vunpack.c.l.b16 %v3370
      %v3387 = vunpack.c.l.b16 %v3371
      %v3388 = vunpack.c.l.b16 %v3372
      %v3389 = vpack.c.b16 %v3386, %v3385
      %v3390 = vpack.c.b16 %v3388, %v3387
      %3393 = vmatprep.subr.bf16.mxu0 0
      %3394 = vmatpush1.bf16.msra.mxu0 0
      %3395 = vmatprep.subr.bf16.mxu0 0
      %3396 = vmatpush1.bf16.msra.mxu0 0
      %3397 = vmatprep.subr.bf16.mxu0 0
      %3398 = vmatpush1.bf16.msra.mxu0 0
      %3399 = vmatprep.subr.bf16.mxu0 0
      %3400 = vmatpush1.bf16.msra.mxu0 0
      %3401 = vmatprep.subr.bf16.mxu0 0
      %3402 = vmatpush1.bf16.msra.mxu0 0
      %3403 = vmatprep.subr.bf16.mxu0 0
      %3404 = vmatpush1.bf16.msra.mxu0 0
      %3405 = vmatprep.subr.bf16.mxu0 0
      %3406 = vmatpush1.bf16.msra.mxu0 %v3390
      %3407 = vmatprep.subr.bf16.mxu0 0
      %3408 = vmatpush1.bf16.msra.mxu0 %v3389
      %3409 = vmatprep.subr.bf16.mxu0 0
      %3410 = vmatpush2.bf16.msra.mxu0 0
      %3411 = vmatprep.subr.bf16.mxu0 0
      %3412 = vmatpush2.bf16.msra.mxu0 0
      %3413 = vmatprep.subr.bf16.mxu0 0
      %3414 = vmatpush2.bf16.msra.mxu0 0
      %3415 = vmatprep.subr.bf16.mxu0 0
      %3416 = vmatpush2.bf16.msra.mxu0 0
      %3417 = vmatprep.subr.bf16.mxu0 0
      %3418 = vmatpush2.bf16.msra.mxu0 0
      %3419 = vmatprep.subr.bf16.mxu0 0
      %3420 = vmatpush2.bf16.msra.mxu0 0
      %3421 = vmatprep.subr.bf16.mxu0 0
      %3422 = vmatpush2.bf16.msra.mxu0 0
      %3423 = vmatprep.subr.bf16.mxu0 0
      %3424 = vmatpush2.bf16.msra.mxu0 0
      %3425 = vmatprep.mubr.bf16.mxu0 0
      %3426 = vmatmul.mubr.bf16.gmra.mxu0 %v2336
      %v3427 = vpop.f32.mrf.mxu0
      %v3428 = vadd.f32 %v3379, %v3427
      %v3429 = vpop.f32.mrf.mxu0
      %v3430 = vpop.f32.mrf.mxu0
      %v3431 = vpop.f32.mrf.mxu0
      %3432 = vdwg.mxu0
      %s3433 = scalar_lea.vmem %s12, 48
      %v3434 = vld [vmem:[%s3433] sm:$0xf]
      %v3435 = vld [vmem:[%s3433 + $0x4] sm:$0xf]
      %v3436 = vld [vmem:[%s3433 + $0x8] sm:$0xf]
      %v3437 = vld [vmem:[%s3433 + $0xc] sm:$0xf]
      %s3438 = scalar_lea.vmem %s13, 3
      %v3439 = vld [vmem:[%s3438] sm:$0x1]
      %v3441 = vlaneseq
      %v3442 = vshrl.u32 %v3441, 7
      %v3443 = vsub.s32 0, %v3442
      %v3444 = vrot.slane %v3439, %v3443
      %v3450 = vunpack.c.l.b16 %v3434
      %v3451 = vunpack.c.l.b16 %v3435
      %v3452 = vunpack.c.l.b16 %v3436
      %v3453 = vunpack.c.l.b16 %v3437
      %v3454 = vpack.c.b16 %v3451, %v3450
      %v3455 = vpack.c.b16 %v3453, %v3452
      %3458 = vmatprep.subr.bf16.mxu0 0
      %3459 = vmatpush1.bf16.msra.mxu0 0
      %3460 = vmatprep.subr.bf16.mxu0 0
      %3461 = vmatpush1.bf16.msra.mxu0 0
      %3462 = vmatprep.subr.bf16.mxu0 0
      %3463 = vmatpush1.bf16.msra.mxu0 0
      %3464 = vmatprep.subr.bf16.mxu0 0
      %3465 = vmatpush1.bf16.msra.mxu0 0
      %3466 = vmatprep.subr.bf16.mxu0 0
      %3467 = vmatpush1.bf16.msra.mxu0 0
      %3468 = vmatprep.subr.bf16.mxu0 0
      %3469 = vmatpush1.bf16.msra.mxu0 0
      %3470 = vmatprep.subr.bf16.mxu0 0
      %3471 = vmatpush1.bf16.msra.mxu0 %v3455
      %3472 = vmatprep.subr.bf16.mxu0 0
      %3473 = vmatpush1.bf16.msra.mxu0 %v3454
      %3474 = vmatprep.subr.bf16.mxu0 0
      %3475 = vmatpush2.bf16.msra.mxu0 0
      %3476 = vmatprep.subr.bf16.mxu0 0
      %3477 = vmatpush2.bf16.msra.mxu0 0
      %3478 = vmatprep.subr.bf16.mxu0 0
      %3479 = vmatpush2.bf16.msra.mxu0 0
      %3480 = vmatprep.subr.bf16.mxu0 0
      %3481 = vmatpush2.bf16.msra.mxu0 0
      %3482 = vmatprep.subr.bf16.mxu0 0
      %3483 = vmatpush2.bf16.msra.mxu0 0
      %3484 = vmatprep.subr.bf16.mxu0 0
      %3485 = vmatpush2.bf16.msra.mxu0 0
      %3486 = vmatprep.subr.bf16.mxu0 0
      %3487 = vmatpush2.bf16.msra.mxu0 0
      %3488 = vmatprep.subr.bf16.mxu0 0
      %3489 = vmatpush2.bf16.msra.mxu0 0
      %3490 = vmatprep.mubr.bf16.mxu0 0
      %3491 = vmatmul.mubr.bf16.gmra.mxu0 %v2402
      %v3492 = vpop.f32.mrf.mxu0
      %v3493 = vadd.f32 %v3444, %v3492
      %v3494 = vpop.f32.mrf.mxu0
      %v3495 = vpop.f32.mrf.mxu0
      %v3496 = vpop.f32.mrf.mxu0
      %3497 = vdwg.mxu0
      %s3498 = scalar_lea.vmem %s14, 48
      %v3499 = vld [vmem:[%s3498] sm:$0xf]
      %v3500 = vld [vmem:[%s3498 + $0x4] sm:$0xf]
      %v3501 = vld [vmem:[%s3498 + $0x8] sm:$0xf]
      %v3502 = vld [vmem:[%s3498 + $0xc] sm:$0xf]
      %s3503 = scalar_lea.vmem %s15, 3
      %v3504 = vld [vmem:[%s3503] sm:$0x1]
      %v3506 = vlaneseq
      %v3507 = vshrl.u32 %v3506, 7
      %v3508 = vsub.s32 0, %v3507
      %v3509 = vrot.slane %v3504, %v3508
      %v3515 = vunpack.c.l.b16 %v3499
      %v3516 = vunpack.c.l.b16 %v3500
      %v3517 = vunpack.c.l.b16 %v3501
      %v3518 = vunpack.c.l.b16 %v3502
      %v3519 = vpack.c.b16 %v3516, %v3515
      %v3520 = vpack.c.b16 %v3518, %v3517
      %3523 = vmatprep.subr.bf16.mxu0 0
      %3524 = vmatpush1.bf16.msra.mxu0 0
      %3525 = vmatprep.subr.bf16.mxu0 0
      %3526 = vmatpush1.bf16.msra.mxu0 0
      %3527 = vmatprep.subr.bf16.mxu0 0
      %3528 = vmatpush1.bf16.msra.mxu0 0
      %3529 = vmatprep.subr.bf16.mxu0 0
      %3530 = vmatpush1.bf16.msra.mxu0 0
      %3531 = vmatprep.subr.bf16.mxu0 0
      %3532 = vmatpush1.bf16.msra.mxu0 0
      %3533 = vmatprep.subr.bf16.mxu0 0
      %3534 = vmatpush1.bf16.msra.mxu0 0
      %3535 = vmatprep.subr.bf16.mxu0 0
      %3536 = vmatpush1.bf16.msra.mxu0 %v3520
      %3537 = vmatprep.subr.bf16.mxu0 0
      %3538 = vmatpush1.bf16.msra.mxu0 %v3519
      %3539 = vmatprep.subr.bf16.mxu0 0
      %3540 = vmatpush2.bf16.msra.mxu0 0
      %3541 = vmatprep.subr.bf16.mxu0 0
      %3542 = vmatpush2.bf16.msra.mxu0 0
      %3543 = vmatprep.subr.bf16.mxu0 0
      %3544 = vmatpush2.bf16.msra.mxu0 0
      %3545 = vmatprep.subr.bf16.mxu0 0
      %3546 = vmatpush2.bf16.msra.mxu0 0
      %3547 = vmatprep.subr.bf16.mxu0 0
      %3548 = vmatpush2.bf16.msra.mxu0 0
      %3549 = vmatprep.subr.bf16.mxu0 0
      %3550 = vmatpush2.bf16.msra.mxu0 0
      %3551 = vmatprep.subr.bf16.mxu0 0
      %3552 = vmatpush2.bf16.msra.mxu0 0
      %3553 = vmatprep.subr.bf16.mxu0 0
      %3554 = vmatpush2.bf16.msra.mxu0 0
      %3555 = vmatprep.mubr.bf16.mxu0 0
      %3556 = vmatmul.mubr.bf16.gmra.mxu0 %v2402
      %v3557 = vpop.f32.mrf.mxu0
      %v3558 = vadd.f32 %v3509, %v3557
      %v3559 = vpop.f32.mrf.mxu0
      %v3560 = vpop.f32.mrf.mxu0
      %v3561 = vpop.f32.mrf.mxu0
      %3562 = vdwg.mxu0
      %v3563 = vpack.c.bf16 %v3428, %v3428
      %v3564 = vpack.c.bf16 %v3493, %v3493
      %v3566 = vsel %vm1058, %v3563, 0
      %v3569 = vsel %vm1058, %v3564, 0
      %3571 = vmatprep.subr.bf16.mxu0 0
      %3572 = vmatpush1.bf16.xpose.msra.mxu0 0
      %3573 = vmatprep.subr.bf16.mxu0 0
      %3574 = vmatpush1.bf16.xpose.msra.mxu0 0
      %3575 = vmatprep.subr.bf16.mxu0 0
      %3576 = vmatpush1.bf16.xpose.msra.mxu0 0
      %3577 = vmatprep.subr.bf16.mxu0 0
      %3578 = vmatpush1.bf16.xpose.msra.mxu0 0
      %3579 = vmatprep.subr.bf16.mxu0 0
      %3580 = vmatpush1.bf16.xpose.msra.mxu0 0
      %3581 = vmatprep.subr.bf16.mxu0 0
      %3582 = vmatpush1.bf16.xpose.msra.mxu0 0
      %3583 = vmatprep.subr.bf16.mxu0 0
      %3584 = vmatpush1.bf16.xpose.msra.mxu0 0
      %3585 = vmatprep.subr.bf16.mxu0 0
      %3586 = vmatpush1.bf16.xpose.msra.mxu0 %v3569
      %3587 = vmatprep.subr.bf16.mxu0 0
      %3588 = vmatpush2.bf16.xpose.msra.mxu0 0
      %3589 = vmatprep.subr.bf16.mxu0 0
      %3590 = vmatpush2.bf16.xpose.msra.mxu0 0
      %3591 = vmatprep.subr.bf16.mxu0 0
      %3592 = vmatpush2.bf16.xpose.msra.mxu0 0
      %3593 = vmatprep.subr.bf16.mxu0 0
      %3594 = vmatpush2.bf16.xpose.msra.mxu0 0
      %3595 = vmatprep.subr.bf16.mxu0 0
      %3596 = vmatpush2.bf16.xpose.msra.mxu0 0
      %3597 = vmatprep.subr.bf16.mxu0 0
      %3598 = vmatpush2.bf16.xpose.msra.mxu0 0
      %3599 = vmatprep.subr.bf16.mxu0 0
      %3600 = vmatpush2.bf16.xpose.msra.mxu0 0
      %3601 = vmatprep.subr.bf16.mxu0 0
      %3602 = vmatpush2.bf16.xpose.msra.mxu0 0
      %3603 = vmatprep.mubr.bf16.mxu0 0
      %3604 = vmatmul.mubr.bf16.gmra.mxu0 %v3566
      %v3605 = vpop.f32.mrf.mxu0
      %v3606 = vadd.f32 0.0, %v3605
      %v3607 = vpop.f32.mrf.mxu0
      %v3608 = vpop.f32.mrf.mxu0
      %v3609 = vpop.f32.mrf.mxu0
      %3610 = vdwg.mxu0
      %v3611 = vmul.f32 %v3606, 0.35355338
      %v3612 = vsel %vm1058, %v3611, -inf
      %3613 = vmax.xlane.f32.xlu0 %v3612
      %v3614 = vpop.xlane.xlu0 %3613
      %v3615 = vsub.f32 %v3611, %v3614
      %v3616 = vmul.f32 %v3615, 1.442695
      %v3617 = vpow.pop %v3616
      %v3618 = vsel %vm1058, %v3617, 0.0
      %3619 = vadd.xlane.f32.xlu0 %v3618
      %v3620 = vpop.xlane.xlu0 %3619
      %v3621 = vrcp.pop %v3620
      %v3622 = vmul.f32 %v3617, %v3621
      %v3623 = vpack.c.bf16 %v3622, %v3622
      %v3624 = vpack.c.bf16 %v3558, %v3558
      %v3626 = vsel %vm1058, %v3623, 0
      %v3629 = vsel %vm1122, %v3624, 0
      %3631 = vmatprep.subr.bf16.mxu0 0
      %3632 = vmatpush1.bf16.msra.mxu0 0
      %3633 = vmatprep.subr.bf16.mxu0 0
      %3634 = vmatpush1.bf16.msra.mxu0 0
      %3635 = vmatprep.subr.bf16.mxu0 0
      %3636 = vmatpush1.bf16.msra.mxu0 0
      %3637 = vmatprep.subr.bf16.mxu0 0
      %3638 = vmatpush1.bf16.msra.mxu0 0
      %3639 = vmatprep.subr.bf16.mxu0 0
      %3640 = vmatpush1.bf16.msra.mxu0 0
      %3641 = vmatprep.subr.bf16.mxu0 0
      %3642 = vmatpush1.bf16.msra.mxu0 0
      %3643 = vmatprep.subr.bf16.mxu0 0
      %3644 = vmatpush1.bf16.msra.mxu0 0
      %3645 = vmatprep.subr.bf16.mxu0 0
      %3646 = vmatpush1.bf16.msra.mxu0 %v3629
      %3647 = vmatprep.subr.bf16.mxu0 0
      %3648 = vmatpush2.bf16.msra.mxu0 0
      %3649 = vmatprep.subr.bf16.mxu0 0
      %3650 = vmatpush2.bf16.msra.mxu0 0
      %3651 = vmatprep.subr.bf16.mxu0 0
      %3652 = vmatpush2.bf16.msra.mxu0 0
      %3653 = vmatprep.subr.bf16.mxu0 0
      %3654 = vmatpush2.bf16.msra.mxu0 0
      %3655 = vmatprep.subr.bf16.mxu0 0
      %3656 = vmatpush2.bf16.msra.mxu0 0
      %3657 = vmatprep.subr.bf16.mxu0 0
      %3658 = vmatpush2.bf16.msra.mxu0 0
      %3659 = vmatprep.subr.bf16.mxu0 0
      %3660 = vmatpush2.bf16.msra.mxu0 0
      %3661 = vmatprep.subr.bf16.mxu0 0
      %3662 = vmatpush2.bf16.msra.mxu0 0
      %3663 = vmatprep.mubr.bf16.mxu0 0
      %3664 = vmatmul.mubr.bf16.gmra.mxu0 %v3626
      %v3665 = vpop.f32.mrf.mxu0
      %v3666 = vadd.f32 0.0, %v3665
      %v3667 = vpop.f32.mrf.mxu0
      %v3668 = vpop.f32.mrf.mxu0
      %v3669 = vpop.f32.mrf.mxu0
      %3670 = vdwg.mxu0
      %v3671 = vpack.c.bf16 %v3666, %v3666
      %s3672 = scalar_lea.vmem %s16, 12
      %v3673 = vld [vmem:[%s3672] sm:$0xf]
      %v3675 = vsel %vm1058, %v3671, 0
      %v3678 = vsel %vm1122, %v3673, 0
      %3680 = vmatprep.subr.bf16.mxu0 0
      %3681 = vmatpush1.bf16.msra.mxu0 0
      %3682 = vmatprep.subr.bf16.mxu0 0
      %3683 = vmatpush1.bf16.msra.mxu0 0
      %3684 = vmatprep.subr.bf16.mxu0 0
      %3685 = vmatpush1.bf16.msra.mxu0 0
      %3686 = vmatprep.subr.bf16.mxu0 0
      %3687 = vmatpush1.bf16.msra.mxu0 0
      %3688 = vmatprep.subr.bf16.mxu0 0
      %3689 = vmatpush1.bf16.msra.mxu0 0
      %3690 = vmatprep.subr.bf16.mxu0 0
      %3691 = vmatpush1.bf16.msra.mxu0 0
      %3692 = vmatprep.subr.bf16.mxu0 0
      %3693 = vmatpush1.bf16.msra.mxu0 0
      %3694 = vmatprep.subr.bf16.mxu0 0
      %3695 = vmatpush1.bf16.msra.mxu0 %v3678
      %3696 = vmatprep.subr.bf16.mxu0 0
      %3697 = vmatpush2.bf16.msra.mxu0 0
      %3698 = vmatprep.subr.bf16.mxu0 0
      %3699 = vmatpush2.bf16.msra.mxu0 0
      %3700 = vmatprep.subr.bf16.mxu0 0
      %3701 = vmatpush2.bf16.msra.mxu0 0
      %3702 = vmatprep.subr.bf16.mxu0 0
      %3703 = vmatpush2.bf16.msra.mxu0 0
      %3704 = vmatprep.subr.bf16.mxu0 0
      %3705 = vmatpush2.bf16.msra.mxu0 0
      %3706 = vmatprep.subr.bf16.mxu0 0
      %3707 = vmatpush2.bf16.msra.mxu0 0
      %3708 = vmatprep.subr.bf16.mxu0 0
      %3709 = vmatpush2.bf16.msra.mxu0 0
      %3710 = vmatprep.subr.bf16.mxu0 0
      %3711 = vmatpush2.bf16.msra.mxu0 0
      %3712 = vmatprep.mubr.bf16.mxu0 0
      %3713 = vmatmul.mubr.bf16.gmra.mxu0 %v3675
      %v3714 = vpop.f32.mrf.mxu0
      %v3715 = vadd.f32 0.0, %v3714
      %v3716 = vpop.f32.mrf.mxu0
      %v3717 = vpop.f32.mrf.mxu0
      %v3718 = vpop.f32.mrf.mxu0
      %3719 = vdwg.mxu0
      %v3720 = vadd.f32 %v3367, %v3715
      %v3721 = vld [vmem:[%s17] sm:$0x1]
      %v3723 = vlaneseq
      %v3724 = vshrl.u32 %v3723, 7
      %v3725 = vsub.s32 0, %v3724
      %v3726 = vrot.slane %v3721, %v3725
      %v3728 = vadd.f32 %v3720, %v3726
      %v3729 = vadd.f32 %v2310, %v3728
      %v3730 = vsel %vm886, %v3729, 0.0
      %3731 = vadd.xlane.f32.xlu0 %v3730
      %v3732 = vpop.xlane.xlu0 %3731
      %v3733 = vmul.f32 %v3732, %v2284
      %v3734 = vsub.f32 %v3729, %v3733
      %v3735 = vmul.f32 %v3734, %v3734
      %v3736 = vsel %vm886, %v3735, 0.0
      %3737 = vadd.xlane.f32.xlu0 %v3736
      %v3738 = vpop.xlane.xlu0 %3737
      %v3739 = vmul.f32 %v3738, %v2284
      %v3740 = vadd.f32 %v3739, 1e-05
      %v3741 = vrsqrt.pop %v3740
      %v3742 = vmul.f32 %v3734, %v3741
      %v3743 = vld [vmem:[%s20] sm:$0x1]
      %v3745 = vlaneseq
      %v3746 = vshrl.u32 %v3745, 7
      %v3747 = vsub.s32 0, %v3746
      %v3748 = vrot.slane %v3743, %v3747
      %v3750 = vmul.f32 %v3742, %v3748
      %v3751 = vld [vmem:[%s21] sm:$0x1]
      %v3753 = vlaneseq
      %v3754 = vshrl.u32 %v3753, 7
      %v3755 = vsub.s32 0, %v3754
      %v3756 = vrot.slane %v3751, %v3755
      %v3758 = vadd.f32 %v3750, %v3756
      %v3759 = vpack.c.bf16 %v3758, %v3758
      %v3760 = vld [vmem:[%s24] sm:$0xf]
      %v3761 = vld [vmem:[%s24 + $0x4] sm:$0xf]
      %v3762 = vld [vmem:[%s24 + $0x8] sm:$0xf]
      %v3763 = vld [vmem:[%s24 + $0xc] sm:$0xf]
      %v3764 = vld [vmem:[%s25] sm:$0x1]
      %v3766 = vlaneseq
      %v3767 = vshrl.u32 %v3766, 7
      %v3768 = vsub.s32 0, %v3767
      %v3769 = vrot.slane %v3764, %v3768
      %v3775 = vunpack.c.l.b16 %v3760
      %v3776 = vunpack.c.l.b16 %v3761
      %v3777 = vunpack.c.l.b16 %v3762
      %v3778 = vunpack.c.l.b16 %v3763
      %v3779 = vpack.c.b16 %v3776, %v3775
      %v3780 = vpack.c.b16 %v3778, %v3777
      %v3784 = vsel %vm886, %v3759, 0
      %3786 = vmatprep.subr.bf16.mxu0 0
      %3787 = vmatpush1.bf16.msra.mxu0 0
      %3788 = vmatprep.subr.bf16.mxu0 0
      %3789 = vmatpush1.bf16.msra.mxu0 0
      %3790 = vmatprep.subr.bf16.mxu0 0
      %3791 = vmatpush1.bf16.msra.mxu0 0
      %3792 = vmatprep.subr.bf16.mxu0 0
      %3793 = vmatpush1.bf16.msra.mxu0 0
      %3794 = vmatprep.subr.bf16.mxu0 0
      %3795 = vmatpush1.bf16.msra.mxu0 0
      %3796 = vmatprep.subr.bf16.mxu0 0
      %3797 = vmatpush1.bf16.msra.mxu0 0
      %3798 = vmatprep.subr.bf16.mxu0 0
      %3799 = vmatpush1.bf16.msra.mxu0 %v3780
      %3800 = vmatprep.subr.bf16.mxu0 0
      %3801 = vmatpush1.bf16.msra.mxu0 %v3779
      %3802 = vmatprep.subr.bf16.mxu0 0
      %3803 = vmatpush2.bf16.msra.mxu0 0
      %3804 = vmatprep.subr.bf16.mxu0 0
      %3805 = vmatpush2.bf16.msra.mxu0 0
      %3806 = vmatprep.subr.bf16.mxu0 0
      %3807 = vmatpush2.bf16.msra.mxu0 0
      %3808 = vmatprep.subr.bf16.mxu0 0
      %3809 = vmatpush2.bf16.msra.mxu0 0
      %3810 = vmatprep.subr.bf16.mxu0 0
      %3811 = vmatpush2.bf16.msra.mxu0 0
      %3812 = vmatprep.subr.bf16.mxu0 0
      %3813 = vmatpush2.bf16.msra.mxu0 0
      %3814 = vmatprep.subr.bf16.mxu0 0
      %3815 = vmatpush2.bf16.msra.mxu0 0
      %3816 = vmatprep.subr.bf16.mxu0 0
      %3817 = vmatpush2.bf16.msra.mxu0 0
      %3818 = vmatprep.mubr.bf16.mxu0 0
      %3819 = vmatmul.mubr.bf16.gmra.mxu0 %v3784
      %v3820 = vpop.f32.mrf.mxu0
      %v3821 = vadd.f32 %v3769, %v3820
      %v3822 = vpop.f32.mrf.mxu0
      %v3823 = vpop.f32.mrf.mxu0
      %v3824 = vpop.f32.mrf.mxu0
      %3825 = vdwg.mxu0
      %v3826 = vmax.f32 %v3821, 0.0
      %v3827 = vpack.c.bf16 %v3826, %v3826
      %v3828 = vld [vmem:[%s26] sm:$0xf]
      %v3829 = vld [vmem:[%s26 + $0x4] sm:$0xf]
      %v3830 = vld [vmem:[%s26 + $0x8] sm:$0xf]
      %v3831 = vld [vmem:[%s26 + $0xc] sm:$0xf]
      %v3832 = vld [vmem:[%s26 + $0x10] sm:$0xf]
      %v3833 = vld [vmem:[%s26 + $0x14] sm:$0xf]
      %v3834 = vld [vmem:[%s26 + $0x18] sm:$0xf]
      %v3835 = vld [vmem:[%s26 + $0x1c] sm:$0xf]
      %v3836 = vld [vmem:[%s27] sm:$0x1]
      %v3838 = vlaneseq
      %v3839 = vshrl.u32 %v3838, 7
      %v3840 = vsub.s32 0, %v3839
      %v3841 = vrot.slane %v3836, %v3840
      %v3851 = vunpack.c.l.b16 %v3828
      %v3852 = vunpack.c.l.b16 %v3829
      %v3853 = vunpack.c.l.b16 %v3830
      %v3854 = vunpack.c.l.b16 %v3831
      %v3855 = vunpack.c.l.b16 %v3832
      %v3856 = vunpack.c.l.b16 %v3833
      %v3857 = vunpack.c.l.b16 %v3834
      %v3858 = vunpack.c.l.b16 %v3835
      %v3859 = vpack.c.b16 %v3852, %v3851
      %v3860 = vpack.c.b16 %v3854, %v3853
      %v3861 = vpack.c.b16 %v3856, %v3855
      %v3862 = vpack.c.b16 %v3858, %v3857
      %vm3867 = vcmask 523264
      %v3869 = vsel %vm3867, %v3827, 0
      %3871 = vmatprep.subr.bf16.mxu0 0
      %3872 = vmatpush1.bf16.msra.mxu0 0
      %3873 = vmatprep.subr.bf16.mxu0 0
      %3874 = vmatpush1.bf16.msra.mxu0 0
      %3875 = vmatprep.subr.bf16.mxu0 0
      %3876 = vmatpush1.bf16.msra.mxu0 0
      %3877 = vmatprep.subr.bf16.mxu0 0
      %3878 = vmatpush1.bf16.msra.mxu0 0
      %3879 = vmatprep.subr.bf16.mxu0 0
      %3880 = vmatpush1.bf16.msra.mxu0 %v3862
      %3881 = vmatprep.subr.bf16.mxu0 0
      %3882 = vmatpush1.bf16.msra.mxu0 %v3861
      %3883 = vmatprep.subr.bf16.mxu0 0
      %3884 = vmatpush1.bf16.msra.mxu0 %v3860
      %3885 = vmatprep.subr.bf16.mxu0 0
      %3886 = vmatpush1.bf16.msra.mxu0 %v3859
      %3887 = vmatprep.subr.bf16.mxu0 0
      %3888 = vmatpush2.bf16.msra.mxu0 0
      %3889 = vmatprep.subr.bf16.mxu0 0
      %3890 = vmatpush2.bf16.msra.mxu0 0
      %3891 = vmatprep.subr.bf16.mxu0 0
      %3892 = vmatpush2.bf16.msra.mxu0 0
      %3893 = vmatprep.subr.bf16.mxu0 0
      %3894 = vmatpush2.bf16.msra.mxu0 0
      %3895 = vmatprep.subr.bf16.mxu0 0
      %3896 = vmatpush2.bf16.msra.mxu0 0
      %3897 = vmatprep.subr.bf16.mxu0 0
      %3898 = vmatpush2.bf16.msra.mxu0 0
      %3899 = vmatprep.subr.bf16.mxu0 0
      %3900 = vmatpush2.bf16.msra.mxu0 0
      %3901 = vmatprep.subr.bf16.mxu0 0
      %3902 = vmatpush2.bf16.msra.mxu0 0
      %3903 = vmatprep.mubr.bf16.mxu0 0
      %3904 = vmatmul.mubr.bf16.gmra.mxu0 %v3869
      %v3905 = vpop.f32.mrf.mxu0
      %v3906 = vadd.f32 %v3841, %v3905
      %v3907 = vpop.f32.mrf.mxu0
      %v3908 = vpop.f32.mrf.mxu0
      %v3909 = vpop.f32.mrf.mxu0
      %3910 = vdwg.mxu0
      %v3911 = vadd.f32 %v3758, %v3906
      %v3912 = vsel %vm886, %v3911, 0.0
      %3913 = vadd.xlane.f32.xlu0 %v3912
      %v3914 = vpop.xlane.xlu0 %3913
      %v3915 = vmul.f32 %v3914, %v2284
      %v3916 = vsub.f32 %v3911, %v3915
      %v3917 = vmul.f32 %v3916, %v3916
      %v3918 = vsel %vm886, %v3917, 0.0
      %3919 = vadd.xlane.f32.xlu0 %v3918
      %v3920 = vpop.xlane.xlu0 %3919
      %v3921 = vmul.f32 %v3920, %v2284
      %v3922 = vadd.f32 %v3921, 1e-05
      %v3923 = vrsqrt.pop %v3922
      %v3924 = vmul.f32 %v3916, %v3923
      %v3925 = vld [vmem:[%s22] sm:$0x1]
      %v3927 = vlaneseq
      %v3928 = vshrl.u32 %v3927, 7
      %v3929 = vsub.s32 0, %v3928
      %v3930 = vrot.slane %v3925, %v3929
      %v3932 = vmul.f32 %v3924, %v3930
      %v3933 = vld [vmem:[%s23] sm:$0x1]
      %v3935 = vlaneseq
      %v3936 = vshrl.u32 %v3935, 7
      %v3937 = vsub.s32 0, %v3936
      %v3938 = vrot.slane %v3933, %v3937
      %v3940 = vadd.f32 %v3932, %v3938
      %3941 = vst.msk [vmem:[%s857] sm:$0xff] %vm886, %v3940
      %p3942 = scmp.lt.s32.totalorder %s39, 1
      %s3943 = scalar_select %p3942, %s39, 1
      %s3944 = smul.addr %s3943, 8
      %s3945 = scalar_lea.vmem %s28, %s3944
      // Predicated region
      $region133: #{custom_transformer_forward.9} parent=131 // pred_check
        %p3946 = pneg %p655
      $region134: #{custom_transformer_forward.9} parent=131 // pred_check_branch
        %3948 = sbr.rel (%p3946) target = $region136
      $region135: #{custom_transformer_forward.9} parent=131 // pred_region
        _
      $region136: #{custom_transformer_forward.9} parent=131 // pred_fallthru
        _
    $region132: #{custom_transformer_forward.9} parent=5 // pred_fallthru
      _
    %p3949 = scmp.le.s32.totalorder 2, %s34
    // Predicated region
    $region137: #{custom_transformer_forward.9} parent=5 // pred_check
      %p3950 = pneg %p3949
    $region138: #{custom_transformer_forward.9} parent=5 // pred_check_branch
      %3952 = sbr.rel (%p3950) target = $region140
    $region139: #{custom_transformer_forward.9} parent=5 // pred_region
      %s3953 = ssub.s32 %s34, 2
      // Predicated region
      $region141: #{custom_transformer_forward.9} parent=139 // pred_check
        %p3954 = pneg %p661
      $region142: #{custom_transformer_forward.9} parent=139 // pred_check_branch
        %3956 = sbr.rel (%p3954) target = $region144
      $region143: #{custom_transformer_forward.9} parent=139 // pred_region
        %p3957 = scmp.lt.s32.totalorder %s40, 1
        %s3958 = scalar_select %p3957, %s40, 1
        %s3959 = smul.addr %s3958, 8
        %s3960 = scalar_lea.vmem %s28, %s3959
      $region144: #{custom_transformer_forward.9} parent=139 // pred_fallthru
        _
    $region140: #{custom_transformer_forward.9} parent=5 // pred_fallthru
      _
  $region6: #{custom_transformer_forward.9} parent=0 // loop_footer
    %s38 = sadd.s32 1, %s34
  $region7: #{custom_transformer_forward.9} parent=0 // loop_footer_branch
    %33 = sbr.rel target = $region3
  $region8: #{custom_transformer_forward.9} parent=0 // loop_exit
    _

</llo_original>
